<compile_context>
chip_gen: v6e
topology: v6e:2x2x1
jax: 0.10.0
libtpu: 0.0.40
codegen_flags: <defaults>
</compile_context>

<pallas_src>
import functools

import numpy as np
import jax
import jax.numpy as jnp
from jax.experimental import pallas as pl
from jax.experimental.pallas import tpu as pltpu


# ----------------------------------------------------------------------------
# small helpers
# ----------------------------------------------------------------------------
def _round_up(x, m):
    return ((x + m - 1) // m) * m


def _tile(dim, align, cap):
    """(tile, padded): tile multiple of `align`, <= cap, tile divides padded."""
    p = _round_up(dim, align)
    if p <= cap:
        return p, p
    t = (cap // align) * align
    return t, _round_up(p, t)


# Abramowitz & Stegun 7.1.26 erf approximation (|err| < 1.5e-7); built only
# from ops with guaranteed Mosaic lowerings (abs / recip / exp / select).
_ERF_P, _ERF_A1, _ERF_A2 = 0.3275911, 0.254829592, -0.284496736
_ERF_A3, _ERF_A4, _ERF_A5 = 1.421413741, -1.453152027, 1.061405429


def _erf_f32(x):
    ax = jnp.abs(x)
    t = 1.0 / (1.0 + _ERF_P * ax)
    poly = t * (_ERF_A1 + t * (_ERF_A2 + t * (_ERF_A3 + t * (_ERF_A4 + t * _ERF_A5))))
    y = 1.0 - poly * jnp.exp(-ax * ax)
    return jnp.where(x < 0.0, -y, y)


def _gelu_f32(x):
    return 0.5 * x * (1.0 + _erf_f32(x * 0.7071067811865476))


def _ln_f32(x, gamma, beta, eps):
    """LayerNorm over the last axis in f32.  gamma/beta are (1, D)."""
    mu = jnp.mean(x, axis=-1, keepdims=True)
    xc = x - mu
    var = jnp.mean(xc * xc, axis=-1, keepdims=True)
    return xc * jax.lax.rsqrt(var + eps) * gamma + beta


def bilinear_matrix(out_size, in_size):
    """1-D interpolation matrix matching torch bilinear, align_corners=False."""
    A = np.zeros((out_size, in_size), np.float32)
    if in_size == 1:
        A[:, 0] = 1.0
        return A
    scale = in_size / out_size
    for i in range(out_size):
        src = max((i + 0.5) * scale - 0.5, 0.0)
        i0 = min(int(np.floor(src)), in_size - 1)
        i1 = min(i0 + 1, in_size - 1)
        w = src - i0
        A[i, i0] += 1.0 - w
        A[i, i1] += w
    return A


# ----------------------------------------------------------------------------
# Generic tiled matmul kernel: optional fused LayerNorm prologue (needs the
# full K row in one tile), bias, ReLU/GELU, residual add.
# ----------------------------------------------------------------------------
def _mm_kernel(*refs, act, has_bias, has_res, has_ln, eps):
    idx = 0
    a_ref = refs[idx]; idx += 1
    g_ref = bln_ref = None
    if has_ln:
        g_ref, bln_ref = refs[idx], refs[idx + 1]; idx += 2
    b_ref = refs[idx]; idx += 1
    bias_ref = res_ref = None
    if has_bias:
        bias_ref = refs[idx]; idx += 1
    if has_res:
        res_ref = refs[idx]; idx += 1
    o_ref, acc_ref = refs[idx], refs[idx + 1]

    @pl.when(pl.program_id(2) == 0)
    def _():
        acc_ref[...] = jnp.zeros_like(acc_ref)

    a = a_ref[...]
    if has_ln:
        a = _ln_f32(a.astype(jnp.float32), g_ref[...], bln_ref[...], eps)
    a = a.astype(jnp.bfloat16)
    acc_ref[...] += jnp.dot(a, b_ref[...], preferred_element_type=jnp.float32)

    @pl.when(pl.program_id(2) == pl.num_programs(2) - 1)
    def _():
        acc = acc_ref[...]
        if has_bias:
            acc = acc + bias_ref[...]
        if act == "relu":
            acc = jnp.maximum(acc, 0.0)
        elif act == "gelu":
            acc = _gelu_f32(acc)
        if has_res:
            acc = acc + res_ref[...]
        o_ref[...] = acc.astype(o_ref.dtype)


def matmul_fused(a, b, bias=None, residual=None, act=None, ln=None,
                 out_dtype=jnp.float32, eps=1e-6):
    """out = act(LN?(a) @ b + bias) + residual.  b is already (K, N) bf16."""
    M, K = a.shape
    K2, N = b.shape
    assert K == K2, (a.shape, b.shape)
    tk, Kp = _tile(K, 128, 768)
    tn, Np = _tile(N, 128, 512)
    tm, Mp = _tile(M, 8, 256)
    # >=2 parallel (i,j) grid steps -> both v7x TensorCores get work.
    if (Mp // tm) * (Np // tn) < 2:
        if tm % 16 == 0:
            tm //= 2
        elif tn % 256 == 0:
            tn //= 2

    has_ln = ln is not None
    if has_ln:
        assert Kp == K and tk == K, "LN fusion needs the full row in one K tile"
        a_p = a if a.dtype == jnp.float32 else a.astype(jnp.float32)
    else:
        a_p = a if a.dtype == jnp.bfloat16 else a.astype(jnp.bfloat16)
    if (Mp, Kp) != (M, K):
        a_p = jnp.pad(a_p, ((0, Mp - M), (0, Kp - K)))
    b_p = b if b.dtype == jnp.bfloat16 else b.astype(jnp.bfloat16)
    if (Kp, Np) != (K, N):
        b_p = jnp.pad(b_p, ((0, Kp - K), (0, Np - N)))

    inputs = [a_p]
    in_specs = [pl.BlockSpec((tm, tk), lambda i, j, k: (i, k))]
    if has_ln:
        gamma, beta = ln
        inputs += [gamma, beta]
        in_specs += [pl.BlockSpec((1, K), lambda i, j, k: (0, 0)),
                     pl.BlockSpec((1, K), lambda i, j, k: (0, 0))]
    inputs.append(b_p)
    in_specs.append(pl.BlockSpec((tk, tn), lambda i, j, k: (k, j)))

    has_bias = bias is not None
    if has_bias:
        bias_p = bias.reshape(1, N).astype(jnp.float32)
        if Np != N:
            bias_p = jnp.pad(bias_p, ((0, 0), (0, Np - N)))
        inputs.append(bias_p)
        in_specs.append(pl.BlockSpec((1, tn), lambda i, j, k: (0, j)))
    has_res = residual is not None
    if has_res:
        res_p = residual
        if (Mp, Np) != (M, N):
            res_p = jnp.pad(res_p, ((0, Mp - M), (0, Np - N)))
        inputs.append(res_p)
        in_specs.append(pl.BlockSpec((tm, tn), lambda i, j, k: (i, j)))

    out = pl.pallas_call(
        functools.partial(_mm_kernel, act=act, has_bias=has_bias,
                          has_res=has_res, has_ln=has_ln, eps=eps),
        out_shape=jax.ShapeDtypeStruct((Mp, Np), out_dtype),
        grid=(Mp // tm, Np // tn, Kp // tk),
        in_specs=in_specs,
        out_specs=pl.BlockSpec((tm, tn), lambda i, j, k: (i, j)),
        scratch_shapes=[pltpu.VMEM((tm, tn), jnp.float32)],
        compiler_params=pltpu.CompilerParams(
            dimension_semantics=("parallel", "parallel", "arbitrary")),
    )(*inputs)
    if (Mp, Np) != (M, N):
        out = out[:M, :N]
    return out


# ----------------------------------------------------------------------------
# Fused transformer block kernel: one grid step per batch element.
# ----------------------------------------------------------------------------
def _block_kernel(x_ref, ln1g_ref, ln1b_ref, wq_ref, wk_ref, wv_ref,
                  bq_ref, bk_ref, bv_ref, wproj_ref, bproj_ref,
                  ln2g_ref, ln2b_ref, wfc1_ref, bfc1_ref, wfc2_ref, bfc2_ref,
                  o_ref, *, heads, dh, eps):
    x = x_ref[0]                                                # (N, D) f32
    scale = dh ** -0.5

    # --- attention branch: x = x + proj(attn(LN1(x))) ---
    hb = _ln_f32(x, ln1g_ref[...], ln1b_ref[...], eps).astype(jnp.bfloat16)
    acc = jnp.zeros(x.shape, jnp.float32)
    for hd in range(heads):                                     # static unroll
        q = jnp.dot(hb, wq_ref[hd], preferred_element_type=jnp.float32) + bq_ref[hd]
        k = jnp.dot(hb, wk_ref[hd], preferred_element_type=jnp.float32) + bk_ref[hd]
        v = jnp.dot(hb, wv_ref[hd], preferred_element_type=jnp.float32) + bv_ref[hd]
        s = jax.lax.dot_general(q.astype(jnp.bfloat16), k.astype(jnp.bfloat16),
                                (((1,), (1,)), ((), ())),
                                preferred_element_type=jnp.float32) * scale
        s = s - jnp.max(s, axis=-1, keepdims=True)
        p = jnp.exp(s)
        p = p * pl.reciprocal(jnp.sum(p, axis=-1, keepdims=True), approx=True)
        o = jnp.dot(p.astype(jnp.bfloat16), v.astype(jnp.bfloat16),
                    preferred_element_type=jnp.float32)
        # accumulate this head's slice of the output projection -> no concat,
        # no lane-misaligned head slicing.
        acc = acc + jnp.dot(o.astype(jnp.bfloat16), wproj_ref[hd],
                            preferred_element_type=jnp.float32)
    x = x + acc + bproj_ref[...]

    # --- MLP branch: x = x + fc2(GELU(fc1(LN2(x)))) ---
    h2 = _ln_f32(x, ln2g_ref[...], ln2b_ref[...], eps).astype(jnp.bfloat16)
    u = jnp.dot(h2, wfc1_ref[...], preferred_element_type=jnp.float32) + bfc1_ref[...]
    u = _gelu_f32(u)
    y = jnp.dot(u.astype(jnp.bfloat16), wfc2_ref[...],
                preferred_element_type=jnp.float32) + bfc2_ref[...]
    o_ref[0] = (x + y).astype(o_ref.dtype)


def transformer_block(x, bp, cfg, eps=1e-6):
    """x: (B, N, D) f32 residual stream -> (B, N, D) f32."""
    B, N, D = x.shape
    heads = cfg["heads"]
    dh = D // heads

    def full(arr):
        nd = arr.ndim
        return pl.BlockSpec(arr.shape, lambda b, _nd=nd: (0,) * _nd)

    inputs = [x, bp["ln1_g"], bp["ln1_b"], bp["wq"], bp["wk"], bp["wv"],
              bp["bq"], bp["bk"], bp["bv"], bp["wproj"], bp["bproj"],
              bp["ln2_g"], bp["ln2_b"], bp["fc1_w"], bp["fc1_b"],
              bp["fc2_w"], bp["fc2_b"]]
    in_specs = [pl.BlockSpec((1, N, D), lambda b: (b, 0, 0))] + \
               [full(a) for a in inputs[1:]]
    return pl.pallas_call(
        functools.partial(_block_kernel, heads=heads, dh=dh, eps=eps),
        out_shape=jax.ShapeDtypeStruct((B, N, D), jnp.float32),
        grid=(B,),
        in_specs=in_specs,
        out_specs=pl.BlockSpec((1, N, D), lambda b: (b, 0, 0)),
        compiler_params=pltpu.CompilerParams(dimension_semantics=("parallel",)),
    )(*inputs)


# ----------------------------------------------------------------------------
# Height pass of the separable bilinear upsample: out[b] = A @ z[b].
# ----------------------------------------------------------------------------
def _left_mm_kernel(a_ref, z_ref, o_ref):
    o_ref[0] = jnp.dot(a_ref[...], z_ref[0],
                       preferred_element_type=jnp.float32).astype(o_ref.dtype)


def batched_left_matmul(A, z, out_dtype=jnp.float32):
    """A: (P, Q) bf16, z: (B, Q, R) -> (B, P, R)."""
    Bsz, Q, R = z.shape
    P, Q2 = A.shape
    assert Q == Q2
    return pl.pallas_call(
        _left_mm_kernel,
        out_shape=jax.ShapeDtypeStruct((Bsz, P, R), out_dtype),
        grid=(Bsz,),
        in_specs=[pl.BlockSpec((P, Q), lambda b: (0, 0)),
                  pl.BlockSpec((1, Q, R), lambda b: (b, 0, 0))],
        out_specs=pl.BlockSpec((1, P, R), lambda b: (b, 0, 0)),
        compiler_params=pltpu.CompilerParams(dimension_semantics=("parallel",)),
    )(A, z)


# ----------------------------------------------------------------------------
# Parameters (torch layout) + one-time preparation into kernel-friendly layout
# ----------------------------------------------------------------------------
def init_params(key, cfg):
    D, C, P = cfg["embed_dim"], cfg["in_chans"], cfg["patch"]
    hidden = D * cfg["mlp_ratio"]
    dec1, dec2, nc = cfg["dec1"], cfg["dec2"], cfg["num_classes"]
    keys = iter(jax.random.split(key, 8 + 6 * cfg["depth"]))
    nrm = lambda shape, s=0.02: s * jax.random.normal(next(keys), shape, jnp.float32)
    params = {
        "patch_w": nrm((D, C, P, P)),                 # Conv2d (D, C, P, P)
        "patch_b": jnp.zeros((D,), jnp.float32),
        "pos_embed": nrm((1, 197, D)),                # timm cls + 14x14 grid
        "norm_g": jnp.ones((D,), jnp.float32),
        "norm_b": jnp.zeros((D,), jnp.float32),
        "dec1_w": nrm((D, dec1, 2, 2)),               # ConvTranspose2d (Cin,Cout,2,2)
        "dec1_b": jnp.zeros((dec1,), jnp.float32),
        "dec2_w": nrm((dec1, dec2, 2, 2)),
        "dec2_b": jnp.zeros((dec2,), jnp.float32),
        "dec3_w": nrm((dec2, nc, 1, 1)),              # ConvTranspose2d k=1
        "dec3_b": jnp.zeros((nc,), jnp.float32),
        "blocks": [],
    }
    for _ in range(cfg["depth"]):
        params["blocks"].append({
            "ln1_g": jnp.ones((D,), jnp.float32), "ln1_b": jnp.zeros((D,), jnp.float32),
            "qkv_w": nrm((3 * D, D)), "qkv_b": jnp.zeros((3 * D,), jnp.float32),
            "proj_w": nrm((D, D)), "proj_b": jnp.zeros((D,), jnp.float32),
            "ln2_g": jnp.ones((D,), jnp.float32), "ln2_b": jnp.zeros((D,), jnp.float32),
            "fc1_w": nrm((hidden, D)), "fc1_b": jnp.zeros((hidden,), jnp.float32),
            "fc2_w": nrm((D, hidden)), "fc2_b": jnp.zeros((D,), jnp.float32),
        })
    return params


def prepare_params(p, cfg):
    """One-time: pre-transpose / per-head split / pre-cast weights."""
    D, C, P = cfg["embed_dim"], cfg["in_chans"], cfg["patch"]
    heads = cfg["heads"]; dh = D // heads
    dec1, dec2, nc = cfg["dec1"], cfg["dec2"], cfg["num_classes"]
    H = W = cfg["img"]
    Hp, Wp = H // P, W // P
    H2, W2 = 4 * Hp, 4 * Wp                           # after the two 2x up-convs
    bf = lambda w: jnp.asarray(w, jnp.bfloat16)
    row = lambda v: jnp.asarray(np.asarray(v, np.float32).reshape(1, -1))

    # Interpolated position embedding: cls token in row 0 + bilinearly resized
    # 14x14 grid, then (exactly like the torch forward) only the first N rows
    # are added -> cls lands on patch token 0, last grid row is dropped.
    pos = np.asarray(p["pos_embed"], np.float32)
    grid_pe = pos[0, 1:, :].reshape(14, 14, D)
    interp = np.einsum("ip,jq,pqd->ijd", bilinear_matrix(Hp, 14),
                       bilinear_matrix(Wp, 14), grid_pe).reshape(Hp * Wp, D)
    pos_tok = np.concatenate([pos[0, :1, :], interp], axis=0)[:Hp * Wp]

    dec3_mat = np.asarray(p["dec3_w"], np.float32).reshape(dec2, nc)
    fp = {
        "patch_w": bf(np.asarray(p["patch_w"], np.float32).reshape(D, C * P * P).T),
        "patch_b": row(p["patch_b"]),
        "pos_tok": jnp.asarray(pos_tok, jnp.float32),                     # (N, D)
        "norm_g": row(p["norm_g"]), "norm_b": row(p["norm_b"]),
        # ConvTranspose2d(k=2,s=2): (Cin,Cout,2,2) -> (Cin, (di,dj,Cout))
        "dec1_w": bf(np.asarray(p["dec1_w"], np.float32).transpose(0, 2, 3, 1).reshape(D, 4 * dec1)),
        "dec1_b": row(np.tile(np.asarray(p["dec1_b"], np.float32), 4)),
        "dec2_w": bf(np.asarray(p["dec2_w"], np.float32).transpose(0, 2, 3, 1).reshape(dec1, 4 * dec2)),
        "dec2_b": row(np.tile(np.asarray(p["dec2_b"], np.float32), 4)),
        # width bilinear upsample (align_corners=False) folded with the 1x1
        # dec3 conv: weight[(w2*dec2+c'), (w*nc+c)] = Aw[w,w2] * Wdec3[c',c]
        "wup_w": bf(np.kron(bilinear_matrix(W, W2).T, dec3_mat)),          # (W2*dec2, W*nc)
        "wup_b": row(np.tile(np.asarray(p["dec3_b"], np.float32), W)),
        "ah": bf(bilinear_matrix(H, H2)),                                  # (H, H2)
        "blocks": [],
    }
    for bp in p["blocks"]:
        qkv_w = np.asarray(bp["qkv_w"], np.float32)          # (3D, D) torch (out,in)
        qkv_b = np.asarray(bp["qkv_b"], np.float32)
        split = lambda w: w.T.reshape(D, heads, dh).transpose(1, 0, 2)     # (heads, D, dh)
        proj_w = np.asarray(bp["proj_w"], np.float32)        # (D, D)
        fp["blocks"].append({
            "ln1_g": row(bp["ln1_g"]), "ln1_b": row(bp["ln1_b"]),
            "wq": bf(split(qkv_w[0 * D:1 * D])),
            "wk": bf(split(qkv_w[1 * D:2 * D])),
            "wv": bf(split(qkv_w[2 * D:3 * D])),
            "bq": jnp.asarray(qkv_b[0 * D:1 * D].reshape(heads, 1, dh), jnp.float32),
            "bk": jnp.asarray(qkv_b[1 * D:2 * D].reshape(heads, 1, dh), jnp.float32),
            "bv": jnp.asarray(qkv_b[2 * D:3 * D].reshape(heads, 1, dh), jnp.float32),
            "wproj": bf(proj_w.T.reshape(heads, dh, D)),
            "bproj": row(bp["proj_b"]),
            "ln2_g": row(bp["ln2_g"]), "ln2_b": row(bp["ln2_b"]),
            "fc1_w": bf(np.asarray(bp["fc1_w"], np.float32).T), "fc1_b": row(bp["fc1_b"]),
            "fc2_w": bf(np.asarray(bp["fc2_w"], np.float32).T), "fc2_b": row(bp["fc2_b"]),
        })
    return fp


# ----------------------------------------------------------------------------
# Forward pass
# ----------------------------------------------------------------------------
def vit_segmentation_forward(x, fp, cfg):
    """x: (B, C, H, W) f32 NCHW -> logits (B, num_classes, H, W) f32."""
    B, C, H, W = x.shape
    P, D = cfg["patch"], cfg["embed_dim"]
    Hp, Wp = H // P, W // P
    N = Hp * Wp

    # --- patch embed: im2col (XLA) + matmul with pos_embed fused as residual.
    # TODO(synk): fold the im2col into the patch matmul via a BlockSpec over
    # the (Hp, Wp) patch grid instead of this 6-D XLA transpose.
    patches = (x.reshape(B, C, Hp, P, Wp, P)
                 .transpose(0, 2, 4, 1, 3, 5)
                 .reshape(B * N, C * P * P)).astype(jnp.bfloat16)
    pos_res = jnp.broadcast_to(fp["pos_tok"][None], (B, N, D)).reshape(B * N, D)
    tok = matmul_fused(patches, fp["patch_w"], fp["patch_b"],
                       residual=pos_res, out_dtype=jnp.float32)            # (B*N, D)

    # --- transformer: one fused kernel per block (grid over batch) ---
    xs = tok.reshape(B, N, D)
    for bp in fp["blocks"]:
        xs = transformer_block(xs, bp, cfg)
    feat = xs.reshape(B * N, D)                     # f32, token order (b, hp, wp)

    # --- decoder (channels-last); final norm fused into dec1 as LN prologue ---
    dec1, dec2, nc = cfg["dec1"], cfg["dec2"], cfg["num_classes"]
    y = matmul_fused(feat, fp["dec1_w"], fp["dec1_b"], act="relu",
                     ln=(fp["norm_g"], fp["norm_b"]),
                     out_dtype=jnp.bfloat16)                               # (B*N, 4*dec1)
    H1, W1 = 2 * Hp, 2 * Wp
    # TODO(synk): fold the 2x2 pixel-shuffles into the matmul output
    # BlockSpec (row-strided index_map) instead of these XLA transposes.
    y = (y.reshape(B, Hp, Wp, 2, 2, dec1)
           .transpose(0, 1, 3, 2, 4, 5).reshape(B * H1 * W1, dec1))
    y = matmul_fused(y, fp["dec2_w"], fp["dec2_b"], act="relu",
                     out_dtype=jnp.bfloat16)                               # (B*H1*W1, 4*dec2)
    H2, W2 = 2 * H1, 2 * W1
    y = (y.reshape(B, H1, W1, 2, 2, dec2)
           .transpose(0, 1, 3, 2, 4, 5).reshape(B * H2, W2 * dec2))        # (B*H2, W2*dec2)

    # --- separable bilinear upsample (align_corners=False) ---
    # width pass + 1x1 dec3 conv folded into one matmul, then per-batch
    # height pass (out[b] = Ah @ z[b]).
    zw = matmul_fused(y, fp["wup_w"], fp["wup_b"], out_dtype=jnp.bfloat16) # (B*H2, W*nc)
    zw = zw.reshape(B, H2, W * nc)
    out = batched_left_matmul(fp["ah"], zw, out_dtype=jnp.float32)         # (B, H, W*nc)
    return out.reshape(B, H, W, nc).transpose(0, 3, 1, 2)                  # (B, nc, H, W)


# ----------------------------------------------------------------------------
if __name__ == "__main__":
    cfg = dict(img=64, in_chans=3, patch=16, embed_dim=128, depth=2, heads=4,
               mlp_ratio=4, dec1=64, dec2=32, num_classes=5)
    key = jax.random.PRNGKey(0)
    kp, kx = jax.random.split(key)
    params = init_params(kp, cfg)
    fast_params = prepare_params(params, cfg)   # per-head split, pre-cast bf16

    B = 2
    x = jax.random.normal(kx, (B, cfg["in_chans"], cfg["img"], cfg["img"]),
                          jnp.float32)

    fwd = jax.jit(functools.partial(vit_segmentation_forward, cfg=cfg))
    out = jax.block_until_ready(fwd(x, fast_params))
    assert out.shape == (B, cfg["num_classes"], cfg["img"], cfg["img"]), out.shape
    assert bool(jnp.all(jnp.isfinite(out)))
    print("KERNEL_OK")
</pallas_src>

<mosaic_0001>
module attributes {stable_mosaic.version = 11 : i64} {
  func.func @_mm_kernel(%arg0: i32, %arg1: i32, %arg2: i32, %arg3: memref<16x768xbf16, #tpu.memory_space<vmem>>, %arg4: memref<768x128xbf16, #tpu.memory_space<vmem>>, %arg5: memref<1x128xf32, #tpu.memory_space<vmem>>, %arg6: memref<16x128xf32, #tpu.memory_space<vmem>>, %arg7: memref<16x128xf32, #tpu.memory_space<vmem>>, %arg8: memref<16x128xf32, #tpu.memory_space<vmem>>) attributes {dimension_semantics = [#tpu.dimension_semantics<parallel>, #tpu.dimension_semantics<parallel>, #tpu.dimension_semantics<arbitrary>], iteration_bounds = array<i64: 2, 1, 1>, scalar_prefetch = 0 : i64, scratch_operands = 1 : i64, tpu.core_type = #tpu.core_type<tc>, window_params = [{transform_indices = @transform_0, window_bounds = array<i64: 16, 768>}, {transform_indices = @transform_1, window_bounds = array<i64: 768, 128>}, {transform_indices = @transform_2, window_bounds = array<i64: 1, 128>}, {transform_indices = @transform_3, window_bounds = array<i64: 16, 128>}, {transform_indices = @transform_4, window_bounds = array<i64: 16, 128>}]} {
    %c0_i32 = arith.constant 0 : i32
    %0 = arith.cmpi eq, %arg2, %c0_i32 : i32
    %1 = arith.extui %0 : i1 to i32
    %c0_i32_0 = arith.constant 0 : i32
    %2 = arith.cmpi ne, %1, %c0_i32_0 : i32
    scf.if %2 {
      %cst_10 = arith.constant 0.000000e+00 : f32
      %12 = vector.broadcast %cst_10 : f32 to vector<16x128xf32>
      %c0_11 = arith.constant 0 : index
      %c0_12 = arith.constant 0 : index
      %13 = vector.load %arg8[%c0_11, %c0_12] : memref<16x128xf32, #tpu.memory_space<vmem>>, vector<16x128xf32>
      tpu.vector_store %arg8[%c0_11, %c0_12], %12 {strides = array<i32>} : memref<16x128xf32, #tpu.memory_space<vmem>>, vector<16x128xf32>,
    } else {
    }
    %c0 = arith.constant 0 : index
    %c0_1 = arith.constant 0 : index
    %3 = vector.load %arg3[%c0, %c0_1] : memref<16x768xbf16, #tpu.memory_space<vmem>>, vector<16x768xbf16>
    %c0_2 = arith.constant 0 : index
    %c0_3 = arith.constant 0 : index
    %4 = vector.load %arg8[%c0_2, %c0_3] : memref<16x128xf32, #tpu.memory_space<vmem>>, vector<16x128xf32>
    %c0_4 = arith.constant 0 : index
    %c0_5 = arith.constant 0 : index
    %5 = vector.load %arg4[%c0_4, %c0_5] : memref<768x128xbf16, #tpu.memory_space<vmem>>, vector<768x128xbf16>
    %cst = arith.constant dense<0.000000e+00> : vector<16x128xf32>
    %6 = tpu.matmul %3, %5, %cst {dimension_numbers = #tpu.dot_dimension_numbers<[1], [0], [0], [1], [0, 0, 1, 1], [], []>} : vector<16x768xbf16>, vector<768x128xbf16>, vector<16x128xf32> -> vector<16x128xf32>
    %7 = arith.addf %4, %6 : vector<16x128xf32>
    %c0_6 = arith.constant 0 : index
    %c0_7 = arith.constant 0 : index
    %8 = vector.load %arg8[%c0_6, %c0_7] : memref<16x128xf32, #tpu.memory_space<vmem>>, vector<16x128xf32>
    tpu.vector_store %arg8[%c0_6, %c0_7], %7 {strides = array<i32>} : memref<16x128xf32, #tpu.memory_space<vmem>>, vector<16x128xf32>,
    %c0_i32_8 = arith.constant 0 : i32
    %9 = arith.cmpi eq, %arg2, %c0_i32_8 : i32
    %10 = arith.extui %9 : i1 to i32
    %c0_i32_9 = arith.constant 0 : i32
    %11 = arith.cmpi ne, %10, %c0_i32_9 : i32
    scf.if %11 {
      %c0_10 = arith.constant 0 : index
      %c0_11 = arith.constant 0 : index
      %12 = vector.load %arg8[%c0_10, %c0_11] : memref<16x128xf32, #tpu.memory_space<vmem>>, vector<16x128xf32>
      %c0_12 = arith.constant 0 : index
      %c0_13 = arith.constant 0 : index
      %13 = vector.load %arg5[%c0_12, %c0_13] : memref<1x128xf32, #tpu.memory_space<vmem>>, vector<1x128xf32>
      %14 = vector.broadcast %13 : vector<1x128xf32> to vector<16x128xf32>
      %15 = arith.addf %12, %14 : vector<16x128xf32>
      %c0_14 = arith.constant 0 : index
      %c0_15 = arith.constant 0 : index
      %16 = vector.load %arg6[%c0_14, %c0_15] : memref<16x128xf32, #tpu.memory_space<vmem>>, vector<16x128xf32>
      %17 = arith.addf %15, %16 : vector<16x128xf32>
      %c0_16 = arith.constant 0 : index
      %c0_17 = arith.constant 0 : index
      %18 = vector.load %arg7[%c0_16, %c0_17] : memref<16x128xf32, #tpu.memory_space<vmem>>, vector<16x128xf32>
      tpu.vector_store %arg7[%c0_16, %c0_17], %17 {strides = array<i32>} : memref<16x128xf32, #tpu.memory_space<vmem>>, vector<16x128xf32>,
    } else {
    }
    return
  }
  func.func @transform_0(%arg0: i32, %arg1: i32, %arg2: i32) -> (i32, i32) {
    %c0_i32 = arith.constant 0 : i32
    return %arg0, %arg2 : i32, i32
  }
  func.func @transform_1(%arg0: i32, %arg1: i32, %arg2: i32) -> (i32, i32) {
    %c0_i32 = arith.constant 0 : i32
    return %arg2, %arg1 : i32, i32
  }
  func.func @transform_2(%arg0: i32, %arg1: i32, %arg2: i32) -> (i32, i32) {
    %c0_i32 = arith.constant 0 : i32
    %c0_i32_0 = arith.constant 0 : i32
    return %c0_i32, %arg1 : i32, i32
  }
  func.func @transform_3(%arg0: i32, %arg1: i32, %arg2: i32) -> (i32, i32) {
    %c0_i32 = arith.constant 0 : i32
    return %arg0, %arg1 : i32, i32
  }
  func.func @transform_4(%arg0: i32, %arg1: i32, %arg2: i32) -> (i32, i32) {
    %c0_i32 = arith.constant 0 : i32
    return %arg0, %arg1 : i32, i32
  }
}

module attributes {stable_mosaic.version = 11 : i64} {
  func.func @_mm_kernel(%arg0: i32, %arg1: i32, %arg2: i32, %arg3: memref<16x128xf32, #tpu.memory_space<vmem>>, %arg4: memref<1x128xf32, #tpu.memory_space<vmem>>, %arg5: memref<1x128xf32, #tpu.memory_space<vmem>>, %arg6: memref<128x256xbf16, #tpu.memory_space<vmem>>, %arg7: memref<1x256xf32, #tpu.memory_space<vmem>>, %arg8: memref<16x256xbf16, #tpu.memory_space<vmem>>, %arg9: memref<16x256xf32, #tpu.memory_space<vmem>>) attributes {dimension_semantics = [#tpu.dimension_semantics<parallel>, #tpu.dimension_semantics<parallel>, #tpu.dimension_semantics<arbitrary>], iteration_bounds = array<i64: 2, 1, 1>, scalar_prefetch = 0 : i64, scratch_operands = 1 : i64, tpu.core_type = #tpu.core_type<tc>, window_params = [{transform_indices = @transform_0, window_bounds = array<i64: 16, 128>}, {pipeline_mode = #tpu.pipeline_mode<synchronous>, transform_indices = @transform_1, window_bounds = array<i64: 1, 128>}, {pipeline_mode = #tpu.pipeline_mode<synchronous>, transform_indices = @transform_2, window_bounds = array<i64: 1, 128>}, {transform_indices = @transform_3, window_bounds = array<i64: 128, 256>}, {transform_indices = @transform_4, window_bounds = array<i64: 1, 256>}, {transform_indices = @transform_5, window_bounds = array<i64: 16, 256>}]} {
    %c0_i32 = arith.constant 0 : i32
    %0 = arith.cmpi eq, %arg2, %c0_i32 : i32
    %1 = arith.extui %0 : i1 to i32
    %c0_i32_0 = arith.constant 0 : i32
    %2 = arith.cmpi ne, %1, %c0_i32_0 : i32
    scf.if %2 {
      %cst_19 = arith.constant 0.000000e+00 : f32
      %35 = vector.broadcast %cst_19 : f32 to vector<16x256xf32>
      %c0_20 = arith.constant 0 : index
      %c0_21 = arith.constant 0 : index
      %36 = vector.load %arg9[%c0_20, %c0_21] : memref<16x256xf32, #tpu.memory_space<vmem>>, vector<16x256xf32>
      tpu.vector_store %arg9[%c0_20, %c0_21], %35 {strides = array<i32>} : memref<16x256xf32, #tpu.memory_space<vmem>>, vector<16x256xf32>,
    } else {
    }
    %c0 = arith.constant 0 : index
    %c0_1 = arith.constant 0 : index
    %3 = vector.load %arg3[%c0, %c0_1] : memref<16x128xf32, #tpu.memory_space<vmem>>, vector<16x128xf32>
    %c0_2 = arith.constant 0 : index
    %c0_3 = arith.constant 0 : index
    %4 = vector.load %arg4[%c0_2, %c0_3] : memref<1x128xf32, #tpu.memory_space<vmem>>, vector<1x128xf32>
    %c0_4 = arith.constant 0 : index
    %c0_5 = arith.constant 0 : index
    %5 = vector.load %arg5[%c0_4, %c0_5] : memref<1x128xf32, #tpu.memory_space<vmem>>, vector<1x128xf32>
    %cst = arith.constant dense<0.000000e+00> : vector<16xf32>
    %6 = vector.multi_reduction <add>, %3, %cst [1] : vector<16x128xf32> to vector<16xf32>
    %7 = vector.shape_cast %6 : vector<16xf32> to vector<16x1xf32>
    %cst_6 = arith.constant 1.280000e+02 : f32
    %8 = vector.broadcast %cst_6 : f32 to vector<16x1xf32>
    %9 = arith.divf %7, %8 : vector<16x1xf32>
    %10 = vector.broadcast %9 : vector<16x1xf32> to vector<16x128xf32>
    %11 = arith.subf %3, %10 : vector<16x128xf32>
    %12 = arith.mulf %11, %11 : vector<16x128xf32>
    %cst_7 = arith.constant dense<0.000000e+00> : vector<16xf32>
    %13 = vector.multi_reduction <add>, %12, %cst_7 [1] : vector<16x128xf32> to vector<16xf32>
    %14 = vector.shape_cast %13 : vector<16xf32> to vector<16x1xf32>
    %cst_8 = arith.constant 1.280000e+02 : f32
    %15 = vector.broadcast %cst_8 : f32 to vector<16x1xf32>
    %16 = arith.divf %14, %15 : vector<16x1xf32>
    %cst_9 = arith.constant 9.99999997E-7 : f32
    %17 = vector.broadcast %cst_9 : f32 to vector<16x1xf32>
    %18 = arith.addf %16, %17 : vector<16x1xf32>
    %19 = math.rsqrt %18 : vector<16x1xf32>
    %20 = vector.broadcast %19 : vector<16x1xf32> to vector<16x128xf32>
    %21 = arith.mulf %11, %20 : vector<16x128xf32>
    %22 = vector.broadcast %4 : vector<1x128xf32> to vector<16x128xf32>
    %23 = arith.mulf %21, %22 : vector<16x128xf32>
    %24 = vector.broadcast %5 : vector<1x128xf32> to vector<16x128xf32>
    %25 = arith.addf %23, %24 : vector<16x128xf32>
    %26 = arith.truncf %25 : vector<16x128xf32> to vector<16x128xbf16>
    %c0_10 = arith.constant 0 : index
    %c0_11 = arith.constant 0 : index
    %27 = vector.load %arg9[%c0_10, %c0_11] : memref<16x256xf32, #tpu.memory_space<vmem>>, vector<16x256xf32>
    %c0_12 = arith.constant 0 : index
    %c0_13 = arith.constant 0 : index
    %28 = vector.load %arg6[%c0_12, %c0_13] : memref<128x256xbf16, #tpu.memory_space<vmem>>, vector<128x256xbf16>
    %cst_14 = arith.constant dense<0.000000e+00> : vector<16x256xf32>
    %29 = tpu.matmul %26, %28, %cst_14 {dimension_numbers = #tpu.dot_dimension_numbers<[1], [0], [0], [1], [0, 0, 1, 1], [], []>} : vector<16x128xbf16>, vector<128x256xbf16>, vector<16x256xf32> -> vector<16x256xf32>
    %30 = arith.addf %27, %29 : vector<16x256xf32>
    %c0_15 = arith.constant 0 : index
    %c0_16 = arith.constant 0 : index
    %31 = vector.load %arg9[%c0_15, %c0_16] : memref<16x256xf32, #tpu.memory_space<vmem>>, vector<16x256xf32>
    tpu.vector_store %arg9[%c0_15, %c0_16], %30 {strides = array<i32>} : memref<16x256xf32, #tpu.memory_space<vmem>>, vector<16x256xf32>,
    %c0_i32_17 = arith.constant 0 : i32
    %32 = arith.cmpi eq, %arg2, %c0_i32_17 : i32
    %33 = arith.extui %32 : i1 to i32
    %c0_i32_18 = arith.constant 0 : i32
    %34 = arith.cmpi ne, %33, %c0_i32_18 : i32
    scf.if %34 {
      %c0_19 = arith.constant 0 : index
      %c0_20 = arith.constant 0 : index
      %35 = vector.load %arg9[%c0_19, %c0_20] : memref<16x256xf32, #tpu.memory_space<vmem>>, vector<16x256xf32>
      %c0_21 = arith.constant 0 : index
      %c0_22 = arith.constant 0 : index
      %36 = vector.load %arg7[%c0_21, %c0_22] : memref<1x256xf32, #tpu.memory_space<vmem>>, vector<1x256xf32>
      %37 = vector.broadcast %36 : vector<1x256xf32> to vector<16x256xf32>
      %38 = arith.addf %35, %37 : vector<16x256xf32>
      %cst_23 = arith.constant 0.000000e+00 : f32
      %39 = vector.broadcast %cst_23 : f32 to vector<16x256xf32>
      %40 = arith.maximumf %38, %39 : vector<16x256xf32>
      %41 = arith.truncf %40 : vector<16x256xf32> to vector<16x256xbf16>
      %c0_24 = arith.constant 0 : index
      %c0_25 = arith.constant 0 : index
      %42 = vector.load %arg8[%c0_24, %c0_25] : memref<16x256xbf16, #tpu.memory_space<vmem>>, vector<16x256xbf16>
      tpu.vector_store %arg8[%c0_24, %c0_25], %41 {strides = array<i32>} : memref<16x256xbf16, #tpu.memory_space<vmem>>, vector<16x256xbf16>,
    } else {
    }
    return
  }
  func.func @transform_0(%arg0: i32, %arg1: i32, %arg2: i32) -> (i32, i32) {
    %c0_i32 = arith.constant 0 : i32
    return %arg0, %arg2 : i32, i32
  }
  func.func @transform_1(%arg0: i32, %arg1: i32, %arg2: i32) -> (i32, i32) {
    %c0_i32 = arith.constant 0 : i32
    %c0_i32_0 = arith.constant 0 : i32
    %c0_i32_1 = arith.constant 0 : i32
    return %c0_i32, %c0_i32_0 : i32, i32
  }
  func.func @transform_2(%arg0: i32, %arg1: i32, %arg2: i32) -> (i32, i32) {
    %c0_i32 = arith.constant 0 : i32
    %c0_i32_0 = arith.constant 0 : i32
    %c0_i32_1 = arith.constant 0 : i32
    return %c0_i32, %c0_i32_0 : i32, i32
  }
  func.func @transform_3(%arg0: i32, %arg1: i32, %arg2: i32) -> (i32, i32) {
    %c0_i32 = arith.constant 0 : i32
    return %arg2, %arg1 : i32, i32
  }
  func.func @transform_4(%arg0: i32, %arg1: i32, %arg2: i32) -> (i32, i32) {
    %c0_i32 = arith.constant 0 : i32
    %c0_i32_0 = arith.constant 0 : i32
    return %c0_i32, %arg1 : i32, i32
  }
  func.func @transform_5(%arg0: i32, %arg1: i32, %arg2: i32) -> (i32, i32) {
    %c0_i32 = arith.constant 0 : i32
    return %arg0, %arg1 : i32, i32
  }
}

module attributes {stable_mosaic.version = 11 : i64} {
  func.func @_block_kernel(%arg0: i32, %arg1: memref<1x16x128xf32, #tpu.memory_space<vmem>>, %arg2: memref<1x128xf32, #tpu.memory_space<vmem>>, %arg3: memref<1x128xf32, #tpu.memory_space<vmem>>, %arg4: memref<4x128x32xbf16, #tpu.memory_space<vmem>>, %arg5: memref<4x128x32xbf16, #tpu.memory_space<vmem>>, %arg6: memref<4x128x32xbf16, #tpu.memory_space<vmem>>, %arg7: memref<4x1x32xf32, #tpu.memory_space<vmem>>, %arg8: memref<4x1x32xf32, #tpu.memory_space<vmem>>, %arg9: memref<4x1x32xf32, #tpu.memory_space<vmem>>, %arg10: memref<4x32x128xbf16, #tpu.memory_space<vmem>>, %arg11: memref<1x128xf32, #tpu.memory_space<vmem>>, %arg12: memref<1x128xf32, #tpu.memory_space<vmem>>, %arg13: memref<1x128xf32, #tpu.memory_space<vmem>>, %arg14: memref<128x512xbf16, #tpu.memory_space<vmem>>, %arg15: memref<1x512xf32, #tpu.memory_space<vmem>>, %arg16: memref<512x128xbf16, #tpu.memory_space<vmem>>, %arg17: memref<1x128xf32, #tpu.memory_space<vmem>>, %arg18: memref<1x16x128xf32, #tpu.memory_space<vmem>>) attributes {dimension_semantics = [#tpu.dimension_semantics<parallel>], iteration_bounds = array<i64: 2>, scalar_prefetch = 0 : i64, scratch_operands = 0 : i64, tpu.core_type = #tpu.core_type<tc>, window_params = [{transform_indices = @transform_0, window_bounds = array<i64: 1, 16, 128>}, {pipeline_mode = #tpu.pipeline_mode<synchronous>, transform_indices = @transform_1, window_bounds = array<i64: 1, 128>}, {pipeline_mode = #tpu.pipeline_mode<synchronous>, transform_indices = @transform_2, window_bounds = array<i64: 1, 128>}, {pipeline_mode = #tpu.pipeline_mode<synchronous>, transform_indices = @transform_3, window_bounds = array<i64: 4, 128, 32>}, {pipeline_mode = #tpu.pipeline_mode<synchronous>, transform_indices = @transform_4, window_bounds = array<i64: 4, 128, 32>}, {pipeline_mode = #tpu.pipeline_mode<synchronous>, transform_indices = @transform_5, window_bounds = array<i64: 4, 128, 32>}, {pipeline_mode = #tpu.pipeline_mode<synchronous>, transform_indices = @transform_6, window_bounds = array<i64: 4, 1, 32>}, {pipeline_mode = #tpu.pipeline_mode<synchronous>, transform_indices = @transform_7, window_bounds = array<i64: 4, 1, 32>}, {pipeline_mode = #tpu.pipeline_mode<synchronous>, transform_indices = @transform_8, window_bounds = array<i64: 4, 1, 32>}, {pipeline_mode = #tpu.pipeline_mode<synchronous>, transform_indices = @transform_9, window_bounds = array<i64: 4, 32, 128>}, {pipeline_mode = #tpu.pipeline_mode<synchronous>, transform_indices = @transform_10, window_bounds = array<i64: 1, 128>}, {pipeline_mode = #tpu.pipeline_mode<synchronous>, transform_indices = @transform_11, window_bounds = array<i64: 1, 128>}, {pipeline_mode = #tpu.pipeline_mode<synchronous>, transform_indices = @transform_12, window_bounds = array<i64: 1, 128>}, {pipeline_mode = #tpu.pipeline_mode<synchronous>, transform_indices = @transform_13, window_bounds = array<i64: 128, 512>}, {pipeline_mode = #tpu.pipeline_mode<synchronous>, transform_indices = @transform_14, window_bounds = array<i64: 1, 512>}, {pipeline_mode = #tpu.pipeline_mode<synchronous>, transform_indices = @transform_15, window_bounds = array<i64: 512, 128>}, {pipeline_mode = #tpu.pipeline_mode<synchronous>, transform_indices = @transform_16, window_bounds = array<i64: 1, 128>}, {transform_indices = @transform_17, window_bounds = array<i64: 1, 16, 128>}]} {
    %c0 = arith.constant 0 : index
    %c0_0 = arith.constant 0 : index
    %c0_1 = arith.constant 0 : index
    %0 = vector.load %arg1[%c0, %c0_0, %c0_1] : memref<1x16x128xf32, #tpu.memory_space<vmem>>, vector<1x16x128xf32>
    %1 = vector.shape_cast %0 : vector<1x16x128xf32> to vector<16x128xf32>
    %c0_2 = arith.constant 0 : index
    %c0_3 = arith.constant 0 : index
    %2 = vector.load %arg2[%c0_2, %c0_3] : memref<1x128xf32, #tpu.memory_space<vmem>>, vector<1x128xf32>
    %c0_4 = arith.constant 0 : index
    %c0_5 = arith.constant 0 : index
    %3 = vector.load %arg3[%c0_4, %c0_5] : memref<1x128xf32, #tpu.memory_space<vmem>>, vector<1x128xf32>
    %cst = arith.constant dense<0.000000e+00> : vector<16xf32>
    %4 = vector.multi_reduction <add>, %1, %cst [1] : vector<16x128xf32> to vector<16xf32>
    %5 = vector.shape_cast %4 : vector<16xf32> to vector<16x1xf32>
    %cst_6 = arith.constant 1.280000e+02 : f32
    %6 = vector.broadcast %cst_6 : f32 to vector<16x1xf32>
    %7 = arith.divf %5, %6 : vector<16x1xf32>
    %8 = vector.broadcast %7 : vector<16x1xf32> to vector<16x128xf32>
    %9 = arith.subf %1, %8 : vector<16x128xf32>
    %10 = arith.mulf %9, %9 : vector<16x128xf32>
    %cst_7 = arith.constant dense<0.000000e+00> : vector<16xf32>
    %11 = vector.multi_reduction <add>, %10, %cst_7 [1] : vector<16x128xf32> to vector<16xf32>
    %12 = vector.shape_cast %11 : vector<16xf32> to vector<16x1xf32>
    %cst_8 = arith.constant 1.280000e+02 : f32
    %13 = vector.broadcast %cst_8 : f32 to vector<16x1xf32>
    %14 = arith.divf %12, %13 : vector<16x1xf32>
    %cst_9 = arith.constant 9.99999997E-7 : f32
    %15 = vector.broadcast %cst_9 : f32 to vector<16x1xf32>
    %16 = arith.addf %14, %15 : vector<16x1xf32>
    %17 = math.rsqrt %16 : vector<16x1xf32>
    %18 = vector.broadcast %17 : vector<16x1xf32> to vector<16x128xf32>
    %19 = arith.mulf %9, %18 : vector<16x128xf32>
    %20 = vector.broadcast %2 : vector<1x128xf32> to vector<16x128xf32>
    %21 = arith.mulf %19, %20 : vector<16x128xf32>
    %22 = vector.broadcast %3 : vector<1x128xf32> to vector<16x128xf32>
    %23 = arith.addf %21, %22 : vector<16x128xf32>
    %24 = arith.truncf %23 : vector<16x128xf32> to vector<16x128xbf16>
    %cst_10 = arith.constant 0.000000e+00 : f32
    %25 = vector.broadcast %cst_10 : f32 to vector<16x128xf32>
    %c0_11 = arith.constant 0 : index
    %c0_12 = arith.constant 0 : index
    %c0_13 = arith.constant 0 : index
    %26 = vector.load %arg4[%c0_11, %c0_12, %c0_13] : memref<4x128x32xbf16, #tpu.memory_space<vmem>>, vector<1x128x32xbf16>
    %27 = vector.shape_cast %26 : vector<1x128x32xbf16> to vector<128x32xbf16>
    %cst_14 = arith.constant dense<0.000000e+00> : vector<16x32xf32>
    %28 = tpu.matmul %24, %27, %cst_14 {dimension_numbers = #tpu.dot_dimension_numbers<[1], [0], [0], [1], [0, 0, 1, 1], [], []>} : vector<16x128xbf16>, vector<128x32xbf16>, vector<16x32xf32> -> vector<16x32xf32>
    %c0_15 = arith.constant 0 : index
    %c0_16 = arith.constant 0 : index
    %c0_17 = arith.constant 0 : index
    %29 = vector.load %arg7[%c0_15, %c0_16, %c0_17] : memref<4x1x32xf32, #tpu.memory_space<vmem>>, vector<1x1x32xf32>
    %30 = vector.shape_cast %29 : vector<1x1x32xf32> to vector<1x32xf32>
    %31 = vector.broadcast %30 : vector<1x32xf32> to vector<16x32xf32>
    %32 = arith.addf %28, %31 : vector<16x32xf32>
    %c0_18 = arith.constant 0 : index
    %c0_19 = arith.constant 0 : index
    %c0_20 = arith.constant 0 : index
    %33 = vector.load %arg5[%c0_18, %c0_19, %c0_20] : memref<4x128x32xbf16, #tpu.memory_space<vmem>>, vector<1x128x32xbf16>
    %34 = vector.shape_cast %33 : vector<1x128x32xbf16> to vector<128x32xbf16>
    %cst_21 = arith.constant dense<0.000000e+00> : vector<16x32xf32>
    %35 = tpu.matmul %24, %34, %cst_21 {dimension_numbers = #tpu.dot_dimension_numbers<[1], [0], [0], [1], [0, 0, 1, 1], [], []>} : vector<16x128xbf16>, vector<128x32xbf16>, vector<16x32xf32> -> vector<16x32xf32>
    %c0_22 = arith.constant 0 : index
    %c0_23 = arith.constant 0 : index
    %c0_24 = arith.constant 0 : index
    %36 = vector.load %arg8[%c0_22, %c0_23, %c0_24] : memref<4x1x32xf32, #tpu.memory_space<vmem>>, vector<1x1x32xf32>
    %37 = vector.shape_cast %36 : vector<1x1x32xf32> to vector<1x32xf32>
    %38 = vector.broadcast %37 : vector<1x32xf32> to vector<16x32xf32>
    %39 = arith.addf %35, %38 : vector<16x32xf32>
    %c0_25 = arith.constant 0 : index
    %c0_26 = arith.constant 0 : index
    %c0_27 = arith.constant 0 : index
    %40 = vector.load %arg6[%c0_25, %c0_26, %c0_27] : memref<4x128x32xbf16, #tpu.memory_space<vmem>>, vector<1x128x32xbf16>
    %41 = vector.shape_cast %40 : vector<1x128x32xbf16> to vector<128x32xbf16>
    %cst_28 = arith.constant dense<0.000000e+00> : vector<16x32xf32>
    %42 = tpu.matmul %24, %41, %cst_28 {dimension_numbers = #tpu.dot_dimension_numbers<[1], [0], [0], [1], [0, 0, 1, 1], [], []>} : vector<16x128xbf16>, vector<128x32xbf16>, vector<16x32xf32> -> vector<16x32xf32>
    %c0_29 = arith.constant 0 : index
    %c0_30 = arith.constant 0 : index
    %c0_31 = arith.constant 0 : index
    %43 = vector.load %arg9[%c0_29, %c0_30, %c0_31] : memref<4x1x32xf32, #tpu.memory_space<vmem>>, vector<1x1x32xf32>
    %44 = vector.shape_cast %43 : vector<1x1x32xf32> to vector<1x32xf32>
    %45 = vector.broadcast %44 : vector<1x32xf32> to vector<16x32xf32>
    %46 = arith.addf %42, %45 : vector<16x32xf32>
    %47 = arith.truncf %32 : vector<16x32xf32> to vector<16x32xbf16>
    %48 = arith.truncf %39 : vector<16x32xf32> to vector<16x32xbf16>
    %cst_32 = arith.constant dense<0.000000e+00> : vector<16x16xf32>
    %49 = tpu.matmul %47, %48, %cst_32 {dimension_numbers = #tpu.dot_dimension_numbers<[1], [1], [0], [0], [0, 0, 1, 0], [], []>} : vector<16x32xbf16>, vector<16x32xbf16>, vector<16x16xf32> -> vector<16x16xf32>
    %cst_33 = arith.constant 0.176776692 : f32
    %50 = vector.broadcast %cst_33 : f32 to vector<16x16xf32>
    %51 = arith.mulf %49, %50 : vector<16x16xf32>
    %cst_34 = arith.constant dense<0xFF800000> : vector<16xf32>
    %52 = vector.multi_reduction <maximumf>, %51, %cst_34 [1] : vector<16x16xf32> to vector<16xf32>
    %53 = vector.shape_cast %52 : vector<16xf32> to vector<16x1xf32>
    %54 = vector.broadcast %53 : vector<16x1xf32> to vector<16x16xf32>
    %55 = arith.subf %51, %54 : vector<16x16xf32>
    %56 = math.exp %55 : vector<16x16xf32>
    %cst_35 = arith.constant dense<0.000000e+00> : vector<16xf32>
    %57 = vector.multi_reduction <add>, %56, %cst_35 [1] : vector<16x16xf32> to vector<16xf32>
    %58 = vector.shape_cast %57 : vector<16xf32> to vector<16x1xf32>
    %59 = tpu.reciprocal %58 {approx = true} : vector<16x1xf32> -> vector<16x1xf32>
    %60 = vector.broadcast %59 : vector<16x1xf32> to vector<16x16xf32>
    %61 = arith.mulf %56, %60 : vector<16x16xf32>
    %62 = arith.truncf %61 : vector<16x16xf32> to vector<16x16xbf16>
    %63 = arith.truncf %46 : vector<16x32xf32> to vector<16x32xbf16>
    %cst_36 = arith.constant dense<0.000000e+00> : vector<16x32xf32>
    %64 = tpu.matmul %62, %63, %cst_36 {dimension_numbers = #tpu.dot_dimension_numbers<[1], [0], [0], [1], [0, 0, 1, 1], [], []>} : vector<16x16xbf16>, vector<16x32xbf16>, vector<16x32xf32> -> vector<16x32xf32>
    %65 = arith.truncf %64 : vector<16x32xf32> to vector<16x32xbf16>
    %c0_37 = arith.constant 0 : index
    %c0_38 = arith.constant 0 : index
    %c0_39 = arith.constant 0 : index
    %66 = vector.load %arg10[%c0_37, %c0_38, %c0_39] : memref<4x32x128xbf16, #tpu.memory_space<vmem>>, vector<1x32x128xbf16>
    %67 = vector.shape_cast %66 : vector<1x32x128xbf16> to vector<32x128xbf16>
    %cst_40 = arith.constant dense<0.000000e+00> : vector<16x128xf32>
    %68 = tpu.matmul %65, %67, %cst_40 {dimension_numbers = #tpu.dot_dimension_numbers<[1], [0], [0], [1], [0, 0, 1, 1], [], []>} : vector<16x32xbf16>, vector<32x128xbf16>, vector<16x128xf32> -> vector<16x128xf32>
    %69 = arith.addf %25, %68 : vector<16x128xf32>
    %c1 = arith.constant 1 : index
    %c0_41 = arith.constant 0 : index
    %c0_42 = arith.constant 0 : index
    %70 = vector.load %arg4[%c1, %c0_41, %c0_42] : memref<4x128x32xbf16, #tpu.memory_space<vmem>>, vector<1x128x32xbf16>
    %71 = vector.shape_cast %70 : vector<1x128x32xbf16> to vector<128x32xbf16>
    %cst_43 = arith.constant dense<0.000000e+00> : vector<16x32xf32>
    %72 = tpu.matmul %24, %71, %cst_43 {dimension_numbers = #tpu.dot_dimension_numbers<[1], [0], [0], [1], [0, 0, 1, 1], [], []>} : vector<16x128xbf16>, vector<128x32xbf16>, vector<16x32xf32> -> vector<16x32xf32>
    %c1_44 = arith.constant 1 : index
    %c0_45 = arith.constant 0 : index
    %c0_46 = arith.constant 0 : index
    %73 = vector.load %arg7[%c1_44, %c0_45, %c0_46] : memref<4x1x32xf32, #tpu.memory_space<vmem>>, vector<1x1x32xf32>
    %74 = vector.shape_cast %73 : vector<1x1x32xf32> to vector<1x32xf32>
    %75 = vector.broadcast %74 : vector<1x32xf32> to vector<16x32xf32>
    %76 = arith.addf %72, %75 : vector<16x32xf32>
    %c1_47 = arith.constant 1 : index
    %c0_48 = arith.constant 0 : index
    %c0_49 = arith.constant 0 : index
    %77 = vector.load %arg5[%c1_47, %c0_48, %c0_49] : memref<4x128x32xbf16, #tpu.memory_space<vmem>>, vector<1x128x32xbf16>
    %78 = vector.shape_cast %77 : vector<1x128x32xbf16> to vector<128x32xbf16>
    %cst_50 = arith.constant dense<0.000000e+00> : vector<16x32xf32>
    %79 = tpu.matmul %24, %78, %cst_50 {dimension_numbers = #tpu.dot_dimension_numbers<[1], [0], [0], [1], [0, 0, 1, 1], [], []>} : vector<16x128xbf16>, vector<128x32xbf16>, vector<16x32xf32> -> vector<16x32xf32>
    %c1_51 = arith.constant 1 : index
    %c0_52 = arith.constant 0 : index
    %c0_53 = arith.constant 0 : index
    %80 = vector.load %arg8[%c1_51, %c0_52, %c0_53] : memref<4x1x32xf32, #tpu.memory_space<vmem>>, vector<1x1x32xf32>
    %81 = vector.shape_cast %80 : vector<1x1x32xf32> to vector<1x32xf32>
    %82 = vector.broadcast %81 : vector<1x32xf32> to vector<16x32xf32>
    %83 = arith.addf %79, %82 : vector<16x32xf32>
    %c1_54 = arith.constant 1 : index
    %c0_55 = arith.constant 0 : index
    %c0_56 = arith.constant 0 : index
    %84 = vector.load %arg6[%c1_54, %c0_55, %c0_56] : memref<4x128x32xbf16, #tpu.memory_space<vmem>>, vector<1x128x32xbf16>
    %85 = vector.shape_cast %84 : vector<1x128x32xbf16> to vector<128x32xbf16>
    %cst_57 = arith.constant dense<0.000000e+00> : vector<16x32xf32>
    %86 = tpu.matmul %24, %85, %cst_57 {dimension_numbers = #tpu.dot_dimension_numbers<[1], [0], [0], [1], [0, 0, 1, 1], [], []>} : vector<16x128xbf16>, vector<128x32xbf16>, vector<16x32xf32> -> vector<16x32xf32>
    %c1_58 = arith.constant 1 : index
    %c0_59 = arith.constant 0 : index
    %c0_60 = arith.constant 0 : index
    %87 = vector.load %arg9[%c1_58, %c0_59, %c0_60] : memref<4x1x32xf32, #tpu.memory_space<vmem>>, vector<1x1x32xf32>
    %88 = vector.shape_cast %87 : vector<1x1x32xf32> to vector<1x32xf32>
    %89 = vector.broadcast %88 : vector<1x32xf32> to vector<16x32xf32>
    %90 = arith.addf %86, %89 : vector<16x32xf32>
    %91 = arith.truncf %76 : vector<16x32xf32> to vector<16x32xbf16>
    %92 = arith.truncf %83 : vector<16x32xf32> to vector<16x32xbf16>
    %cst_61 = arith.constant dense<0.000000e+00> : vector<16x16xf32>
    %93 = tpu.matmul %91, %92, %cst_61 {dimension_numbers = #tpu.dot_dimension_numbers<[1], [1], [0], [0], [0, 0, 1, 0], [], []>} : vector<16x32xbf16>, vector<16x32xbf16>, vector<16x16xf32> -> vector<16x16xf32>
    %cst_62 = arith.constant 0.176776692 : f32
    %94 = vector.broadcast %cst_62 : f32 to vector<16x16xf32>
    %95 = arith.mulf %93, %94 : vector<16x16xf32>
    %cst_63 = arith.constant dense<0xFF800000> : vector<16xf32>
    %96 = vector.multi_reduction <maximumf>, %95, %cst_63 [1] : vector<16x16xf32> to vector<16xf32>
    %97 = vector.shape_cast %96 : vector<16xf32> to vector<16x1xf32>
    %98 = vector.broadcast %97 : vector<16x1xf32> to vector<16x16xf32>
    %99 = arith.subf %95, %98 : vector<16x16xf32>
    %100 = math.exp %99 : vector<16x16xf32>
    %cst_64 = arith.constant dense<0.000000e+00> : vector<16xf32>
    %101 = vector.multi_reduction <add>, %100, %cst_64 [1] : vector<16x16xf32> to vector<16xf32>
    %102 = vector.shape_cast %101 : vector<16xf32> to vector<16x1xf32>
    %103 = tpu.reciprocal %102 {approx = true} : vector<16x1xf32> -> vector<16x1xf32>
    %104 = vector.broadcast %103 : vector<16x1xf32> to vector<16x16xf32>
    %105 = arith.mulf %100, %104 : vector<16x16xf32>
    %106 = arith.truncf %105 : vector<16x16xf32> to vector<16x16xbf16>
    %107 = arith.truncf %90 : vector<16x32xf32> to vector<16x32xbf16>
    %cst_65 = arith.constant dense<0.000000e+00> : vector<16x32xf32>
    %108 = tpu.matmul %106, %107, %cst_65 {dimension_numbers = #tpu.dot_dimension_numbers<[1], [0], [0], [1], [0, 0, 1, 1], [], []>} : vector<16x16xbf16>, vector<16x32xbf16>, vector<16x32xf32> -> vector<16x32xf32>
    %109 = arith.truncf %108 : vector<16x32xf32> to vector<16x32xbf16>
    %c1_66 = arith.constant 1 : index
    %c0_67 = arith.constant 0 : index
    %c0_68 = arith.constant 0 : index
    %110 = vector.load %arg10[%c1_66, %c0_67, %c0_68] : memref<4x32x128xbf16, #tpu.memory_space<vmem>>, vector<1x32x128xbf16>
    %111 = vector.shape_cast %110 : vector<1x32x128xbf16> to vector<32x128xbf16>
    %cst_69 = arith.constant dense<0.000000e+00> : vector<16x128xf32>
    %112 = tpu.matmul %109, %111, %cst_69 {dimension_numbers = #tpu.dot_dimension_numbers<[1], [0], [0], [1], [0, 0, 1, 1], [], []>} : vector<16x32xbf16>, vector<32x128xbf16>, vector<16x128xf32> -> vector<16x128xf32>
    %113 = arith.addf %69, %112 : vector<16x128xf32>
    %c2 = arith.constant 2 : index
    %c0_70 = arith.constant 0 : index
    %c0_71 = arith.constant 0 : index
    %114 = vector.load %arg4[%c2, %c0_70, %c0_71] : memref<4x128x32xbf16, #tpu.memory_space<vmem>>, vector<1x128x32xbf16>
    %115 = vector.shape_cast %114 : vector<1x128x32xbf16> to vector<128x32xbf16>
    %cst_72 = arith.constant dense<0.000000e+00> : vector<16x32xf32>
    %116 = tpu.matmul %24, %115, %cst_72 {dimension_numbers = #tpu.dot_dimension_numbers<[1], [0], [0], [1], [0, 0, 1, 1], [], []>} : vector<16x128xbf16>, vector<128x32xbf16>, vector<16x32xf32> -> vector<16x32xf32>
    %c2_73 = arith.constant 2 : index
    %c0_74 = arith.constant 0 : index
    %c0_75 = arith.constant 0 : index
    %117 = vector.load %arg7[%c2_73, %c0_74, %c0_75] : memref<4x1x32xf32, #tpu.memory_space<vmem>>, vector<1x1x32xf32>
    %118 = vector.shape_cast %117 : vector<1x1x32xf32> to vector<1x32xf32>
    %119 = vector.broadcast %118 : vector<1x32xf32> to vector<16x32xf32>
    %120 = arith.addf %116, %119 : vector<16x32xf32>
    %c2_76 = arith.constant 2 : index
    %c0_77 = arith.constant 0 : index
    %c0_78 = arith.constant 0 : index
    %121 = vector.load %arg5[%c2_76, %c0_77, %c0_78] : memref<4x128x32xbf16, #tpu.memory_space<vmem>>, vector<1x128x32xbf16>
    %122 = vector.shape_cast %121 : vector<1x128x32xbf16> to vector<128x32xbf16>
    %cst_79 = arith.constant dense<0.000000e+00> : vector<16x32xf32>
    %123 = tpu.matmul %24, %122, %cst_79 {dimension_numbers = #tpu.dot_dimension_numbers<[1], [0], [0], [1], [0, 0, 1, 1], [], []>} : vector<16x128xbf16>, vector<128x32xbf16>, vector<16x32xf32> -> vector<16x32xf32>
    %c2_80 = arith.constant 2 : index
    %c0_81 = arith.constant 0 : index
    %c0_82 = arith.constant 0 : index
    %124 = vector.load %arg8[%c2_80, %c0_81, %c0_82] : memref<4x1x32xf32, #tpu.memory_space<vmem>>, vector<1x1x32xf32>
    %125 = vector.shape_cast %124 : vector<1x1x32xf32> to vector<1x32xf32>
    %126 = vector.broadcast %125 : vector<1x32xf32> to vector<16x32xf32>
    %127 = arith.addf %123, %126 : vector<16x32xf32>
    %c2_83 = arith.constant 2 : index
    %c0_84 = arith.constant 0 : index
    %c0_85 = arith.constant 0 : index
    %128 = vector.load %arg6[%c2_83, %c0_84, %c0_85] : memref<4x128x32xbf16, #tpu.memory_space<vmem>>, vector<1x128x32xbf16>
    %129 = vector.shape_cast %128 : vector<1x128x32xbf16> to vector<128x32xbf16>
    %cst_86 = arith.constant dense<0.000000e+00> : vector<16x32xf32>
    %130 = tpu.matmul %24, %129, %cst_86 {dimension_numbers = #tpu.dot_dimension_numbers<[1], [0], [0], [1], [0, 0, 1, 1], [], []>} : vector<16x128xbf16>, vector<128x32xbf16>, vector<16x32xf32> -> vector<16x32xf32>
    %c2_87 = arith.constant 2 : index
    %c0_88 = arith.constant 0 : index
    %c0_89 = arith.constant 0 : index
    %131 = vector.load %arg9[%c2_87, %c0_88, %c0_89] : memref<4x1x32xf32, #tpu.memory_space<vmem>>, vector<1x1x32xf32>
    %132 = vector.shape_cast %131 : vector<1x1x32xf32> to vector<1x32xf32>
    %133 = vector.broadcast %132 : vector<1x32xf32> to vector<16x32xf32>
    %134 = arith.addf %130, %133 : vector<16x32xf32>
    %135 = arith.truncf %120 : vector<16x32xf32> to vector<16x32xbf16>
    %136 = arith.truncf %127 : vector<16x32xf32> to vector<16x32xbf16>
    %cst_90 = arith.constant dense<0.000000e+00> : vector<16x16xf32>
    %137 = tpu.matmul %135, %136, %cst_90 {dimension_numbers = #tpu.dot_dimension_numbers<[1], [1], [0], [0], [0, 0, 1, 0], [], []>} : vector<16x32xbf16>, vector<16x32xbf16>, vector<16x16xf32> -> vector<16x16xf32>
    %cst_91 = arith.constant 0.176776692 : f32
    %138 = vector.broadcast %cst_91 : f32 to vector<16x16xf32>
    %139 = arith.mulf %137, %138 : vector<16x16xf32>
    %cst_92 = arith.constant dense<0xFF800000> : vector<16xf32>
    %140 = vector.multi_reduction <maximumf>, %139, %cst_92 [1] : vector<16x16xf32> to vector<16xf32>
    %141 = vector.shape_cast %140 : vector<16xf32> to vector<16x1xf32>
    %142 = vector.broadcast %141 : vector<16x1xf32> to vector<16x16xf32>
    %143 = arith.subf %139, %142 : vector<16x16xf32>
    %144 = math.exp %143 : vector<16x16xf32>
    %cst_93 = arith.constant dense<0.000000e+00> : vector<16xf32>
    %145 = vector.multi_reduction <add>, %144, %cst_93 [1] : vector<16x16xf32> to vector<16xf32>
    %146 = vector.shape_cast %145 : vector<16xf32> to vector<16x1xf32>
    %147 = tpu.reciprocal %146 {approx = true} : vector<16x1xf32> -> vector<16x1xf32>
    %148 = vector.broadcast %147 : vector<16x1xf32> to vector<16x16xf32>
    %149 = arith.mulf %144, %148 : vector<16x16xf32>
    %150 = arith.truncf %149 : vector<16x16xf32> to vector<16x16xbf16>
    %151 = arith.truncf %134 : vector<16x32xf32> to vector<16x32xbf16>
    %cst_94 = arith.constant dense<0.000000e+00> : vector<16x32xf32>
    %152 = tpu.matmul %150, %151, %cst_94 {dimension_numbers = #tpu.dot_dimension_numbers<[1], [0], [0], [1], [0, 0, 1, 1], [], []>} : vector<16x16xbf16>, vector<16x32xbf16>, vector<16x32xf32> -> vector<16x32xf32>
    %153 = arith.truncf %152 : vector<16x32xf32> to vector<16x32xbf16>
    %c2_95 = arith.constant 2 : index
    %c0_96 = arith.constant 0 : index
    %c0_97 = arith.constant 0 : index
    %154 = vector.load %arg10[%c2_95, %c0_96, %c0_97] : memref<4x32x128xbf16, #tpu.memory_space<vmem>>, vector<1x32x128xbf16>
    %155 = vector.shape_cast %154 : vector<1x32x128xbf16> to vector<32x128xbf16>
    %cst_98 = arith.constant dense<0.000000e+00> : vector<16x128xf32>
    %156 = tpu.matmul %153, %155, %cst_98 {dimension_numbers = #tpu.dot_dimension_numbers<[1], [0], [0], [1], [0, 0, 1, 1], [], []>} : vector<16x32xbf16>, vector<32x128xbf16>, vector<16x128xf32> -> vector<16x128xf32>
    %157 = arith.addf %113, %156 : vector<16x128xf32>
    %c3 = arith.constant 3 : index
    %c0_99 = arith.constant 0 : index
    %c0_100 = arith.constant 0 : index
    %158 = vector.load %arg4[%c3, %c0_99, %c0_100] : memref<4x128x32xbf16, #tpu.memory_space<vmem>>, vector<1x128x32xbf16>
    %159 = vector.shape_cast %158 : vector<1x128x32xbf16> to vector<128x32xbf16>
    %cst_101 = arith.constant dense<0.000000e+00> : vector<16x32xf32>
    %160 = tpu.matmul %24, %159, %cst_101 {dimension_numbers = #tpu.dot_dimension_numbers<[1], [0], [0], [1], [0, 0, 1, 1], [], []>} : vector<16x128xbf16>, vector<128x32xbf16>, vector<16x32xf32> -> vector<16x32xf32>
    %c3_102 = arith.constant 3 : index
    %c0_103 = arith.constant 0 : index
    %c0_104 = arith.constant 0 : index
    %161 = vector.load %arg7[%c3_102, %c0_103, %c0_104] : memref<4x1x32xf32, #tpu.memory_space<vmem>>, vector<1x1x32xf32>
    %162 = vector.shape_cast %161 : vector<1x1x32xf32> to vector<1x32xf32>
    %163 = vector.broadcast %162 : vector<1x32xf32> to vector<16x32xf32>
    %164 = arith.addf %160, %163 : vector<16x32xf32>
    %c3_105 = arith.constant 3 : index
    %c0_106 = arith.constant 0 : index
    %c0_107 = arith.constant 0 : index
    %165 = vector.load %arg5[%c3_105, %c0_106, %c0_107] : memref<4x128x32xbf16, #tpu.memory_space<vmem>>, vector<1x128x32xbf16>
    %166 = vector.shape_cast %165 : vector<1x128x32xbf16> to vector<128x32xbf16>
    %cst_108 = arith.constant dense<0.000000e+00> : vector<16x32xf32>
    %167 = tpu.matmul %24, %166, %cst_108 {dimension_numbers = #tpu.dot_dimension_numbers<[1], [0], [0], [1], [0, 0, 1, 1], [], []>} : vector<16x128xbf16>, vector<128x32xbf16>, vector<16x32xf32> -> vector<16x32xf32>
    %c3_109 = arith.constant 3 : index
    %c0_110 = arith.constant 0 : index
    %c0_111 = arith.constant 0 : index
    %168 = vector.load %arg8[%c3_109, %c0_110, %c0_111] : memref<4x1x32xf32, #tpu.memory_space<vmem>>, vector<1x1x32xf32>
    %169 = vector.shape_cast %168 : vector<1x1x32xf32> to vector<1x32xf32>
    %170 = vector.broadcast %169 : vector<1x32xf32> to vector<16x32xf32>
    %171 = arith.addf %167, %170 : vector<16x32xf32>
    %c3_112 = arith.constant 3 : index
    %c0_113 = arith.constant 0 : index
    %c0_114 = arith.constant 0 : index
    %172 = vector.load %arg6[%c3_112, %c0_113, %c0_114] : memref<4x128x32xbf16, #tpu.memory_space<vmem>>, vector<1x128x32xbf16>
    %173 = vector.shape_cast %172 : vector<1x128x32xbf16> to vector<128x32xbf16>
    %cst_115 = arith.constant dense<0.000000e+00> : vector<16x32xf32>
    %174 = tpu.matmul %24, %173, %cst_115 {dimension_numbers = #tpu.dot_dimension_numbers<[1], [0], [0], [1], [0, 0, 1, 1], [], []>} : vector<16x128xbf16>, vector<128x32xbf16>, vector<16x32xf32> -> vector<16x32xf32>
    %c3_116 = arith.constant 3 : index
    %c0_117 = arith.constant 0 : index
    %c0_118 = arith.constant 0 : index
    %175 = vector.load %arg9[%c3_116, %c0_117, %c0_118] : memref<4x1x32xf32, #tpu.memory_space<vmem>>, vector<1x1x32xf32>
    %176 = vector.shape_cast %175 : vector<1x1x32xf32> to vector<1x32xf32>
    %177 = vector.broadcast %176 : vector<1x32xf32> to vector<16x32xf32>
    %178 = arith.addf %174, %177 : vector<16x32xf32>
    %179 = arith.truncf %164 : vector<16x32xf32> to vector<16x32xbf16>
    %180 = arith.truncf %171 : vector<16x32xf32> to vector<16x32xbf16>
    %cst_119 = arith.constant dense<0.000000e+00> : vector<16x16xf32>
    %181 = tpu.matmul %179, %180, %cst_119 {dimension_numbers = #tpu.dot_dimension_numbers<[1], [1], [0], [0], [0, 0, 1, 0], [], []>} : vector<16x32xbf16>, vector<16x32xbf16>, vector<16x16xf32> -> vector<16x16xf32>
    %cst_120 = arith.constant 0.176776692 : f32
    %182 = vector.broadcast %cst_120 : f32 to vector<16x16xf32>
    %183 = arith.mulf %181, %182 : vector<16x16xf32>
    %cst_121 = arith.constant dense<0xFF800000> : vector<16xf32>
    %184 = vector.multi_reduction <maximumf>, %183, %cst_121 [1] : vector<16x16xf32> to vector<16xf32>
    %185 = vector.shape_cast %184 : vector<16xf32> to vector<16x1xf32>
    %186 = vector.broadcast %185 : vector<16x1xf32> to vector<16x16xf32>
    %187 = arith.subf %183, %186 : vector<16x16xf32>
    %188 = math.exp %187 : vector<16x16xf32>
    %cst_122 = arith.constant dense<0.000000e+00> : vector<16xf32>
    %189 = vector.multi_reduction <add>, %188, %cst_122 [1] : vector<16x16xf32> to vector<16xf32>
    %190 = vector.shape_cast %189 : vector<16xf32> to vector<16x1xf32>
    %191 = tpu.reciprocal %190 {approx = true} : vector<16x1xf32> -> vector<16x1xf32>
    %192 = vector.broadcast %191 : vector<16x1xf32> to vector<16x16xf32>
    %193 = arith.mulf %188, %192 : vector<16x16xf32>
    %194 = arith.truncf %193 : vector<16x16xf32> to vector<16x16xbf16>
    %195 = arith.truncf %178 : vector<16x32xf32> to vector<16x32xbf16>
    %cst_123 = arith.constant dense<0.000000e+00> : vector<16x32xf32>
    %196 = tpu.matmul %194, %195, %cst_123 {dimension_numbers = #tpu.dot_dimension_numbers<[1], [0], [0], [1], [0, 0, 1, 1], [], []>} : vector<16x16xbf16>, vector<16x32xbf16>, vector<16x32xf32> -> vector<16x32xf32>
    %197 = arith.truncf %196 : vector<16x32xf32> to vector<16x32xbf16>
    %c3_124 = arith.constant 3 : index
    %c0_125 = arith.constant 0 : index
    %c0_126 = arith.constant 0 : index
    %198 = vector.load %arg10[%c3_124, %c0_125, %c0_126] : memref<4x32x128xbf16, #tpu.memory_space<vmem>>, vector<1x32x128xbf16>
    %199 = vector.shape_cast %198 : vector<1x32x128xbf16> to vector<32x128xbf16>
    %cst_127 = arith.constant dense<0.000000e+00> : vector<16x128xf32>
    %200 = tpu.matmul %197, %199, %cst_127 {dimension_numbers = #tpu.dot_dimension_numbers<[1], [0], [0], [1], [0, 0, 1, 1], [], []>} : vector<16x32xbf16>, vector<32x128xbf16>, vector<16x128xf32> -> vector<16x128xf32>
    %201 = arith.addf %157, %200 : vector<16x128xf32>
    %202 = arith.addf %1, %201 : vector<16x128xf32>
    %c0_128 = arith.constant 0 : index
    %c0_129 = arith.constant 0 : index
    %203 = vector.load %arg11[%c0_128, %c0_129] : memref<1x128xf32, #tpu.memory_space<vmem>>, vector<1x128xf32>
    %204 = vector.broadcast %203 : vector<1x128xf32> to vector<16x128xf32>
    %205 = arith.addf %202, %204 : vector<16x128xf32>
    %c0_130 = arith.constant 0 : index
    %c0_131 = arith.constant 0 : index
    %206 = vector.load %arg12[%c0_130, %c0_131] : memref<1x128xf32, #tpu.memory_space<vmem>>, vector<1x128xf32>
    %c0_132 = arith.constant 0 : index
    %c0_133 = arith.constant 0 : index
    %207 = vector.load %arg13[%c0_132, %c0_133] : memref<1x128xf32, #tpu.memory_space<vmem>>, vector<1x128xf32>
    %cst_134 = arith.constant dense<0.000000e+00> : vector<16xf32>
    %208 = vector.multi_reduction <add>, %205, %cst_134 [1] : vector<16x128xf32> to vector<16xf32>
    %209 = vector.shape_cast %208 : vector<16xf32> to vector<16x1xf32>
    %cst_135 = arith.constant 1.280000e+02 : f32
    %210 = vector.broadcast %cst_135 : f32 to vector<16x1xf32>
    %211 = arith.divf %209, %210 : vector<16x1xf32>
    %212 = vector.broadcast %211 : vector<16x1xf32> to vector<16x128xf32>
    %213 = arith.subf %205, %212 : vector<16x128xf32>
    %214 = arith.mulf %213, %213 : vector<16x128xf32>
    %cst_136 = arith.constant dense<0.000000e+00> : vector<16xf32>
    %215 = vector.multi_reduction <add>, %214, %cst_136 [1] : vector<16x128xf32> to vector<16xf32>
    %216 = vector.shape_cast %215 : vector<16xf32> to vector<16x1xf32>
    %cst_137 = arith.constant 1.280000e+02 : f32
    %217 = vector.broadcast %cst_137 : f32 to vector<16x1xf32>
    %218 = arith.divf %216, %217 : vector<16x1xf32>
    %cst_138 = arith.constant 9.99999997E-7 : f32
    %219 = vector.broadcast %cst_138 : f32 to vector<16x1xf32>
    %220 = arith.addf %218, %219 : vector<16x1xf32>
    %221 = math.rsqrt %220 : vector<16x1xf32>
    %222 = vector.broadcast %221 : vector<16x1xf32> to vector<16x128xf32>
    %223 = arith.mulf %213, %222 : vector<16x128xf32>
    %224 = vector.broadcast %206 : vector<1x128xf32> to vector<16x128xf32>
    %225 = arith.mulf %223, %224 : vector<16x128xf32>
    %226 = vector.broadcast %207 : vector<1x128xf32> to vector<16x128xf32>
    %227 = arith.addf %225, %226 : vector<16x128xf32>
    %228 = arith.truncf %227 : vector<16x128xf32> to vector<16x128xbf16>
    %c0_139 = arith.constant 0 : index
    %c0_140 = arith.constant 0 : index
    %229 = vector.load %arg14[%c0_139, %c0_140] : memref<128x512xbf16, #tpu.memory_space<vmem>>, vector<128x512xbf16>
    %cst_141 = arith.constant dense<0.000000e+00> : vector<16x512xf32>
    %230 = tpu.matmul %228, %229, %cst_141 {dimension_numbers = #tpu.dot_dimension_numbers<[1], [0], [0], [1], [0, 0, 1, 1], [], []>} : vector<16x128xbf16>, vector<128x512xbf16>, vector<16x512xf32> -> vector<16x512xf32>
    %c0_142 = arith.constant 0 : index
    %c0_143 = arith.constant 0 : index
    %231 = vector.load %arg15[%c0_142, %c0_143] : memref<1x512xf32, #tpu.memory_space<vmem>>, vector<1x512xf32>
    %232 = vector.broadcast %231 : vector<1x512xf32> to vector<16x512xf32>
    %233 = arith.addf %230, %232 : vector<16x512xf32>
    %cst_144 = arith.constant 5.000000e-01 : f32
    %234 = vector.broadcast %cst_144 : f32 to vector<16x512xf32>
    %235 = arith.mulf %234, %233 : vector<16x512xf32>
    %cst_145 = arith.constant 0.707106769 : f32
    %236 = vector.broadcast %cst_145 : f32 to vector<16x512xf32>
    %237 = arith.mulf %233, %236 : vector<16x512xf32>
    %238 = math.absf %237 : vector<16x512xf32>
    %cst_146 = arith.constant 0.327591091 : f32
    %239 = vector.broadcast %cst_146 : f32 to vector<16x512xf32>
    %240 = arith.mulf %239, %238 : vector<16x512xf32>
    %cst_147 = arith.constant 1.000000e+00 : f32
    %241 = vector.broadcast %cst_147 : f32 to vector<16x512xf32>
    %242 = arith.addf %241, %240 : vector<16x512xf32>
    %cst_148 = arith.constant 1.000000e+00 : f32
    %243 = vector.broadcast %cst_148 : f32 to vector<16x512xf32>
    %244 = arith.divf %243, %242 : vector<16x512xf32>
    %cst_149 = arith.constant 1.06140542 : f32
    %245 = vector.broadcast %cst_149 : f32 to vector<16x512xf32>
    %246 = arith.mulf %244, %245 : vector<16x512xf32>
    %cst_150 = arith.constant -1.45315206 : f32
    %247 = vector.broadcast %cst_150 : f32 to vector<16x512xf32>
    %248 = arith.addf %247, %246 : vector<16x512xf32>
    %249 = arith.mulf %244, %248 : vector<16x512xf32>
    %cst_151 = arith.constant 1.42141378 : f32
    %250 = vector.broadcast %cst_151 : f32 to vector<16x512xf32>
    %251 = arith.addf %250, %249 : vector<16x512xf32>
    %252 = arith.mulf %244, %251 : vector<16x512xf32>
    %cst_152 = arith.constant -0.284496725 : f32
    %253 = vector.broadcast %cst_152 : f32 to vector<16x512xf32>
    %254 = arith.addf %253, %252 : vector<16x512xf32>
    %255 = arith.mulf %244, %254 : vector<16x512xf32>
    %cst_153 = arith.constant 0.254829586 : f32
    %256 = vector.broadcast %cst_153 : f32 to vector<16x512xf32>
    %257 = arith.addf %256, %255 : vector<16x512xf32>
    %258 = arith.mulf %244, %257 : vector<16x512xf32>
    %cst_154 = arith.constant 0.000000e+00 : f32
    %259 = vector.broadcast %cst_154 : f32 to vector<16x512xf32>
    %260 = arith.subf %259, %238 : vector<16x512xf32>
    %261 = arith.mulf %260, %238 : vector<16x512xf32>
    %262 = math.exp %261 : vector<16x512xf32>
    %263 = arith.mulf %258, %262 : vector<16x512xf32>
    %cst_155 = arith.constant 1.000000e+00 : f32
    %264 = vector.broadcast %cst_155 : f32 to vector<16x512xf32>
    %265 = arith.subf %264, %263 : vector<16x512xf32>
    %cst_156 = arith.constant 0.000000e+00 : f32
    %266 = vector.broadcast %cst_156 : f32 to vector<16x512xf32>
    %267 = arith.cmpf olt, %237, %266 : vector<16x512xf32>
    %cst_157 = arith.constant 0.000000e+00 : f32
    %268 = vector.broadcast %cst_157 : f32 to vector<16x512xf32>
    %269 = arith.subf %268, %265 : vector<16x512xf32>
    %270 = arith.select %267, %269, %265 : vector<16x512xi1>, vector<16x512xf32>
    %cst_158 = arith.constant 1.000000e+00 : f32
    %271 = vector.broadcast %cst_158 : f32 to vector<16x512xf32>
    %272 = arith.addf %271, %270 : vector<16x512xf32>
    %273 = arith.mulf %235, %272 : vector<16x512xf32>
    %274 = arith.truncf %273 : vector<16x512xf32> to vector<16x512xbf16>
    %c0_159 = arith.constant 0 : index
    %c0_160 = arith.constant 0 : index
    %275 = vector.load %arg16[%c0_159, %c0_160] : memref<512x128xbf16, #tpu.memory_space<vmem>>, vector<512x128xbf16>
    %cst_161 = arith.constant dense<0.000000e+00> : vector<16x128xf32>
    %276 = tpu.matmul %274, %275, %cst_161 {dimension_numbers = #tpu.dot_dimension_numbers<[1], [0], [0], [1], [0, 0, 1, 1], [], []>} : vector<16x512xbf16>, vector<512x128xbf16>, vector<16x128xf32> -> vector<16x128xf32>
    %c0_162 = arith.constant 0 : index
    %c0_163 = arith.constant 0 : index
    %277 = vector.load %arg17[%c0_162, %c0_163] : memref<1x128xf32, #tpu.memory_space<vmem>>, vector<1x128xf32>
    %278 = vector.broadcast %277 : vector<1x128xf32> to vector<16x128xf32>
    %279 = arith.addf %276, %278 : vector<16x128xf32>
    %280 = arith.addf %205, %279 : vector<16x128xf32>
    %c0_164 = arith.constant 0 : index
    %c0_165 = arith.constant 0 : index
    %c0_166 = arith.constant 0 : index
    %281 = vector.load %arg18[%c0_164, %c0_165, %c0_166] : memref<1x16x128xf32, #tpu.memory_space<vmem>>, vector<1x16x128xf32>
    %282 = vector.shape_cast %281 : vector<1x16x128xf32> to vector<16x128xf32>
    %283 = vector.shape_cast %280 : vector<16x128xf32> to vector<1x16x128xf32>
    tpu.vector_store %arg18[%c0_164, %c0_165, %c0_166], %283 {strides = array<i32>} : memref<1x16x128xf32, #tpu.memory_space<vmem>>, vector<1x16x128xf32>,
    return
  }
  func.func @transform_0(%arg0: i32) -> (i32, i32, i32) {
    %c0_i32 = arith.constant 0 : i32
    %c0_i32_0 = arith.constant 0 : i32
    %c0_i32_1 = arith.constant 0 : i32
    return %arg0, %c0_i32, %c0_i32_0 : i32, i32, i32
  }
  func.func @transform_1(%arg0: i32) -> (i32, i32) {
    %c0_i32 = arith.constant 0 : i32
    %c0_i32_0 = arith.constant 0 : i32
    %c0_i32_1 = arith.constant 0 : i32
    return %c0_i32, %c0_i32_0 : i32, i32
  }
  func.func @transform_2(%arg0: i32) -> (i32, i32) {
    %c0_i32 = arith.constant 0 : i32
    %c0_i32_0 = arith.constant 0 : i32
    %c0_i32_1 = arith.constant 0 : i32
    return %c0_i32, %c0_i32_0 : i32, i32
  }
  func.func @transform_3(%arg0: i32) -> (i32, i32, i32) {
    %c0_i32 = arith.constant 0 : i32
    %c0_i32_0 = arith.constant 0 : i32
    %c0_i32_1 = arith.constant 0 : i32
    %c0_i32_2 = arith.constant 0 : i32
    return %c0_i32, %c0_i32_0, %c0_i32_1 : i32, i32, i32
  }
  func.func @transform_4(%arg0: i32) -> (i32, i32, i32) {
    %c0_i32 = arith.constant 0 : i32
    %c0_i32_0 = arith.constant 0 : i32
    %c0_i32_1 = arith.constant 0 : i32
    %c0_i32_2 = arith.constant 0 : i32
    return %c0_i32, %c0_i32_0, %c0_i32_1 : i32, i32, i32
  }
  func.func @transform_5(%arg0: i32) -> (i32, i32, i32) {
    %c0_i32 = arith.constant 0 : i32
    %c0_i32_0 = arith.constant 0 : i32
    %c0_i32_1 = arith.constant 0 : i32
    %c0_i32_2 = arith.constant 0 : i32
    return %c0_i32, %c0_i32_0, %c0_i32_1 : i32, i32, i32
  }
  func.func @transform_6(%arg0: i32) -> (i32, i32, i32) {
    %c0_i32 = arith.constant 0 : i32
    %c0_i32_0 = arith.constant 0 : i32
    %c0_i32_1 = arith.constant 0 : i32
    %c0_i32_2 = arith.constant 0 : i32
    return %c0_i32, %c0_i32_0, %c0_i32_1 : i32, i32, i32
  }
  func.func @transform_7(%arg0: i32) -> (i32, i32, i32) {
    %c0_i32 = arith.constant 0 : i32
    %c0_i32_0 = arith.constant 0 : i32
    %c0_i32_1 = arith.constant 0 : i32
    %c0_i32_2 = arith.constant 0 : i32
    return %c0_i32, %c0_i32_0, %c0_i32_1 : i32, i32, i32
  }
  func.func @transform_8(%arg0: i32) -> (i32, i32, i32) {
    %c0_i32 = arith.constant 0 : i32
    %c0_i32_0 = arith.constant 0 : i32
    %c0_i32_1 = arith.constant 0 : i32
    %c0_i32_2 = arith.constant 0 : i32
    return %c0_i32, %c0_i32_0, %c0_i32_1 : i32, i32, i32
  }
  func.func @transform_9(%arg0: i32) -> (i32, i32, i32) {
    %c0_i32 = arith.constant 0 : i32
    %c0_i32_0 = arith.constant 0 : i32
    %c0_i32_1 = arith.constant 0 : i32
    %c0_i32_2 = arith.constant 0 : i32
    return %c0_i32, %c0_i32_0, %c0_i32_1 : i32, i32, i32
  }
  func.func @transform_10(%arg0: i32) -> (i32, i32) {
    %c0_i32 = arith.constant 0 : i32
    %c0_i32_0 = arith.constant 0 : i32
    %c0_i32_1 = arith.constant 0 : i32
    return %c0_i32, %c0_i32_0 : i32, i32
  }
  func.func @transform_11(%arg0: i32) -> (i32, i32) {
    %c0_i32 = arith.constant 0 : i32
    %c0_i32_0 = arith.constant 0 : i32
    %c0_i32_1 = arith.constant 0 : i32
    return %c0_i32, %c0_i32_0 : i32, i32
  }
  func.func @transform_12(%arg0: i32) -> (i32, i32) {
    %c0_i32 = arith.constant 0 : i32
    %c0_i32_0 = arith.constant 0 : i32
    %c0_i32_1 = arith.constant 0 : i32
    return %c0_i32, %c0_i32_0 : i32, i32
  }
  func.func @transform_13(%arg0: i32) -> (i32, i32) {
    %c0_i32 = arith.constant 0 : i32
    %c0_i32_0 = arith.constant 0 : i32
    %c0_i32_1 = arith.constant 0 : i32
    return %c0_i32, %c0_i32_0 : i32, i32
  }
  func.func @transform_14(%arg0: i32) -> (i32, i32) {
    %c0_i32 = arith.constant 0 : i32
    %c0_i32_0 = arith.constant 0 : i32
    %c0_i32_1 = arith.constant 0 : i32
    return %c0_i32, %c0_i32_0 : i32, i32
  }
  func.func @transform_15(%arg0: i32) -> (i32, i32) {
    %c0_i32 = arith.constant 0 : i32
    %c0_i32_0 = arith.constant 0 : i32
    %c0_i32_1 = arith.constant 0 : i32
    return %c0_i32, %c0_i32_0 : i32, i32
  }
  func.func @transform_16(%arg0: i32) -> (i32, i32) {
    %c0_i32 = arith.constant 0 : i32
    %c0_i32_0 = arith.constant 0 : i32
    %c0_i32_1 = arith.constant 0 : i32
    return %c0_i32, %c0_i32_0 : i32, i32
  }
  func.func @transform_17(%arg0: i32) -> (i32, i32, i32) {
    %c0_i32 = arith.constant 0 : i32
    %c0_i32_0 = arith.constant 0 : i32
    %c0_i32_1 = arith.constant 0 : i32
    return %arg0, %c0_i32, %c0_i32_0 : i32, i32, i32
  }
}

module attributes {stable_mosaic.version = 11 : i64} {
  func.func @_mm_kernel(%arg0: i32, %arg1: i32, %arg2: i32, %arg3: memref<64x128xbf16, #tpu.memory_space<vmem>>, %arg4: memref<128x128xbf16, #tpu.memory_space<vmem>>, %arg5: memref<1x128xf32, #tpu.memory_space<vmem>>, %arg6: memref<64x128xbf16, #tpu.memory_space<vmem>>, %arg7: memref<64x128xf32, #tpu.memory_space<vmem>>) attributes {dimension_semantics = [#tpu.dimension_semantics<parallel>, #tpu.dimension_semantics<parallel>, #tpu.dimension_semantics<arbitrary>], iteration_bounds = array<i64: 2, 1, 1>, scalar_prefetch = 0 : i64, scratch_operands = 1 : i64, tpu.core_type = #tpu.core_type<tc>, window_params = [{transform_indices = @transform_0, window_bounds = array<i64: 64, 128>}, {transform_indices = @transform_1, window_bounds = array<i64: 128, 128>}, {transform_indices = @transform_2, window_bounds = array<i64: 1, 128>}, {transform_indices = @transform_3, window_bounds = array<i64: 64, 128>}]} {
    %c0_i32 = arith.constant 0 : i32
    %0 = arith.cmpi eq, %arg2, %c0_i32 : i32
    %1 = arith.extui %0 : i1 to i32
    %c0_i32_0 = arith.constant 0 : i32
    %2 = arith.cmpi ne, %1, %c0_i32_0 : i32
    scf.if %2 {
      %cst_10 = arith.constant 0.000000e+00 : f32
      %12 = vector.broadcast %cst_10 : f32 to vector<64x128xf32>
      %c0_11 = arith.constant 0 : index
      %c0_12 = arith.constant 0 : index
      %13 = vector.load %arg7[%c0_11, %c0_12] : memref<64x128xf32, #tpu.memory_space<vmem>>, vector<64x128xf32>
      tpu.vector_store %arg7[%c0_11, %c0_12], %12 {strides = array<i32>} : memref<64x128xf32, #tpu.memory_space<vmem>>, vector<64x128xf32>,
    } else {
    }
    %c0 = arith.constant 0 : index
    %c0_1 = arith.constant 0 : index
    %3 = vector.load %arg3[%c0, %c0_1] : memref<64x128xbf16, #tpu.memory_space<vmem>>, vector<64x128xbf16>
    %c0_2 = arith.constant 0 : index
    %c0_3 = arith.constant 0 : index
    %4 = vector.load %arg7[%c0_2, %c0_3] : memref<64x128xf32, #tpu.memory_space<vmem>>, vector<64x128xf32>
    %c0_4 = arith.constant 0 : index
    %c0_5 = arith.constant 0 : index
    %5 = vector.load %arg4[%c0_4, %c0_5] : memref<128x128xbf16, #tpu.memory_space<vmem>>, vector<128x128xbf16>
    %cst = arith.constant dense<0.000000e+00> : vector<64x128xf32>
    %6 = tpu.matmul %3, %5, %cst {dimension_numbers = #tpu.dot_dimension_numbers<[1], [0], [0], [1], [0, 0, 1, 1], [], []>} : vector<64x128xbf16>, vector<128x128xbf16>, vector<64x128xf32> -> vector<64x128xf32>
    %7 = arith.addf %4, %6 : vector<64x128xf32>
    %c0_6 = arith.constant 0 : index
    %c0_7 = arith.constant 0 : index
    %8 = vector.load %arg7[%c0_6, %c0_7] : memref<64x128xf32, #tpu.memory_space<vmem>>, vector<64x128xf32>
    tpu.vector_store %arg7[%c0_6, %c0_7], %7 {strides = array<i32>} : memref<64x128xf32, #tpu.memory_space<vmem>>, vector<64x128xf32>,
    %c0_i32_8 = arith.constant 0 : i32
    %9 = arith.cmpi eq, %arg2, %c0_i32_8 : i32
    %10 = arith.extui %9 : i1 to i32
    %c0_i32_9 = arith.constant 0 : i32
    %11 = arith.cmpi ne, %10, %c0_i32_9 : i32
    scf.if %11 {
      %c0_10 = arith.constant 0 : index
      %c0_11 = arith.constant 0 : index
      %12 = vector.load %arg7[%c0_10, %c0_11] : memref<64x128xf32, #tpu.memory_space<vmem>>, vector<64x128xf32>
      %c0_12 = arith.constant 0 : index
      %c0_13 = arith.constant 0 : index
      %13 = vector.load %arg5[%c0_12, %c0_13] : memref<1x128xf32, #tpu.memory_space<vmem>>, vector<1x128xf32>
      %14 = vector.broadcast %13 : vector<1x128xf32> to vector<64x128xf32>
      %15 = arith.addf %12, %14 : vector<64x128xf32>
      %cst_14 = arith.constant 0.000000e+00 : f32
      %16 = vector.broadcast %cst_14 : f32 to vector<64x128xf32>
      %17 = arith.maximumf %15, %16 : vector<64x128xf32>
      %18 = arith.truncf %17 : vector<64x128xf32> to vector<64x128xbf16>
      %c0_15 = arith.constant 0 : index
      %c0_16 = arith.constant 0 : index
      %19 = vector.load %arg6[%c0_15, %c0_16] : memref<64x128xbf16, #tpu.memory_space<vmem>>, vector<64x128xbf16>
      tpu.vector_store %arg6[%c0_15, %c0_16], %18 {strides = array<i32>} : memref<64x128xbf16, #tpu.memory_space<vmem>>, vector<64x128xbf16>,
    } else {
    }
    return
  }
  func.func @transform_0(%arg0: i32, %arg1: i32, %arg2: i32) -> (i32, i32) {
    %c0_i32 = arith.constant 0 : i32
    return %arg0, %arg2 : i32, i32
  }
  func.func @transform_1(%arg0: i32, %arg1: i32, %arg2: i32) -> (i32, i32) {
    %c0_i32 = arith.constant 0 : i32
    return %arg2, %arg1 : i32, i32
  }
  func.func @transform_2(%arg0: i32, %arg1: i32, %arg2: i32) -> (i32, i32) {
    %c0_i32 = arith.constant 0 : i32
    %c0_i32_0 = arith.constant 0 : i32
    return %c0_i32, %arg1 : i32, i32
  }
  func.func @transform_3(%arg0: i32, %arg1: i32, %arg2: i32) -> (i32, i32) {
    %c0_i32 = arith.constant 0 : i32
    return %arg0, %arg1 : i32, i32
  }
}

module attributes {stable_mosaic.version = 11 : i64} {
  func.func @_mm_kernel(%arg0: i32, %arg1: i32, %arg2: i32, %arg3: memref<16x512xbf16, #tpu.memory_space<vmem>>, %arg4: memref<512x384xbf16, #tpu.memory_space<vmem>>, %arg5: memref<1x384xf32, #tpu.memory_space<vmem>>, %arg6: memref<16x384xbf16, #tpu.memory_space<vmem>>, %arg7: memref<16x384xf32, #tpu.memory_space<vmem>>) attributes {dimension_semantics = [#tpu.dimension_semantics<parallel>, #tpu.dimension_semantics<parallel>, #tpu.dimension_semantics<arbitrary>], iteration_bounds = array<i64: 2, 1, 1>, scalar_prefetch = 0 : i64, scratch_operands = 1 : i64, tpu.core_type = #tpu.core_type<tc>, window_params = [{transform_indices = @transform_0, window_bounds = array<i64: 16, 512>}, {transform_indices = @transform_1, window_bounds = array<i64: 512, 384>}, {transform_indices = @transform_2, window_bounds = array<i64: 1, 384>}, {transform_indices = @transform_3, window_bounds = array<i64: 16, 384>}]} {
    %c0_i32 = arith.constant 0 : i32
    %0 = arith.cmpi eq, %arg2, %c0_i32 : i32
    %1 = arith.extui %0 : i1 to i32
    %c0_i32_0 = arith.constant 0 : i32
    %2 = arith.cmpi ne, %1, %c0_i32_0 : i32
    scf.if %2 {
      %cst_10 = arith.constant 0.000000e+00 : f32
      %12 = vector.broadcast %cst_10 : f32 to vector<16x384xf32>
      %c0_11 = arith.constant 0 : index
      %c0_12 = arith.constant 0 : index
      %13 = vector.load %arg7[%c0_11, %c0_12] : memref<16x384xf32, #tpu.memory_space<vmem>>, vector<16x384xf32>
      tpu.vector_store %arg7[%c0_11, %c0_12], %12 {strides = array<i32>} : memref<16x384xf32, #tpu.memory_space<vmem>>, vector<16x384xf32>,
    } else {
    }
    %c0 = arith.constant 0 : index
    %c0_1 = arith.constant 0 : index
    %3 = vector.load %arg3[%c0, %c0_1] : memref<16x512xbf16, #tpu.memory_space<vmem>>, vector<16x512xbf16>
    %c0_2 = arith.constant 0 : index
    %c0_3 = arith.constant 0 : index
    %4 = vector.load %arg7[%c0_2, %c0_3] : memref<16x384xf32, #tpu.memory_space<vmem>>, vector<16x384xf32>
    %c0_4 = arith.constant 0 : index
    %c0_5 = arith.constant 0 : index
    %5 = vector.load %arg4[%c0_4, %c0_5] : memref<512x384xbf16, #tpu.memory_space<vmem>>, vector<512x384xbf16>
    %cst = arith.constant dense<0.000000e+00> : vector<16x384xf32>
    %6 = tpu.matmul %3, %5, %cst {dimension_numbers = #tpu.dot_dimension_numbers<[1], [0], [0], [1], [0, 0, 1, 1], [], []>} : vector<16x512xbf16>, vector<512x384xbf16>, vector<16x384xf32> -> vector<16x384xf32>
    %7 = arith.addf %4, %6 : vector<16x384xf32>
    %c0_6 = arith.constant 0 : index
    %c0_7 = arith.constant 0 : index
    %8 = vector.load %arg7[%c0_6, %c0_7] : memref<16x384xf32, #tpu.memory_space<vmem>>, vector<16x384xf32>
    tpu.vector_store %arg7[%c0_6, %c0_7], %7 {strides = array<i32>} : memref<16x384xf32, #tpu.memory_space<vmem>>, vector<16x384xf32>,
    %c0_i32_8 = arith.constant 0 : i32
    %9 = arith.cmpi eq, %arg2, %c0_i32_8 : i32
    %10 = arith.extui %9 : i1 to i32
    %c0_i32_9 = arith.constant 0 : i32
    %11 = arith.cmpi ne, %10, %c0_i32_9 : i32
    scf.if %11 {
      %c0_10 = arith.constant 0 : index
      %c0_11 = arith.constant 0 : index
      %12 = vector.load %arg7[%c0_10, %c0_11] : memref<16x384xf32, #tpu.memory_space<vmem>>, vector<16x384xf32>
      %c0_12 = arith.constant 0 : index
      %c0_13 = arith.constant 0 : index
      %13 = vector.load %arg5[%c0_12, %c0_13] : memref<1x384xf32, #tpu.memory_space<vmem>>, vector<1x384xf32>
      %14 = vector.broadcast %13 : vector<1x384xf32> to vector<16x384xf32>
      %15 = arith.addf %12, %14 : vector<16x384xf32>
      %16 = arith.truncf %15 : vector<16x384xf32> to vector<16x384xbf16>
      %c0_14 = arith.constant 0 : index
      %c0_15 = arith.constant 0 : index
      %17 = vector.load %arg6[%c0_14, %c0_15] : memref<16x384xbf16, #tpu.memory_space<vmem>>, vector<16x384xbf16>
      tpu.vector_store %arg6[%c0_14, %c0_15], %16 {strides = array<i32>} : memref<16x384xbf16, #tpu.memory_space<vmem>>, vector<16x384xbf16>,
    } else {
    }
    return
  }
  func.func @transform_0(%arg0: i32, %arg1: i32, %arg2: i32) -> (i32, i32) {
    %c0_i32 = arith.constant 0 : i32
    return %arg0, %arg2 : i32, i32
  }
  func.func @transform_1(%arg0: i32, %arg1: i32, %arg2: i32) -> (i32, i32) {
    %c0_i32 = arith.constant 0 : i32
    return %arg2, %arg1 : i32, i32
  }
  func.func @transform_2(%arg0: i32, %arg1: i32, %arg2: i32) -> (i32, i32) {
    %c0_i32 = arith.constant 0 : i32
    %c0_i32_0 = arith.constant 0 : i32
    return %c0_i32, %arg1 : i32, i32
  }
  func.func @transform_3(%arg0: i32, %arg1: i32, %arg2: i32) -> (i32, i32) {
    %c0_i32 = arith.constant 0 : i32
    return %arg0, %arg1 : i32, i32
  }
}

module attributes {stable_mosaic.version = 11 : i64} {
  func.func @_left_mm_kernel(%arg0: i32, %arg1: memref<64x16xbf16, #tpu.memory_space<vmem>>, %arg2: memref<1x16x320xbf16, #tpu.memory_space<vmem>>, %arg3: memref<1x64x320xf32, #tpu.memory_space<vmem>>) attributes {dimension_semantics = [#tpu.dimension_semantics<parallel>], iteration_bounds = array<i64: 2>, scalar_prefetch = 0 : i64, scratch_operands = 0 : i64, tpu.core_type = #tpu.core_type<tc>, window_params = [{pipeline_mode = #tpu.pipeline_mode<synchronous>, transform_indices = @transform_0, window_bounds = array<i64: 64, 16>}, {transform_indices = @transform_1, window_bounds = array<i64: 1, 16, 320>}, {transform_indices = @transform_2, window_bounds = array<i64: 1, 64, 320>}]} {
    %c0 = arith.constant 0 : index
    %c0_0 = arith.constant 0 : index
    %0 = vector.load %arg1[%c0, %c0_0] : memref<64x16xbf16, #tpu.memory_space<vmem>>, vector<64x16xbf16>
    %c0_1 = arith.constant 0 : index
    %c0_2 = arith.constant 0 : index
    %c0_3 = arith.constant 0 : index
    %1 = vector.load %arg2[%c0_1, %c0_2, %c0_3] : memref<1x16x320xbf16, #tpu.memory_space<vmem>>, vector<1x16x320xbf16>
    %2 = vector.shape_cast %1 : vector<1x16x320xbf16> to vector<16x320xbf16>
    %cst = arith.constant dense<0.000000e+00> : vector<64x320xf32>
    %3 = tpu.matmul %0, %2, %cst {dimension_numbers = #tpu.dot_dimension_numbers<[1], [0], [0], [1], [0, 0, 1, 1], [], []>} : vector<64x16xbf16>, vector<16x320xbf16>, vector<64x320xf32> -> vector<64x320xf32>
    %c0_4 = arith.constant 0 : index
    %c0_5 = arith.constant 0 : index
    %c0_6 = arith.constant 0 : index
    %4 = vector.load %arg3[%c0_4, %c0_5, %c0_6] : memref<1x64x320xf32, #tpu.memory_space<vmem>>, vector<1x64x320xf32>
    %5 = vector.shape_cast %4 : vector<1x64x320xf32> to vector<64x320xf32>
    %6 = vector.shape_cast %3 : vector<64x320xf32> to vector<1x64x320xf32>
    tpu.vector_store %arg3[%c0_4, %c0_5, %c0_6], %6 {strides = array<i32>} : memref<1x64x320xf32, #tpu.memory_space<vmem>>, vector<1x64x320xf32>,
    return
  }
  func.func @transform_0(%arg0: i32) -> (i32, i32) {
    %c0_i32 = arith.constant 0 : i32
    %c0_i32_0 = arith.constant 0 : i32
    %c0_i32_1 = arith.constant 0 : i32
    return %c0_i32, %c0_i32_0 : i32, i32
  }
  func.func @transform_1(%arg0: i32) -> (i32, i32, i32) {
    %c0_i32 = arith.constant 0 : i32
    %c0_i32_0 = arith.constant 0 : i32
    %c0_i32_1 = arith.constant 0 : i32
    return %arg0, %c0_i32, %c0_i32_0 : i32, i32, i32
  }
  func.func @transform_2(%arg0: i32) -> (i32, i32, i32) {
    %c0_i32 = arith.constant 0 : i32
    %c0_i32_0 = arith.constant 0 : i32
    %c0_i32_1 = arith.constant 0 : i32
    return %arg0, %c0_i32, %c0_i32_0 : i32, i32, i32
  }
}

</mosaic_0001>

<llo_original>
// kernel: vit_segmentation_forward.10
$region0: #{vit_segmentation_forward.10}
  #allocation0 [shape = 'u32[]', space=smem, size = 0x4, offset = 0x4, fixed_abs, tag = 'smem constant byte address 0x4 - core index']
  #allocation1 [shape = 'u32[144,128]{1,0:T(1,128)}', space=vmem, size = 0x12000, scoped, tag = 'internal scratch']
  #allocation2 [shape = 'f32[16,256]{1,0:T(8,128)}', space=vmem, size = 0x4000, scoped, tag = 'scratch operand']
  %s0 = inlined_call_operand.vmem [shape: f32[32,128], index: 0, kind: input, shape index: {}]
  %s1 = inlined_call_operand.vmem [shape: f32[1,128], index: 1, kind: input, shape index: {}]
  %s2 = inlined_call_operand.vmem [shape: f32[1,128], index: 2, kind: input, shape index: {}]
  %s3 = inlined_call_operand.vmem [shape: bf16[128,256], index: 3, kind: input, shape index: {}]
  %s4 = inlined_call_operand.vmem [shape: f32[1,256], index: 4, kind: input, shape index: {}]
  %s5 = inlined_call_operand.vmem [shape: bf16[32,256], index: 5, kind: output, shape index: {}]
  %s6 = sld [smem:[#allocation0]]
  $region61: #{vit_segmentation_forward.10} parent=0
    _
  %s8 = ssub.s32 1, %s6
  %s9 = scalar_select 0, %s8, %s6
  loop: start=0, step=1, limit=4
  $region2: #{vit_segmentation_forward.10} parent=0 // loop_pre_header
    _
  $region3: #{vit_segmentation_forward.10} parent=0 // loop_header
    %s11 = sphi 0, %s15
    %p12 = scmp.ge.s32.totalorder %s11, 4
    %s18 = sphi 0, %s37
    %s19 = sphi 0, %s33
    %s20 = sphi 0, %s29
    %s21 = sphi 0, %s18
    %s22 = sphi 0, %s19
    %s23 = sphi 0, %s20
    %s24 = sphi 0, %s21
    %s25 = sphi 0, %s22
    %s26 = sphi 0, %s23
    %s42 = sphi 0, %s44
    %s45 = sphi 0, %s42
    %s46 = sphi 0, %s45
    %s62 = sphi 0, %s46
    %s66 = sphi 0, %s66
    %s68 = sphi 0, %s66
    %s69 = sphi 0, %s68
    %s83 = sphi 0, %s69
    %s87 = sphi 0, %s87
    %s89 = sphi 0, %s87
    %s90 = sphi 0, %s89
    %s104 = sphi 0, %s90
    %s112 = sphi 0, %s114
    %s115 = sphi 0, %s112
    %s116 = sphi 0, %s115
    %s132 = sphi 0, %s116
    %s138 = sphi 0, %s140
    %s141 = sphi 0, %s138
    %s142 = sphi 0, %s141
    %s158 = sphi 0, %s142
    %s166 = sphi 0, %s168
    %s169 = sphi 0, %s166
    %s170 = sphi 0, %s169
    %s186 = sphi 0, %s170
  $region4: #{vit_segmentation_forward.10} parent=0 // loop_header_branch
    %14 = sbr.rel (%p12) target = $region8
  $region5: #{vit_segmentation_forward.10} parent=0 // loop_body
    %s16 = ssub.s32 %s11, 1
    %s17 = ssub.s32 %s11, 2
    %s27 = sadd.s32 1, %s20
    %p28 = scmp.ge.s32.totalorder %s27, 1
    %s29 = scalar_select %p28, 0, %s27
    %s30 = sadd.s32 1, %s19
    %s31 = scalar_select %p28, %s30, %s19
    %p32 = scmp.ge.s32.totalorder %s31, 1
    %s33 = scalar_select %p32, 0, %s31
    %s34 = sadd.s32 1, %s18
    %s35 = scalar_select %p32, %s34, %s18
    %p36 = scmp.ge.s32.totalorder %s35, 2
    %s37 = scalar_select %p36, 0, %s35
    %s38 = ssub.s32 %s18, %s37
    %s39 = ssub.s32 %s20, %s29
    %s40 = sor.u32 %s38, %s39
    %p41 = scmp.eq.s32.totalorder %s40, 0
    %s43 = sadd.s32 %s42, 1
    %s44 = scalar_select %p41, %s42, %s43
    %p47 = pneg %p41
    %p48 = scmp.eq.s32.totalorder %s11, 1
    %p49 = por %p47, %p48
    %p50 = scmp.ne.s32.totalorder %s42, %s45
    %p51 = scmp.eq.s32.totalorder %s11, 0
    %p52 = por %p50, %p51
    %p53 = scmp.ne.s32.totalorder %s42, %s45
    %p54 = scmp.eq.s32.totalorder %s16, 1
    %p55 = por %p53, %p54
    %p56 = scmp.ne.s32.totalorder %s45, %s46
    %p57 = scmp.eq.s32.totalorder %s16, 0
    %p58 = por %p56, %p57
    %p59 = scmp.ne.s32.totalorder %s45, %s46
    %p60 = scmp.eq.s32.totalorder %s17, 1
    %p61 = por %p59, %p60
    %p63 = scmp.ne.s32.totalorder %s46, %s62
    %p64 = scmp.eq.s32.totalorder %s17, 0
    %p65 = por %p63, %p64
    %s67 = sadd.s32 %s66, 1
    %p70 = scmp.eq.s32.totalorder %s11, 1
    %p71 = scmp.ne.s32.totalorder %s66, %s68
    %p72 = scmp.eq.s32.totalorder %s11, 0
    %p73 = por %p71, %p72
    %p74 = scmp.ne.s32.totalorder %s66, %s68
    %p75 = scmp.eq.s32.totalorder %s16, 1
    %p76 = por %p74, %p75
    %p77 = scmp.ne.s32.totalorder %s68, %s69
    %p78 = scmp.eq.s32.totalorder %s16, 0
    %p79 = por %p77, %p78
    %p80 = scmp.ne.s32.totalorder %s68, %s69
    %p81 = scmp.eq.s32.totalorder %s17, 1
    %p82 = por %p80, %p81
    %p84 = scmp.ne.s32.totalorder %s69, %s83
    %p85 = scmp.eq.s32.totalorder %s17, 0
    %p86 = por %p84, %p85
    %s88 = sadd.s32 %s87, 1
    %p91 = scmp.eq.s32.totalorder %s11, 1
    %p92 = scmp.ne.s32.totalorder %s87, %s89
    %p93 = scmp.eq.s32.totalorder %s11, 0
    %p94 = por %p92, %p93
    %p95 = scmp.ne.s32.totalorder %s87, %s89
    %p96 = scmp.eq.s32.totalorder %s16, 1
    %p97 = por %p95, %p96
    %p98 = scmp.ne.s32.totalorder %s89, %s90
    %p99 = scmp.eq.s32.totalorder %s16, 0
    %p100 = por %p98, %p99
    %p101 = scmp.ne.s32.totalorder %s89, %s90
    %p102 = scmp.eq.s32.totalorder %s17, 1
    %p103 = por %p101, %p102
    %p105 = scmp.ne.s32.totalorder %s90, %s104
    %p106 = scmp.eq.s32.totalorder %s17, 0
    %p107 = por %p105, %p106
    %s108 = ssub.s32 %s20, %s29
    %s109 = ssub.s32 %s19, %s33
    %s110 = sor.u32 %s108, %s109
    %p111 = scmp.eq.s32.totalorder %s110, 0
    %s113 = sadd.s32 %s112, 1
    %s114 = scalar_select %p111, %s112, %s113
    %p117 = pneg %p111
    %p118 = scmp.eq.s32.totalorder %s11, 1
    %p119 = por %p117, %p118
    %p120 = scmp.ne.s32.totalorder %s112, %s115
    %p121 = scmp.eq.s32.totalorder %s11, 0
    %p122 = por %p120, %p121
    %p123 = scmp.ne.s32.totalorder %s112, %s115
    %p124 = scmp.eq.s32.totalorder %s16, 1
    %p125 = por %p123, %p124
    %p126 = scmp.ne.s32.totalorder %s115, %s116
    %p127 = scmp.eq.s32.totalorder %s16, 0
    %p128 = por %p126, %p127
    %p129 = scmp.ne.s32.totalorder %s115, %s116
    %p130 = scmp.eq.s32.totalorder %s17, 1
    %p131 = por %p129, %p130
    %p133 = scmp.ne.s32.totalorder %s116, %s132
    %p134 = scmp.eq.s32.totalorder %s17, 0
    %p135 = por %p133, %p134
    %s136 = ssub.s32 %s19, %s33
    %p137 = scmp.eq.s32.totalorder %s136, 0
    %s139 = sadd.s32 %s138, 1
    %s140 = scalar_select %p137, %s138, %s139
    %p143 = pneg %p137
    %p144 = scmp.eq.s32.totalorder %s11, 1
    %p145 = por %p143, %p144
    %p146 = scmp.ne.s32.totalorder %s138, %s141
    %p147 = scmp.eq.s32.totalorder %s11, 0
    %p148 = por %p146, %p147
    %p149 = scmp.ne.s32.totalorder %s138, %s141
    %p150 = scmp.eq.s32.totalorder %s16, 1
    %p151 = por %p149, %p150
    %p152 = scmp.ne.s32.totalorder %s141, %s142
    %p153 = scmp.eq.s32.totalorder %s16, 0
    %p154 = por %p152, %p153
    %p155 = scmp.ne.s32.totalorder %s141, %s142
    %p156 = scmp.eq.s32.totalorder %s17, 1
    %p157 = por %p155, %p156
    %p159 = scmp.ne.s32.totalorder %s142, %s158
    %p160 = scmp.eq.s32.totalorder %s17, 0
    %p161 = por %p159, %p160
    %s162 = ssub.s32 %s18, %s37
    %s163 = ssub.s32 %s19, %s33
    %s164 = sor.u32 %s162, %s163
    %p165 = scmp.eq.s32.totalorder %s164, 0
    %s167 = sadd.s32 %s166, 1
    %s168 = scalar_select %p165, %s166, %s167
    %p171 = pneg %p165
    %p172 = scmp.eq.s32.totalorder %s11, 1
    %p173 = por %p171, %p172
    %p174 = scmp.ne.s32.totalorder %s166, %s169
    %p175 = scmp.eq.s32.totalorder %s11, 0
    %p176 = por %p174, %p175
    %p177 = scmp.ne.s32.totalorder %s166, %s169
    %p178 = scmp.eq.s32.totalorder %s16, 1
    %p179 = por %p177, %p178
    %p180 = scmp.ne.s32.totalorder %s169, %s170
    %p181 = scmp.eq.s32.totalorder %s16, 0
    %p182 = por %p180, %p181
    %p183 = scmp.ne.s32.totalorder %s169, %s170
    %p184 = scmp.eq.s32.totalorder %s17, 1
    %p185 = por %p183, %p184
    %p187 = scmp.ne.s32.totalorder %s170, %s186
    %p188 = scmp.eq.s32.totalorder %s17, 0
    %p189 = por %p187, %p188
    %p190 = scmp.le.s32.totalorder 1, %s11
    %p191 = scmp.lt.s32.totalorder %s11, 3
    %p192 = pnand %p190, %p191
    %p193 = pneg %p192
    // Predicated region
    $region9: #{vit_segmentation_forward.10} parent=5 // pred_check
      _
    $region10: #{vit_segmentation_forward.10} parent=5 // pred_check_branch
      %195 = sbr.rel (%p192) target = $region12
    $region11: #{vit_segmentation_forward.10} parent=5 // pred_region
      %s196 = ssub.s32 %s11, 1
      // Predicated region
      $region13: #{vit_segmentation_forward.10} parent=11 // pred_check
        %p197 = pneg %p79
      $region14: #{vit_segmentation_forward.10} parent=11 // pred_check_branch
        %199 = sbr.rel (%p197) target = $region16
      $region15: #{vit_segmentation_forward.10} parent=11 // pred_region
        _
      $region16: #{vit_segmentation_forward.10} parent=11 // pred_fallthru
        _
      // Predicated region
      $region17: #{vit_segmentation_forward.10} parent=11 // pred_check
        %p200 = pneg %p100
      $region18: #{vit_segmentation_forward.10} parent=11 // pred_check_branch
        %202 = sbr.rel (%p200) target = $region20
      $region19: #{vit_segmentation_forward.10} parent=11 // pred_region
        _
      $region20: #{vit_segmentation_forward.10} parent=11 // pred_fallthru
        _
      // Predicated region
      $region21: #{vit_segmentation_forward.10} parent=11 // pred_check
        %p203 = pneg %p128
      $region22: #{vit_segmentation_forward.10} parent=11 // pred_check_branch
        %205 = sbr.rel (%p203) target = $region24
      $region23: #{vit_segmentation_forward.10} parent=11 // pred_region
        %s206 = smul.u32 16, %s23
        %s207 = smul.u32 2, %s22
        %p208 = scmp.lt.s32.totalorder %s206, 15
        %s209 = scalar_select %p208, %s206, 15
        %p210 = scmp.lt.s32.totalorder %s207, 1
        %s211 = scalar_select %p210, %s207, 1
        %s212 = smul.addr %s209, 2
        %s213 = sadd.s32 %s211, %s212
        %s214 = smul.addr %s213, 4
        %s215 = scalar_lea.vmem %s3, %s214
        %s216 = smul.u32 16, %s23
        %s217 = smul.u32 2, %s22
      $region24: #{vit_segmentation_forward.10} parent=11 // pred_fallthru
        _
      // Predicated region
      $region25: #{vit_segmentation_forward.10} parent=11 // pred_check
        %p218 = pneg %p154
      $region26: #{vit_segmentation_forward.10} parent=11 // pred_check_branch
        %220 = sbr.rel (%p218) target = $region28
      $region27: #{vit_segmentation_forward.10} parent=11 // pred_region
        %s221 = smul.u32 2, %s22
        %p222 = scmp.lt.s32.totalorder %s221, 1
        %s223 = scalar_select %p222, %s221, 1
        %s224 = scalar_lea.vmem %s4, %s223
        %s225 = smul.u32 2, %s22
      $region28: #{vit_segmentation_forward.10} parent=11 // pred_fallthru
        _
    $region12: #{vit_segmentation_forward.10} parent=5 // pred_fallthru
      _
    %p226 = scmp.lt.s32.totalorder %s11, 2
    // Predicated region
    $region29: #{vit_segmentation_forward.10} parent=5 // pred_check
      %p227 = pneg %p226
    $region30: #{vit_segmentation_forward.10} parent=5 // pred_check_branch
      %229 = sbr.rel (%p227) target = $region32
    $region31: #{vit_segmentation_forward.10} parent=5 // pred_region
      // Predicated region
      $region33: #{vit_segmentation_forward.10} parent=31 // pred_check
        %p230 = pneg %p52
      $region34: #{vit_segmentation_forward.10} parent=31 // pred_check_branch
        %232 = sbr.rel (%p230) target = $region36
      $region35: #{vit_segmentation_forward.10} parent=31 // pred_region
        %s233 = smul.u32 2, %s18
        %p234 = scmp.lt.s32.totalorder %s233, 3
        %s235 = scalar_select %p234, %s233, 3
        %p236 = scmp.lt.s32.totalorder %s20, 0
        %s237 = scalar_select %p236, %s20, 0
        %s238 = sadd.s32 %s237, %s235
        %s239 = smul.addr %s238, 8
        %s240 = scalar_lea.vmem %s0, %s239
        %s241 = smul.u32 2, %s18
      $region36: #{vit_segmentation_forward.10} parent=31 // pred_fallthru
        _
    $region32: #{vit_segmentation_forward.10} parent=5 // pred_fallthru
      _
    %p242 = scmp.le.s32.totalorder 1, %s11
    %p243 = scmp.lt.s32.totalorder %s11, 3
    %p244 = pnand %p242, %p243
    %p245 = pneg %p244
    // Predicated region
    $region37: #{vit_segmentation_forward.10} parent=5 // pred_check
      _
    $region38: #{vit_segmentation_forward.10} parent=5 // pred_check_branch
      %247 = sbr.rel (%p244) target = $region40
    $region39: #{vit_segmentation_forward.10} parent=5 // pred_region
      %s248 = ssub.s32 %s11, 1
      %s249 = smul.u32 2, %s21
      %p250 = scmp.lt.s32.totalorder %s249, 3
      %s251 = scalar_select %p250, %s249, 3
      %p252 = scmp.lt.s32.totalorder %s23, 0
      %s253 = scalar_select %p252, %s23, 0
      %s254 = sadd.s32 %s253, %s251
      %s255 = smul.addr %s254, 8
      %s256 = scalar_lea.vmem %s0, %s255
      %p257 = pneg %p58
      %p258 = pneg %p55
      %p259 = pneg %p79
      %p260 = pneg %p76
      %p261 = pneg %p100
      %p262 = pneg %p97
      %s263 = smul.u32 16, %s23
      %s264 = smul.u32 2, %s22
      %p265 = scmp.lt.s32.totalorder %s263, 15
      %s266 = scalar_select %p265, %s263, 15
      %p267 = scmp.lt.s32.totalorder %s264, 1
      %s268 = scalar_select %p267, %s264, 1
      %s269 = smul.addr %s266, 2
      %s270 = sadd.s32 %s268, %s269
      %s271 = smul.addr %s270, 4
      %s272 = scalar_lea.vmem %s3, %s271
      %p273 = pneg %p128
      %p274 = pneg %p125
      %s275 = smul.u32 2, %s22
      %p276 = scmp.lt.s32.totalorder %s275, 1
      %s277 = scalar_select %p276, %s275, 1
      %s278 = scalar_lea.vmem %s4, %s277
      %p279 = pneg %p154
      %p280 = pneg %p151
      %p281 = pneg %p182
      %p282 = pneg %p179
      %s283 = smul.u32 2, %s21
      %s284 = smul.u32 2, %s22
      %p285 = scmp.lt.s32.totalorder %s283, 3
      %s286 = scalar_select %p285, %s283, 3
      %p287 = scmp.lt.s32.totalorder %s284, 1
      %s288 = scalar_select %p287, %s284, 1
      %s289 = smul.addr %s286, 2
      %s290 = sadd.s32 %s288, %s289
      %s291 = smul.addr %s290, 4
      %s292 = scalar_lea.vmem %s5, %s291
      %s293 = smul.u32 2, %s21
      %p294 = scmp.lt.s32.totalorder %s293, 3
      %s295 = scalar_select %p294, %s293, 3
      %p296 = scmp.lt.s32.totalorder %s23, 0
      %s297 = scalar_select %p296, %s23, 0
      %s298 = sadd.s32 %s297, %s295
      %s299 = smul.addr %s298, 8
      %s300 = scalar_lea.vmem %s0, %s299
      %s301 = smul.u32 2, %s21
      %s302 = smul.u32 16, %s23
      %s303 = smul.u32 2, %s22
      %p304 = scmp.lt.s32.totalorder %s302, 15
      %s305 = scalar_select %p304, %s302, 15
      %p306 = scmp.lt.s32.totalorder %s303, 1
      %s307 = scalar_select %p306, %s303, 1
      %s308 = smul.addr %s305, 2
      %s309 = sadd.s32 %s307, %s308
      %s310 = smul.addr %s309, 4
      %s311 = scalar_lea.vmem %s3, %s310
      %s312 = smul.u32 16, %s23
      %s313 = smul.u32 2, %s22
      %s314 = smul.u32 2, %s22
      %p315 = scmp.lt.s32.totalorder %s314, 1
      %s316 = scalar_select %p315, %s314, 1
      %s317 = scalar_lea.vmem %s4, %s316
      %s318 = smul.u32 2, %s22
      %s319 = smul.u32 2, %s21
      %s320 = smul.u32 2, %s22
      %p321 = scmp.lt.s32.totalorder %s319, 3
      %s322 = scalar_select %p321, %s319, 3
      %p323 = scmp.lt.s32.totalorder %s320, 1
      %s324 = scalar_select %p323, %s320, 1
      %s325 = smul.addr %s322, 2
      %s326 = sadd.s32 %s324, %s325
      %s327 = smul.addr %s326, 4
      %s328 = scalar_lea.vmem %s5, %s327
      %s329 = smul.u32 2, %s21
      %s330 = smul.u32 2, %s22
      %p332 = scmp.eq.s32.totalorder %s23, 0
      // Predicated region
      $region41: #{vit_segmentation_forward.10} parent=39 // pred_check
        %p333 = pneg %p332
      $region42: #{vit_segmentation_forward.10} parent=39 // pred_check_branch
        %335 = sbr.rel (%p333) target = $region44
      $region43: #{vit_segmentation_forward.10} parent=39 // pred_region
        %336 = vst [vmem:[#allocation2] sm:$0xff] 0.0
        %337 = vst [vmem:[#allocation2 + $0x8] sm:$0xff] 0.0
        %338 = vst [vmem:[#allocation2 + $0x10] sm:$0xff] 0.0
        %339 = vst [vmem:[#allocation2 + $0x18] sm:$0xff] 0.0
      $region44: #{vit_segmentation_forward.10} parent=39 // pred_fallthru
        _
      %v340 = vld [vmem:[%s300] sm:$0xff]
      %v341 = vld [vmem:[%s300 + $0x8] sm:$0xff]
      %v342 = vld [vmem:[%s1] sm:$0x1]
      %v343 = vld [vmem:[%s2] sm:$0x1]
      %344 = vadd.xlane.f32.xlu0 %v340
      %v345 = vpop.xlane.xlu0 %344
      %346 = vadd.xlane.f32.xlu0 %v341
      %v347 = vpop.xlane.xlu0 %346
      %v348 = vrcp.pop 128.0
      %v349 = vmul.f32 %v345, %v348
      %v350 = vmul.f32 %v347, %v348
      %v351 = vsub.f32 %v340, %v349
      %v352 = vsub.f32 %v341, %v350
      %v353 = vmul.f32 %v351, %v351
      %v354 = vmul.f32 %v352, %v352
      %355 = vadd.xlane.f32.xlu0 %v353
      %v356 = vpop.xlane.xlu0 %355
      %357 = vadd.xlane.f32.xlu0 %v354
      %v358 = vpop.xlane.xlu0 %357
      %v359 = vmul.f32 %v356, %v348
      %v360 = vmul.f32 %v358, %v348
      %v361 = vadd.f32 %v359, 1e-06
      %v362 = vadd.f32 %v360, 1e-06
      %v363 = vrsqrt.pop %v361
      %v364 = vrsqrt.pop %v362
      %v365 = vmul.f32 %v351, %v363
      %v366 = vmul.f32 %v352, %v364
      %v368 = vlaneseq
      %v369 = vshrl.u32 %v368, 7
      %v370 = vsub.s32 0, %v369
      %v371 = vrot.slane %v342, %v370
      %v373 = vmul.f32 %v365, %v371
      %v374 = vmul.f32 %v366, %v371
      %v376 = vlaneseq
      %v377 = vshrl.u32 %v376, 7
      %v378 = vsub.s32 0, %v377
      %v379 = vrot.slane %v343, %v378
      %v381 = vadd.f32 %v373, %v379
      %v382 = vadd.f32 %v374, %v379
      %v383 = vpack.c.bf16 %v382, %v381
      %v384 = vld [vmem:[#allocation2] sm:$0xff]
      %v385 = vld [vmem:[#allocation2 + $0x8] sm:$0xff]
      %v386 = vld [vmem:[#allocation2 + $0x10] sm:$0xff]
      %v387 = vld [vmem:[#allocation2 + $0x18] sm:$0xff]
      %v388 = vld [vmem:[%s311] sm:$0xff]
      %v389 = vld [vmem:[%s311 + $0x8] sm:$0xff]
      %v390 = vld [vmem:[%s311 + $0x10] sm:$0xff]
      %v391 = vld [vmem:[%s311 + $0x18] sm:$0xff]
      %v392 = vld [vmem:[%s311 + $0x20] sm:$0xff]
      %v393 = vld [vmem:[%s311 + $0x28] sm:$0xff]
      %v394 = vld [vmem:[%s311 + $0x30] sm:$0xff]
      %v395 = vld [vmem:[%s311 + $0x38] sm:$0xff]
      %v396 = vld [vmem:[%s311 + $0x40] sm:$0xff]
      %v397 = vld [vmem:[%s311 + $0x48] sm:$0xff]
      %v398 = vld [vmem:[%s311 + $0x50] sm:$0xff]
      %v399 = vld [vmem:[%s311 + $0x58] sm:$0xff]
      %v400 = vld [vmem:[%s311 + $0x60] sm:$0xff]
      %v401 = vld [vmem:[%s311 + $0x68] sm:$0xff]
      %v402 = vld [vmem:[%s311 + $0x70] sm:$0xff]
      %v403 = vld [vmem:[%s311 + $0x78] sm:$0xff]
      %v420 = vunpack.c.l.b16 %v388
      %v421 = vunpack.c.h.b16 %v388
      %v422 = vunpack.c.l.b16 %v389
      %v423 = vunpack.c.h.b16 %v389
      %v424 = vunpack.c.l.b16 %v390
      %v425 = vunpack.c.h.b16 %v390
      %v426 = vunpack.c.l.b16 %v391
      %v427 = vunpack.c.h.b16 %v391
      %v428 = vunpack.c.l.b16 %v392
      %v429 = vunpack.c.h.b16 %v392
      %v430 = vunpack.c.l.b16 %v393
      %v431 = vunpack.c.h.b16 %v393
      %v432 = vunpack.c.l.b16 %v394
      %v433 = vunpack.c.h.b16 %v394
      %v434 = vunpack.c.l.b16 %v395
      %v435 = vunpack.c.h.b16 %v395
      %v436 = vunpack.c.l.b16 %v396
      %v437 = vunpack.c.h.b16 %v396
      %v438 = vunpack.c.l.b16 %v397
      %v439 = vunpack.c.h.b16 %v397
      %v440 = vunpack.c.l.b16 %v398
      %v441 = vunpack.c.h.b16 %v398
      %v442 = vunpack.c.l.b16 %v399
      %v443 = vunpack.c.h.b16 %v399
      %v444 = vunpack.c.l.b16 %v400
      %v445 = vunpack.c.h.b16 %v400
      %v446 = vunpack.c.l.b16 %v401
      %v447 = vunpack.c.h.b16 %v401
      %v448 = vunpack.c.l.b16 %v402
      %v449 = vunpack.c.h.b16 %v402
      %v450 = vunpack.c.l.b16 %v403
      %v451 = vunpack.c.h.b16 %v403
      %v452 = vpack.c.b16 %v422, %v420
      %v453 = vpack.c.b16 %v423, %v421
      %v454 = vpack.c.b16 %v426, %v424
      %v455 = vpack.c.b16 %v427, %v425
      %v456 = vpack.c.b16 %v430, %v428
      %v457 = vpack.c.b16 %v431, %v429
      %v458 = vpack.c.b16 %v434, %v432
      %v459 = vpack.c.b16 %v435, %v433
      %v460 = vpack.c.b16 %v438, %v436
      %v461 = vpack.c.b16 %v439, %v437
      %v462 = vpack.c.b16 %v442, %v440
      %v463 = vpack.c.b16 %v443, %v441
      %v464 = vpack.c.b16 %v446, %v444
      %v465 = vpack.c.b16 %v447, %v445
      %v466 = vpack.c.b16 %v450, %v448
      %v467 = vpack.c.b16 %v451, %v449
      %484 = vmatprep.subr.bf16.mxu0 %v467
      %485 = vmatpush1.bf16.msra.mxu0 %v466
      %486 = vmatprep.subr.bf16.mxu0 %v465
      %487 = vmatpush1.bf16.msra.mxu0 %v464
      %488 = vmatprep.subr.bf16.mxu0 %v463
      %489 = vmatpush1.bf16.msra.mxu0 %v462
      %490 = vmatprep.subr.bf16.mxu0 %v461
      %491 = vmatpush1.bf16.msra.mxu0 %v460
      %492 = vmatprep.subr.bf16.mxu0 %v459
      %493 = vmatpush1.bf16.msra.mxu0 %v458
      %494 = vmatprep.subr.bf16.mxu0 %v457
      %495 = vmatpush1.bf16.msra.mxu0 %v456
      %496 = vmatprep.subr.bf16.mxu0 %v455
      %497 = vmatpush1.bf16.msra.mxu0 %v454
      %498 = vmatprep.subr.bf16.mxu0 %v453
      %499 = vmatpush1.bf16.msra.mxu0 %v452
      %500 = vmatprep.subr.bf16.mxu0 0
      %501 = vmatpush2.bf16.msra.mxu0 0
      %502 = vmatprep.subr.bf16.mxu0 0
      %503 = vmatpush2.bf16.msra.mxu0 0
      %504 = vmatprep.subr.bf16.mxu0 0
      %505 = vmatpush2.bf16.msra.mxu0 0
      %506 = vmatprep.subr.bf16.mxu0 0
      %507 = vmatpush2.bf16.msra.mxu0 0
      %508 = vmatprep.subr.bf16.mxu0 0
      %509 = vmatpush2.bf16.msra.mxu0 0
      %510 = vmatprep.subr.bf16.mxu0 0
      %511 = vmatpush2.bf16.msra.mxu0 0
      %512 = vmatprep.subr.bf16.mxu0 0
      %513 = vmatpush2.bf16.msra.mxu0 0
      %514 = vmatprep.subr.bf16.mxu0 0
      %515 = vmatpush2.bf16.msra.mxu0 0
      %516 = vmatprep.mubr.bf16.mxu0 0
      %517 = vmatmul.mubr.bf16.gmra.mxu0 %v383
      %v518 = vpop.f32.mrf.mxu0
      %v519 = vadd.f32 0.0, %v518
      %v520 = vpop.f32.mrf.mxu0
      %v521 = vadd.f32 0.0, %v520
      %v522 = vpop.f32.mrf.mxu0
      %v523 = vadd.f32 0.0, %v522
      %v524 = vpop.f32.mrf.mxu0
      %v525 = vadd.f32 0.0, %v524
      %526 = vdwg.mxu0
      %v527 = vadd.f32 %v384, %v519
      %v528 = vadd.f32 %v385, %v521
      %v529 = vadd.f32 %v386, %v523
      %v530 = vadd.f32 %v387, %v525
      %531 = vst [vmem:[#allocation2] sm:$0xff] %v527
      %532 = vst [vmem:[#allocation2 + $0x8] sm:$0xff] %v528
      %533 = vst [vmem:[#allocation2 + $0x10] sm:$0xff] %v529
      %534 = vst [vmem:[#allocation2 + $0x18] sm:$0xff] %v530
      // Predicated region
      $region45: #{vit_segmentation_forward.10} parent=39 // pred_check
        %p535 = pneg %p332
      $region46: #{vit_segmentation_forward.10} parent=39 // pred_check_branch
        %537 = sbr.rel (%p535) target = $region48
      $region47: #{vit_segmentation_forward.10} parent=39 // pred_region
        %v538 = vld [vmem:[#allocation2] sm:$0xff]
        %v539 = vld [vmem:[#allocation2 + $0x8] sm:$0xff]
        %v540 = vld [vmem:[#allocation2 + $0x10] sm:$0xff]
        %v541 = vld [vmem:[#allocation2 + $0x18] sm:$0xff]
        %v542 = vld [vmem:[%s317] sm:$0x3]
        %v544 = vlaneseq
        %v545 = vshrl.u32 %v544, 7
        %v546 = vsub.s32 0, %v545
        %v547 = vrot.slane %v542, %v546
        %v548 = vlaneseq
        %v549 = vshrl.u32 %v548, 7
        %v550 = vsub.s32 1, %v549
        %v551 = vrot.slane %v542, %v550
        %v554 = vadd.f32 %v538, %v547
        %v555 = vadd.f32 %v539, %v551
        %v556 = vadd.f32 %v540, %v547
        %v557 = vadd.f32 %v541, %v551
        %v558 = vmax.f32 %v554, 0.0
        %v559 = vmax.f32 %v555, 0.0
        %v560 = vmax.f32 %v556, 0.0
        %v561 = vmax.f32 %v557, 0.0
        %v562 = vpack.c.bf16 %v560, %v558
        %v563 = vpack.c.bf16 %v561, %v559
        %v566 = vunpack.c.l.b16 %v562
        %v567 = vunpack.c.l.b16 %v563
        %v568 = vunpack.c.h.b16 %v562
        %v569 = vunpack.c.h.b16 %v563
        %v570 = vpack.c.b16 %v567, %v566
        %v571 = vpack.c.b16 %v569, %v568
        %574 = vst [vmem:[%s328] sm:$0xff] %v570
        %575 = vst [vmem:[%s328 + $0x8] sm:$0xff] %v571
      $region48: #{vit_segmentation_forward.10} parent=39 // pred_fallthru
        _
      %s576 = smul.u32 2, %s21
      %s577 = smul.u32 2, %s22
      %p578 = scmp.lt.s32.totalorder %s576, 3
      %s579 = scalar_select %p578, %s576, 3
      %p580 = scmp.lt.s32.totalorder %s577, 1
      %s581 = scalar_select %p580, %s577, 1
      %s582 = smul.addr %s579, 2
      %s583 = sadd.s32 %s581, %s582
      %s584 = smul.addr %s583, 4
      %s585 = scalar_lea.vmem %s5, %s584
      // Predicated region
      $region49: #{vit_segmentation_forward.10} parent=39 // pred_check
        %p586 = pneg %p179
      $region50: #{vit_segmentation_forward.10} parent=39 // pred_check_branch
        %588 = sbr.rel (%p586) target = $region52
      $region51: #{vit_segmentation_forward.10} parent=39 // pred_region
        %s589 = smul.u32 2, %s21
        %s590 = smul.u32 2, %s22
      $region52: #{vit_segmentation_forward.10} parent=39 // pred_fallthru
        _
    $region40: #{vit_segmentation_forward.10} parent=5 // pred_fallthru
      _
    %p591 = scmp.le.s32.totalorder 2, %s11
    // Predicated region
    $region53: #{vit_segmentation_forward.10} parent=5 // pred_check
      %p592 = pneg %p591
    $region54: #{vit_segmentation_forward.10} parent=5 // pred_check_branch
      %594 = sbr.rel (%p592) target = $region56
    $region55: #{vit_segmentation_forward.10} parent=5 // pred_region
      %s595 = ssub.s32 %s11, 2
      // Predicated region
      $region57: #{vit_segmentation_forward.10} parent=55 // pred_check
        %p596 = pneg %p185
      $region58: #{vit_segmentation_forward.10} parent=55 // pred_check_branch
        %598 = sbr.rel (%p596) target = $region60
      $region59: #{vit_segmentation_forward.10} parent=55 // pred_region
        %s599 = smul.u32 2, %s24
        %s600 = smul.u32 2, %s25
        %p601 = scmp.lt.s32.totalorder %s599, 3
        %s602 = scalar_select %p601, %s599, 3
        %p603 = scmp.lt.s32.totalorder %s600, 1
        %s604 = scalar_select %p603, %s600, 1
        %s605 = smul.addr %s602, 2
        %s606 = sadd.s32 %s604, %s605
        %s607 = smul.addr %s606, 4
        %s608 = scalar_lea.vmem %s5, %s607
      $region60: #{vit_segmentation_forward.10} parent=55 // pred_fallthru
        _
    $region56: #{vit_segmentation_forward.10} parent=5 // pred_fallthru
      _
  $region6: #{vit_segmentation_forward.10} parent=0 // loop_footer
    %s15 = sadd.s32 1, %s11
  $region7: #{vit_segmentation_forward.10} parent=0 // loop_footer_branch
    %10 = sbr.rel target = $region3
  $region8: #{vit_segmentation_forward.10} parent=0 // loop_exit
    _

// kernel: vit_segmentation_forward.7
$region0: #{vit_segmentation_forward.7}
  #allocation0 [shape = 'u32[]', space=smem, size = 0x4, offset = 0x4, fixed_abs, tag = 'smem constant byte address 0x4 - core index']
  #allocation1 [shape = 'u32[144,128]{1,0:T(1,128)}', space=vmem, size = 0x12000, scoped, tag = 'internal scratch']
  #allocation2 [shape = 'f32[16,128]{1,0:T(8,128)}', space=vmem, size = 0x2000, scoped, tag = 'scratch operand']
  %s0 = inlined_call_operand.vmem [shape: bf16[32,768], index: 0, kind: input, shape index: {}]
  %s1 = inlined_call_operand.vmem [shape: bf16[768,128], index: 1, kind: input, shape index: {}]
  %s2 = inlined_call_operand.vmem [shape: f32[1,128], index: 2, kind: input, shape index: {}]
  %s3 = inlined_call_operand.vmem [shape: f32[32,128], index: 3, kind: input, shape index: {}]
  %s4 = inlined_call_operand.vmem [shape: f32[32,128], index: 4, kind: output, shape index: {}]
  %s5 = sld [smem:[#allocation0]]
  $region57: #{vit_segmentation_forward.7} parent=0
    _
  %s7 = ssub.s32 1, %s5
  %s8 = scalar_select 0, %s7, %s5
  loop: start=0, step=1, limit=4
  $region2: #{vit_segmentation_forward.7} parent=0 // loop_pre_header
    _
  $region3: #{vit_segmentation_forward.7} parent=0 // loop_header
    %s10 = sphi 0, %s14
    %p11 = scmp.ge.s32.totalorder %s10, 4
    %s17 = sphi 0, %s36
    %s18 = sphi 0, %s32
    %s19 = sphi 0, %s28
    %s20 = sphi 0, %s17
    %s21 = sphi 0, %s18
    %s22 = sphi 0, %s19
    %s23 = sphi 0, %s20
    %s24 = sphi 0, %s21
    %s25 = sphi 0, %s22
    %s41 = sphi 0, %s43
    %s44 = sphi 0, %s41
    %s45 = sphi 0, %s44
    %s61 = sphi 0, %s45
    %s69 = sphi 0, %s71
    %s72 = sphi 0, %s69
    %s73 = sphi 0, %s72
    %s89 = sphi 0, %s73
    %s95 = sphi 0, %s97
    %s98 = sphi 0, %s95
    %s99 = sphi 0, %s98
    %s115 = sphi 0, %s99
    %s123 = sphi 0, %s125
    %s126 = sphi 0, %s123
    %s127 = sphi 0, %s126
    %s143 = sphi 0, %s127
    %s151 = sphi 0, %s153
    %s154 = sphi 0, %s151
    %s155 = sphi 0, %s154
    %s171 = sphi 0, %s155
  $region4: #{vit_segmentation_forward.7} parent=0 // loop_header_branch
    %13 = sbr.rel (%p11) target = $region8
  $region5: #{vit_segmentation_forward.7} parent=0 // loop_body
    %s15 = ssub.s32 %s10, 1
    %s16 = ssub.s32 %s10, 2
    %s26 = sadd.s32 1, %s19
    %p27 = scmp.ge.s32.totalorder %s26, 1
    %s28 = scalar_select %p27, 0, %s26
    %s29 = sadd.s32 1, %s18
    %s30 = scalar_select %p27, %s29, %s18
    %p31 = scmp.ge.s32.totalorder %s30, 1
    %s32 = scalar_select %p31, 0, %s30
    %s33 = sadd.s32 1, %s17
    %s34 = scalar_select %p31, %s33, %s17
    %p35 = scmp.ge.s32.totalorder %s34, 2
    %s36 = scalar_select %p35, 0, %s34
    %s37 = ssub.s32 %s17, %s36
    %s38 = ssub.s32 %s19, %s28
    %s39 = sor.u32 %s37, %s38
    %p40 = scmp.eq.s32.totalorder %s39, 0
    %s42 = sadd.s32 %s41, 1
    %s43 = scalar_select %p40, %s41, %s42
    %p46 = pneg %p40
    %p47 = scmp.eq.s32.totalorder %s10, 1
    %p48 = por %p46, %p47
    %p49 = scmp.ne.s32.totalorder %s41, %s44
    %p50 = scmp.eq.s32.totalorder %s10, 0
    %p51 = por %p49, %p50
    %p52 = scmp.ne.s32.totalorder %s41, %s44
    %p53 = scmp.eq.s32.totalorder %s15, 1
    %p54 = por %p52, %p53
    %p55 = scmp.ne.s32.totalorder %s44, %s45
    %p56 = scmp.eq.s32.totalorder %s15, 0
    %p57 = por %p55, %p56
    %p58 = scmp.ne.s32.totalorder %s44, %s45
    %p59 = scmp.eq.s32.totalorder %s16, 1
    %p60 = por %p58, %p59
    %p62 = scmp.ne.s32.totalorder %s45, %s61
    %p63 = scmp.eq.s32.totalorder %s16, 0
    %p64 = por %p62, %p63
    %s65 = ssub.s32 %s19, %s28
    %s66 = ssub.s32 %s18, %s32
    %s67 = sor.u32 %s65, %s66
    %p68 = scmp.eq.s32.totalorder %s67, 0
    %s70 = sadd.s32 %s69, 1
    %s71 = scalar_select %p68, %s69, %s70
    %p74 = pneg %p68
    %p75 = scmp.eq.s32.totalorder %s10, 1
    %p76 = por %p74, %p75
    %p77 = scmp.ne.s32.totalorder %s69, %s72
    %p78 = scmp.eq.s32.totalorder %s10, 0
    %p79 = por %p77, %p78
    %p80 = scmp.ne.s32.totalorder %s69, %s72
    %p81 = scmp.eq.s32.totalorder %s15, 1
    %p82 = por %p80, %p81
    %p83 = scmp.ne.s32.totalorder %s72, %s73
    %p84 = scmp.eq.s32.totalorder %s15, 0
    %p85 = por %p83, %p84
    %p86 = scmp.ne.s32.totalorder %s72, %s73
    %p87 = scmp.eq.s32.totalorder %s16, 1
    %p88 = por %p86, %p87
    %p90 = scmp.ne.s32.totalorder %s73, %s89
    %p91 = scmp.eq.s32.totalorder %s16, 0
    %p92 = por %p90, %p91
    %s93 = ssub.s32 %s18, %s32
    %p94 = scmp.eq.s32.totalorder %s93, 0
    %s96 = sadd.s32 %s95, 1
    %s97 = scalar_select %p94, %s95, %s96
    %p100 = pneg %p94
    %p101 = scmp.eq.s32.totalorder %s10, 1
    %p102 = por %p100, %p101
    %p103 = scmp.ne.s32.totalorder %s95, %s98
    %p104 = scmp.eq.s32.totalorder %s10, 0
    %p105 = por %p103, %p104
    %p106 = scmp.ne.s32.totalorder %s95, %s98
    %p107 = scmp.eq.s32.totalorder %s15, 1
    %p108 = por %p106, %p107
    %p109 = scmp.ne.s32.totalorder %s98, %s99
    %p110 = scmp.eq.s32.totalorder %s15, 0
    %p111 = por %p109, %p110
    %p112 = scmp.ne.s32.totalorder %s98, %s99
    %p113 = scmp.eq.s32.totalorder %s16, 1
    %p114 = por %p112, %p113
    %p116 = scmp.ne.s32.totalorder %s99, %s115
    %p117 = scmp.eq.s32.totalorder %s16, 0
    %p118 = por %p116, %p117
    %s119 = ssub.s32 %s17, %s36
    %s120 = ssub.s32 %s18, %s32
    %s121 = sor.u32 %s119, %s120
    %p122 = scmp.eq.s32.totalorder %s121, 0
    %s124 = sadd.s32 %s123, 1
    %s125 = scalar_select %p122, %s123, %s124
    %p128 = pneg %p122
    %p129 = scmp.eq.s32.totalorder %s10, 1
    %p130 = por %p128, %p129
    %p131 = scmp.ne.s32.totalorder %s123, %s126
    %p132 = scmp.eq.s32.totalorder %s10, 0
    %p133 = por %p131, %p132
    %p134 = scmp.ne.s32.totalorder %s123, %s126
    %p135 = scmp.eq.s32.totalorder %s15, 1
    %p136 = por %p134, %p135
    %p137 = scmp.ne.s32.totalorder %s126, %s127
    %p138 = scmp.eq.s32.totalorder %s15, 0
    %p139 = por %p137, %p138
    %p140 = scmp.ne.s32.totalorder %s126, %s127
    %p141 = scmp.eq.s32.totalorder %s16, 1
    %p142 = por %p140, %p141
    %p144 = scmp.ne.s32.totalorder %s127, %s143
    %p145 = scmp.eq.s32.totalorder %s16, 0
    %p146 = por %p144, %p145
    %s147 = ssub.s32 %s17, %s36
    %s148 = ssub.s32 %s18, %s32
    %s149 = sor.u32 %s147, %s148
    %p150 = scmp.eq.s32.totalorder %s149, 0
    %s152 = sadd.s32 %s151, 1
    %s153 = scalar_select %p150, %s151, %s152
    %p156 = pneg %p150
    %p157 = scmp.eq.s32.totalorder %s10, 1
    %p158 = por %p156, %p157
    %p159 = scmp.ne.s32.totalorder %s151, %s154
    %p160 = scmp.eq.s32.totalorder %s10, 0
    %p161 = por %p159, %p160
    %p162 = scmp.ne.s32.totalorder %s151, %s154
    %p163 = scmp.eq.s32.totalorder %s15, 1
    %p164 = por %p162, %p163
    %p165 = scmp.ne.s32.totalorder %s154, %s155
    %p166 = scmp.eq.s32.totalorder %s15, 0
    %p167 = por %p165, %p166
    %p168 = scmp.ne.s32.totalorder %s154, %s155
    %p169 = scmp.eq.s32.totalorder %s16, 1
    %p170 = por %p168, %p169
    %p172 = scmp.ne.s32.totalorder %s155, %s171
    %p173 = scmp.eq.s32.totalorder %s16, 0
    %p174 = por %p172, %p173
    %p175 = scmp.le.s32.totalorder 1, %s10
    %p176 = scmp.lt.s32.totalorder %s10, 3
    %p177 = pnand %p175, %p176
    %p178 = pneg %p177
    // Predicated region
    $region9: #{vit_segmentation_forward.7} parent=5 // pred_check
      _
    $region10: #{vit_segmentation_forward.7} parent=5 // pred_check_branch
      %180 = sbr.rel (%p177) target = $region12
    $region11: #{vit_segmentation_forward.7} parent=5 // pred_region
      %s181 = ssub.s32 %s10, 1
      // Predicated region
      $region13: #{vit_segmentation_forward.7} parent=11 // pred_check
        %p182 = pneg %p85
      $region14: #{vit_segmentation_forward.7} parent=11 // pred_check_branch
        %184 = sbr.rel (%p182) target = $region16
      $region15: #{vit_segmentation_forward.7} parent=11 // pred_region
        %s185 = smul.u32 96, %s22
        %p186 = scmp.lt.s32.totalorder %s185, 95
        %s187 = scalar_select %p186, %s185, 95
        %p188 = scmp.lt.s32.totalorder %s21, 0
        %s189 = scalar_select %p188, %s21, 0
        %s190 = sadd.s32 %s189, %s187
        %s191 = smul.addr %s190, 4
        %s192 = scalar_lea.vmem %s1, %s191
        %s193 = smul.u32 96, %s22
      $region16: #{vit_segmentation_forward.7} parent=11 // pred_fallthru
        _
      // Predicated region
      $region17: #{vit_segmentation_forward.7} parent=11 // pred_check
        %p194 = pneg %p111
      $region18: #{vit_segmentation_forward.7} parent=11 // pred_check_branch
        %196 = sbr.rel (%p194) target = $region20
      $region19: #{vit_segmentation_forward.7} parent=11 // pred_region
        %p197 = scmp.lt.s32.totalorder %s21, 0
        %s198 = scalar_select %p197, %s21, 0
        %s199 = scalar_lea.vmem %s2, %s198
      $region20: #{vit_segmentation_forward.7} parent=11 // pred_fallthru
        _
    $region12: #{vit_segmentation_forward.7} parent=5 // pred_fallthru
      _
    %p200 = scmp.lt.s32.totalorder %s10, 2
    // Predicated region
    $region21: #{vit_segmentation_forward.7} parent=5 // pred_check
      %p201 = pneg %p200
    $region22: #{vit_segmentation_forward.7} parent=5 // pred_check_branch
      %203 = sbr.rel (%p201) target = $region24
    $region23: #{vit_segmentation_forward.7} parent=5 // pred_region
      // Predicated region
      $region25: #{vit_segmentation_forward.7} parent=23 // pred_check
        %p204 = pneg %p51
      $region26: #{vit_segmentation_forward.7} parent=23 // pred_check_branch
        %206 = sbr.rel (%p204) target = $region28
      $region27: #{vit_segmentation_forward.7} parent=23 // pred_region
        %s207 = smul.u32 2, %s17
        %s208 = smul.u32 6, %s19
        %p209 = scmp.lt.s32.totalorder %s207, 3
        %s210 = scalar_select %p209, %s207, 3
        %p211 = scmp.lt.s32.totalorder %s208, 5
        %s212 = scalar_select %p211, %s208, 5
        %s213 = smul.addr %s210, 6
        %s214 = sadd.s32 %s212, %s213
        %s215 = smul.addr %s214, 4
        %s216 = scalar_lea.vmem %s0, %s215
        %s217 = smul.u32 2, %s17
        %s218 = smul.u32 6, %s19
      $region28: #{vit_segmentation_forward.7} parent=23 // pred_fallthru
        _
      // Predicated region
      $region29: #{vit_segmentation_forward.7} parent=23 // pred_check
        %p219 = pneg %p133
      $region30: #{vit_segmentation_forward.7} parent=23 // pred_check_branch
        %221 = sbr.rel (%p219) target = $region32
      $region31: #{vit_segmentation_forward.7} parent=23 // pred_region
        %s222 = smul.u32 2, %s17
        %p223 = scmp.lt.s32.totalorder %s222, 3
        %s224 = scalar_select %p223, %s222, 3
        %p225 = scmp.lt.s32.totalorder %s18, 0
        %s226 = scalar_select %p225, %s18, 0
        %s227 = sadd.s32 %s226, %s224
        %s228 = smul.addr %s227, 8
        %s229 = scalar_lea.vmem %s3, %s228
        %s230 = smul.u32 2, %s17
      $region32: #{vit_segmentation_forward.7} parent=23 // pred_fallthru
        _
    $region24: #{vit_segmentation_forward.7} parent=5 // pred_fallthru
      _
    %p231 = scmp.le.s32.totalorder 1, %s10
    %p232 = scmp.lt.s32.totalorder %s10, 3
    %p233 = pnand %p231, %p232
    %p234 = pneg %p233
    // Predicated region
    $region33: #{vit_segmentation_forward.7} parent=5 // pred_check
      _
    $region34: #{vit_segmentation_forward.7} parent=5 // pred_check_branch
      %236 = sbr.rel (%p233) target = $region36
    $region35: #{vit_segmentation_forward.7} parent=5 // pred_region
      %s237 = ssub.s32 %s10, 1
      %s238 = smul.u32 2, %s20
      %s239 = smul.u32 6, %s22
      %p240 = scmp.lt.s32.totalorder %s238, 3
      %s241 = scalar_select %p240, %s238, 3
      %p242 = scmp.lt.s32.totalorder %s239, 5
      %s243 = scalar_select %p242, %s239, 5
      %s244 = smul.addr %s241, 6
      %s245 = sadd.s32 %s243, %s244
      %s246 = smul.addr %s245, 4
      %s247 = scalar_lea.vmem %s0, %s246
      %p248 = pneg %p57
      %p249 = pneg %p54
      %s250 = smul.u32 96, %s22
      %p251 = scmp.lt.s32.totalorder %s250, 95
      %s252 = scalar_select %p251, %s250, 95
      %p253 = scmp.lt.s32.totalorder %s21, 0
      %s254 = scalar_select %p253, %s21, 0
      %s255 = sadd.s32 %s254, %s252
      %s256 = smul.addr %s255, 4
      %s257 = scalar_lea.vmem %s1, %s256
      %p258 = pneg %p85
      %p259 = pneg %p82
      %p260 = scmp.lt.s32.totalorder %s21, 0
      %s261 = scalar_select %p260, %s21, 0
      %s262 = scalar_lea.vmem %s2, %s261
      %p263 = pneg %p111
      %p264 = pneg %p108
      %s265 = smul.u32 2, %s20
      %p266 = scmp.lt.s32.totalorder %s265, 3
      %s267 = scalar_select %p266, %s265, 3
      %p268 = scmp.lt.s32.totalorder %s21, 0
      %s269 = scalar_select %p268, %s21, 0
      %s270 = sadd.s32 %s269, %s267
      %s271 = smul.addr %s270, 8
      %s272 = scalar_lea.vmem %s3, %s271
      %p273 = pneg %p139
      %p274 = pneg %p136
      %p275 = pneg %p167
      %p276 = pneg %p164
      %s277 = smul.u32 2, %s20
      %p278 = scmp.lt.s32.totalorder %s277, 3
      %s279 = scalar_select %p278, %s277, 3
      %p280 = scmp.lt.s32.totalorder %s21, 0
      %s281 = scalar_select %p280, %s21, 0
      %s282 = sadd.s32 %s281, %s279
      %s283 = smul.addr %s282, 8
      %s284 = scalar_lea.vmem %s4, %s283
      %s285 = smul.u32 2, %s20
      %s286 = smul.u32 6, %s22
      %p287 = scmp.lt.s32.totalorder %s285, 3
      %s288 = scalar_select %p287, %s285, 3
      %p289 = scmp.lt.s32.totalorder %s286, 5
      %s290 = scalar_select %p289, %s286, 5
      %s291 = smul.addr %s288, 6
      %s292 = sadd.s32 %s290, %s291
      %s293 = smul.addr %s292, 4
      %s294 = scalar_lea.vmem %s0, %s293
      %s295 = smul.u32 2, %s20
      %s296 = smul.u32 6, %s22
      %s297 = smul.u32 96, %s22
      %p298 = scmp.lt.s32.totalorder %s297, 95
      %s299 = scalar_select %p298, %s297, 95
      %p300 = scmp.lt.s32.totalorder %s21, 0
      %s301 = scalar_select %p300, %s21, 0
      %s302 = sadd.s32 %s301, %s299
      %s303 = smul.addr %s302, 4
      %s304 = scalar_lea.vmem %s1, %s303
      %s305 = smul.u32 96, %s22
      %p306 = scmp.lt.s32.totalorder %s21, 0
      %s307 = scalar_select %p306, %s21, 0
      %s308 = scalar_lea.vmem %s2, %s307
      %s309 = smul.u32 2, %s20
      %p310 = scmp.lt.s32.totalorder %s309, 3
      %s311 = scalar_select %p310, %s309, 3
      %p312 = scmp.lt.s32.totalorder %s21, 0
      %s313 = scalar_select %p312, %s21, 0
      %s314 = sadd.s32 %s313, %s311
      %s315 = smul.addr %s314, 8
      %s316 = scalar_lea.vmem %s3, %s315
      %s317 = smul.u32 2, %s20
      %s318 = smul.u32 2, %s20
      %p319 = scmp.lt.s32.totalorder %s318, 3
      %s320 = scalar_select %p319, %s318, 3
      %p321 = scmp.lt.s32.totalorder %s21, 0
      %s322 = scalar_select %p321, %s21, 0
      %s323 = sadd.s32 %s322, %s320
      %s324 = smul.addr %s323, 8
      %s325 = scalar_lea.vmem %s4, %s324
      %s326 = smul.u32 2, %s20
      %p328 = scmp.eq.s32.totalorder %s22, 0
      // Predicated region
      $region37: #{vit_segmentation_forward.7} parent=35 // pred_check
        %p329 = pneg %p328
      $region38: #{vit_segmentation_forward.7} parent=35 // pred_check_branch
        %331 = sbr.rel (%p329) target = $region40
      $region39: #{vit_segmentation_forward.7} parent=35 // pred_region
        %332 = vst [vmem:[#allocation2] sm:$0xff] 0.0
        %333 = vst [vmem:[#allocation2 + $0x8] sm:$0xff] 0.0
      $region40: #{vit_segmentation_forward.7} parent=35 // pred_fallthru
        _
      %v334 = vld [vmem:[%s294] sm:$0xff]
      %v335 = vld [vmem:[%s294 + $0x8] sm:$0xff]
      %v336 = vld [vmem:[%s294 + $0x10] sm:$0xff]
      %v337 = vld [vmem:[%s294 + $0x18] sm:$0xff]
      %v338 = vld [vmem:[%s294 + $0x20] sm:$0xff]
      %v339 = vld [vmem:[%s294 + $0x28] sm:$0xff]
      %v340 = vld [vmem:[#allocation2] sm:$0xff]
      %v341 = vld [vmem:[#allocation2 + $0x8] sm:$0xff]
      %v342 = vld [vmem:[%s304] sm:$0xf]
      %v343 = vld [vmem:[%s304 + $0x4] sm:$0xf]
      %v344 = vld [vmem:[%s304 + $0x8] sm:$0xf]
      %v345 = vld [vmem:[%s304 + $0xc] sm:$0xf]
      %v346 = vld [vmem:[%s304 + $0x10] sm:$0xf]
      %v347 = vld [vmem:[%s304 + $0x14] sm:$0xf]
      %v348 = vld [vmem:[%s304 + $0x18] sm:$0xf]
      %v349 = vld [vmem:[%s304 + $0x1c] sm:$0xf]
      %v350 = vld [vmem:[%s304 + $0x20] sm:$0xf]
      %v351 = vld [vmem:[%s304 + $0x24] sm:$0xf]
      %v352 = vld [vmem:[%s304 + $0x28] sm:$0xf]
      %v353 = vld [vmem:[%s304 + $0x2c] sm:$0xf]
      %v354 = vld [vmem:[%s304 + $0x30] sm:$0xf]
      %v355 = vld [vmem:[%s304 + $0x34] sm:$0xf]
      %v356 = vld [vmem:[%s304 + $0x38] sm:$0xf]
      %v357 = vld [vmem:[%s304 + $0x3c] sm:$0xf]
      %v358 = vld [vmem:[%s304 + $0x40] sm:$0xf]
      %v359 = vld [vmem:[%s304 + $0x44] sm:$0xf]
      %v360 = vld [vmem:[%s304 + $0x48] sm:$0xf]
      %v361 = vld [vmem:[%s304 + $0x4c] sm:$0xf]
      %v362 = vld [vmem:[%s304 + $0x50] sm:$0xf]
      %v363 = vld [vmem:[%s304 + $0x54] sm:$0xf]
      %v364 = vld [vmem:[%s304 + $0x58] sm:$0xf]
      %v365 = vld [vmem:[%s304 + $0x5c] sm:$0xf]
      %v366 = vld [vmem:[%s304 + $0x60] sm:$0xf]
      %v367 = vld [vmem:[%s304 + $0x64] sm:$0xf]
      %v368 = vld [vmem:[%s304 + $0x68] sm:$0xf]
      %v369 = vld [vmem:[%s304 + $0x6c] sm:$0xf]
      %v370 = vld [vmem:[%s304 + $0x70] sm:$0xf]
      %v371 = vld [vmem:[%s304 + $0x74] sm:$0xf]
      %v372 = vld [vmem:[%s304 + $0x78] sm:$0xf]
      %v373 = vld [vmem:[%s304 + $0x7c] sm:$0xf]
      %v374 = vld [vmem:[%s304 + $0x80] sm:$0xf]
      %v375 = vld [vmem:[%s304 + $0x84] sm:$0xf]
      %v376 = vld [vmem:[%s304 + $0x88] sm:$0xf]
      %v377 = vld [vmem:[%s304 + $0x8c] sm:$0xf]
      %v378 = vld [vmem:[%s304 + $0x90] sm:$0xf]
      %v379 = vld [vmem:[%s304 + $0x94] sm:$0xf]
      %v380 = vld [vmem:[%s304 + $0x98] sm:$0xf]
      %v381 = vld [vmem:[%s304 + $0x9c] sm:$0xf]
      %v382 = vld [vmem:[%s304 + $0xa0] sm:$0xf]
      %v383 = vld [vmem:[%s304 + $0xa4] sm:$0xf]
      %v384 = vld [vmem:[%s304 + $0xa8] sm:$0xf]
      %v385 = vld [vmem:[%s304 + $0xac] sm:$0xf]
      %v386 = vld [vmem:[%s304 + $0xb0] sm:$0xf]
      %v387 = vld [vmem:[%s304 + $0xb4] sm:$0xf]
      %v388 = vld [vmem:[%s304 + $0xb8] sm:$0xf]
      %v389 = vld [vmem:[%s304 + $0xbc] sm:$0xf]
      %v390 = vld [vmem:[%s304 + $0xc0] sm:$0xf]
      %v391 = vld [vmem:[%s304 + $0xc4] sm:$0xf]
      %v392 = vld [vmem:[%s304 + $0xc8] sm:$0xf]
      %v393 = vld [vmem:[%s304 + $0xcc] sm:$0xf]
      %v394 = vld [vmem:[%s304 + $0xd0] sm:$0xf]
      %v395 = vld [vmem:[%s304 + $0xd4] sm:$0xf]
      %v396 = vld [vmem:[%s304 + $0xd8] sm:$0xf]
      %v397 = vld [vmem:[%s304 + $0xdc] sm:$0xf]
      %v398 = vld [vmem:[%s304 + $0xe0] sm:$0xf]
      %v399 = vld [vmem:[%s304 + $0xe4] sm:$0xf]
      %v400 = vld [vmem:[%s304 + $0xe8] sm:$0xf]
      %v401 = vld [vmem:[%s304 + $0xec] sm:$0xf]
      %v402 = vld [vmem:[%s304 + $0xf0] sm:$0xf]
      %v403 = vld [vmem:[%s304 + $0xf4] sm:$0xf]
      %v404 = vld [vmem:[%s304 + $0xf8] sm:$0xf]
      %v405 = vld [vmem:[%s304 + $0xfc] sm:$0xf]
      %v406 = vld [vmem:[%s304 + $0x100] sm:$0xf]
      %v407 = vld [vmem:[%s304 + $0x104] sm:$0xf]
      %v408 = vld [vmem:[%s304 + $0x108] sm:$0xf]
      %v409 = vld [vmem:[%s304 + $0x10c] sm:$0xf]
      %v410 = vld [vmem:[%s304 + $0x110] sm:$0xf]
      %v411 = vld [vmem:[%s304 + $0x114] sm:$0xf]
      %v412 = vld [vmem:[%s304 + $0x118] sm:$0xf]
      %v413 = vld [vmem:[%s304 + $0x11c] sm:$0xf]
      %v414 = vld [vmem:[%s304 + $0x120] sm:$0xf]
      %v415 = vld [vmem:[%s304 + $0x124] sm:$0xf]
      %v416 = vld [vmem:[%s304 + $0x128] sm:$0xf]
      %v417 = vld [vmem:[%s304 + $0x12c] sm:$0xf]
      %v418 = vld [vmem:[%s304 + $0x130] sm:$0xf]
      %v419 = vld [vmem:[%s304 + $0x134] sm:$0xf]
      %v420 = vld [vmem:[%s304 + $0x138] sm:$0xf]
      %v421 = vld [vmem:[%s304 + $0x13c] sm:$0xf]
      %v422 = vld [vmem:[%s304 + $0x140] sm:$0xf]
      %v423 = vld [vmem:[%s304 + $0x144] sm:$0xf]
      %v424 = vld [vmem:[%s304 + $0x148] sm:$0xf]
      %v425 = vld [vmem:[%s304 + $0x14c] sm:$0xf]
      %v426 = vld [vmem:[%s304 + $0x150] sm:$0xf]
      %v427 = vld [vmem:[%s304 + $0x154] sm:$0xf]
      %v428 = vld [vmem:[%s304 + $0x158] sm:$0xf]
      %v429 = vld [vmem:[%s304 + $0x15c] sm:$0xf]
      %v430 = vld [vmem:[%s304 + $0x160] sm:$0xf]
      %v431 = vld [vmem:[%s304 + $0x164] sm:$0xf]
      %v432 = vld [vmem:[%s304 + $0x168] sm:$0xf]
      %v433 = vld [vmem:[%s304 + $0x16c] sm:$0xf]
      %v434 = vld [vmem:[%s304 + $0x170] sm:$0xf]
      %v435 = vld [vmem:[%s304 + $0x174] sm:$0xf]
      %v436 = vld [vmem:[%s304 + $0x178] sm:$0xf]
      %v437 = vld [vmem:[%s304 + $0x17c] sm:$0xf]
      %v444 = vunpack.c.l.b16 %v334
      %v445 = vunpack.c.h.b16 %v334
      %v446 = vunpack.c.l.b16 %v335
      %v447 = vunpack.c.h.b16 %v335
      %v448 = vunpack.c.l.b16 %v336
      %v449 = vunpack.c.h.b16 %v336
      %v450 = vunpack.c.l.b16 %v337
      %v451 = vunpack.c.h.b16 %v337
      %v452 = vunpack.c.l.b16 %v338
      %v453 = vunpack.c.h.b16 %v338
      %v454 = vunpack.c.l.b16 %v339
      %v455 = vunpack.c.h.b16 %v339
      %v456 = vpack.c.b16 %v450, %v444
      %v457 = vpack.c.b16 %v451, %v445
      %v458 = vpack.c.b16 %v452, %v446
      %v459 = vpack.c.b16 %v453, %v447
      %v460 = vpack.c.b16 %v454, %v448
      %v461 = vpack.c.b16 %v455, %v449
      %v564 = vunpack.c.l.b16 %v342
      %v565 = vunpack.c.l.b16 %v343
      %v566 = vunpack.c.l.b16 %v344
      %v567 = vunpack.c.l.b16 %v345
      %v568 = vunpack.c.l.b16 %v346
      %v569 = vunpack.c.l.b16 %v347
      %v570 = vunpack.c.l.b16 %v348
      %v571 = vunpack.c.l.b16 %v349
      %v572 = vunpack.c.l.b16 %v350
      %v573 = vunpack.c.l.b16 %v351
      %v574 = vunpack.c.l.b16 %v352
      %v575 = vunpack.c.l.b16 %v353
      %v576 = vunpack.c.l.b16 %v354
      %v577 = vunpack.c.l.b16 %v355
      %v578 = vunpack.c.l.b16 %v356
      %v579 = vunpack.c.l.b16 %v357
      %v580 = vunpack.c.l.b16 %v358
      %v581 = vunpack.c.l.b16 %v359
      %v582 = vunpack.c.l.b16 %v360
      %v583 = vunpack.c.l.b16 %v361
      %v584 = vunpack.c.l.b16 %v362
      %v585 = vunpack.c.l.b16 %v363
      %v586 = vunpack.c.l.b16 %v364
      %v587 = vunpack.c.l.b16 %v365
      %v588 = vunpack.c.l.b16 %v366
      %v589 = vunpack.c.l.b16 %v367
      %v590 = vunpack.c.l.b16 %v368
      %v591 = vunpack.c.l.b16 %v369
      %v592 = vunpack.c.l.b16 %v370
      %v593 = vunpack.c.l.b16 %v371
      %v594 = vunpack.c.l.b16 %v372
      %v595 = vunpack.c.l.b16 %v373
      %v596 = vunpack.c.l.b16 %v374
      %v597 = vunpack.c.l.b16 %v375
      %v598 = vunpack.c.l.b16 %v376
      %v599 = vunpack.c.l.b16 %v377
      %v600 = vunpack.c.l.b16 %v378
      %v601 = vunpack.c.l.b16 %v379
      %v602 = vunpack.c.l.b16 %v380
      %v603 = vunpack.c.l.b16 %v381
      %v604 = vunpack.c.l.b16 %v382
      %v605 = vunpack.c.l.b16 %v383
      %v606 = vunpack.c.l.b16 %v384
      %v607 = vunpack.c.l.b16 %v385
      %v608 = vunpack.c.l.b16 %v386
      %v609 = vunpack.c.l.b16 %v387
      %v610 = vunpack.c.l.b16 %v388
      %v611 = vunpack.c.l.b16 %v389
      %v612 = vunpack.c.l.b16 %v390
      %v613 = vunpack.c.l.b16 %v391
      %v614 = vunpack.c.l.b16 %v392
      %v615 = vunpack.c.l.b16 %v393
      %v616 = vunpack.c.l.b16 %v394
      %v617 = vunpack.c.l.b16 %v395
      %v618 = vunpack.c.l.b16 %v396
      %v619 = vunpack.c.l.b16 %v397
      %v620 = vunpack.c.l.b16 %v398
      %v621 = vunpack.c.l.b16 %v399
      %v622 = vunpack.c.l.b16 %v400
      %v623 = vunpack.c.l.b16 %v401
      %v624 = vunpack.c.l.b16 %v402
      %v625 = vunpack.c.l.b16 %v403
      %v626 = vunpack.c.l.b16 %v404
      %v627 = vunpack.c.l.b16 %v405
      %v628 = vunpack.c.l.b16 %v406
      %v629 = vunpack.c.l.b16 %v407
      %v630 = vunpack.c.l.b16 %v408
      %v631 = vunpack.c.l.b16 %v409
      %v632 = vunpack.c.l.b16 %v410
      %v633 = vunpack.c.l.b16 %v411
      %v634 = vunpack.c.l.b16 %v412
      %v635 = vunpack.c.l.b16 %v413
      %v636 = vunpack.c.l.b16 %v414
      %v637 = vunpack.c.l.b16 %v415
      %v638 = vunpack.c.l.b16 %v416
      %v639 = vunpack.c.l.b16 %v417
      %v640 = vunpack.c.l.b16 %v418
      %v641 = vunpack.c.l.b16 %v419
      %v642 = vunpack.c.l.b16 %v420
      %v643 = vunpack.c.l.b16 %v421
      %v644 = vunpack.c.l.b16 %v422
      %v645 = vunpack.c.l.b16 %v423
      %v646 = vunpack.c.l.b16 %v424
      %v647 = vunpack.c.l.b16 %v425
      %v648 = vunpack.c.l.b16 %v426
      %v649 = vunpack.c.l.b16 %v427
      %v650 = vunpack.c.l.b16 %v428
      %v651 = vunpack.c.l.b16 %v429
      %v652 = vunpack.c.l.b16 %v430
      %v653 = vunpack.c.l.b16 %v431
      %v654 = vunpack.c.l.b16 %v432
      %v655 = vunpack.c.l.b16 %v433
      %v656 = vunpack.c.l.b16 %v434
      %v657 = vunpack.c.l.b16 %v435
      %v658 = vunpack.c.l.b16 %v436
      %v659 = vunpack.c.l.b16 %v437
      %v660 = vpack.c.b16 %v565, %v564
      %v661 = vpack.c.b16 %v567, %v566
      %v662 = vpack.c.b16 %v569, %v568
      %v663 = vpack.c.b16 %v571, %v570
      %v664 = vpack.c.b16 %v573, %v572
      %v665 = vpack.c.b16 %v575, %v574
      %v666 = vpack.c.b16 %v577, %v576
      %v667 = vpack.c.b16 %v579, %v578
      %v668 = vpack.c.b16 %v581, %v580
      %v669 = vpack.c.b16 %v583, %v582
      %v670 = vpack.c.b16 %v585, %v584
      %v671 = vpack.c.b16 %v587, %v586
      %v672 = vpack.c.b16 %v589, %v588
      %v673 = vpack.c.b16 %v591, %v590
      %v674 = vpack.c.b16 %v593, %v592
      %v675 = vpack.c.b16 %v595, %v594
      %v676 = vpack.c.b16 %v597, %v596
      %v677 = vpack.c.b16 %v599, %v598
      %v678 = vpack.c.b16 %v601, %v600
      %v679 = vpack.c.b16 %v603, %v602
      %v680 = vpack.c.b16 %v605, %v604
      %v681 = vpack.c.b16 %v607, %v606
      %v682 = vpack.c.b16 %v609, %v608
      %v683 = vpack.c.b16 %v611, %v610
      %v684 = vpack.c.b16 %v613, %v612
      %v685 = vpack.c.b16 %v615, %v614
      %v686 = vpack.c.b16 %v617, %v616
      %v687 = vpack.c.b16 %v619, %v618
      %v688 = vpack.c.b16 %v621, %v620
      %v689 = vpack.c.b16 %v623, %v622
      %v690 = vpack.c.b16 %v625, %v624
      %v691 = vpack.c.b16 %v627, %v626
      %v692 = vpack.c.b16 %v629, %v628
      %v693 = vpack.c.b16 %v631, %v630
      %v694 = vpack.c.b16 %v633, %v632
      %v695 = vpack.c.b16 %v635, %v634
      %v696 = vpack.c.b16 %v637, %v636
      %v697 = vpack.c.b16 %v639, %v638
      %v698 = vpack.c.b16 %v641, %v640
      %v699 = vpack.c.b16 %v643, %v642
      %v700 = vpack.c.b16 %v645, %v644
      %v701 = vpack.c.b16 %v647, %v646
      %v702 = vpack.c.b16 %v649, %v648
      %v703 = vpack.c.b16 %v651, %v650
      %v704 = vpack.c.b16 %v653, %v652
      %v705 = vpack.c.b16 %v655, %v654
      %v706 = vpack.c.b16 %v657, %v656
      %v707 = vpack.c.b16 %v659, %v658
      %756 = vmatprep.subr.bf16.mxu0 0
      %757 = vmatpush1.bf16.msra.mxu0 %v667
      %758 = vmatprep.subr.bf16.mxu0 0
      %759 = vmatpush1.bf16.msra.mxu0 %v666
      %760 = vmatprep.subr.bf16.mxu0 0
      %761 = vmatpush1.bf16.msra.mxu0 %v665
      %762 = vmatprep.subr.bf16.mxu0 0
      %763 = vmatpush1.bf16.msra.mxu0 %v664
      %764 = vmatprep.subr.bf16.mxu0 0
      %765 = vmatpush1.bf16.msra.mxu0 %v663
      %766 = vmatprep.subr.bf16.mxu0 0
      %767 = vmatpush1.bf16.msra.mxu0 %v662
      %768 = vmatprep.subr.bf16.mxu0 0
      %769 = vmatpush1.bf16.msra.mxu0 %v661
      %770 = vmatprep.subr.bf16.mxu0 0
      %771 = vmatpush1.bf16.msra.mxu0 %v660
      %772 = vmatprep.subr.bf16.mxu0 0
      %773 = vmatpush2.bf16.msra.mxu0 %v675
      %774 = vmatprep.subr.bf16.mxu0 0
      %775 = vmatpush2.bf16.msra.mxu0 %v674
      %776 = vmatprep.subr.bf16.mxu0 0
      %777 = vmatpush2.bf16.msra.mxu0 %v673
      %778 = vmatprep.subr.bf16.mxu0 0
      %779 = vmatpush2.bf16.msra.mxu0 %v672
      %780 = vmatprep.subr.bf16.mxu0 0
      %781 = vmatpush2.bf16.msra.mxu0 %v671
      %782 = vmatprep.subr.bf16.mxu0 0
      %783 = vmatpush2.bf16.msra.mxu0 %v670
      %784 = vmatprep.subr.bf16.mxu0 0
      %785 = vmatpush2.bf16.msra.mxu0 %v669
      %786 = vmatprep.subr.bf16.mxu0 0
      %787 = vmatpush2.bf16.msra.mxu0 %v668
      %788 = vmatprep.mubr.bf16.mxu0 %v457
      %789 = vmatmul.mubr.bf16.gmra.mxu0 %v456
      %v790 = vpop.f32.mrf.mxu0
      %v791 = vadd.f32 0.0, %v790
      %v792 = vpop.f32.mrf.mxu0
      %v793 = vpop.f32.mrf.mxu0
      %v794 = vadd.f32 0.0, %v793
      %v795 = vpop.f32.mrf.mxu0
      %796 = vdwg.mxu0
      %797 = vmatprep.subr.bf16.mxu0 0
      %798 = vmatpush1.bf16.msra.mxu0 %v683
      %799 = vmatprep.subr.bf16.mxu0 0
      %800 = vmatpush1.bf16.msra.mxu0 %v682
      %801 = vmatprep.subr.bf16.mxu0 0
      %802 = vmatpush1.bf16.msra.mxu0 %v681
      %803 = vmatprep.subr.bf16.mxu0 0
      %804 = vmatpush1.bf16.msra.mxu0 %v680
      %805 = vmatprep.subr.bf16.mxu0 0
      %806 = vmatpush1.bf16.msra.mxu0 %v679
      %807 = vmatprep.subr.bf16.mxu0 0
      %808 = vmatpush1.bf16.msra.mxu0 %v678
      %809 = vmatprep.subr.bf16.mxu0 0
      %810 = vmatpush1.bf16.msra.mxu0 %v677
      %811 = vmatprep.subr.bf16.mxu0 0
      %812 = vmatpush1.bf16.msra.mxu0 %v676
      %813 = vmatprep.subr.bf16.mxu0 0
      %814 = vmatpush2.bf16.msra.mxu0 %v691
      %815 = vmatprep.subr.bf16.mxu0 0
      %816 = vmatpush2.bf16.msra.mxu0 %v690
      %817 = vmatprep.subr.bf16.mxu0 0
      %818 = vmatpush2.bf16.msra.mxu0 %v689
      %819 = vmatprep.subr.bf16.mxu0 0
      %820 = vmatpush2.bf16.msra.mxu0 %v688
      %821 = vmatprep.subr.bf16.mxu0 0
      %822 = vmatpush2.bf16.msra.mxu0 %v687
      %823 = vmatprep.subr.bf16.mxu0 0
      %824 = vmatpush2.bf16.msra.mxu0 %v686
      %825 = vmatprep.subr.bf16.mxu0 0
      %826 = vmatpush2.bf16.msra.mxu0 %v685
      %827 = vmatprep.subr.bf16.mxu0 0
      %828 = vmatpush2.bf16.msra.mxu0 %v684
      %829 = vmatprep.mubr.bf16.mxu0 %v459
      %830 = vmatmul.mubr.bf16.gmra.mxu0 %v458
      %v831 = vpop.f32.mrf.mxu0
      %v832 = vadd.f32 %v791, %v831
      %v833 = vpop.f32.mrf.mxu0
      %v834 = vpop.f32.mrf.mxu0
      %v835 = vadd.f32 %v794, %v834
      %v836 = vpop.f32.mrf.mxu0
      %837 = vdwg.mxu0
      %838 = vmatprep.subr.bf16.mxu0 0
      %839 = vmatpush1.bf16.msra.mxu0 %v699
      %840 = vmatprep.subr.bf16.mxu0 0
      %841 = vmatpush1.bf16.msra.mxu0 %v698
      %842 = vmatprep.subr.bf16.mxu0 0
      %843 = vmatpush1.bf16.msra.mxu0 %v697
      %844 = vmatprep.subr.bf16.mxu0 0
      %845 = vmatpush1.bf16.msra.mxu0 %v696
      %846 = vmatprep.subr.bf16.mxu0 0
      %847 = vmatpush1.bf16.msra.mxu0 %v695
      %848 = vmatprep.subr.bf16.mxu0 0
      %849 = vmatpush1.bf16.msra.mxu0 %v694
      %850 = vmatprep.subr.bf16.mxu0 0
      %851 = vmatpush1.bf16.msra.mxu0 %v693
      %852 = vmatprep.subr.bf16.mxu0 0
      %853 = vmatpush1.bf16.msra.mxu0 %v692
      %854 = vmatprep.subr.bf16.mxu0 0
      %855 = vmatpush2.bf16.msra.mxu0 %v707
      %856 = vmatprep.subr.bf16.mxu0 0
      %857 = vmatpush2.bf16.msra.mxu0 %v706
      %858 = vmatprep.subr.bf16.mxu0 0
      %859 = vmatpush2.bf16.msra.mxu0 %v705
      %860 = vmatprep.subr.bf16.mxu0 0
      %861 = vmatpush2.bf16.msra.mxu0 %v704
      %862 = vmatprep.subr.bf16.mxu0 0
      %863 = vmatpush2.bf16.msra.mxu0 %v703
      %864 = vmatprep.subr.bf16.mxu0 0
      %865 = vmatpush2.bf16.msra.mxu0 %v702
      %866 = vmatprep.subr.bf16.mxu0 0
      %867 = vmatpush2.bf16.msra.mxu0 %v701
      %868 = vmatprep.subr.bf16.mxu0 0
      %869 = vmatpush2.bf16.msra.mxu0 %v700
      %870 = vmatprep.mubr.bf16.mxu0 %v461
      %871 = vmatmul.mubr.bf16.gmra.mxu0 %v460
      %v872 = vpop.f32.mrf.mxu0
      %v873 = vadd.f32 %v832, %v872
      %v874 = vpop.f32.mrf.mxu0
      %v875 = vpop.f32.mrf.mxu0
      %v876 = vadd.f32 %v835, %v875
      %v877 = vpop.f32.mrf.mxu0
      %878 = vdwg.mxu0
      %v879 = vadd.f32 %v340, %v873
      %v880 = vadd.f32 %v341, %v876
      %881 = vst [vmem:[#allocation2] sm:$0xff] %v879
      %882 = vst [vmem:[#allocation2 + $0x8] sm:$0xff] %v880
      // Predicated region
      $region41: #{vit_segmentation_forward.7} parent=35 // pred_check
        %p883 = pneg %p328
      $region42: #{vit_segmentation_forward.7} parent=35 // pred_check_branch
        %885 = sbr.rel (%p883) target = $region44
      $region43: #{vit_segmentation_forward.7} parent=35 // pred_region
        %v886 = vld [vmem:[#allocation2] sm:$0xff]
        %v887 = vld [vmem:[#allocation2 + $0x8] sm:$0xff]
        %v888 = vld [vmem:[%s308] sm:$0x1]
        %v890 = vlaneseq
        %v891 = vshrl.u32 %v890, 7
        %v892 = vsub.s32 0, %v891
        %v893 = vrot.slane %v888, %v892
        %v895 = vadd.f32 %v886, %v893
        %v896 = vadd.f32 %v887, %v893
        %v897 = vld [vmem:[%s316] sm:$0xff]
        %v898 = vld [vmem:[%s316 + $0x8] sm:$0xff]
        %v899 = vadd.f32 %v895, %v897
        %v900 = vadd.f32 %v896, %v898
        %901 = vst [vmem:[%s325] sm:$0xff] %v899
        %902 = vst [vmem:[%s325 + $0x8] sm:$0xff] %v900
      $region44: #{vit_segmentation_forward.7} parent=35 // pred_fallthru
        _
      %s903 = smul.u32 2, %s20
      %p904 = scmp.lt.s32.totalorder %s903, 3
      %s905 = scalar_select %p904, %s903, 3
      %p906 = scmp.lt.s32.totalorder %s21, 0
      %s907 = scalar_select %p906, %s21, 0
      %s908 = sadd.s32 %s907, %s905
      %s909 = smul.addr %s908, 8
      %s910 = scalar_lea.vmem %s4, %s909
      // Predicated region
      $region45: #{vit_segmentation_forward.7} parent=35 // pred_check
        %p911 = pneg %p164
      $region46: #{vit_segmentation_forward.7} parent=35 // pred_check_branch
        %913 = sbr.rel (%p911) target = $region48
      $region47: #{vit_segmentation_forward.7} parent=35 // pred_region
        %s914 = smul.u32 2, %s20
      $region48: #{vit_segmentation_forward.7} parent=35 // pred_fallthru
        _
    $region36: #{vit_segmentation_forward.7} parent=5 // pred_fallthru
      _
    %p915 = scmp.le.s32.totalorder 2, %s10
    // Predicated region
    $region49: #{vit_segmentation_forward.7} parent=5 // pred_check
      %p916 = pneg %p915
    $region50: #{vit_segmentation_forward.7} parent=5 // pred_check_branch
      %918 = sbr.rel (%p916) target = $region52
    $region51: #{vit_segmentation_forward.7} parent=5 // pred_region
      %s919 = ssub.s32 %s10, 2
      // Predicated region
      $region53: #{vit_segmentation_forward.7} parent=51 // pred_check
        %p920 = pneg %p170
      $region54: #{vit_segmentation_forward.7} parent=51 // pred_check_branch
        %922 = sbr.rel (%p920) target = $region56
      $region55: #{vit_segmentation_forward.7} parent=51 // pred_region
        %s923 = smul.u32 2, %s23
        %p924 = scmp.lt.s32.totalorder %s923, 3
        %s925 = scalar_select %p924, %s923, 3
        %p926 = scmp.lt.s32.totalorder %s24, 0
        %s927 = scalar_select %p926, %s24, 0
        %s928 = sadd.s32 %s927, %s925
        %s929 = smul.addr %s928, 8
        %s930 = scalar_lea.vmem %s4, %s929
      $region56: #{vit_segmentation_forward.7} parent=51 // pred_fallthru
        _
    $region52: #{vit_segmentation_forward.7} parent=5 // pred_fallthru
      _
  $region6: #{vit_segmentation_forward.7} parent=0 // loop_footer
    %s14 = sadd.s32 1, %s10
  $region7: #{vit_segmentation_forward.7} parent=0 // loop_footer_branch
    %9 = sbr.rel target = $region3
  $region8: #{vit_segmentation_forward.7} parent=0 // loop_exit
    _

// kernel: vit_segmentation_forward.11
$region0: #{vit_segmentation_forward.11}
  #allocation0 [shape = 'u32[]', space=smem, size = 0x4, offset = 0x4, fixed_abs, tag = 'smem constant byte address 0x4 - core index']
  #allocation1 [shape = 'u32[144,128]{1,0:T(1,128)}', space=vmem, size = 0x12000, scoped, tag = 'internal scratch']
  #allocation2 [shape = 'f32[64,128]{1,0:T(8,128)}', space=vmem, size = 0x8000, scoped, tag = 'scratch operand']
  %s0 = inlined_call_operand.vmem [shape: bf16[128,128], index: 0, kind: input, shape index: {}]
  %s1 = inlined_call_operand.vmem [shape: bf16[128,128], index: 1, kind: input, shape index: {}]
  %s2 = inlined_call_operand.vmem [shape: f32[1,128], index: 2, kind: input, shape index: {}]
  %s3 = inlined_call_operand.vmem [shape: bf16[128,128], index: 3, kind: output, shape index: {}]
  %s4 = sld [smem:[#allocation0]]
  $region53: #{vit_segmentation_forward.11} parent=0
    _
  %s6 = ssub.s32 1, %s4
  %s7 = scalar_select 0, %s6, %s4
  loop: start=0, step=1, limit=4
  $region2: #{vit_segmentation_forward.11} parent=0 // loop_pre_header
    _
  $region3: #{vit_segmentation_forward.11} parent=0 // loop_header
    %s9 = sphi 0, %s13
    %p10 = scmp.ge.s32.totalorder %s9, 4
    %s16 = sphi 0, %s35
    %s17 = sphi 0, %s31
    %s18 = sphi 0, %s27
    %s19 = sphi 0, %s16
    %s20 = sphi 0, %s17
    %s21 = sphi 0, %s18
    %s22 = sphi 0, %s19
    %s23 = sphi 0, %s20
    %s24 = sphi 0, %s21
    %s40 = sphi 0, %s42
    %s43 = sphi 0, %s40
    %s44 = sphi 0, %s43
    %s60 = sphi 0, %s44
    %s68 = sphi 0, %s70
    %s71 = sphi 0, %s68
    %s72 = sphi 0, %s71
    %s88 = sphi 0, %s72
    %s94 = sphi 0, %s96
    %s97 = sphi 0, %s94
    %s98 = sphi 0, %s97
    %s114 = sphi 0, %s98
    %s122 = sphi 0, %s124
    %s125 = sphi 0, %s122
    %s126 = sphi 0, %s125
    %s142 = sphi 0, %s126
  $region4: #{vit_segmentation_forward.11} parent=0 // loop_header_branch
    %12 = sbr.rel (%p10) target = $region8
  $region5: #{vit_segmentation_forward.11} parent=0 // loop_body
    %s14 = ssub.s32 %s9, 1
    %s15 = ssub.s32 %s9, 2
    %s25 = sadd.s32 1, %s18
    %p26 = scmp.ge.s32.totalorder %s25, 1
    %s27 = scalar_select %p26, 0, %s25
    %s28 = sadd.s32 1, %s17
    %s29 = scalar_select %p26, %s28, %s17
    %p30 = scmp.ge.s32.totalorder %s29, 1
    %s31 = scalar_select %p30, 0, %s29
    %s32 = sadd.s32 1, %s16
    %s33 = scalar_select %p30, %s32, %s16
    %p34 = scmp.ge.s32.totalorder %s33, 2
    %s35 = scalar_select %p34, 0, %s33
    %s36 = ssub.s32 %s16, %s35
    %s37 = ssub.s32 %s18, %s27
    %s38 = sor.u32 %s36, %s37
    %p39 = scmp.eq.s32.totalorder %s38, 0
    %s41 = sadd.s32 %s40, 1
    %s42 = scalar_select %p39, %s40, %s41
    %p45 = pneg %p39
    %p46 = scmp.eq.s32.totalorder %s9, 1
    %p47 = por %p45, %p46
    %p48 = scmp.ne.s32.totalorder %s40, %s43
    %p49 = scmp.eq.s32.totalorder %s9, 0
    %p50 = por %p48, %p49
    %p51 = scmp.ne.s32.totalorder %s40, %s43
    %p52 = scmp.eq.s32.totalorder %s14, 1
    %p53 = por %p51, %p52
    %p54 = scmp.ne.s32.totalorder %s43, %s44
    %p55 = scmp.eq.s32.totalorder %s14, 0
    %p56 = por %p54, %p55
    %p57 = scmp.ne.s32.totalorder %s43, %s44
    %p58 = scmp.eq.s32.totalorder %s15, 1
    %p59 = por %p57, %p58
    %p61 = scmp.ne.s32.totalorder %s44, %s60
    %p62 = scmp.eq.s32.totalorder %s15, 0
    %p63 = por %p61, %p62
    %s64 = ssub.s32 %s18, %s27
    %s65 = ssub.s32 %s17, %s31
    %s66 = sor.u32 %s64, %s65
    %p67 = scmp.eq.s32.totalorder %s66, 0
    %s69 = sadd.s32 %s68, 1
    %s70 = scalar_select %p67, %s68, %s69
    %p73 = pneg %p67
    %p74 = scmp.eq.s32.totalorder %s9, 1
    %p75 = por %p73, %p74
    %p76 = scmp.ne.s32.totalorder %s68, %s71
    %p77 = scmp.eq.s32.totalorder %s9, 0
    %p78 = por %p76, %p77
    %p79 = scmp.ne.s32.totalorder %s68, %s71
    %p80 = scmp.eq.s32.totalorder %s14, 1
    %p81 = por %p79, %p80
    %p82 = scmp.ne.s32.totalorder %s71, %s72
    %p83 = scmp.eq.s32.totalorder %s14, 0
    %p84 = por %p82, %p83
    %p85 = scmp.ne.s32.totalorder %s71, %s72
    %p86 = scmp.eq.s32.totalorder %s15, 1
    %p87 = por %p85, %p86
    %p89 = scmp.ne.s32.totalorder %s72, %s88
    %p90 = scmp.eq.s32.totalorder %s15, 0
    %p91 = por %p89, %p90
    %s92 = ssub.s32 %s17, %s31
    %p93 = scmp.eq.s32.totalorder %s92, 0
    %s95 = sadd.s32 %s94, 1
    %s96 = scalar_select %p93, %s94, %s95
    %p99 = pneg %p93
    %p100 = scmp.eq.s32.totalorder %s9, 1
    %p101 = por %p99, %p100
    %p102 = scmp.ne.s32.totalorder %s94, %s97
    %p103 = scmp.eq.s32.totalorder %s9, 0
    %p104 = por %p102, %p103
    %p105 = scmp.ne.s32.totalorder %s94, %s97
    %p106 = scmp.eq.s32.totalorder %s14, 1
    %p107 = por %p105, %p106
    %p108 = scmp.ne.s32.totalorder %s97, %s98
    %p109 = scmp.eq.s32.totalorder %s14, 0
    %p110 = por %p108, %p109
    %p111 = scmp.ne.s32.totalorder %s97, %s98
    %p112 = scmp.eq.s32.totalorder %s15, 1
    %p113 = por %p111, %p112
    %p115 = scmp.ne.s32.totalorder %s98, %s114
    %p116 = scmp.eq.s32.totalorder %s15, 0
    %p117 = por %p115, %p116
    %s118 = ssub.s32 %s16, %s35
    %s119 = ssub.s32 %s17, %s31
    %s120 = sor.u32 %s118, %s119
    %p121 = scmp.eq.s32.totalorder %s120, 0
    %s123 = sadd.s32 %s122, 1
    %s124 = scalar_select %p121, %s122, %s123
    %p127 = pneg %p121
    %p128 = scmp.eq.s32.totalorder %s9, 1
    %p129 = por %p127, %p128
    %p130 = scmp.ne.s32.totalorder %s122, %s125
    %p131 = scmp.eq.s32.totalorder %s9, 0
    %p132 = por %p130, %p131
    %p133 = scmp.ne.s32.totalorder %s122, %s125
    %p134 = scmp.eq.s32.totalorder %s14, 1
    %p135 = por %p133, %p134
    %p136 = scmp.ne.s32.totalorder %s125, %s126
    %p137 = scmp.eq.s32.totalorder %s14, 0
    %p138 = por %p136, %p137
    %p139 = scmp.ne.s32.totalorder %s125, %s126
    %p140 = scmp.eq.s32.totalorder %s15, 1
    %p141 = por %p139, %p140
    %p143 = scmp.ne.s32.totalorder %s126, %s142
    %p144 = scmp.eq.s32.totalorder %s15, 0
    %p145 = por %p143, %p144
    %p146 = scmp.le.s32.totalorder 1, %s9
    %p147 = scmp.lt.s32.totalorder %s9, 3
    %p148 = pnand %p146, %p147
    %p149 = pneg %p148
    // Predicated region
    $region9: #{vit_segmentation_forward.11} parent=5 // pred_check
      _
    $region10: #{vit_segmentation_forward.11} parent=5 // pred_check_branch
      %151 = sbr.rel (%p148) target = $region12
    $region11: #{vit_segmentation_forward.11} parent=5 // pred_region
      %s152 = ssub.s32 %s9, 1
      // Predicated region
      $region13: #{vit_segmentation_forward.11} parent=11 // pred_check
        %p153 = pneg %p84
      $region14: #{vit_segmentation_forward.11} parent=11 // pred_check_branch
        %155 = sbr.rel (%p153) target = $region16
      $region15: #{vit_segmentation_forward.11} parent=11 // pred_region
        %s156 = smul.u32 16, %s21
        %p157 = scmp.lt.s32.totalorder %s156, 15
        %s158 = scalar_select %p157, %s156, 15
        %p159 = scmp.lt.s32.totalorder %s20, 0
        %s160 = scalar_select %p159, %s20, 0
        %s161 = sadd.s32 %s160, %s158
        %s162 = smul.addr %s161, 4
        %s163 = scalar_lea.vmem %s1, %s162
        %s164 = smul.u32 16, %s21
      $region16: #{vit_segmentation_forward.11} parent=11 // pred_fallthru
        _
      // Predicated region
      $region17: #{vit_segmentation_forward.11} parent=11 // pred_check
        %p165 = pneg %p110
      $region18: #{vit_segmentation_forward.11} parent=11 // pred_check_branch
        %167 = sbr.rel (%p165) target = $region20
      $region19: #{vit_segmentation_forward.11} parent=11 // pred_region
        %p168 = scmp.lt.s32.totalorder %s20, 0
        %s169 = scalar_select %p168, %s20, 0
        %s170 = scalar_lea.vmem %s2, %s169
      $region20: #{vit_segmentation_forward.11} parent=11 // pred_fallthru
        _
    $region12: #{vit_segmentation_forward.11} parent=5 // pred_fallthru
      _
    %p171 = scmp.lt.s32.totalorder %s9, 2
    // Predicated region
    $region21: #{vit_segmentation_forward.11} parent=5 // pred_check
      %p172 = pneg %p171
    $region22: #{vit_segmentation_forward.11} parent=5 // pred_check_branch
      %174 = sbr.rel (%p172) target = $region24
    $region23: #{vit_segmentation_forward.11} parent=5 // pred_region
      // Predicated region
      $region25: #{vit_segmentation_forward.11} parent=23 // pred_check
        %p175 = pneg %p50
      $region26: #{vit_segmentation_forward.11} parent=23 // pred_check_branch
        %177 = sbr.rel (%p175) target = $region28
      $region27: #{vit_segmentation_forward.11} parent=23 // pred_region
        %s178 = smul.u32 8, %s16
        %p179 = scmp.lt.s32.totalorder %s178, 15
        %s180 = scalar_select %p179, %s178, 15
        %p181 = scmp.lt.s32.totalorder %s18, 0
        %s182 = scalar_select %p181, %s18, 0
        %s183 = sadd.s32 %s182, %s180
        %s184 = smul.addr %s183, 4
        %s185 = scalar_lea.vmem %s0, %s184
        %s186 = smul.u32 8, %s16
      $region28: #{vit_segmentation_forward.11} parent=23 // pred_fallthru
        _
    $region24: #{vit_segmentation_forward.11} parent=5 // pred_fallthru
      _
    %p187 = scmp.le.s32.totalorder 1, %s9
    %p188 = scmp.lt.s32.totalorder %s9, 3
    %p189 = pnand %p187, %p188
    %p190 = pneg %p189
    // Predicated region
    $region29: #{vit_segmentation_forward.11} parent=5 // pred_check
      _
    $region30: #{vit_segmentation_forward.11} parent=5 // pred_check_branch
      %192 = sbr.rel (%p189) target = $region32
    $region31: #{vit_segmentation_forward.11} parent=5 // pred_region
      %s193 = ssub.s32 %s9, 1
      %s194 = smul.u32 8, %s19
      %p195 = scmp.lt.s32.totalorder %s194, 15
      %s196 = scalar_select %p195, %s194, 15
      %p197 = scmp.lt.s32.totalorder %s21, 0
      %s198 = scalar_select %p197, %s21, 0
      %s199 = sadd.s32 %s198, %s196
      %s200 = smul.addr %s199, 4
      %s201 = scalar_lea.vmem %s0, %s200
      %p202 = pneg %p56
      %p203 = pneg %p53
      %s204 = smul.u32 16, %s21
      %p205 = scmp.lt.s32.totalorder %s204, 15
      %s206 = scalar_select %p205, %s204, 15
      %p207 = scmp.lt.s32.totalorder %s20, 0
      %s208 = scalar_select %p207, %s20, 0
      %s209 = sadd.s32 %s208, %s206
      %s210 = smul.addr %s209, 4
      %s211 = scalar_lea.vmem %s1, %s210
      %p212 = pneg %p84
      %p213 = pneg %p81
      %p214 = scmp.lt.s32.totalorder %s20, 0
      %s215 = scalar_select %p214, %s20, 0
      %s216 = scalar_lea.vmem %s2, %s215
      %p217 = pneg %p110
      %p218 = pneg %p107
      %p219 = pneg %p138
      %p220 = pneg %p135
      %s221 = smul.u32 8, %s19
      %p222 = scmp.lt.s32.totalorder %s221, 15
      %s223 = scalar_select %p222, %s221, 15
      %p224 = scmp.lt.s32.totalorder %s20, 0
      %s225 = scalar_select %p224, %s20, 0
      %s226 = sadd.s32 %s225, %s223
      %s227 = smul.addr %s226, 4
      %s228 = scalar_lea.vmem %s3, %s227
      %s229 = smul.u32 8, %s19
      %p230 = scmp.lt.s32.totalorder %s229, 15
      %s231 = scalar_select %p230, %s229, 15
      %p232 = scmp.lt.s32.totalorder %s21, 0
      %s233 = scalar_select %p232, %s21, 0
      %s234 = sadd.s32 %s233, %s231
      %s235 = smul.addr %s234, 4
      %s236 = scalar_lea.vmem %s0, %s235
      %s237 = smul.u32 8, %s19
      %s238 = smul.u32 16, %s21
      %p239 = scmp.lt.s32.totalorder %s238, 15
      %s240 = scalar_select %p239, %s238, 15
      %p241 = scmp.lt.s32.totalorder %s20, 0
      %s242 = scalar_select %p241, %s20, 0
      %s243 = sadd.s32 %s242, %s240
      %s244 = smul.addr %s243, 4
      %s245 = scalar_lea.vmem %s1, %s244
      %s246 = smul.u32 16, %s21
      %p247 = scmp.lt.s32.totalorder %s20, 0
      %s248 = scalar_select %p247, %s20, 0
      %s249 = scalar_lea.vmem %s2, %s248
      %s250 = smul.u32 8, %s19
      %p251 = scmp.lt.s32.totalorder %s250, 15
      %s252 = scalar_select %p251, %s250, 15
      %p253 = scmp.lt.s32.totalorder %s20, 0
      %s254 = scalar_select %p253, %s20, 0
      %s255 = sadd.s32 %s254, %s252
      %s256 = smul.addr %s255, 4
      %s257 = scalar_lea.vmem %s3, %s256
      %s258 = smul.u32 8, %s19
      %p260 = scmp.eq.s32.totalorder %s21, 0
      // Predicated region
      $region33: #{vit_segmentation_forward.11} parent=31 // pred_check
        %p261 = pneg %p260
      $region34: #{vit_segmentation_forward.11} parent=31 // pred_check_branch
        %263 = sbr.rel (%p261) target = $region36
      $region35: #{vit_segmentation_forward.11} parent=31 // pred_region
        %264 = vst [vmem:[#allocation2] sm:$0xff] 0.0
        %265 = vst [vmem:[#allocation2 + $0x8] sm:$0xff] 0.0
        %266 = vst [vmem:[#allocation2 + $0x10] sm:$0xff] 0.0
        %267 = vst [vmem:[#allocation2 + $0x18] sm:$0xff] 0.0
        %268 = vst [vmem:[#allocation2 + $0x20] sm:$0xff] 0.0
        %269 = vst [vmem:[#allocation2 + $0x28] sm:$0xff] 0.0
        %270 = vst [vmem:[#allocation2 + $0x30] sm:$0xff] 0.0
        %271 = vst [vmem:[#allocation2 + $0x38] sm:$0xff] 0.0
      $region36: #{vit_segmentation_forward.11} parent=31 // pred_fallthru
        _
      %v272 = vld [vmem:[%s236] sm:$0xf]
      %v273 = vld [vmem:[%s236 + $0x4] sm:$0xf]
      %v274 = vld [vmem:[%s236 + $0x8] sm:$0xf]
      %v275 = vld [vmem:[%s236 + $0xc] sm:$0xf]
      %v276 = vld [vmem:[%s236 + $0x10] sm:$0xf]
      %v277 = vld [vmem:[%s236 + $0x14] sm:$0xf]
      %v278 = vld [vmem:[%s236 + $0x18] sm:$0xf]
      %v279 = vld [vmem:[%s236 + $0x1c] sm:$0xf]
      %v280 = vld [vmem:[#allocation2] sm:$0xff]
      %v281 = vld [vmem:[#allocation2 + $0x8] sm:$0xff]
      %v282 = vld [vmem:[#allocation2 + $0x10] sm:$0xff]
      %v283 = vld [vmem:[#allocation2 + $0x18] sm:$0xff]
      %v284 = vld [vmem:[#allocation2 + $0x20] sm:$0xff]
      %v285 = vld [vmem:[#allocation2 + $0x28] sm:$0xff]
      %v286 = vld [vmem:[#allocation2 + $0x30] sm:$0xff]
      %v287 = vld [vmem:[#allocation2 + $0x38] sm:$0xff]
      %v288 = vld [vmem:[%s245] sm:$0xf]
      %v289 = vld [vmem:[%s245 + $0x4] sm:$0xf]
      %v290 = vld [vmem:[%s245 + $0x8] sm:$0xf]
      %v291 = vld [vmem:[%s245 + $0xc] sm:$0xf]
      %v292 = vld [vmem:[%s245 + $0x10] sm:$0xf]
      %v293 = vld [vmem:[%s245 + $0x14] sm:$0xf]
      %v294 = vld [vmem:[%s245 + $0x18] sm:$0xf]
      %v295 = vld [vmem:[%s245 + $0x1c] sm:$0xf]
      %v296 = vld [vmem:[%s245 + $0x20] sm:$0xf]
      %v297 = vld [vmem:[%s245 + $0x24] sm:$0xf]
      %v298 = vld [vmem:[%s245 + $0x28] sm:$0xf]
      %v299 = vld [vmem:[%s245 + $0x2c] sm:$0xf]
      %v300 = vld [vmem:[%s245 + $0x30] sm:$0xf]
      %v301 = vld [vmem:[%s245 + $0x34] sm:$0xf]
      %v302 = vld [vmem:[%s245 + $0x38] sm:$0xf]
      %v303 = vld [vmem:[%s245 + $0x3c] sm:$0xf]
      %v312 = vunpack.c.l.b16 %v272
      %v313 = vunpack.c.l.b16 %v273
      %v314 = vunpack.c.l.b16 %v274
      %v315 = vunpack.c.l.b16 %v275
      %v316 = vunpack.c.l.b16 %v276
      %v317 = vunpack.c.l.b16 %v277
      %v318 = vunpack.c.l.b16 %v278
      %v319 = vunpack.c.l.b16 %v279
      %v320 = vpack.c.b16 %v313, %v312
      %v321 = vpack.c.b16 %v315, %v314
      %v322 = vpack.c.b16 %v317, %v316
      %v323 = vpack.c.b16 %v319, %v318
      %v344 = vunpack.c.l.b16 %v288
      %v345 = vunpack.c.l.b16 %v289
      %v346 = vunpack.c.l.b16 %v290
      %v347 = vunpack.c.l.b16 %v291
      %v348 = vunpack.c.l.b16 %v292
      %v349 = vunpack.c.l.b16 %v293
      %v350 = vunpack.c.l.b16 %v294
      %v351 = vunpack.c.l.b16 %v295
      %v352 = vunpack.c.l.b16 %v296
      %v353 = vunpack.c.l.b16 %v297
      %v354 = vunpack.c.l.b16 %v298
      %v355 = vunpack.c.l.b16 %v299
      %v356 = vunpack.c.l.b16 %v300
      %v357 = vunpack.c.l.b16 %v301
      %v358 = vunpack.c.l.b16 %v302
      %v359 = vunpack.c.l.b16 %v303
      %v360 = vpack.c.b16 %v345, %v344
      %v361 = vpack.c.b16 %v347, %v346
      %v362 = vpack.c.b16 %v349, %v348
      %v363 = vpack.c.b16 %v351, %v350
      %v364 = vpack.c.b16 %v353, %v352
      %v365 = vpack.c.b16 %v355, %v354
      %v366 = vpack.c.b16 %v357, %v356
      %v367 = vpack.c.b16 %v359, %v358
      %376 = vmatprep.subr.bf16.mxu0 0
      %377 = vmatpush1.bf16.msra.mxu0 %v367
      %378 = vmatprep.subr.bf16.mxu0 0
      %379 = vmatpush1.bf16.msra.mxu0 %v366
      %380 = vmatprep.subr.bf16.mxu0 0
      %381 = vmatpush1.bf16.msra.mxu0 %v365
      %382 = vmatprep.subr.bf16.mxu0 0
      %383 = vmatpush1.bf16.msra.mxu0 %v364
      %384 = vmatprep.subr.bf16.mxu0 0
      %385 = vmatpush1.bf16.msra.mxu0 %v363
      %386 = vmatprep.subr.bf16.mxu0 0
      %387 = vmatpush1.bf16.msra.mxu0 %v362
      %388 = vmatprep.subr.bf16.mxu0 0
      %389 = vmatpush1.bf16.msra.mxu0 %v361
      %390 = vmatprep.subr.bf16.mxu0 0
      %391 = vmatpush1.bf16.msra.mxu0 %v360
      %392 = vmatprep.subr.bf16.mxu0 0
      %393 = vmatpush2.bf16.msra.mxu0 0
      %394 = vmatprep.subr.bf16.mxu0 0
      %395 = vmatpush2.bf16.msra.mxu0 0
      %396 = vmatprep.subr.bf16.mxu0 0
      %397 = vmatpush2.bf16.msra.mxu0 0
      %398 = vmatprep.subr.bf16.mxu0 0
      %399 = vmatpush2.bf16.msra.mxu0 0
      %400 = vmatprep.subr.bf16.mxu0 0
      %401 = vmatpush2.bf16.msra.mxu0 0
      %402 = vmatprep.subr.bf16.mxu0 0
      %403 = vmatpush2.bf16.msra.mxu0 0
      %404 = vmatprep.subr.bf16.mxu0 0
      %405 = vmatpush2.bf16.msra.mxu0 0
      %406 = vmatprep.subr.bf16.mxu0 0
      %407 = vmatpush2.bf16.msra.mxu0 0
      %408 = vmatprep.mubr.bf16.mxu0 0
      %409 = vmatmul.mubr.bf16.gmra.mxu0 %v320
      %v410 = vpop.f32.mrf.mxu0
      %v411 = vadd.f32 0.0, %v410
      %v412 = vpop.f32.mrf.mxu0
      %v413 = vpop.f32.mrf.mxu0
      %v414 = vadd.f32 0.0, %v413
      %v415 = vpop.f32.mrf.mxu0
      %416 = vmatprep.mubr.bf16.mxu0 0
      %417 = vmatmul.mubr.bf16.gmra.mxu0 %v321
      %v418 = vpop.f32.mrf.mxu0
      %v419 = vadd.f32 0.0, %v418
      %v420 = vpop.f32.mrf.mxu0
      %v421 = vpop.f32.mrf.mxu0
      %v422 = vadd.f32 0.0, %v421
      %v423 = vpop.f32.mrf.mxu0
      %424 = vmatprep.mubr.bf16.mxu0 0
      %425 = vmatmul.mubr.bf16.gmra.mxu0 %v322
      %v426 = vpop.f32.mrf.mxu0
      %v427 = vadd.f32 0.0, %v426
      %v428 = vpop.f32.mrf.mxu0
      %v429 = vpop.f32.mrf.mxu0
      %v430 = vadd.f32 0.0, %v429
      %v431 = vpop.f32.mrf.mxu0
      %432 = vmatprep.mubr.bf16.mxu0 0
      %433 = vmatmul.mubr.bf16.gmra.mxu0 %v323
      %v434 = vpop.f32.mrf.mxu0
      %v435 = vadd.f32 0.0, %v434
      %v436 = vpop.f32.mrf.mxu0
      %v437 = vpop.f32.mrf.mxu0
      %v438 = vadd.f32 0.0, %v437
      %v439 = vpop.f32.mrf.mxu0
      %440 = vdwg.mxu0
      %v441 = vadd.f32 %v280, %v411
      %v442 = vadd.f32 %v281, %v414
      %v443 = vadd.f32 %v282, %v419
      %v444 = vadd.f32 %v283, %v422
      %v445 = vadd.f32 %v284, %v427
      %v446 = vadd.f32 %v285, %v430
      %v447 = vadd.f32 %v286, %v435
      %v448 = vadd.f32 %v287, %v438
      %449 = vst [vmem:[#allocation2] sm:$0xff] %v441
      %450 = vst [vmem:[#allocation2 + $0x8] sm:$0xff] %v442
      %451 = vst [vmem:[#allocation2 + $0x10] sm:$0xff] %v443
      %452 = vst [vmem:[#allocation2 + $0x18] sm:$0xff] %v444
      %453 = vst [vmem:[#allocation2 + $0x20] sm:$0xff] %v445
      %454 = vst [vmem:[#allocation2 + $0x28] sm:$0xff] %v446
      %455 = vst [vmem:[#allocation2 + $0x30] sm:$0xff] %v447
      %456 = vst [vmem:[#allocation2 + $0x38] sm:$0xff] %v448
      // Predicated region
      $region37: #{vit_segmentation_forward.11} parent=31 // pred_check
        %p457 = pneg %p260
      $region38: #{vit_segmentation_forward.11} parent=31 // pred_check_branch
        %459 = sbr.rel (%p457) target = $region40
      $region39: #{vit_segmentation_forward.11} parent=31 // pred_region
        %v460 = vld [vmem:[#allocation2] sm:$0xff]
        %v461 = vld [vmem:[#allocation2 + $0x8] sm:$0xff]
        %v462 = vld [vmem:[#allocation2 + $0x10] sm:$0xff]
        %v463 = vld [vmem:[#allocation2 + $0x18] sm:$0xff]
        %v464 = vld [vmem:[#allocation2 + $0x20] sm:$0xff]
        %v465 = vld [vmem:[#allocation2 + $0x28] sm:$0xff]
        %v466 = vld [vmem:[#allocation2 + $0x30] sm:$0xff]
        %v467 = vld [vmem:[#allocation2 + $0x38] sm:$0xff]
        %v468 = vld [vmem:[%s249] sm:$0x1]
        %v470 = vlaneseq
        %v471 = vshrl.u32 %v470, 7
        %v472 = vsub.s32 0, %v471
        %v473 = vrot.slane %v468, %v472
        %v475 = vadd.f32 %v460, %v473
        %v476 = vadd.f32 %v461, %v473
        %v477 = vadd.f32 %v462, %v473
        %v478 = vadd.f32 %v463, %v473
        %v479 = vadd.f32 %v464, %v473
        %v480 = vadd.f32 %v465, %v473
        %v481 = vadd.f32 %v466, %v473
        %v482 = vadd.f32 %v467, %v473
        %v483 = vmax.f32 %v475, 0.0
        %v484 = vmax.f32 %v476, 0.0
        %v485 = vmax.f32 %v477, 0.0
        %v486 = vmax.f32 %v478, 0.0
        %v487 = vmax.f32 %v479, 0.0
        %v488 = vmax.f32 %v480, 0.0
        %v489 = vmax.f32 %v481, 0.0
        %v490 = vmax.f32 %v482, 0.0
        %v491 = vpack.c.bf16 %v484, %v483
        %v492 = vpack.c.bf16 %v486, %v485
        %v493 = vpack.c.bf16 %v488, %v487
        %v494 = vpack.c.bf16 %v490, %v489
        %v499 = vunpack.c.l.b16 %v491
        %v500 = vunpack.c.h.b16 %v491
        %v501 = vunpack.c.l.b16 %v492
        %v502 = vunpack.c.h.b16 %v492
        %v503 = vunpack.c.l.b16 %v493
        %v504 = vunpack.c.h.b16 %v493
        %v505 = vunpack.c.l.b16 %v494
        %v506 = vunpack.c.h.b16 %v494
        %v507 = vpack.c.b16 %v499, %v499
        %v508 = vpack.c.b16 %v500, %v500
        %v509 = vpack.c.b16 %v501, %v501
        %v510 = vpack.c.b16 %v502, %v502
        %v511 = vpack.c.b16 %v503, %v503
        %v512 = vpack.c.b16 %v504, %v504
        %v513 = vpack.c.b16 %v505, %v505
        %v514 = vpack.c.b16 %v506, %v506
        %523 = vst [vmem:[%s257] sm:$0xf] %v507
        %524 = vst [vmem:[%s257 + $0x4] sm:$0xf] %v508
        %525 = vst [vmem:[%s257 + $0x8] sm:$0xf] %v509
        %526 = vst [vmem:[%s257 + $0xc] sm:$0xf] %v510
        %527 = vst [vmem:[%s257 + $0x10] sm:$0xf] %v511
        %528 = vst [vmem:[%s257 + $0x14] sm:$0xf] %v512
        %529 = vst [vmem:[%s257 + $0x18] sm:$0xf] %v513
        %530 = vst [vmem:[%s257 + $0x1c] sm:$0xf] %v514
      $region40: #{vit_segmentation_forward.11} parent=31 // pred_fallthru
        _
      %s531 = smul.u32 8, %s19
      %p532 = scmp.lt.s32.totalorder %s531, 15
      %s533 = scalar_select %p532, %s531, 15
      %p534 = scmp.lt.s32.totalorder %s20, 0
      %s535 = scalar_select %p534, %s20, 0
      %s536 = sadd.s32 %s535, %s533
      %s537 = smul.addr %s536, 4
      %s538 = scalar_lea.vmem %s3, %s537
      // Predicated region
      $region41: #{vit_segmentation_forward.11} parent=31 // pred_check
        %p539 = pneg %p135
      $region42: #{vit_segmentation_forward.11} parent=31 // pred_check_branch
        %541 = sbr.rel (%p539) target = $region44
      $region43: #{vit_segmentation_forward.11} parent=31 // pred_region
        %s542 = smul.u32 8, %s19
      $region44: #{vit_segmentation_forward.11} parent=31 // pred_fallthru
        _
    $region32: #{vit_segmentation_forward.11} parent=5 // pred_fallthru
      _
    %p543 = scmp.le.s32.totalorder 2, %s9
    // Predicated region
    $region45: #{vit_segmentation_forward.11} parent=5 // pred_check
      %p544 = pneg %p543
    $region46: #{vit_segmentation_forward.11} parent=5 // pred_check_branch
      %546 = sbr.rel (%p544) target = $region48
    $region47: #{vit_segmentation_forward.11} parent=5 // pred_region
      %s547 = ssub.s32 %s9, 2
      // Predicated region
      $region49: #{vit_segmentation_forward.11} parent=47 // pred_check
        %p548 = pneg %p141
      $region50: #{vit_segmentation_forward.11} parent=47 // pred_check_branch
        %550 = sbr.rel (%p548) target = $region52
      $region51: #{vit_segmentation_forward.11} parent=47 // pred_region
        %s551 = smul.u32 8, %s22
        %p552 = scmp.lt.s32.totalorder %s551, 15
        %s553 = scalar_select %p552, %s551, 15
        %p554 = scmp.lt.s32.totalorder %s23, 0
        %s555 = scalar_select %p554, %s23, 0
        %s556 = sadd.s32 %s555, %s553
        %s557 = smul.addr %s556, 4
        %s558 = scalar_lea.vmem %s3, %s557
      $region52: #{vit_segmentation_forward.11} parent=47 // pred_fallthru
        _
    $region48: #{vit_segmentation_forward.11} parent=5 // pred_fallthru
      _
  $region6: #{vit_segmentation_forward.11} parent=0 // loop_footer
    %s13 = sadd.s32 1, %s9
  $region7: #{vit_segmentation_forward.11} parent=0 // loop_footer_branch
    %8 = sbr.rel target = $region3
  $region8: #{vit_segmentation_forward.11} parent=0 // loop_exit
    _

// kernel: vit_segmentation_forward.8
$region0: #{vit_segmentation_forward.8}
  #allocation0 [shape = 'u32[]', space=smem, size = 0x4, offset = 0x4, fixed_abs, tag = 'smem constant byte address 0x4 - core index']
  #allocation1 [shape = 'u32[144,128]{1,0:T(1,128)}', space=vmem, size = 0x12000, scoped, tag = 'internal scratch']
  %s0 = inlined_call_operand.vmem [shape: f32[2,16,128], index: 0, kind: input, shape index: {}]
  %s1 = inlined_call_operand.vmem [shape: f32[1,128], index: 1, kind: input, shape index: {}]
  %s2 = inlined_call_operand.vmem [shape: f32[1,128], index: 2, kind: input, shape index: {}]
  %s3 = inlined_call_operand.vmem [shape: bf16[4,128,32], index: 3, kind: input, shape index: {}]
  %s4 = inlined_call_operand.vmem [shape: bf16[4,128,32], index: 4, kind: input, shape index: {}]
  %s5 = inlined_call_operand.vmem [shape: bf16[4,128,32], index: 5, kind: input, shape index: {}]
  %s6 = inlined_call_operand.vmem [shape: f32[4,1,32], index: 6, kind: input, shape index: {}]
  %s7 = inlined_call_operand.vmem [shape: f32[4,1,32], index: 7, kind: input, shape index: {}]
  %s8 = inlined_call_operand.vmem [shape: f32[4,1,32], index: 8, kind: input, shape index: {}]
  %s9 = inlined_call_operand.vmem [shape: bf16[4,32,128], index: 9, kind: input, shape index: {}]
  %s10 = inlined_call_operand.vmem [shape: f32[1,128], index: 10, kind: input, shape index: {}]
  %s11 = inlined_call_operand.vmem [shape: f32[1,128], index: 11, kind: input, shape index: {}]
  %s12 = inlined_call_operand.vmem [shape: f32[1,128], index: 12, kind: input, shape index: {}]
  %s13 = inlined_call_operand.vmem [shape: bf16[128,512], index: 13, kind: input, shape index: {}]
  %s14 = inlined_call_operand.vmem [shape: f32[1,512], index: 14, kind: input, shape index: {}]
  %s15 = inlined_call_operand.vmem [shape: bf16[512,128], index: 15, kind: input, shape index: {}]
  %s16 = inlined_call_operand.vmem [shape: f32[1,128], index: 16, kind: input, shape index: {}]
  %s17 = inlined_call_operand.vmem [shape: f32[2,16,128], index: 17, kind: output, shape index: {}]
  %s18 = sld [smem:[#allocation0]]
  $region101: #{vit_segmentation_forward.8} parent=0
    _
  %s20 = ssub.s32 1, %s18
  %s21 = scalar_select 0, %s20, %s18
  loop: start=0, step=1, limit=4
  $region2: #{vit_segmentation_forward.8} parent=0 // loop_pre_header
    _
  $region3: #{vit_segmentation_forward.8} parent=0 // loop_header
    %s23 = sphi 0, %s27
    %p24 = scmp.ge.s32.totalorder %s23, 4
    %s33 = sphi 0, %s35
    %s36 = sphi 0, %s33
    %s37 = sphi 0, %s36
    %s53 = sphi 0, %s37
    %s57 = sphi 0, %s57
    %s59 = sphi 0, %s57
    %s60 = sphi 0, %s59
    %s74 = sphi 0, %s60
    %s78 = sphi 0, %s78
    %s80 = sphi 0, %s78
    %s81 = sphi 0, %s80
    %s95 = sphi 0, %s81
    %s99 = sphi 0, %s99
    %s101 = sphi 0, %s99
    %s102 = sphi 0, %s101
    %s116 = sphi 0, %s102
    %s120 = sphi 0, %s120
    %s122 = sphi 0, %s120
    %s123 = sphi 0, %s122
    %s137 = sphi 0, %s123
    %s141 = sphi 0, %s141
    %s143 = sphi 0, %s141
    %s144 = sphi 0, %s143
    %s158 = sphi 0, %s144
    %s162 = sphi 0, %s162
    %s164 = sphi 0, %s162
    %s165 = sphi 0, %s164
    %s179 = sphi 0, %s165
    %s183 = sphi 0, %s183
    %s185 = sphi 0, %s183
    %s186 = sphi 0, %s185
    %s200 = sphi 0, %s186
    %s204 = sphi 0, %s204
    %s206 = sphi 0, %s204
    %s207 = sphi 0, %s206
    %s221 = sphi 0, %s207
    %s225 = sphi 0, %s225
    %s227 = sphi 0, %s225
    %s228 = sphi 0, %s227
    %s242 = sphi 0, %s228
    %s246 = sphi 0, %s246
    %s248 = sphi 0, %s246
    %s249 = sphi 0, %s248
    %s263 = sphi 0, %s249
    %s267 = sphi 0, %s267
    %s269 = sphi 0, %s267
    %s270 = sphi 0, %s269
    %s284 = sphi 0, %s270
    %s288 = sphi 0, %s288
    %s290 = sphi 0, %s288
    %s291 = sphi 0, %s290
    %s305 = sphi 0, %s291
    %s309 = sphi 0, %s309
    %s311 = sphi 0, %s309
    %s312 = sphi 0, %s311
    %s326 = sphi 0, %s312
    %s330 = sphi 0, %s330
    %s332 = sphi 0, %s330
    %s333 = sphi 0, %s332
    %s347 = sphi 0, %s333
    %s351 = sphi 0, %s351
    %s353 = sphi 0, %s351
    %s354 = sphi 0, %s353
    %s368 = sphi 0, %s354
    %s372 = sphi 0, %s372
    %s374 = sphi 0, %s372
    %s375 = sphi 0, %s374
    %s389 = sphi 0, %s375
    %s395 = sphi 0, %s397
    %s398 = sphi 0, %s395
    %s399 = sphi 0, %s398
    %s415 = sphi 0, %s399
  $region4: #{vit_segmentation_forward.8} parent=0 // loop_header_branch
    %26 = sbr.rel (%p24) target = $region8
  $region5: #{vit_segmentation_forward.8} parent=0 // loop_body
    %s28 = ssub.s32 %s23, 1
    %s29 = ssub.s32 %s23, 2
    %s30 = sadd.s32 %s23, 1
    %s31 = ssub.s32 %s23, %s30
    %p32 = scmp.eq.s32.totalorder %s31, 0
    %s34 = sadd.s32 %s33, 1
    %s35 = scalar_select %p32, %s33, %s34
    %p38 = pneg %p32
    %p39 = scmp.eq.s32.totalorder %s23, 1
    %p40 = por %p38, %p39
    %p41 = scmp.ne.s32.totalorder %s33, %s36
    %p42 = scmp.eq.s32.totalorder %s23, 0
    %p43 = por %p41, %p42
    %p44 = scmp.ne.s32.totalorder %s33, %s36
    %p45 = scmp.eq.s32.totalorder %s28, 1
    %p46 = por %p44, %p45
    %p47 = scmp.ne.s32.totalorder %s36, %s37
    %p48 = scmp.eq.s32.totalorder %s28, 0
    %p49 = por %p47, %p48
    %p50 = scmp.ne.s32.totalorder %s36, %s37
    %p51 = scmp.eq.s32.totalorder %s29, 1
    %p52 = por %p50, %p51
    %p54 = scmp.ne.s32.totalorder %s37, %s53
    %p55 = scmp.eq.s32.totalorder %s29, 0
    %p56 = por %p54, %p55
    %s58 = sadd.s32 %s57, 1
    %p61 = scmp.eq.s32.totalorder %s23, 1
    %p62 = scmp.ne.s32.totalorder %s57, %s59
    %p63 = scmp.eq.s32.totalorder %s23, 0
    %p64 = por %p62, %p63
    %p65 = scmp.ne.s32.totalorder %s57, %s59
    %p66 = scmp.eq.s32.totalorder %s28, 1
    %p67 = por %p65, %p66
    %p68 = scmp.ne.s32.totalorder %s59, %s60
    %p69 = scmp.eq.s32.totalorder %s28, 0
    %p70 = por %p68, %p69
    %p71 = scmp.ne.s32.totalorder %s59, %s60
    %p72 = scmp.eq.s32.totalorder %s29, 1
    %p73 = por %p71, %p72
    %p75 = scmp.ne.s32.totalorder %s60, %s74
    %p76 = scmp.eq.s32.totalorder %s29, 0
    %p77 = por %p75, %p76
    %s79 = sadd.s32 %s78, 1
    %p82 = scmp.eq.s32.totalorder %s23, 1
    %p83 = scmp.ne.s32.totalorder %s78, %s80
    %p84 = scmp.eq.s32.totalorder %s23, 0
    %p85 = por %p83, %p84
    %p86 = scmp.ne.s32.totalorder %s78, %s80
    %p87 = scmp.eq.s32.totalorder %s28, 1
    %p88 = por %p86, %p87
    %p89 = scmp.ne.s32.totalorder %s80, %s81
    %p90 = scmp.eq.s32.totalorder %s28, 0
    %p91 = por %p89, %p90
    %p92 = scmp.ne.s32.totalorder %s80, %s81
    %p93 = scmp.eq.s32.totalorder %s29, 1
    %p94 = por %p92, %p93
    %p96 = scmp.ne.s32.totalorder %s81, %s95
    %p97 = scmp.eq.s32.totalorder %s29, 0
    %p98 = por %p96, %p97
    %s100 = sadd.s32 %s99, 1
    %p103 = scmp.eq.s32.totalorder %s23, 1
    %p104 = scmp.ne.s32.totalorder %s99, %s101
    %p105 = scmp.eq.s32.totalorder %s23, 0
    %p106 = por %p104, %p105
    %p107 = scmp.ne.s32.totalorder %s99, %s101
    %p108 = scmp.eq.s32.totalorder %s28, 1
    %p109 = por %p107, %p108
    %p110 = scmp.ne.s32.totalorder %s101, %s102
    %p111 = scmp.eq.s32.totalorder %s28, 0
    %p112 = por %p110, %p111
    %p113 = scmp.ne.s32.totalorder %s101, %s102
    %p114 = scmp.eq.s32.totalorder %s29, 1
    %p115 = por %p113, %p114
    %p117 = scmp.ne.s32.totalorder %s102, %s116
    %p118 = scmp.eq.s32.totalorder %s29, 0
    %p119 = por %p117, %p118
    %s121 = sadd.s32 %s120, 1
    %p124 = scmp.eq.s32.totalorder %s23, 1
    %p125 = scmp.ne.s32.totalorder %s120, %s122
    %p126 = scmp.eq.s32.totalorder %s23, 0
    %p127 = por %p125, %p126
    %p128 = scmp.ne.s32.totalorder %s120, %s122
    %p129 = scmp.eq.s32.totalorder %s28, 1
    %p130 = por %p128, %p129
    %p131 = scmp.ne.s32.totalorder %s122, %s123
    %p132 = scmp.eq.s32.totalorder %s28, 0
    %p133 = por %p131, %p132
    %p134 = scmp.ne.s32.totalorder %s122, %s123
    %p135 = scmp.eq.s32.totalorder %s29, 1
    %p136 = por %p134, %p135
    %p138 = scmp.ne.s32.totalorder %s123, %s137
    %p139 = scmp.eq.s32.totalorder %s29, 0
    %p140 = por %p138, %p139
    %s142 = sadd.s32 %s141, 1
    %p145 = scmp.eq.s32.totalorder %s23, 1
    %p146 = scmp.ne.s32.totalorder %s141, %s143
    %p147 = scmp.eq.s32.totalorder %s23, 0
    %p148 = por %p146, %p147
    %p149 = scmp.ne.s32.totalorder %s141, %s143
    %p150 = scmp.eq.s32.totalorder %s28, 1
    %p151 = por %p149, %p150
    %p152 = scmp.ne.s32.totalorder %s143, %s144
    %p153 = scmp.eq.s32.totalorder %s28, 0
    %p154 = por %p152, %p153
    %p155 = scmp.ne.s32.totalorder %s143, %s144
    %p156 = scmp.eq.s32.totalorder %s29, 1
    %p157 = por %p155, %p156
    %p159 = scmp.ne.s32.totalorder %s144, %s158
    %p160 = scmp.eq.s32.totalorder %s29, 0
    %p161 = por %p159, %p160
    %s163 = sadd.s32 %s162, 1
    %p166 = scmp.eq.s32.totalorder %s23, 1
    %p167 = scmp.ne.s32.totalorder %s162, %s164
    %p168 = scmp.eq.s32.totalorder %s23, 0
    %p169 = por %p167, %p168
    %p170 = scmp.ne.s32.totalorder %s162, %s164
    %p171 = scmp.eq.s32.totalorder %s28, 1
    %p172 = por %p170, %p171
    %p173 = scmp.ne.s32.totalorder %s164, %s165
    %p174 = scmp.eq.s32.totalorder %s28, 0
    %p175 = por %p173, %p174
    %p176 = scmp.ne.s32.totalorder %s164, %s165
    %p177 = scmp.eq.s32.totalorder %s29, 1
    %p178 = por %p176, %p177
    %p180 = scmp.ne.s32.totalorder %s165, %s179
    %p181 = scmp.eq.s32.totalorder %s29, 0
    %p182 = por %p180, %p181
    %s184 = sadd.s32 %s183, 1
    %p187 = scmp.eq.s32.totalorder %s23, 1
    %p188 = scmp.ne.s32.totalorder %s183, %s185
    %p189 = scmp.eq.s32.totalorder %s23, 0
    %p190 = por %p188, %p189
    %p191 = scmp.ne.s32.totalorder %s183, %s185
    %p192 = scmp.eq.s32.totalorder %s28, 1
    %p193 = por %p191, %p192
    %p194 = scmp.ne.s32.totalorder %s185, %s186
    %p195 = scmp.eq.s32.totalorder %s28, 0
    %p196 = por %p194, %p195
    %p197 = scmp.ne.s32.totalorder %s185, %s186
    %p198 = scmp.eq.s32.totalorder %s29, 1
    %p199 = por %p197, %p198
    %p201 = scmp.ne.s32.totalorder %s186, %s200
    %p202 = scmp.eq.s32.totalorder %s29, 0
    %p203 = por %p201, %p202
    %s205 = sadd.s32 %s204, 1
    %p208 = scmp.eq.s32.totalorder %s23, 1
    %p209 = scmp.ne.s32.totalorder %s204, %s206
    %p210 = scmp.eq.s32.totalorder %s23, 0
    %p211 = por %p209, %p210
    %p212 = scmp.ne.s32.totalorder %s204, %s206
    %p213 = scmp.eq.s32.totalorder %s28, 1
    %p214 = por %p212, %p213
    %p215 = scmp.ne.s32.totalorder %s206, %s207
    %p216 = scmp.eq.s32.totalorder %s28, 0
    %p217 = por %p215, %p216
    %p218 = scmp.ne.s32.totalorder %s206, %s207
    %p219 = scmp.eq.s32.totalorder %s29, 1
    %p220 = por %p218, %p219
    %p222 = scmp.ne.s32.totalorder %s207, %s221
    %p223 = scmp.eq.s32.totalorder %s29, 0
    %p224 = por %p222, %p223
    %s226 = sadd.s32 %s225, 1
    %p229 = scmp.eq.s32.totalorder %s23, 1
    %p230 = scmp.ne.s32.totalorder %s225, %s227
    %p231 = scmp.eq.s32.totalorder %s23, 0
    %p232 = por %p230, %p231
    %p233 = scmp.ne.s32.totalorder %s225, %s227
    %p234 = scmp.eq.s32.totalorder %s28, 1
    %p235 = por %p233, %p234
    %p236 = scmp.ne.s32.totalorder %s227, %s228
    %p237 = scmp.eq.s32.totalorder %s28, 0
    %p238 = por %p236, %p237
    %p239 = scmp.ne.s32.totalorder %s227, %s228
    %p240 = scmp.eq.s32.totalorder %s29, 1
    %p241 = por %p239, %p240
    %p243 = scmp.ne.s32.totalorder %s228, %s242
    %p244 = scmp.eq.s32.totalorder %s29, 0
    %p245 = por %p243, %p244
    %s247 = sadd.s32 %s246, 1
    %p250 = scmp.eq.s32.totalorder %s23, 1
    %p251 = scmp.ne.s32.totalorder %s246, %s248
    %p252 = scmp.eq.s32.totalorder %s23, 0
    %p253 = por %p251, %p252
    %p254 = scmp.ne.s32.totalorder %s246, %s248
    %p255 = scmp.eq.s32.totalorder %s28, 1
    %p256 = por %p254, %p255
    %p257 = scmp.ne.s32.totalorder %s248, %s249
    %p258 = scmp.eq.s32.totalorder %s28, 0
    %p259 = por %p257, %p258
    %p260 = scmp.ne.s32.totalorder %s248, %s249
    %p261 = scmp.eq.s32.totalorder %s29, 1
    %p262 = por %p260, %p261
    %p264 = scmp.ne.s32.totalorder %s249, %s263
    %p265 = scmp.eq.s32.totalorder %s29, 0
    %p266 = por %p264, %p265
    %s268 = sadd.s32 %s267, 1
    %p271 = scmp.eq.s32.totalorder %s23, 1
    %p272 = scmp.ne.s32.totalorder %s267, %s269
    %p273 = scmp.eq.s32.totalorder %s23, 0
    %p274 = por %p272, %p273
    %p275 = scmp.ne.s32.totalorder %s267, %s269
    %p276 = scmp.eq.s32.totalorder %s28, 1
    %p277 = por %p275, %p276
    %p278 = scmp.ne.s32.totalorder %s269, %s270
    %p279 = scmp.eq.s32.totalorder %s28, 0
    %p280 = por %p278, %p279
    %p281 = scmp.ne.s32.totalorder %s269, %s270
    %p282 = scmp.eq.s32.totalorder %s29, 1
    %p283 = por %p281, %p282
    %p285 = scmp.ne.s32.totalorder %s270, %s284
    %p286 = scmp.eq.s32.totalorder %s29, 0
    %p287 = por %p285, %p286
    %s289 = sadd.s32 %s288, 1
    %p292 = scmp.eq.s32.totalorder %s23, 1
    %p293 = scmp.ne.s32.totalorder %s288, %s290
    %p294 = scmp.eq.s32.totalorder %s23, 0
    %p295 = por %p293, %p294
    %p296 = scmp.ne.s32.totalorder %s288, %s290
    %p297 = scmp.eq.s32.totalorder %s28, 1
    %p298 = por %p296, %p297
    %p299 = scmp.ne.s32.totalorder %s290, %s291
    %p300 = scmp.eq.s32.totalorder %s28, 0
    %p301 = por %p299, %p300
    %p302 = scmp.ne.s32.totalorder %s290, %s291
    %p303 = scmp.eq.s32.totalorder %s29, 1
    %p304 = por %p302, %p303
    %p306 = scmp.ne.s32.totalorder %s291, %s305
    %p307 = scmp.eq.s32.totalorder %s29, 0
    %p308 = por %p306, %p307
    %s310 = sadd.s32 %s309, 1
    %p313 = scmp.eq.s32.totalorder %s23, 1
    %p314 = scmp.ne.s32.totalorder %s309, %s311
    %p315 = scmp.eq.s32.totalorder %s23, 0
    %p316 = por %p314, %p315
    %p317 = scmp.ne.s32.totalorder %s309, %s311
    %p318 = scmp.eq.s32.totalorder %s28, 1
    %p319 = por %p317, %p318
    %p320 = scmp.ne.s32.totalorder %s311, %s312
    %p321 = scmp.eq.s32.totalorder %s28, 0
    %p322 = por %p320, %p321
    %p323 = scmp.ne.s32.totalorder %s311, %s312
    %p324 = scmp.eq.s32.totalorder %s29, 1
    %p325 = por %p323, %p324
    %p327 = scmp.ne.s32.totalorder %s312, %s326
    %p328 = scmp.eq.s32.totalorder %s29, 0
    %p329 = por %p327, %p328
    %s331 = sadd.s32 %s330, 1
    %p334 = scmp.eq.s32.totalorder %s23, 1
    %p335 = scmp.ne.s32.totalorder %s330, %s332
    %p336 = scmp.eq.s32.totalorder %s23, 0
    %p337 = por %p335, %p336
    %p338 = scmp.ne.s32.totalorder %s330, %s332
    %p339 = scmp.eq.s32.totalorder %s28, 1
    %p340 = por %p338, %p339
    %p341 = scmp.ne.s32.totalorder %s332, %s333
    %p342 = scmp.eq.s32.totalorder %s28, 0
    %p343 = por %p341, %p342
    %p344 = scmp.ne.s32.totalorder %s332, %s333
    %p345 = scmp.eq.s32.totalorder %s29, 1
    %p346 = por %p344, %p345
    %p348 = scmp.ne.s32.totalorder %s333, %s347
    %p349 = scmp.eq.s32.totalorder %s29, 0
    %p350 = por %p348, %p349
    %s352 = sadd.s32 %s351, 1
    %p355 = scmp.eq.s32.totalorder %s23, 1
    %p356 = scmp.ne.s32.totalorder %s351, %s353
    %p357 = scmp.eq.s32.totalorder %s23, 0
    %p358 = por %p356, %p357
    %p359 = scmp.ne.s32.totalorder %s351, %s353
    %p360 = scmp.eq.s32.totalorder %s28, 1
    %p361 = por %p359, %p360
    %p362 = scmp.ne.s32.totalorder %s353, %s354
    %p363 = scmp.eq.s32.totalorder %s28, 0
    %p364 = por %p362, %p363
    %p365 = scmp.ne.s32.totalorder %s353, %s354
    %p366 = scmp.eq.s32.totalorder %s29, 1
    %p367 = por %p365, %p366
    %p369 = scmp.ne.s32.totalorder %s354, %s368
    %p370 = scmp.eq.s32.totalorder %s29, 0
    %p371 = por %p369, %p370
    %s373 = sadd.s32 %s372, 1
    %p376 = scmp.eq.s32.totalorder %s23, 1
    %p377 = scmp.ne.s32.totalorder %s372, %s374
    %p378 = scmp.eq.s32.totalorder %s23, 0
    %p379 = por %p377, %p378
    %p380 = scmp.ne.s32.totalorder %s372, %s374
    %p381 = scmp.eq.s32.totalorder %s28, 1
    %p382 = por %p380, %p381
    %p383 = scmp.ne.s32.totalorder %s374, %s375
    %p384 = scmp.eq.s32.totalorder %s28, 0
    %p385 = por %p383, %p384
    %p386 = scmp.ne.s32.totalorder %s374, %s375
    %p387 = scmp.eq.s32.totalorder %s29, 1
    %p388 = por %p386, %p387
    %p390 = scmp.ne.s32.totalorder %s375, %s389
    %p391 = scmp.eq.s32.totalorder %s29, 0
    %p392 = por %p390, %p391
    %s393 = ssub.s32 %s23, %s30
    %p394 = scmp.eq.s32.totalorder %s393, 0
    %s396 = sadd.s32 %s395, 1
    %s397 = scalar_select %p394, %s395, %s396
    %p400 = pneg %p394
    %p401 = scmp.eq.s32.totalorder %s23, 1
    %p402 = por %p400, %p401
    %p403 = scmp.ne.s32.totalorder %s395, %s398
    %p404 = scmp.eq.s32.totalorder %s23, 0
    %p405 = por %p403, %p404
    %p406 = scmp.ne.s32.totalorder %s395, %s398
    %p407 = scmp.eq.s32.totalorder %s28, 1
    %p408 = por %p406, %p407
    %p409 = scmp.ne.s32.totalorder %s398, %s399
    %p410 = scmp.eq.s32.totalorder %s28, 0
    %p411 = por %p409, %p410
    %p412 = scmp.ne.s32.totalorder %s398, %s399
    %p413 = scmp.eq.s32.totalorder %s29, 1
    %p414 = por %p412, %p413
    %p416 = scmp.ne.s32.totalorder %s399, %s415
    %p417 = scmp.eq.s32.totalorder %s29, 0
    %p418 = por %p416, %p417
    %p419 = scmp.le.s32.totalorder 1, %s23
    %p420 = scmp.lt.s32.totalorder %s23, 3
    %p421 = pnand %p419, %p420
    %p422 = pneg %p421
    // Predicated region
    $region9: #{vit_segmentation_forward.8} parent=5 // pred_check
      _
    $region10: #{vit_segmentation_forward.8} parent=5 // pred_check_branch
      %424 = sbr.rel (%p421) target = $region12
    $region11: #{vit_segmentation_forward.8} parent=5 // pred_region
      %s425 = ssub.s32 %s23, 1
      // Predicated region
      $region13: #{vit_segmentation_forward.8} parent=11 // pred_check
        %p426 = pneg %p70
      $region14: #{vit_segmentation_forward.8} parent=11 // pred_check_branch
        %428 = sbr.rel (%p426) target = $region16
      $region15: #{vit_segmentation_forward.8} parent=11 // pred_region
        _
      $region16: #{vit_segmentation_forward.8} parent=11 // pred_fallthru
        _
      // Predicated region
      $region17: #{vit_segmentation_forward.8} parent=11 // pred_check
        %p429 = pneg %p91
      $region18: #{vit_segmentation_forward.8} parent=11 // pred_check_branch
        %431 = sbr.rel (%p429) target = $region20
      $region19: #{vit_segmentation_forward.8} parent=11 // pred_region
        _
      $region20: #{vit_segmentation_forward.8} parent=11 // pred_fallthru
        _
      // Predicated region
      $region21: #{vit_segmentation_forward.8} parent=11 // pred_check
        %p432 = pneg %p112
      $region22: #{vit_segmentation_forward.8} parent=11 // pred_check_branch
        %434 = sbr.rel (%p432) target = $region24
      $region23: #{vit_segmentation_forward.8} parent=11 // pred_region
        _
      $region24: #{vit_segmentation_forward.8} parent=11 // pred_fallthru
        _
      // Predicated region
      $region25: #{vit_segmentation_forward.8} parent=11 // pred_check
        %p435 = pneg %p133
      $region26: #{vit_segmentation_forward.8} parent=11 // pred_check_branch
        %437 = sbr.rel (%p435) target = $region28
      $region27: #{vit_segmentation_forward.8} parent=11 // pred_region
        _
      $region28: #{vit_segmentation_forward.8} parent=11 // pred_fallthru
        _
      // Predicated region
      $region29: #{vit_segmentation_forward.8} parent=11 // pred_check
        %p438 = pneg %p154
      $region30: #{vit_segmentation_forward.8} parent=11 // pred_check_branch
        %440 = sbr.rel (%p438) target = $region32
      $region31: #{vit_segmentation_forward.8} parent=11 // pred_region
        _
      $region32: #{vit_segmentation_forward.8} parent=11 // pred_fallthru
        _
      // Predicated region
      $region33: #{vit_segmentation_forward.8} parent=11 // pred_check
        %p441 = pneg %p175
      $region34: #{vit_segmentation_forward.8} parent=11 // pred_check_branch
        %443 = sbr.rel (%p441) target = $region36
      $region35: #{vit_segmentation_forward.8} parent=11 // pred_region
        _
      $region36: #{vit_segmentation_forward.8} parent=11 // pred_fallthru
        _
      // Predicated region
      $region37: #{vit_segmentation_forward.8} parent=11 // pred_check
        %p444 = pneg %p196
      $region38: #{vit_segmentation_forward.8} parent=11 // pred_check_branch
        %446 = sbr.rel (%p444) target = $region40
      $region39: #{vit_segmentation_forward.8} parent=11 // pred_region
        _
      $region40: #{vit_segmentation_forward.8} parent=11 // pred_fallthru
        _
      // Predicated region
      $region41: #{vit_segmentation_forward.8} parent=11 // pred_check
        %p447 = pneg %p217
      $region42: #{vit_segmentation_forward.8} parent=11 // pred_check_branch
        %449 = sbr.rel (%p447) target = $region44
      $region43: #{vit_segmentation_forward.8} parent=11 // pred_region
        _
      $region44: #{vit_segmentation_forward.8} parent=11 // pred_fallthru
        _
      // Predicated region
      $region45: #{vit_segmentation_forward.8} parent=11 // pred_check
        %p450 = pneg %p238
      $region46: #{vit_segmentation_forward.8} parent=11 // pred_check_branch
        %452 = sbr.rel (%p450) target = $region48
      $region47: #{vit_segmentation_forward.8} parent=11 // pred_region
        _
      $region48: #{vit_segmentation_forward.8} parent=11 // pred_fallthru
        _
      // Predicated region
      $region49: #{vit_segmentation_forward.8} parent=11 // pred_check
        %p453 = pneg %p259
      $region50: #{vit_segmentation_forward.8} parent=11 // pred_check_branch
        %455 = sbr.rel (%p453) target = $region52
      $region51: #{vit_segmentation_forward.8} parent=11 // pred_region
        _
      $region52: #{vit_segmentation_forward.8} parent=11 // pred_fallthru
        _
      // Predicated region
      $region53: #{vit_segmentation_forward.8} parent=11 // pred_check
        %p456 = pneg %p280
      $region54: #{vit_segmentation_forward.8} parent=11 // pred_check_branch
        %458 = sbr.rel (%p456) target = $region56
      $region55: #{vit_segmentation_forward.8} parent=11 // pred_region
        _
      $region56: #{vit_segmentation_forward.8} parent=11 // pred_fallthru
        _
      // Predicated region
      $region57: #{vit_segmentation_forward.8} parent=11 // pred_check
        %p459 = pneg %p301
      $region58: #{vit_segmentation_forward.8} parent=11 // pred_check_branch
        %461 = sbr.rel (%p459) target = $region60
      $region59: #{vit_segmentation_forward.8} parent=11 // pred_region
        _
      $region60: #{vit_segmentation_forward.8} parent=11 // pred_fallthru
        _
      // Predicated region
      $region61: #{vit_segmentation_forward.8} parent=11 // pred_check
        %p462 = pneg %p322
      $region62: #{vit_segmentation_forward.8} parent=11 // pred_check_branch
        %464 = sbr.rel (%p462) target = $region64
      $region63: #{vit_segmentation_forward.8} parent=11 // pred_region
        _
      $region64: #{vit_segmentation_forward.8} parent=11 // pred_fallthru
        _
      // Predicated region
      $region65: #{vit_segmentation_forward.8} parent=11 // pred_check
        %p465 = pneg %p343
      $region66: #{vit_segmentation_forward.8} parent=11 // pred_check_branch
        %467 = sbr.rel (%p465) target = $region68
      $region67: #{vit_segmentation_forward.8} parent=11 // pred_region
        _
      $region68: #{vit_segmentation_forward.8} parent=11 // pred_fallthru
        _
      // Predicated region
      $region69: #{vit_segmentation_forward.8} parent=11 // pred_check
        %p468 = pneg %p364
      $region70: #{vit_segmentation_forward.8} parent=11 // pred_check_branch
        %470 = sbr.rel (%p468) target = $region72
      $region71: #{vit_segmentation_forward.8} parent=11 // pred_region
        _
      $region72: #{vit_segmentation_forward.8} parent=11 // pred_fallthru
        _
      // Predicated region
      $region73: #{vit_segmentation_forward.8} parent=11 // pred_check
        %p471 = pneg %p385
      $region74: #{vit_segmentation_forward.8} parent=11 // pred_check_branch
        %473 = sbr.rel (%p471) target = $region76
      $region75: #{vit_segmentation_forward.8} parent=11 // pred_region
        _
      $region76: #{vit_segmentation_forward.8} parent=11 // pred_fallthru
        _
    $region12: #{vit_segmentation_forward.8} parent=5 // pred_fallthru
      _
    %p474 = scmp.lt.s32.totalorder %s23, 2
    // Predicated region
    $region77: #{vit_segmentation_forward.8} parent=5 // pred_check
      %p475 = pneg %p474
    $region78: #{vit_segmentation_forward.8} parent=5 // pred_check_branch
      %477 = sbr.rel (%p475) target = $region80
    $region79: #{vit_segmentation_forward.8} parent=5 // pred_region
      // Predicated region
      $region81: #{vit_segmentation_forward.8} parent=79 // pred_check
        %p478 = pneg %p43
      $region82: #{vit_segmentation_forward.8} parent=79 // pred_check_branch
        %480 = sbr.rel (%p478) target = $region84
      $region83: #{vit_segmentation_forward.8} parent=79 // pred_region
        %p481 = scmp.lt.s32.totalorder %s23, 1
        %s482 = scalar_select %p481, %s23, 1
        %s483 = smul.addr %s482, 2
        %s484 = smul.addr %s483, 8
        %s485 = scalar_lea.vmem %s0, %s484
      $region84: #{vit_segmentation_forward.8} parent=79 // pred_fallthru
        _
    $region80: #{vit_segmentation_forward.8} parent=5 // pred_fallthru
      _
    %p486 = scmp.le.s32.totalorder 1, %s23
    %p487 = scmp.lt.s32.totalorder %s23, 3
    %p488 = pnand %p486, %p487
    %p489 = pneg %p488
    // Predicated region
    $region85: #{vit_segmentation_forward.8} parent=5 // pred_check
      _
    $region86: #{vit_segmentation_forward.8} parent=5 // pred_check_branch
      %491 = sbr.rel (%p488) target = $region88
    $region87: #{vit_segmentation_forward.8} parent=5 // pred_region
      %s492 = ssub.s32 %s23, 1
      %p493 = scmp.lt.s32.totalorder %s28, 1
      %s494 = scalar_select %p493, %s28, 1
      %s495 = smul.addr %s494, 2
      %s496 = smul.addr %s495, 8
      %s497 = scalar_lea.vmem %s0, %s496
      %p498 = pneg %p49
      %p499 = pneg %p46
      %p500 = pneg %p70
      %p501 = pneg %p67
      %p502 = pneg %p91
      %p503 = pneg %p88
      %p504 = pneg %p112
      %p505 = pneg %p109
      %p506 = pneg %p133
      %p507 = pneg %p130
      %p508 = pneg %p154
      %p509 = pneg %p151
      %p510 = pneg %p175
      %p511 = pneg %p172
      %p512 = pneg %p196
      %p513 = pneg %p193
      %p514 = pneg %p217
      %p515 = pneg %p214
      %p516 = pneg %p238
      %p517 = pneg %p235
      %p518 = pneg %p259
      %p519 = pneg %p256
      %p520 = pneg %p280
      %p521 = pneg %p277
      %p522 = pneg %p301
      %p523 = pneg %p298
      %p524 = pneg %p322
      %p525 = pneg %p319
      %p526 = pneg %p343
      %p527 = pneg %p340
      %p528 = pneg %p364
      %p529 = pneg %p361
      %p530 = pneg %p385
      %p531 = pneg %p382
      %p532 = pneg %p411
      %p533 = pneg %p408
      %p534 = scmp.lt.s32.totalorder %s28, 1
      %s535 = scalar_select %p534, %s28, 1
      %s536 = smul.addr %s535, 2
      %s537 = smul.addr %s536, 8
      %s538 = scalar_lea.vmem %s17, %s537
      %p539 = scmp.lt.s32.totalorder %s28, 1
      %s540 = scalar_select %p539, %s28, 1
      %s541 = smul.addr %s540, 2
      %s542 = smul.addr %s541, 8
      %s543 = scalar_lea.vmem %s0, %s542
      %p544 = scmp.lt.s32.totalorder %s28, 1
      %s545 = scalar_select %p544, %s28, 1
      %s546 = smul.addr %s545, 2
      %s547 = smul.addr %s546, 8
      %s548 = scalar_lea.vmem %s17, %s547
      %v550 = vld [vmem:[%s543] sm:$0xff]
      %v551 = vld [vmem:[%s543 + $0x8] sm:$0xff]
      %v552 = vld [vmem:[%s1] sm:$0x1]
      %v553 = vld [vmem:[%s2] sm:$0x1]
      %554 = vadd.xlane.f32.xlu0 %v550
      %v555 = vpop.xlane.xlu0 %554
      %556 = vadd.xlane.f32.xlu0 %v551
      %v557 = vpop.xlane.xlu0 %556
      %v558 = vrcp.pop 128.0
      %v559 = vmul.f32 %v555, %v558
      %v560 = vmul.f32 %v557, %v558
      %v561 = vsub.f32 %v550, %v559
      %v562 = vsub.f32 %v551, %v560
      %v563 = vmul.f32 %v561, %v561
      %v564 = vmul.f32 %v562, %v562
      %565 = vadd.xlane.f32.xlu0 %v563
      %v566 = vpop.xlane.xlu0 %565
      %567 = vadd.xlane.f32.xlu0 %v564
      %v568 = vpop.xlane.xlu0 %567
      %v569 = vmul.f32 %v566, %v558
      %v570 = vmul.f32 %v568, %v558
      %v571 = vadd.f32 %v569, 1e-06
      %v572 = vadd.f32 %v570, 1e-06
      %v573 = vrsqrt.pop %v571
      %v574 = vrsqrt.pop %v572
      %v575 = vmul.f32 %v561, %v573
      %v576 = vmul.f32 %v562, %v574
      %v578 = vlaneseq
      %v579 = vshrl.u32 %v578, 7
      %v580 = vsub.s32 0, %v579
      %v581 = vrot.slane %v552, %v580
      %v583 = vmul.f32 %v575, %v581
      %v584 = vmul.f32 %v576, %v581
      %v586 = vlaneseq
      %v587 = vshrl.u32 %v586, 7
      %v588 = vsub.s32 0, %v587
      %v589 = vrot.slane %v553, %v588
      %v591 = vadd.f32 %v583, %v589
      %v592 = vadd.f32 %v584, %v589
      %v593 = vpack.c.bf16 %v592, %v591
      %v594 = vld [vmem:[%s3] sm:$0xf]
      %v595 = vld [vmem:[%s3 + $0x4] sm:$0xf]
      %v596 = vld [vmem:[%s3 + $0x8] sm:$0xf]
      %v597 = vld [vmem:[%s3 + $0xc] sm:$0xf]
      %v598 = vld [vmem:[%s3 + $0x10] sm:$0xf]
      %v599 = vld [vmem:[%s3 + $0x14] sm:$0xf]
      %v600 = vld [vmem:[%s3 + $0x18] sm:$0xf]
      %v601 = vld [vmem:[%s3 + $0x1c] sm:$0xf]
      %v602 = vld [vmem:[%s3 + $0x20] sm:$0xf]
      %v603 = vld [vmem:[%s3 + $0x24] sm:$0xf]
      %v604 = vld [vmem:[%s3 + $0x28] sm:$0xf]
      %v605 = vld [vmem:[%s3 + $0x2c] sm:$0xf]
      %v606 = vld [vmem:[%s3 + $0x30] sm:$0xf]
      %v607 = vld [vmem:[%s3 + $0x34] sm:$0xf]
      %v608 = vld [vmem:[%s3 + $0x38] sm:$0xf]
      %v609 = vld [vmem:[%s3 + $0x3c] sm:$0xf]
      %v610 = vld [vmem:[%s6] sm:$0x1]
      %v612 = vlaneseq
      %v613 = vshrl.u32 %v612, 7
      %v614 = vsub.s32 0, %v613
      %v615 = vrot.slane %v610, %v614
      %v633 = vunpack.c.l.b16 %v594
      %v634 = vunpack.c.l.b16 %v595
      %v635 = vunpack.c.l.b16 %v596
      %v636 = vunpack.c.l.b16 %v597
      %v637 = vunpack.c.l.b16 %v598
      %v638 = vunpack.c.l.b16 %v599
      %v639 = vunpack.c.l.b16 %v600
      %v640 = vunpack.c.l.b16 %v601
      %v641 = vunpack.c.l.b16 %v602
      %v642 = vunpack.c.l.b16 %v603
      %v643 = vunpack.c.l.b16 %v604
      %v644 = vunpack.c.l.b16 %v605
      %v645 = vunpack.c.l.b16 %v606
      %v646 = vunpack.c.l.b16 %v607
      %v647 = vunpack.c.l.b16 %v608
      %v648 = vunpack.c.l.b16 %v609
      %v649 = vpack.c.b16 %v634, %v633
      %v650 = vpack.c.b16 %v636, %v635
      %v651 = vpack.c.b16 %v638, %v637
      %v652 = vpack.c.b16 %v640, %v639
      %v653 = vpack.c.b16 %v642, %v641
      %v654 = vpack.c.b16 %v644, %v643
      %v655 = vpack.c.b16 %v646, %v645
      %v656 = vpack.c.b16 %v648, %v647
      %665 = vmatprep.subr.bf16.mxu0 0
      %666 = vmatpush1.bf16.msra.mxu0 %v656
      %667 = vmatprep.subr.bf16.mxu0 0
      %668 = vmatpush1.bf16.msra.mxu0 %v655
      %669 = vmatprep.subr.bf16.mxu0 0
      %670 = vmatpush1.bf16.msra.mxu0 %v654
      %671 = vmatprep.subr.bf16.mxu0 0
      %672 = vmatpush1.bf16.msra.mxu0 %v653
      %673 = vmatprep.subr.bf16.mxu0 0
      %674 = vmatpush1.bf16.msra.mxu0 %v652
      %675 = vmatprep.subr.bf16.mxu0 0
      %676 = vmatpush1.bf16.msra.mxu0 %v651
      %677 = vmatprep.subr.bf16.mxu0 0
      %678 = vmatpush1.bf16.msra.mxu0 %v650
      %679 = vmatprep.subr.bf16.mxu0 0
      %680 = vmatpush1.bf16.msra.mxu0 %v649
      %681 = vmatprep.subr.bf16.mxu0 0
      %682 = vmatpush2.bf16.msra.mxu0 0
      %683 = vmatprep.subr.bf16.mxu0 0
      %684 = vmatpush2.bf16.msra.mxu0 0
      %685 = vmatprep.subr.bf16.mxu0 0
      %686 = vmatpush2.bf16.msra.mxu0 0
      %687 = vmatprep.subr.bf16.mxu0 0
      %688 = vmatpush2.bf16.msra.mxu0 0
      %689 = vmatprep.subr.bf16.mxu0 0
      %690 = vmatpush2.bf16.msra.mxu0 0
      %691 = vmatprep.subr.bf16.mxu0 0
      %692 = vmatpush2.bf16.msra.mxu0 0
      %693 = vmatprep.subr.bf16.mxu0 0
      %694 = vmatpush2.bf16.msra.mxu0 0
      %695 = vmatprep.subr.bf16.mxu0 0
      %696 = vmatpush2.bf16.msra.mxu0 0
      %697 = vmatprep.mubr.bf16.mxu0 0
      %698 = vmatmul.mubr.bf16.gmra.mxu0 %v593
      %v699 = vpop.f32.mrf.mxu0
      %v700 = vadd.f32 %v615, %v699
      %v701 = vpop.f32.mrf.mxu0
      %v702 = vpop.f32.mrf.mxu0
      %v703 = vadd.f32 %v615, %v702
      %v704 = vpop.f32.mrf.mxu0
      %705 = vdwg.mxu0
      %v706 = vld [vmem:[%s4] sm:$0xf]
      %v707 = vld [vmem:[%s4 + $0x4] sm:$0xf]
      %v708 = vld [vmem:[%s4 + $0x8] sm:$0xf]
      %v709 = vld [vmem:[%s4 + $0xc] sm:$0xf]
      %v710 = vld [vmem:[%s4 + $0x10] sm:$0xf]
      %v711 = vld [vmem:[%s4 + $0x14] sm:$0xf]
      %v712 = vld [vmem:[%s4 + $0x18] sm:$0xf]
      %v713 = vld [vmem:[%s4 + $0x1c] sm:$0xf]
      %v714 = vld [vmem:[%s4 + $0x20] sm:$0xf]
      %v715 = vld [vmem:[%s4 + $0x24] sm:$0xf]
      %v716 = vld [vmem:[%s4 + $0x28] sm:$0xf]
      %v717 = vld [vmem:[%s4 + $0x2c] sm:$0xf]
      %v718 = vld [vmem:[%s4 + $0x30] sm:$0xf]
      %v719 = vld [vmem:[%s4 + $0x34] sm:$0xf]
      %v720 = vld [vmem:[%s4 + $0x38] sm:$0xf]
      %v721 = vld [vmem:[%s4 + $0x3c] sm:$0xf]
      %v722 = vld [vmem:[%s7] sm:$0x1]
      %v724 = vlaneseq
      %v725 = vshrl.u32 %v724, 7
      %v726 = vsub.s32 0, %v725
      %v727 = vrot.slane %v722, %v726
      %v745 = vunpack.c.l.b16 %v706
      %v746 = vunpack.c.l.b16 %v707
      %v747 = vunpack.c.l.b16 %v708
      %v748 = vunpack.c.l.b16 %v709
      %v749 = vunpack.c.l.b16 %v710
      %v750 = vunpack.c.l.b16 %v711
      %v751 = vunpack.c.l.b16 %v712
      %v752 = vunpack.c.l.b16 %v713
      %v753 = vunpack.c.l.b16 %v714
      %v754 = vunpack.c.l.b16 %v715
      %v755 = vunpack.c.l.b16 %v716
      %v756 = vunpack.c.l.b16 %v717
      %v757 = vunpack.c.l.b16 %v718
      %v758 = vunpack.c.l.b16 %v719
      %v759 = vunpack.c.l.b16 %v720
      %v760 = vunpack.c.l.b16 %v721
      %v761 = vpack.c.b16 %v746, %v745
      %v762 = vpack.c.b16 %v748, %v747
      %v763 = vpack.c.b16 %v750, %v749
      %v764 = vpack.c.b16 %v752, %v751
      %v765 = vpack.c.b16 %v754, %v753
      %v766 = vpack.c.b16 %v756, %v755
      %v767 = vpack.c.b16 %v758, %v757
      %v768 = vpack.c.b16 %v760, %v759
      %777 = vmatprep.subr.bf16.mxu0 0
      %778 = vmatpush1.bf16.msra.mxu0 %v768
      %779 = vmatprep.subr.bf16.mxu0 0
      %780 = vmatpush1.bf16.msra.mxu0 %v767
      %781 = vmatprep.subr.bf16.mxu0 0
      %782 = vmatpush1.bf16.msra.mxu0 %v766
      %783 = vmatprep.subr.bf16.mxu0 0
      %784 = vmatpush1.bf16.msra.mxu0 %v765
      %785 = vmatprep.subr.bf16.mxu0 0
      %786 = vmatpush1.bf16.msra.mxu0 %v764
      %787 = vmatprep.subr.bf16.mxu0 0
      %788 = vmatpush1.bf16.msra.mxu0 %v763
      %789 = vmatprep.subr.bf16.mxu0 0
      %790 = vmatpush1.bf16.msra.mxu0 %v762
      %791 = vmatprep.subr.bf16.mxu0 0
      %792 = vmatpush1.bf16.msra.mxu0 %v761
      %793 = vmatprep.subr.bf16.mxu0 0
      %794 = vmatpush2.bf16.msra.mxu0 0
      %795 = vmatprep.subr.bf16.mxu0 0
      %796 = vmatpush2.bf16.msra.mxu0 0
      %797 = vmatprep.subr.bf16.mxu0 0
      %798 = vmatpush2.bf16.msra.mxu0 0
      %799 = vmatprep.subr.bf16.mxu0 0
      %800 = vmatpush2.bf16.msra.mxu0 0
      %801 = vmatprep.subr.bf16.mxu0 0
      %802 = vmatpush2.bf16.msra.mxu0 0
      %803 = vmatprep.subr.bf16.mxu0 0
      %804 = vmatpush2.bf16.msra.mxu0 0
      %805 = vmatprep.subr.bf16.mxu0 0
      %806 = vmatpush2.bf16.msra.mxu0 0
      %807 = vmatprep.subr.bf16.mxu0 0
      %808 = vmatpush2.bf16.msra.mxu0 0
      %809 = vmatprep.mubr.bf16.mxu0 0
      %810 = vmatmul.mubr.bf16.gmra.mxu0 %v593
      %v811 = vpop.f32.mrf.mxu0
      %v812 = vadd.f32 %v727, %v811
      %v813 = vpop.f32.mrf.mxu0
      %v814 = vpop.f32.mrf.mxu0
      %v815 = vadd.f32 %v727, %v814
      %v816 = vpop.f32.mrf.mxu0
      %817 = vdwg.mxu0
      %v818 = vld [vmem:[%s5] sm:$0xf]
      %v819 = vld [vmem:[%s5 + $0x4] sm:$0xf]
      %v820 = vld [vmem:[%s5 + $0x8] sm:$0xf]
      %v821 = vld [vmem:[%s5 + $0xc] sm:$0xf]
      %v822 = vld [vmem:[%s5 + $0x10] sm:$0xf]
      %v823 = vld [vmem:[%s5 + $0x14] sm:$0xf]
      %v824 = vld [vmem:[%s5 + $0x18] sm:$0xf]
      %v825 = vld [vmem:[%s5 + $0x1c] sm:$0xf]
      %v826 = vld [vmem:[%s5 + $0x20] sm:$0xf]
      %v827 = vld [vmem:[%s5 + $0x24] sm:$0xf]
      %v828 = vld [vmem:[%s5 + $0x28] sm:$0xf]
      %v829 = vld [vmem:[%s5 + $0x2c] sm:$0xf]
      %v830 = vld [vmem:[%s5 + $0x30] sm:$0xf]
      %v831 = vld [vmem:[%s5 + $0x34] sm:$0xf]
      %v832 = vld [vmem:[%s5 + $0x38] sm:$0xf]
      %v833 = vld [vmem:[%s5 + $0x3c] sm:$0xf]
      %v834 = vld [vmem:[%s8] sm:$0x1]
      %v836 = vlaneseq
      %v837 = vshrl.u32 %v836, 7
      %v838 = vsub.s32 0, %v837
      %v839 = vrot.slane %v834, %v838
      %v857 = vunpack.c.l.b16 %v818
      %v858 = vunpack.c.l.b16 %v819
      %v859 = vunpack.c.l.b16 %v820
      %v860 = vunpack.c.l.b16 %v821
      %v861 = vunpack.c.l.b16 %v822
      %v862 = vunpack.c.l.b16 %v823
      %v863 = vunpack.c.l.b16 %v824
      %v864 = vunpack.c.l.b16 %v825
      %v865 = vunpack.c.l.b16 %v826
      %v866 = vunpack.c.l.b16 %v827
      %v867 = vunpack.c.l.b16 %v828
      %v868 = vunpack.c.l.b16 %v829
      %v869 = vunpack.c.l.b16 %v830
      %v870 = vunpack.c.l.b16 %v831
      %v871 = vunpack.c.l.b16 %v832
      %v872 = vunpack.c.l.b16 %v833
      %v873 = vpack.c.b16 %v858, %v857
      %v874 = vpack.c.b16 %v860, %v859
      %v875 = vpack.c.b16 %v862, %v861
      %v876 = vpack.c.b16 %v864, %v863
      %v877 = vpack.c.b16 %v866, %v865
      %v878 = vpack.c.b16 %v868, %v867
      %v879 = vpack.c.b16 %v870, %v869
      %v880 = vpack.c.b16 %v872, %v871
      %889 = vmatprep.subr.bf16.mxu0 0
      %890 = vmatpush1.bf16.msra.mxu0 %v880
      %891 = vmatprep.subr.bf16.mxu0 0
      %892 = vmatpush1.bf16.msra.mxu0 %v879
      %893 = vmatprep.subr.bf16.mxu0 0
      %894 = vmatpush1.bf16.msra.mxu0 %v878
      %895 = vmatprep.subr.bf16.mxu0 0
      %896 = vmatpush1.bf16.msra.mxu0 %v877
      %897 = vmatprep.subr.bf16.mxu0 0
      %898 = vmatpush1.bf16.msra.mxu0 %v876
      %899 = vmatprep.subr.bf16.mxu0 0
      %900 = vmatpush1.bf16.msra.mxu0 %v875
      %901 = vmatprep.subr.bf16.mxu0 0
      %902 = vmatpush1.bf16.msra.mxu0 %v874
      %903 = vmatprep.subr.bf16.mxu0 0
      %904 = vmatpush1.bf16.msra.mxu0 %v873
      %905 = vmatprep.subr.bf16.mxu0 0
      %906 = vmatpush2.bf16.msra.mxu0 0
      %907 = vmatprep.subr.bf16.mxu0 0
      %908 = vmatpush2.bf16.msra.mxu0 0
      %909 = vmatprep.subr.bf16.mxu0 0
      %910 = vmatpush2.bf16.msra.mxu0 0
      %911 = vmatprep.subr.bf16.mxu0 0
      %912 = vmatpush2.bf16.msra.mxu0 0
      %913 = vmatprep.subr.bf16.mxu0 0
      %914 = vmatpush2.bf16.msra.mxu0 0
      %915 = vmatprep.subr.bf16.mxu0 0
      %916 = vmatpush2.bf16.msra.mxu0 0
      %917 = vmatprep.subr.bf16.mxu0 0
      %918 = vmatpush2.bf16.msra.mxu0 0
      %919 = vmatprep.subr.bf16.mxu0 0
      %920 = vmatpush2.bf16.msra.mxu0 0
      %921 = vmatprep.mubr.bf16.mxu0 0
      %922 = vmatmul.mubr.bf16.gmra.mxu0 %v593
      %v923 = vpop.f32.mrf.mxu0
      %v924 = vadd.f32 %v839, %v923
      %v925 = vpop.f32.mrf.mxu0
      %v926 = vpop.f32.mrf.mxu0
      %v927 = vadd.f32 %v839, %v926
      %v928 = vpop.f32.mrf.mxu0
      %929 = vdwg.mxu0
      %v930 = vpack.c.bf16 %v703, %v700
      %v931 = vpack.c.bf16 %v815, %v812
      %vm932 = vcmask 261120
      %v934 = vsel %vm932, %v930, 0
      %v937 = vsel %vm932, %v931, 0
      %939 = vmatprep.subr.bf16.mxu0 0
      %940 = vmatpush1.bf16.xpose.msra.mxu0 0
      %941 = vmatprep.subr.bf16.mxu0 0
      %942 = vmatpush1.bf16.xpose.msra.mxu0 0
      %943 = vmatprep.subr.bf16.mxu0 0
      %944 = vmatpush1.bf16.xpose.msra.mxu0 0
      %945 = vmatprep.subr.bf16.mxu0 0
      %946 = vmatpush1.bf16.xpose.msra.mxu0 0
      %947 = vmatprep.subr.bf16.mxu0 0
      %948 = vmatpush1.bf16.xpose.msra.mxu0 0
      %949 = vmatprep.subr.bf16.mxu0 0
      %950 = vmatpush1.bf16.xpose.msra.mxu0 0
      %951 = vmatprep.subr.bf16.mxu0 0
      %952 = vmatpush1.bf16.xpose.msra.mxu0 0
      %953 = vmatprep.subr.bf16.mxu0 0
      %954 = vmatpush1.bf16.xpose.msra.mxu0 %v937
      %955 = vmatprep.subr.bf16.mxu0 0
      %956 = vmatpush2.bf16.xpose.msra.mxu0 0
      %957 = vmatprep.subr.bf16.mxu0 0
      %958 = vmatpush2.bf16.xpose.msra.mxu0 0
      %959 = vmatprep.subr.bf16.mxu0 0
      %960 = vmatpush2.bf16.xpose.msra.mxu0 0
      %961 = vmatprep.subr.bf16.mxu0 0
      %962 = vmatpush2.bf16.xpose.msra.mxu0 0
      %963 = vmatprep.subr.bf16.mxu0 0
      %964 = vmatpush2.bf16.xpose.msra.mxu0 0
      %965 = vmatprep.subr.bf16.mxu0 0
      %966 = vmatpush2.bf16.xpose.msra.mxu0 0
      %967 = vmatprep.subr.bf16.mxu0 0
      %968 = vmatpush2.bf16.xpose.msra.mxu0 0
      %969 = vmatprep.subr.bf16.mxu0 0
      %970 = vmatpush2.bf16.xpose.msra.mxu0 0
      %971 = vmatprep.mubr.bf16.mxu0 0
      %972 = vmatmul.mubr.bf16.gmra.mxu0 %v934
      %v973 = vpop.f32.mrf.mxu0
      %v974 = vadd.f32 0.0, %v973
      %v975 = vpop.f32.mrf.mxu0
      %v976 = vpop.f32.mrf.mxu0
      %v977 = vadd.f32 0.0, %v976
      %v978 = vpop.f32.mrf.mxu0
      %979 = vdwg.mxu0
      %v980 = vmul.f32 %v974, 0.17677669
      %v981 = vmul.f32 %v977, 0.17677669
      %vm982 = vcmask 130048
      %v983 = vsel %vm982, %v980, -inf
      %984 = vmax.xlane.f32.xlu0 %v983
      %v985 = vpop.xlane.xlu0 %984
      %v986 = vsel %vm982, %v981, -inf
      %987 = vmax.xlane.f32.xlu0 %v986
      %v988 = vpop.xlane.xlu0 %987
      %v989 = vsub.f32 %v980, %v985
      %v990 = vsub.f32 %v981, %v988
      %v991 = vmul.f32 %v989, 1.442695
      %v992 = vpow.pop %v991
      %v993 = vmul.f32 %v990, 1.442695
      %v994 = vpow.pop %v993
      %v995 = vsel %vm982, %v992, 0.0
      %996 = vadd.xlane.f32.xlu0 %v995
      %v997 = vpop.xlane.xlu0 %996
      %v998 = vsel %vm982, %v994, 0.0
      %999 = vadd.xlane.f32.xlu0 %v998
      %v1000 = vpop.xlane.xlu0 %999
      %v1001 = vrcp.pop %v997
      %v1002 = vrcp.pop %v1000
      %v1003 = vmul.f32 %v992, %v1001
      %v1004 = vmul.f32 %v994, %v1002
      %v1005 = vpack.c.bf16 %v1004, %v1003
      %v1006 = vpack.c.bf16 %v927, %v924
      %v1008 = vsel %vm982, %v1005, 0
      %1010 = vmatprep.subr.bf16.mxu0 0
      %1011 = vmatpush1.bf16.msra.mxu0 0
      %1012 = vmatprep.subr.bf16.mxu0 0
      %1013 = vmatpush1.bf16.msra.mxu0 0
      %1014 = vmatprep.subr.bf16.mxu0 0
      %1015 = vmatpush1.bf16.msra.mxu0 0
      %1016 = vmatprep.subr.bf16.mxu0 0
      %1017 = vmatpush1.bf16.msra.mxu0 0
      %1018 = vmatprep.subr.bf16.mxu0 0
      %1019 = vmatpush1.bf16.msra.mxu0 0
      %1020 = vmatprep.subr.bf16.mxu0 0
      %1021 = vmatpush1.bf16.msra.mxu0 0
      %1022 = vmatprep.subr.bf16.mxu0 0
      %1023 = vmatpush1.bf16.msra.mxu0 0
      %1024 = vmatprep.subr.bf16.mxu0 0
      %1025 = vmatpush1.bf16.msra.mxu0 %v1006
      %1026 = vmatprep.subr.bf16.mxu0 0
      %1027 = vmatpush2.bf16.msra.mxu0 0
      %1028 = vmatprep.subr.bf16.mxu0 0
      %1029 = vmatpush2.bf16.msra.mxu0 0
      %1030 = vmatprep.subr.bf16.mxu0 0
      %1031 = vmatpush2.bf16.msra.mxu0 0
      %1032 = vmatprep.subr.bf16.mxu0 0
      %1033 = vmatpush2.bf16.msra.mxu0 0
      %1034 = vmatprep.subr.bf16.mxu0 0
      %1035 = vmatpush2.bf16.msra.mxu0 0
      %1036 = vmatprep.subr.bf16.mxu0 0
      %1037 = vmatpush2.bf16.msra.mxu0 0
      %1038 = vmatprep.subr.bf16.mxu0 0
      %1039 = vmatpush2.bf16.msra.mxu0 0
      %1040 = vmatprep.subr.bf16.mxu0 0
      %1041 = vmatpush2.bf16.msra.mxu0 0
      %1042 = vmatprep.mubr.bf16.mxu0 0
      %1043 = vmatmul.mubr.bf16.gmra.mxu0 %v1008
      %v1044 = vpop.f32.mrf.mxu0
      %v1045 = vadd.f32 0.0, %v1044
      %v1046 = vpop.f32.mrf.mxu0
      %v1047 = vpop.f32.mrf.mxu0
      %v1048 = vadd.f32 0.0, %v1047
      %v1049 = vpop.f32.mrf.mxu0
      %1050 = vdwg.mxu0
      %v1051 = vpack.c.bf16 %v1048, %v1045
      %v1052 = vld [vmem:[%s9] sm:$0xf]
      %v1053 = vld [vmem:[%s9 + $0x4] sm:$0xf]
      %v1054 = vld [vmem:[%s9 + $0x8] sm:$0xf]
      %v1055 = vld [vmem:[%s9 + $0xc] sm:$0xf]
      %s1056 = scalar_lea.vmem %s3, 64
      %v1057 = vld [vmem:[%s1056] sm:$0xf]
      %v1058 = vld [vmem:[%s1056 + $0x4] sm:$0xf]
      %v1059 = vld [vmem:[%s1056 + $0x8] sm:$0xf]
      %v1060 = vld [vmem:[%s1056 + $0xc] sm:$0xf]
      %v1061 = vld [vmem:[%s1056 + $0x10] sm:$0xf]
      %v1062 = vld [vmem:[%s1056 + $0x14] sm:$0xf]
      %v1063 = vld [vmem:[%s1056 + $0x18] sm:$0xf]
      %v1064 = vld [vmem:[%s1056 + $0x1c] sm:$0xf]
      %v1065 = vld [vmem:[%s1056 + $0x20] sm:$0xf]
      %v1066 = vld [vmem:[%s1056 + $0x24] sm:$0xf]
      %v1067 = vld [vmem:[%s1056 + $0x28] sm:$0xf]
      %v1068 = vld [vmem:[%s1056 + $0x2c] sm:$0xf]
      %v1069 = vld [vmem:[%s1056 + $0x30] sm:$0xf]
      %v1070 = vld [vmem:[%s1056 + $0x34] sm:$0xf]
      %v1071 = vld [vmem:[%s1056 + $0x38] sm:$0xf]
      %v1072 = vld [vmem:[%s1056 + $0x3c] sm:$0xf]
      %s1073 = scalar_lea.vmem %s6, 1
      %v1074 = vld [vmem:[%s1073] sm:$0x1]
      %v1076 = vlaneseq
      %v1077 = vshrl.u32 %v1076, 7
      %v1078 = vsub.s32 0, %v1077
      %v1079 = vrot.slane %v1074, %v1078
      %v1097 = vunpack.c.l.b16 %v1057
      %v1098 = vunpack.c.l.b16 %v1058
      %v1099 = vunpack.c.l.b16 %v1059
      %v1100 = vunpack.c.l.b16 %v1060
      %v1101 = vunpack.c.l.b16 %v1061
      %v1102 = vunpack.c.l.b16 %v1062
      %v1103 = vunpack.c.l.b16 %v1063
      %v1104 = vunpack.c.l.b16 %v1064
      %v1105 = vunpack.c.l.b16 %v1065
      %v1106 = vunpack.c.l.b16 %v1066
      %v1107 = vunpack.c.l.b16 %v1067
      %v1108 = vunpack.c.l.b16 %v1068
      %v1109 = vunpack.c.l.b16 %v1069
      %v1110 = vunpack.c.l.b16 %v1070
      %v1111 = vunpack.c.l.b16 %v1071
      %v1112 = vunpack.c.l.b16 %v1072
      %v1113 = vpack.c.b16 %v1098, %v1097
      %v1114 = vpack.c.b16 %v1100, %v1099
      %v1115 = vpack.c.b16 %v1102, %v1101
      %v1116 = vpack.c.b16 %v1104, %v1103
      %v1117 = vpack.c.b16 %v1106, %v1105
      %v1118 = vpack.c.b16 %v1108, %v1107
      %v1119 = vpack.c.b16 %v1110, %v1109
      %v1120 = vpack.c.b16 %v1112, %v1111
      %1129 = vmatprep.subr.bf16.mxu0 0
      %1130 = vmatpush1.bf16.msra.mxu0 %v1120
      %1131 = vmatprep.subr.bf16.mxu0 0
      %1132 = vmatpush1.bf16.msra.mxu0 %v1119
      %1133 = vmatprep.subr.bf16.mxu0 0
      %1134 = vmatpush1.bf16.msra.mxu0 %v1118
      %1135 = vmatprep.subr.bf16.mxu0 0
      %1136 = vmatpush1.bf16.msra.mxu0 %v1117
      %1137 = vmatprep.subr.bf16.mxu0 0
      %1138 = vmatpush1.bf16.msra.mxu0 %v1116
      %1139 = vmatprep.subr.bf16.mxu0 0
      %1140 = vmatpush1.bf16.msra.mxu0 %v1115
      %1141 = vmatprep.subr.bf16.mxu0 0
      %1142 = vmatpush1.bf16.msra.mxu0 %v1114
      %1143 = vmatprep.subr.bf16.mxu0 0
      %1144 = vmatpush1.bf16.msra.mxu0 %v1113
      %1145 = vmatprep.subr.bf16.mxu0 0
      %1146 = vmatpush2.bf16.msra.mxu0 0
      %1147 = vmatprep.subr.bf16.mxu0 0
      %1148 = vmatpush2.bf16.msra.mxu0 0
      %1149 = vmatprep.subr.bf16.mxu0 0
      %1150 = vmatpush2.bf16.msra.mxu0 0
      %1151 = vmatprep.subr.bf16.mxu0 0
      %1152 = vmatpush2.bf16.msra.mxu0 0
      %1153 = vmatprep.subr.bf16.mxu0 0
      %1154 = vmatpush2.bf16.msra.mxu0 0
      %1155 = vmatprep.subr.bf16.mxu0 0
      %1156 = vmatpush2.bf16.msra.mxu0 0
      %1157 = vmatprep.subr.bf16.mxu0 0
      %1158 = vmatpush2.bf16.msra.mxu0 0
      %1159 = vmatprep.subr.bf16.mxu0 0
      %1160 = vmatpush2.bf16.msra.mxu0 0
      %1161 = vmatprep.mubr.bf16.mxu0 0
      %1162 = vmatmul.mubr.bf16.gmra.mxu0 %v593
      %v1163 = vpop.f32.mrf.mxu0
      %v1164 = vadd.f32 %v1079, %v1163
      %v1165 = vpop.f32.mrf.mxu0
      %v1166 = vpop.f32.mrf.mxu0
      %v1167 = vadd.f32 %v1079, %v1166
      %v1168 = vpop.f32.mrf.mxu0
      %1169 = vdwg.mxu0
      %s1170 = scalar_lea.vmem %s4, 64
      %v1171 = vld [vmem:[%s1170] sm:$0xf]
      %v1172 = vld [vmem:[%s1170 + $0x4] sm:$0xf]
      %v1173 = vld [vmem:[%s1170 + $0x8] sm:$0xf]
      %v1174 = vld [vmem:[%s1170 + $0xc] sm:$0xf]
      %v1175 = vld [vmem:[%s1170 + $0x10] sm:$0xf]
      %v1176 = vld [vmem:[%s1170 + $0x14] sm:$0xf]
      %v1177 = vld [vmem:[%s1170 + $0x18] sm:$0xf]
      %v1178 = vld [vmem:[%s1170 + $0x1c] sm:$0xf]
      %v1179 = vld [vmem:[%s1170 + $0x20] sm:$0xf]
      %v1180 = vld [vmem:[%s1170 + $0x24] sm:$0xf]
      %v1181 = vld [vmem:[%s1170 + $0x28] sm:$0xf]
      %v1182 = vld [vmem:[%s1170 + $0x2c] sm:$0xf]
      %v1183 = vld [vmem:[%s1170 + $0x30] sm:$0xf]
      %v1184 = vld [vmem:[%s1170 + $0x34] sm:$0xf]
      %v1185 = vld [vmem:[%s1170 + $0x38] sm:$0xf]
      %v1186 = vld [vmem:[%s1170 + $0x3c] sm:$0xf]
      %s1187 = scalar_lea.vmem %s7, 1
      %v1188 = vld [vmem:[%s1187] sm:$0x1]
      %v1190 = vlaneseq
      %v1191 = vshrl.u32 %v1190, 7
      %v1192 = vsub.s32 0, %v1191
      %v1193 = vrot.slane %v1188, %v1192
      %v1211 = vunpack.c.l.b16 %v1171
      %v1212 = vunpack.c.l.b16 %v1172
      %v1213 = vunpack.c.l.b16 %v1173
      %v1214 = vunpack.c.l.b16 %v1174
      %v1215 = vunpack.c.l.b16 %v1175
      %v1216 = vunpack.c.l.b16 %v1176
      %v1217 = vunpack.c.l.b16 %v1177
      %v1218 = vunpack.c.l.b16 %v1178
      %v1219 = vunpack.c.l.b16 %v1179
      %v1220 = vunpack.c.l.b16 %v1180
      %v1221 = vunpack.c.l.b16 %v1181
      %v1222 = vunpack.c.l.b16 %v1182
      %v1223 = vunpack.c.l.b16 %v1183
      %v1224 = vunpack.c.l.b16 %v1184
      %v1225 = vunpack.c.l.b16 %v1185
      %v1226 = vunpack.c.l.b16 %v1186
      %v1227 = vpack.c.b16 %v1212, %v1211
      %v1228 = vpack.c.b16 %v1214, %v1213
      %v1229 = vpack.c.b16 %v1216, %v1215
      %v1230 = vpack.c.b16 %v1218, %v1217
      %v1231 = vpack.c.b16 %v1220, %v1219
      %v1232 = vpack.c.b16 %v1222, %v1221
      %v1233 = vpack.c.b16 %v1224, %v1223
      %v1234 = vpack.c.b16 %v1226, %v1225
      %1243 = vmatprep.subr.bf16.mxu0 0
      %1244 = vmatpush1.bf16.msra.mxu0 %v1234
      %1245 = vmatprep.subr.bf16.mxu0 0
      %1246 = vmatpush1.bf16.msra.mxu0 %v1233
      %1247 = vmatprep.subr.bf16.mxu0 0
      %1248 = vmatpush1.bf16.msra.mxu0 %v1232
      %1249 = vmatprep.subr.bf16.mxu0 0
      %1250 = vmatpush1.bf16.msra.mxu0 %v1231
      %1251 = vmatprep.subr.bf16.mxu0 0
      %1252 = vmatpush1.bf16.msra.mxu0 %v1230
      %1253 = vmatprep.subr.bf16.mxu0 0
      %1254 = vmatpush1.bf16.msra.mxu0 %v1229
      %1255 = vmatprep.subr.bf16.mxu0 0
      %1256 = vmatpush1.bf16.msra.mxu0 %v1228
      %1257 = vmatprep.subr.bf16.mxu0 0
      %1258 = vmatpush1.bf16.msra.mxu0 %v1227
      %1259 = vmatprep.subr.bf16.mxu0 0
      %1260 = vmatpush2.bf16.msra.mxu0 0
      %1261 = vmatprep.subr.bf16.mxu0 0
      %1262 = vmatpush2.bf16.msra.mxu0 0
      %1263 = vmatprep.subr.bf16.mxu0 0
      %1264 = vmatpush2.bf16.msra.mxu0 0
      %1265 = vmatprep.subr.bf16.mxu0 0
      %1266 = vmatpush2.bf16.msra.mxu0 0
      %1267 = vmatprep.subr.bf16.mxu0 0
      %1268 = vmatpush2.bf16.msra.mxu0 0
      %1269 = vmatprep.subr.bf16.mxu0 0
      %1270 = vmatpush2.bf16.msra.mxu0 0
      %1271 = vmatprep.subr.bf16.mxu0 0
      %1272 = vmatpush2.bf16.msra.mxu0 0
      %1273 = vmatprep.subr.bf16.mxu0 0
      %1274 = vmatpush2.bf16.msra.mxu0 0
      %1275 = vmatprep.mubr.bf16.mxu0 0
      %1276 = vmatmul.mubr.bf16.gmra.mxu0 %v593
      %v1277 = vpop.f32.mrf.mxu0
      %v1278 = vadd.f32 %v1193, %v1277
      %v1279 = vpop.f32.mrf.mxu0
      %v1280 = vpop.f32.mrf.mxu0
      %v1281 = vadd.f32 %v1193, %v1280
      %v1282 = vpop.f32.mrf.mxu0
      %1283 = vdwg.mxu0
      %s1284 = scalar_lea.vmem %s5, 64
      %v1285 = vld [vmem:[%s1284] sm:$0xf]
      %v1286 = vld [vmem:[%s1284 + $0x4] sm:$0xf]
      %v1287 = vld [vmem:[%s1284 + $0x8] sm:$0xf]
      %v1288 = vld [vmem:[%s1284 + $0xc] sm:$0xf]
      %v1289 = vld [vmem:[%s1284 + $0x10] sm:$0xf]
      %v1290 = vld [vmem:[%s1284 + $0x14] sm:$0xf]
      %v1291 = vld [vmem:[%s1284 + $0x18] sm:$0xf]
      %v1292 = vld [vmem:[%s1284 + $0x1c] sm:$0xf]
      %v1293 = vld [vmem:[%s1284 + $0x20] sm:$0xf]
      %v1294 = vld [vmem:[%s1284 + $0x24] sm:$0xf]
      %v1295 = vld [vmem:[%s1284 + $0x28] sm:$0xf]
      %v1296 = vld [vmem:[%s1284 + $0x2c] sm:$0xf]
      %v1297 = vld [vmem:[%s1284 + $0x30] sm:$0xf]
      %v1298 = vld [vmem:[%s1284 + $0x34] sm:$0xf]
      %v1299 = vld [vmem:[%s1284 + $0x38] sm:$0xf]
      %v1300 = vld [vmem:[%s1284 + $0x3c] sm:$0xf]
      %s1301 = scalar_lea.vmem %s8, 1
      %v1302 = vld [vmem:[%s1301] sm:$0x1]
      %v1304 = vlaneseq
      %v1305 = vshrl.u32 %v1304, 7
      %v1306 = vsub.s32 0, %v1305
      %v1307 = vrot.slane %v1302, %v1306
      %v1325 = vunpack.c.l.b16 %v1285
      %v1326 = vunpack.c.l.b16 %v1286
      %v1327 = vunpack.c.l.b16 %v1287
      %v1328 = vunpack.c.l.b16 %v1288
      %v1329 = vunpack.c.l.b16 %v1289
      %v1330 = vunpack.c.l.b16 %v1290
      %v1331 = vunpack.c.l.b16 %v1291
      %v1332 = vunpack.c.l.b16 %v1292
      %v1333 = vunpack.c.l.b16 %v1293
      %v1334 = vunpack.c.l.b16 %v1294
      %v1335 = vunpack.c.l.b16 %v1295
      %v1336 = vunpack.c.l.b16 %v1296
      %v1337 = vunpack.c.l.b16 %v1297
      %v1338 = vunpack.c.l.b16 %v1298
      %v1339 = vunpack.c.l.b16 %v1299
      %v1340 = vunpack.c.l.b16 %v1300
      %v1341 = vpack.c.b16 %v1326, %v1325
      %v1342 = vpack.c.b16 %v1328, %v1327
      %v1343 = vpack.c.b16 %v1330, %v1329
      %v1344 = vpack.c.b16 %v1332, %v1331
      %v1345 = vpack.c.b16 %v1334, %v1333
      %v1346 = vpack.c.b16 %v1336, %v1335
      %v1347 = vpack.c.b16 %v1338, %v1337
      %v1348 = vpack.c.b16 %v1340, %v1339
      %1357 = vmatprep.subr.bf16.mxu0 0
      %1358 = vmatpush1.bf16.msra.mxu0 %v1348
      %1359 = vmatprep.subr.bf16.mxu0 0
      %1360 = vmatpush1.bf16.msra.mxu0 %v1347
      %1361 = vmatprep.subr.bf16.mxu0 0
      %1362 = vmatpush1.bf16.msra.mxu0 %v1346
      %1363 = vmatprep.subr.bf16.mxu0 0
      %1364 = vmatpush1.bf16.msra.mxu0 %v1345
      %1365 = vmatprep.subr.bf16.mxu0 0
      %1366 = vmatpush1.bf16.msra.mxu0 %v1344
      %1367 = vmatprep.subr.bf16.mxu0 0
      %1368 = vmatpush1.bf16.msra.mxu0 %v1343
      %1369 = vmatprep.subr.bf16.mxu0 0
      %1370 = vmatpush1.bf16.msra.mxu0 %v1342
      %1371 = vmatprep.subr.bf16.mxu0 0
      %1372 = vmatpush1.bf16.msra.mxu0 %v1341
      %1373 = vmatprep.subr.bf16.mxu0 0
      %1374 = vmatpush2.bf16.msra.mxu0 0
      %1375 = vmatprep.subr.bf16.mxu0 0
      %1376 = vmatpush2.bf16.msra.mxu0 0
      %1377 = vmatprep.subr.bf16.mxu0 0
      %1378 = vmatpush2.bf16.msra.mxu0 0
      %1379 = vmatprep.subr.bf16.mxu0 0
      %1380 = vmatpush2.bf16.msra.mxu0 0
      %1381 = vmatprep.subr.bf16.mxu0 0
      %1382 = vmatpush2.bf16.msra.mxu0 0
      %1383 = vmatprep.subr.bf16.mxu0 0
      %1384 = vmatpush2.bf16.msra.mxu0 0
      %1385 = vmatprep.subr.bf16.mxu0 0
      %1386 = vmatpush2.bf16.msra.mxu0 0
      %1387 = vmatprep.subr.bf16.mxu0 0
      %1388 = vmatpush2.bf16.msra.mxu0 0
      %1389 = vmatprep.mubr.bf16.mxu0 0
      %1390 = vmatmul.mubr.bf16.gmra.mxu0 %v593
      %v1391 = vpop.f32.mrf.mxu0
      %v1392 = vadd.f32 %v1307, %v1391
      %v1393 = vpop.f32.mrf.mxu0
      %v1394 = vpop.f32.mrf.mxu0
      %v1395 = vadd.f32 %v1307, %v1394
      %v1396 = vpop.f32.mrf.mxu0
      %1397 = vdwg.mxu0
      %v1398 = vpack.c.bf16 %v1167, %v1164
      %v1399 = vpack.c.bf16 %v1281, %v1278
      %v1401 = vsel %vm932, %v1398, 0
      %v1404 = vsel %vm932, %v1399, 0
      %1406 = vmatprep.subr.bf16.mxu0 0
      %1407 = vmatpush1.bf16.xpose.msra.mxu0 0
      %1408 = vmatprep.subr.bf16.mxu0 0
      %1409 = vmatpush1.bf16.xpose.msra.mxu0 0
      %1410 = vmatprep.subr.bf16.mxu0 0
      %1411 = vmatpush1.bf16.xpose.msra.mxu0 0
      %1412 = vmatprep.subr.bf16.mxu0 0
      %1413 = vmatpush1.bf16.xpose.msra.mxu0 0
      %1414 = vmatprep.subr.bf16.mxu0 0
      %1415 = vmatpush1.bf16.xpose.msra.mxu0 0
      %1416 = vmatprep.subr.bf16.mxu0 0
      %1417 = vmatpush1.bf16.xpose.msra.mxu0 0
      %1418 = vmatprep.subr.bf16.mxu0 0
      %1419 = vmatpush1.bf16.xpose.msra.mxu0 0
      %1420 = vmatprep.subr.bf16.mxu0 0
      %1421 = vmatpush1.bf16.xpose.msra.mxu0 %v1404
      %1422 = vmatprep.subr.bf16.mxu0 0
      %1423 = vmatpush2.bf16.xpose.msra.mxu0 0
      %1424 = vmatprep.subr.bf16.mxu0 0
      %1425 = vmatpush2.bf16.xpose.msra.mxu0 0
      %1426 = vmatprep.subr.bf16.mxu0 0
      %1427 = vmatpush2.bf16.xpose.msra.mxu0 0
      %1428 = vmatprep.subr.bf16.mxu0 0
      %1429 = vmatpush2.bf16.xpose.msra.mxu0 0
      %1430 = vmatprep.subr.bf16.mxu0 0
      %1431 = vmatpush2.bf16.xpose.msra.mxu0 0
      %1432 = vmatprep.subr.bf16.mxu0 0
      %1433 = vmatpush2.bf16.xpose.msra.mxu0 0
      %1434 = vmatprep.subr.bf16.mxu0 0
      %1435 = vmatpush2.bf16.xpose.msra.mxu0 0
      %1436 = vmatprep.subr.bf16.mxu0 0
      %1437 = vmatpush2.bf16.xpose.msra.mxu0 0
      %1438 = vmatprep.mubr.bf16.mxu0 0
      %1439 = vmatmul.mubr.bf16.gmra.mxu0 %v1401
      %v1440 = vpop.f32.mrf.mxu0
      %v1441 = vadd.f32 0.0, %v1440
      %v1442 = vpop.f32.mrf.mxu0
      %v1443 = vpop.f32.mrf.mxu0
      %v1444 = vadd.f32 0.0, %v1443
      %v1445 = vpop.f32.mrf.mxu0
      %1446 = vdwg.mxu0
      %v1447 = vmul.f32 %v1441, 0.17677669
      %v1448 = vmul.f32 %v1444, 0.17677669
      %v1449 = vsel %vm982, %v1447, -inf
      %1450 = vmax.xlane.f32.xlu0 %v1449
      %v1451 = vpop.xlane.xlu0 %1450
      %v1452 = vsel %vm982, %v1448, -inf
      %1453 = vmax.xlane.f32.xlu0 %v1452
      %v1454 = vpop.xlane.xlu0 %1453
      %v1455 = vsub.f32 %v1447, %v1451
      %v1456 = vsub.f32 %v1448, %v1454
      %v1457 = vmul.f32 %v1455, 1.442695
      %v1458 = vpow.pop %v1457
      %v1459 = vmul.f32 %v1456, 1.442695
      %v1460 = vpow.pop %v1459
      %v1461 = vsel %vm982, %v1458, 0.0
      %1462 = vadd.xlane.f32.xlu0 %v1461
      %v1463 = vpop.xlane.xlu0 %1462
      %v1464 = vsel %vm982, %v1460, 0.0
      %1465 = vadd.xlane.f32.xlu0 %v1464
      %v1466 = vpop.xlane.xlu0 %1465
      %v1467 = vrcp.pop %v1463
      %v1468 = vrcp.pop %v1466
      %v1469 = vmul.f32 %v1458, %v1467
      %v1470 = vmul.f32 %v1460, %v1468
      %v1471 = vpack.c.bf16 %v1470, %v1469
      %v1472 = vpack.c.bf16 %v1395, %v1392
      %v1474 = vsel %vm982, %v1471, 0
      %1476 = vmatprep.subr.bf16.mxu0 0
      %1477 = vmatpush1.bf16.msra.mxu0 0
      %1478 = vmatprep.subr.bf16.mxu0 0
      %1479 = vmatpush1.bf16.msra.mxu0 0
      %1480 = vmatprep.subr.bf16.mxu0 0
      %1481 = vmatpush1.bf16.msra.mxu0 0
      %1482 = vmatprep.subr.bf16.mxu0 0
      %1483 = vmatpush1.bf16.msra.mxu0 0
      %1484 = vmatprep.subr.bf16.mxu0 0
      %1485 = vmatpush1.bf16.msra.mxu0 0
      %1486 = vmatprep.subr.bf16.mxu0 0
      %1487 = vmatpush1.bf16.msra.mxu0 0
      %1488 = vmatprep.subr.bf16.mxu0 0
      %1489 = vmatpush1.bf16.msra.mxu0 0
      %1490 = vmatprep.subr.bf16.mxu0 0
      %1491 = vmatpush1.bf16.msra.mxu0 %v1472
      %1492 = vmatprep.subr.bf16.mxu0 0
      %1493 = vmatpush2.bf16.msra.mxu0 0
      %1494 = vmatprep.subr.bf16.mxu0 0
      %1495 = vmatpush2.bf16.msra.mxu0 0
      %1496 = vmatprep.subr.bf16.mxu0 0
      %1497 = vmatpush2.bf16.msra.mxu0 0
      %1498 = vmatprep.subr.bf16.mxu0 0
      %1499 = vmatpush2.bf16.msra.mxu0 0
      %1500 = vmatprep.subr.bf16.mxu0 0
      %1501 = vmatpush2.bf16.msra.mxu0 0
      %1502 = vmatprep.subr.bf16.mxu0 0
      %1503 = vmatpush2.bf16.msra.mxu0 0
      %1504 = vmatprep.subr.bf16.mxu0 0
      %1505 = vmatpush2.bf16.msra.mxu0 0
      %1506 = vmatprep.subr.bf16.mxu0 0
      %1507 = vmatpush2.bf16.msra.mxu0 0
      %1508 = vmatprep.mubr.bf16.mxu0 0
      %1509 = vmatmul.mubr.bf16.gmra.mxu0 %v1474
      %v1510 = vpop.f32.mrf.mxu0
      %v1511 = vadd.f32 0.0, %v1510
      %v1512 = vpop.f32.mrf.mxu0
      %v1513 = vpop.f32.mrf.mxu0
      %v1514 = vadd.f32 0.0, %v1513
      %v1515 = vpop.f32.mrf.mxu0
      %1516 = vdwg.mxu0
      %v1517 = vpack.c.bf16 %v1514, %v1511
      %s1518 = scalar_lea.vmem %s9, 16
      %v1519 = vld [vmem:[%s1518] sm:$0xf]
      %v1520 = vld [vmem:[%s1518 + $0x4] sm:$0xf]
      %v1521 = vld [vmem:[%s1518 + $0x8] sm:$0xf]
      %v1522 = vld [vmem:[%s1518 + $0xc] sm:$0xf]
      %v1527 = vunpack.c.l.b16 %v1519
      %v1528 = vunpack.c.l.b16 %v1520
      %v1529 = vunpack.c.l.b16 %v1521
      %v1530 = vunpack.c.l.b16 %v1522
      %v1531 = vpack.c.b16 %v1528, %v1527
      %v1532 = vpack.c.b16 %v1530, %v1529
      %v1536 = vsel %vm932, %v1517, 0
      %1538 = vmatprep.subr.bf16.mxu0 0
      %1539 = vmatpush1.bf16.msra.mxu0 0
      %1540 = vmatprep.subr.bf16.mxu0 0
      %1541 = vmatpush1.bf16.msra.mxu0 0
      %1542 = vmatprep.subr.bf16.mxu0 0
      %1543 = vmatpush1.bf16.msra.mxu0 0
      %1544 = vmatprep.subr.bf16.mxu0 0
      %1545 = vmatpush1.bf16.msra.mxu0 0
      %1546 = vmatprep.subr.bf16.mxu0 0
      %1547 = vmatpush1.bf16.msra.mxu0 0
      %1548 = vmatprep.subr.bf16.mxu0 0
      %1549 = vmatpush1.bf16.msra.mxu0 0
      %1550 = vmatprep.subr.bf16.mxu0 0
      %1551 = vmatpush1.bf16.msra.mxu0 %v1532
      %1552 = vmatprep.subr.bf16.mxu0 0
      %1553 = vmatpush1.bf16.msra.mxu0 %v1531
      %1554 = vmatprep.subr.bf16.mxu0 0
      %1555 = vmatpush2.bf16.msra.mxu0 0
      %1556 = vmatprep.subr.bf16.mxu0 0
      %1557 = vmatpush2.bf16.msra.mxu0 0
      %1558 = vmatprep.subr.bf16.mxu0 0
      %1559 = vmatpush2.bf16.msra.mxu0 0
      %1560 = vmatprep.subr.bf16.mxu0 0
      %1561 = vmatpush2.bf16.msra.mxu0 0
      %1562 = vmatprep.subr.bf16.mxu0 0
      %1563 = vmatpush2.bf16.msra.mxu0 0
      %1564 = vmatprep.subr.bf16.mxu0 0
      %1565 = vmatpush2.bf16.msra.mxu0 0
      %1566 = vmatprep.subr.bf16.mxu0 0
      %1567 = vmatpush2.bf16.msra.mxu0 0
      %1568 = vmatprep.subr.bf16.mxu0 0
      %1569 = vmatpush2.bf16.msra.mxu0 0
      %1570 = vmatprep.mubr.bf16.mxu0 0
      %1571 = vmatmul.mubr.bf16.gmra.mxu0 %v1536
      %v1572 = vpop.f32.mrf.mxu0
      %v1573 = vadd.f32 0.0, %v1572
      %v1574 = vpop.f32.mrf.mxu0
      %v1575 = vpop.f32.mrf.mxu0
      %v1576 = vadd.f32 0.0, %v1575
      %v1577 = vpop.f32.mrf.mxu0
      %1578 = vdwg.mxu0
      %v1583 = vunpack.c.l.b16 %v1052
      %v1584 = vunpack.c.l.b16 %v1053
      %v1585 = vunpack.c.l.b16 %v1054
      %v1586 = vunpack.c.l.b16 %v1055
      %v1587 = vpack.c.b16 %v1584, %v1583
      %v1588 = vpack.c.b16 %v1586, %v1585
      %v1592 = vsel %vm932, %v1051, 0
      %1594 = vmatprep.subr.bf16.mxu0 0
      %1595 = vmatpush1.bf16.msra.mxu0 0
      %1596 = vmatprep.subr.bf16.mxu0 0
      %1597 = vmatpush1.bf16.msra.mxu0 0
      %1598 = vmatprep.subr.bf16.mxu0 0
      %1599 = vmatpush1.bf16.msra.mxu0 0
      %1600 = vmatprep.subr.bf16.mxu0 0
      %1601 = vmatpush1.bf16.msra.mxu0 0
      %1602 = vmatprep.subr.bf16.mxu0 0
      %1603 = vmatpush1.bf16.msra.mxu0 0
      %1604 = vmatprep.subr.bf16.mxu0 0
      %1605 = vmatpush1.bf16.msra.mxu0 0
      %1606 = vmatprep.subr.bf16.mxu0 0
      %1607 = vmatpush1.bf16.msra.mxu0 %v1588
      %1608 = vmatprep.subr.bf16.mxu0 0
      %1609 = vmatpush1.bf16.msra.mxu0 %v1587
      %1610 = vmatprep.subr.bf16.mxu0 0
      %1611 = vmatpush2.bf16.msra.mxu0 0
      %1612 = vmatprep.subr.bf16.mxu0 0
      %1613 = vmatpush2.bf16.msra.mxu0 0
      %1614 = vmatprep.subr.bf16.mxu0 0
      %1615 = vmatpush2.bf16.msra.mxu0 0
      %1616 = vmatprep.subr.bf16.mxu0 0
      %1617 = vmatpush2.bf16.msra.mxu0 0
      %1618 = vmatprep.subr.bf16.mxu0 0
      %1619 = vmatpush2.bf16.msra.mxu0 0
      %1620 = vmatprep.subr.bf16.mxu0 0
      %1621 = vmatpush2.bf16.msra.mxu0 0
      %1622 = vmatprep.subr.bf16.mxu0 0
      %1623 = vmatpush2.bf16.msra.mxu0 0
      %1624 = vmatprep.subr.bf16.mxu0 0
      %1625 = vmatpush2.bf16.msra.mxu0 0
      %1626 = vmatprep.mubr.bf16.mxu0 0
      %1627 = vmatmul.mubr.bf16.gmra.mxu0 %v1592
      %v1628 = vpop.f32.mrf.mxu0
      %v1629 = vadd.f32 %v1573, %v1628
      %v1630 = vpop.f32.mrf.mxu0
      %v1631 = vpop.f32.mrf.mxu0
      %v1632 = vadd.f32 %v1576, %v1631
      %v1633 = vpop.f32.mrf.mxu0
      %1634 = vdwg.mxu0
      %s1635 = scalar_lea.vmem %s3, 128
      %v1636 = vld [vmem:[%s1635] sm:$0xf]
      %v1637 = vld [vmem:[%s1635 + $0x4] sm:$0xf]
      %v1638 = vld [vmem:[%s1635 + $0x8] sm:$0xf]
      %v1639 = vld [vmem:[%s1635 + $0xc] sm:$0xf]
      %v1640 = vld [vmem:[%s1635 + $0x10] sm:$0xf]
      %v1641 = vld [vmem:[%s1635 + $0x14] sm:$0xf]
      %v1642 = vld [vmem:[%s1635 + $0x18] sm:$0xf]
      %v1643 = vld [vmem:[%s1635 + $0x1c] sm:$0xf]
      %v1644 = vld [vmem:[%s1635 + $0x20] sm:$0xf]
      %v1645 = vld [vmem:[%s1635 + $0x24] sm:$0xf]
      %v1646 = vld [vmem:[%s1635 + $0x28] sm:$0xf]
      %v1647 = vld [vmem:[%s1635 + $0x2c] sm:$0xf]
      %v1648 = vld [vmem:[%s1635 + $0x30] sm:$0xf]
      %v1649 = vld [vmem:[%s1635 + $0x34] sm:$0xf]
      %v1650 = vld [vmem:[%s1635 + $0x38] sm:$0xf]
      %v1651 = vld [vmem:[%s1635 + $0x3c] sm:$0xf]
      %s1652 = scalar_lea.vmem %s6, 2
      %v1653 = vld [vmem:[%s1652] sm:$0x1]
      %v1655 = vlaneseq
      %v1656 = vshrl.u32 %v1655, 7
      %v1657 = vsub.s32 0, %v1656
      %v1658 = vrot.slane %v1653, %v1657
      %v1676 = vunpack.c.l.b16 %v1636
      %v1677 = vunpack.c.l.b16 %v1637
      %v1678 = vunpack.c.l.b16 %v1638
      %v1679 = vunpack.c.l.b16 %v1639
      %v1680 = vunpack.c.l.b16 %v1640
      %v1681 = vunpack.c.l.b16 %v1641
      %v1682 = vunpack.c.l.b16 %v1642
      %v1683 = vunpack.c.l.b16 %v1643
      %v1684 = vunpack.c.l.b16 %v1644
      %v1685 = vunpack.c.l.b16 %v1645
      %v1686 = vunpack.c.l.b16 %v1646
      %v1687 = vunpack.c.l.b16 %v1647
      %v1688 = vunpack.c.l.b16 %v1648
      %v1689 = vunpack.c.l.b16 %v1649
      %v1690 = vunpack.c.l.b16 %v1650
      %v1691 = vunpack.c.l.b16 %v1651
      %v1692 = vpack.c.b16 %v1677, %v1676
      %v1693 = vpack.c.b16 %v1679, %v1678
      %v1694 = vpack.c.b16 %v1681, %v1680
      %v1695 = vpack.c.b16 %v1683, %v1682
      %v1696 = vpack.c.b16 %v1685, %v1684
      %v1697 = vpack.c.b16 %v1687, %v1686
      %v1698 = vpack.c.b16 %v1689, %v1688
      %v1699 = vpack.c.b16 %v1691, %v1690
      %1708 = vmatprep.subr.bf16.mxu0 0
      %1709 = vmatpush1.bf16.msra.mxu0 %v1699
      %1710 = vmatprep.subr.bf16.mxu0 0
      %1711 = vmatpush1.bf16.msra.mxu0 %v1698
      %1712 = vmatprep.subr.bf16.mxu0 0
      %1713 = vmatpush1.bf16.msra.mxu0 %v1697
      %1714 = vmatprep.subr.bf16.mxu0 0
      %1715 = vmatpush1.bf16.msra.mxu0 %v1696
      %1716 = vmatprep.subr.bf16.mxu0 0
      %1717 = vmatpush1.bf16.msra.mxu0 %v1695
      %1718 = vmatprep.subr.bf16.mxu0 0
      %1719 = vmatpush1.bf16.msra.mxu0 %v1694
      %1720 = vmatprep.subr.bf16.mxu0 0
      %1721 = vmatpush1.bf16.msra.mxu0 %v1693
      %1722 = vmatprep.subr.bf16.mxu0 0
      %1723 = vmatpush1.bf16.msra.mxu0 %v1692
      %1724 = vmatprep.subr.bf16.mxu0 0
      %1725 = vmatpush2.bf16.msra.mxu0 0
      %1726 = vmatprep.subr.bf16.mxu0 0
      %1727 = vmatpush2.bf16.msra.mxu0 0
      %1728 = vmatprep.subr.bf16.mxu0 0
      %1729 = vmatpush2.bf16.msra.mxu0 0
      %1730 = vmatprep.subr.bf16.mxu0 0
      %1731 = vmatpush2.bf16.msra.mxu0 0
      %1732 = vmatprep.subr.bf16.mxu0 0
      %1733 = vmatpush2.bf16.msra.mxu0 0
      %1734 = vmatprep.subr.bf16.mxu0 0
      %1735 = vmatpush2.bf16.msra.mxu0 0
      %1736 = vmatprep.subr.bf16.mxu0 0
      %1737 = vmatpush2.bf16.msra.mxu0 0
      %1738 = vmatprep.subr.bf16.mxu0 0
      %1739 = vmatpush2.bf16.msra.mxu0 0
      %1740 = vmatprep.mubr.bf16.mxu0 0
      %1741 = vmatmul.mubr.bf16.gmra.mxu0 %v593
      %v1742 = vpop.f32.mrf.mxu0
      %v1743 = vadd.f32 %v1658, %v1742
      %v1744 = vpop.f32.mrf.mxu0
      %v1745 = vpop.f32.mrf.mxu0
      %v1746 = vadd.f32 %v1658, %v1745
      %v1747 = vpop.f32.mrf.mxu0
      %1748 = vdwg.mxu0
      %s1749 = scalar_lea.vmem %s4, 128
      %v1750 = vld [vmem:[%s1749] sm:$0xf]
      %v1751 = vld [vmem:[%s1749 + $0x4] sm:$0xf]
      %v1752 = vld [vmem:[%s1749 + $0x8] sm:$0xf]
      %v1753 = vld [vmem:[%s1749 + $0xc] sm:$0xf]
      %v1754 = vld [vmem:[%s1749 + $0x10] sm:$0xf]
      %v1755 = vld [vmem:[%s1749 + $0x14] sm:$0xf]
      %v1756 = vld [vmem:[%s1749 + $0x18] sm:$0xf]
      %v1757 = vld [vmem:[%s1749 + $0x1c] sm:$0xf]
      %v1758 = vld [vmem:[%s1749 + $0x20] sm:$0xf]
      %v1759 = vld [vmem:[%s1749 + $0x24] sm:$0xf]
      %v1760 = vld [vmem:[%s1749 + $0x28] sm:$0xf]
      %v1761 = vld [vmem:[%s1749 + $0x2c] sm:$0xf]
      %v1762 = vld [vmem:[%s1749 + $0x30] sm:$0xf]
      %v1763 = vld [vmem:[%s1749 + $0x34] sm:$0xf]
      %v1764 = vld [vmem:[%s1749 + $0x38] sm:$0xf]
      %v1765 = vld [vmem:[%s1749 + $0x3c] sm:$0xf]
      %s1766 = scalar_lea.vmem %s7, 2
      %v1767 = vld [vmem:[%s1766] sm:$0x1]
      %v1769 = vlaneseq
      %v1770 = vshrl.u32 %v1769, 7
      %v1771 = vsub.s32 0, %v1770
      %v1772 = vrot.slane %v1767, %v1771
      %v1790 = vunpack.c.l.b16 %v1750
      %v1791 = vunpack.c.l.b16 %v1751
      %v1792 = vunpack.c.l.b16 %v1752
      %v1793 = vunpack.c.l.b16 %v1753
      %v1794 = vunpack.c.l.b16 %v1754
      %v1795 = vunpack.c.l.b16 %v1755
      %v1796 = vunpack.c.l.b16 %v1756
      %v1797 = vunpack.c.l.b16 %v1757
      %v1798 = vunpack.c.l.b16 %v1758
      %v1799 = vunpack.c.l.b16 %v1759
      %v1800 = vunpack.c.l.b16 %v1760
      %v1801 = vunpack.c.l.b16 %v1761
      %v1802 = vunpack.c.l.b16 %v1762
      %v1803 = vunpack.c.l.b16 %v1763
      %v1804 = vunpack.c.l.b16 %v1764
      %v1805 = vunpack.c.l.b16 %v1765
      %v1806 = vpack.c.b16 %v1791, %v1790
      %v1807 = vpack.c.b16 %v1793, %v1792
      %v1808 = vpack.c.b16 %v1795, %v1794
      %v1809 = vpack.c.b16 %v1797, %v1796
      %v1810 = vpack.c.b16 %v1799, %v1798
      %v1811 = vpack.c.b16 %v1801, %v1800
      %v1812 = vpack.c.b16 %v1803, %v1802
      %v1813 = vpack.c.b16 %v1805, %v1804
      %1822 = vmatprep.subr.bf16.mxu0 0
      %1823 = vmatpush1.bf16.msra.mxu0 %v1813
      %1824 = vmatprep.subr.bf16.mxu0 0
      %1825 = vmatpush1.bf16.msra.mxu0 %v1812
      %1826 = vmatprep.subr.bf16.mxu0 0
      %1827 = vmatpush1.bf16.msra.mxu0 %v1811
      %1828 = vmatprep.subr.bf16.mxu0 0
      %1829 = vmatpush1.bf16.msra.mxu0 %v1810
      %1830 = vmatprep.subr.bf16.mxu0 0
      %1831 = vmatpush1.bf16.msra.mxu0 %v1809
      %1832 = vmatprep.subr.bf16.mxu0 0
      %1833 = vmatpush1.bf16.msra.mxu0 %v1808
      %1834 = vmatprep.subr.bf16.mxu0 0
      %1835 = vmatpush1.bf16.msra.mxu0 %v1807
      %1836 = vmatprep.subr.bf16.mxu0 0
      %1837 = vmatpush1.bf16.msra.mxu0 %v1806
      %1838 = vmatprep.subr.bf16.mxu0 0
      %1839 = vmatpush2.bf16.msra.mxu0 0
      %1840 = vmatprep.subr.bf16.mxu0 0
      %1841 = vmatpush2.bf16.msra.mxu0 0
      %1842 = vmatprep.subr.bf16.mxu0 0
      %1843 = vmatpush2.bf16.msra.mxu0 0
      %1844 = vmatprep.subr.bf16.mxu0 0
      %1845 = vmatpush2.bf16.msra.mxu0 0
      %1846 = vmatprep.subr.bf16.mxu0 0
      %1847 = vmatpush2.bf16.msra.mxu0 0
      %1848 = vmatprep.subr.bf16.mxu0 0
      %1849 = vmatpush2.bf16.msra.mxu0 0
      %1850 = vmatprep.subr.bf16.mxu0 0
      %1851 = vmatpush2.bf16.msra.mxu0 0
      %1852 = vmatprep.subr.bf16.mxu0 0
      %1853 = vmatpush2.bf16.msra.mxu0 0
      %1854 = vmatprep.mubr.bf16.mxu0 0
      %1855 = vmatmul.mubr.bf16.gmra.mxu0 %v593
      %v1856 = vpop.f32.mrf.mxu0
      %v1857 = vadd.f32 %v1772, %v1856
      %v1858 = vpop.f32.mrf.mxu0
      %v1859 = vpop.f32.mrf.mxu0
      %v1860 = vadd.f32 %v1772, %v1859
      %v1861 = vpop.f32.mrf.mxu0
      %1862 = vdwg.mxu0
      %s1863 = scalar_lea.vmem %s5, 128
      %v1864 = vld [vmem:[%s1863] sm:$0xf]
      %v1865 = vld [vmem:[%s1863 + $0x4] sm:$0xf]
      %v1866 = vld [vmem:[%s1863 + $0x8] sm:$0xf]
      %v1867 = vld [vmem:[%s1863 + $0xc] sm:$0xf]
      %v1868 = vld [vmem:[%s1863 + $0x10] sm:$0xf]
      %v1869 = vld [vmem:[%s1863 + $0x14] sm:$0xf]
      %v1870 = vld [vmem:[%s1863 + $0x18] sm:$0xf]
      %v1871 = vld [vmem:[%s1863 + $0x1c] sm:$0xf]
      %v1872 = vld [vmem:[%s1863 + $0x20] sm:$0xf]
      %v1873 = vld [vmem:[%s1863 + $0x24] sm:$0xf]
      %v1874 = vld [vmem:[%s1863 + $0x28] sm:$0xf]
      %v1875 = vld [vmem:[%s1863 + $0x2c] sm:$0xf]
      %v1876 = vld [vmem:[%s1863 + $0x30] sm:$0xf]
      %v1877 = vld [vmem:[%s1863 + $0x34] sm:$0xf]
      %v1878 = vld [vmem:[%s1863 + $0x38] sm:$0xf]
      %v1879 = vld [vmem:[%s1863 + $0x3c] sm:$0xf]
      %s1880 = scalar_lea.vmem %s8, 2
      %v1881 = vld [vmem:[%s1880] sm:$0x1]
      %v1883 = vlaneseq
      %v1884 = vshrl.u32 %v1883, 7
      %v1885 = vsub.s32 0, %v1884
      %v1886 = vrot.slane %v1881, %v1885
      %v1904 = vunpack.c.l.b16 %v1864
      %v1905 = vunpack.c.l.b16 %v1865
      %v1906 = vunpack.c.l.b16 %v1866
      %v1907 = vunpack.c.l.b16 %v1867
      %v1908 = vunpack.c.l.b16 %v1868
      %v1909 = vunpack.c.l.b16 %v1869
      %v1910 = vunpack.c.l.b16 %v1870
      %v1911 = vunpack.c.l.b16 %v1871
      %v1912 = vunpack.c.l.b16 %v1872
      %v1913 = vunpack.c.l.b16 %v1873
      %v1914 = vunpack.c.l.b16 %v1874
      %v1915 = vunpack.c.l.b16 %v1875
      %v1916 = vunpack.c.l.b16 %v1876
      %v1917 = vunpack.c.l.b16 %v1877
      %v1918 = vunpack.c.l.b16 %v1878
      %v1919 = vunpack.c.l.b16 %v1879
      %v1920 = vpack.c.b16 %v1905, %v1904
      %v1921 = vpack.c.b16 %v1907, %v1906
      %v1922 = vpack.c.b16 %v1909, %v1908
      %v1923 = vpack.c.b16 %v1911, %v1910
      %v1924 = vpack.c.b16 %v1913, %v1912
      %v1925 = vpack.c.b16 %v1915, %v1914
      %v1926 = vpack.c.b16 %v1917, %v1916
      %v1927 = vpack.c.b16 %v1919, %v1918
      %1936 = vmatprep.subr.bf16.mxu0 0
      %1937 = vmatpush1.bf16.msra.mxu0 %v1927
      %1938 = vmatprep.subr.bf16.mxu0 0
      %1939 = vmatpush1.bf16.msra.mxu0 %v1926
      %1940 = vmatprep.subr.bf16.mxu0 0
      %1941 = vmatpush1.bf16.msra.mxu0 %v1925
      %1942 = vmatprep.subr.bf16.mxu0 0
      %1943 = vmatpush1.bf16.msra.mxu0 %v1924
      %1944 = vmatprep.subr.bf16.mxu0 0
      %1945 = vmatpush1.bf16.msra.mxu0 %v1923
      %1946 = vmatprep.subr.bf16.mxu0 0
      %1947 = vmatpush1.bf16.msra.mxu0 %v1922
      %1948 = vmatprep.subr.bf16.mxu0 0
      %1949 = vmatpush1.bf16.msra.mxu0 %v1921
      %1950 = vmatprep.subr.bf16.mxu0 0
      %1951 = vmatpush1.bf16.msra.mxu0 %v1920
      %1952 = vmatprep.subr.bf16.mxu0 0
      %1953 = vmatpush2.bf16.msra.mxu0 0
      %1954 = vmatprep.subr.bf16.mxu0 0
      %1955 = vmatpush2.bf16.msra.mxu0 0
      %1956 = vmatprep.subr.bf16.mxu0 0
      %1957 = vmatpush2.bf16.msra.mxu0 0
      %1958 = vmatprep.subr.bf16.mxu0 0
      %1959 = vmatpush2.bf16.msra.mxu0 0
      %1960 = vmatprep.subr.bf16.mxu0 0
      %1961 = vmatpush2.bf16.msra.mxu0 0
      %1962 = vmatprep.subr.bf16.mxu0 0
      %1963 = vmatpush2.bf16.msra.mxu0 0
      %1964 = vmatprep.subr.bf16.mxu0 0
      %1965 = vmatpush2.bf16.msra.mxu0 0
      %1966 = vmatprep.subr.bf16.mxu0 0
      %1967 = vmatpush2.bf16.msra.mxu0 0
      %1968 = vmatprep.mubr.bf16.mxu0 0
      %1969 = vmatmul.mubr.bf16.gmra.mxu0 %v593
      %v1970 = vpop.f32.mrf.mxu0
      %v1971 = vadd.f32 %v1886, %v1970
      %v1972 = vpop.f32.mrf.mxu0
      %v1973 = vpop.f32.mrf.mxu0
      %v1974 = vadd.f32 %v1886, %v1973
      %v1975 = vpop.f32.mrf.mxu0
      %1976 = vdwg.mxu0
      %v1977 = vpack.c.bf16 %v1746, %v1743
      %v1978 = vpack.c.bf16 %v1860, %v1857
      %v1980 = vsel %vm932, %v1977, 0
      %v1983 = vsel %vm932, %v1978, 0
      %1985 = vmatprep.subr.bf16.mxu0 0
      %1986 = vmatpush1.bf16.xpose.msra.mxu0 0
      %1987 = vmatprep.subr.bf16.mxu0 0
      %1988 = vmatpush1.bf16.xpose.msra.mxu0 0
      %1989 = vmatprep.subr.bf16.mxu0 0
      %1990 = vmatpush1.bf16.xpose.msra.mxu0 0
      %1991 = vmatprep.subr.bf16.mxu0 0
      %1992 = vmatpush1.bf16.xpose.msra.mxu0 0
      %1993 = vmatprep.subr.bf16.mxu0 0
      %1994 = vmatpush1.bf16.xpose.msra.mxu0 0
      %1995 = vmatprep.subr.bf16.mxu0 0
      %1996 = vmatpush1.bf16.xpose.msra.mxu0 0
      %1997 = vmatprep.subr.bf16.mxu0 0
      %1998 = vmatpush1.bf16.xpose.msra.mxu0 0
      %1999 = vmatprep.subr.bf16.mxu0 0
      %2000 = vmatpush1.bf16.xpose.msra.mxu0 %v1983
      %2001 = vmatprep.subr.bf16.mxu0 0
      %2002 = vmatpush2.bf16.xpose.msra.mxu0 0
      %2003 = vmatprep.subr.bf16.mxu0 0
      %2004 = vmatpush2.bf16.xpose.msra.mxu0 0
      %2005 = vmatprep.subr.bf16.mxu0 0
      %2006 = vmatpush2.bf16.xpose.msra.mxu0 0
      %2007 = vmatprep.subr.bf16.mxu0 0
      %2008 = vmatpush2.bf16.xpose.msra.mxu0 0
      %2009 = vmatprep.subr.bf16.mxu0 0
      %2010 = vmatpush2.bf16.xpose.msra.mxu0 0
      %2011 = vmatprep.subr.bf16.mxu0 0
      %2012 = vmatpush2.bf16.xpose.msra.mxu0 0
      %2013 = vmatprep.subr.bf16.mxu0 0
      %2014 = vmatpush2.bf16.xpose.msra.mxu0 0
      %2015 = vmatprep.subr.bf16.mxu0 0
      %2016 = vmatpush2.bf16.xpose.msra.mxu0 0
      %2017 = vmatprep.mubr.bf16.mxu0 0
      %2018 = vmatmul.mubr.bf16.gmra.mxu0 %v1980
      %v2019 = vpop.f32.mrf.mxu0
      %v2020 = vadd.f32 0.0, %v2019
      %v2021 = vpop.f32.mrf.mxu0
      %v2022 = vpop.f32.mrf.mxu0
      %v2023 = vadd.f32 0.0, %v2022
      %v2024 = vpop.f32.mrf.mxu0
      %2025 = vdwg.mxu0
      %v2026 = vmul.f32 %v2020, 0.17677669
      %v2027 = vmul.f32 %v2023, 0.17677669
      %v2028 = vsel %vm982, %v2026, -inf
      %2029 = vmax.xlane.f32.xlu0 %v2028
      %v2030 = vpop.xlane.xlu0 %2029
      %v2031 = vsel %vm982, %v2027, -inf
      %2032 = vmax.xlane.f32.xlu0 %v2031
      %v2033 = vpop.xlane.xlu0 %2032
      %v2034 = vsub.f32 %v2026, %v2030
      %v2035 = vsub.f32 %v2027, %v2033
      %v2036 = vmul.f32 %v2034, 1.442695
      %v2037 = vpow.pop %v2036
      %v2038 = vmul.f32 %v2035, 1.442695
      %v2039 = vpow.pop %v2038
      %v2040 = vsel %vm982, %v2037, 0.0
      %2041 = vadd.xlane.f32.xlu0 %v2040
      %v2042 = vpop.xlane.xlu0 %2041
      %v2043 = vsel %vm982, %v2039, 0.0
      %2044 = vadd.xlane.f32.xlu0 %v2043
      %v2045 = vpop.xlane.xlu0 %2044
      %v2046 = vrcp.pop %v2042
      %v2047 = vrcp.pop %v2045
      %v2048 = vmul.f32 %v2037, %v2046
      %v2049 = vmul.f32 %v2039, %v2047
      %v2050 = vpack.c.bf16 %v2049, %v2048
      %v2051 = vpack.c.bf16 %v1974, %v1971
      %v2053 = vsel %vm982, %v2050, 0
      %2055 = vmatprep.subr.bf16.mxu0 0
      %2056 = vmatpush1.bf16.msra.mxu0 0
      %2057 = vmatprep.subr.bf16.mxu0 0
      %2058 = vmatpush1.bf16.msra.mxu0 0
      %2059 = vmatprep.subr.bf16.mxu0 0
      %2060 = vmatpush1.bf16.msra.mxu0 0
      %2061 = vmatprep.subr.bf16.mxu0 0
      %2062 = vmatpush1.bf16.msra.mxu0 0
      %2063 = vmatprep.subr.bf16.mxu0 0
      %2064 = vmatpush1.bf16.msra.mxu0 0
      %2065 = vmatprep.subr.bf16.mxu0 0
      %2066 = vmatpush1.bf16.msra.mxu0 0
      %2067 = vmatprep.subr.bf16.mxu0 0
      %2068 = vmatpush1.bf16.msra.mxu0 0
      %2069 = vmatprep.subr.bf16.mxu0 0
      %2070 = vmatpush1.bf16.msra.mxu0 %v2051
      %2071 = vmatprep.subr.bf16.mxu0 0
      %2072 = vmatpush2.bf16.msra.mxu0 0
      %2073 = vmatprep.subr.bf16.mxu0 0
      %2074 = vmatpush2.bf16.msra.mxu0 0
      %2075 = vmatprep.subr.bf16.mxu0 0
      %2076 = vmatpush2.bf16.msra.mxu0 0
      %2077 = vmatprep.subr.bf16.mxu0 0
      %2078 = vmatpush2.bf16.msra.mxu0 0
      %2079 = vmatprep.subr.bf16.mxu0 0
      %2080 = vmatpush2.bf16.msra.mxu0 0
      %2081 = vmatprep.subr.bf16.mxu0 0
      %2082 = vmatpush2.bf16.msra.mxu0 0
      %2083 = vmatprep.subr.bf16.mxu0 0
      %2084 = vmatpush2.bf16.msra.mxu0 0
      %2085 = vmatprep.subr.bf16.mxu0 0
      %2086 = vmatpush2.bf16.msra.mxu0 0
      %2087 = vmatprep.mubr.bf16.mxu0 0
      %2088 = vmatmul.mubr.bf16.gmra.mxu0 %v2053
      %v2089 = vpop.f32.mrf.mxu0
      %v2090 = vadd.f32 0.0, %v2089
      %v2091 = vpop.f32.mrf.mxu0
      %v2092 = vpop.f32.mrf.mxu0
      %v2093 = vadd.f32 0.0, %v2092
      %v2094 = vpop.f32.mrf.mxu0
      %2095 = vdwg.mxu0
      %v2096 = vpack.c.bf16 %v2093, %v2090
      %s2097 = scalar_lea.vmem %s9, 32
      %v2098 = vld [vmem:[%s2097] sm:$0xf]
      %v2099 = vld [vmem:[%s2097 + $0x4] sm:$0xf]
      %v2100 = vld [vmem:[%s2097 + $0x8] sm:$0xf]
      %v2101 = vld [vmem:[%s2097 + $0xc] sm:$0xf]
      %v2106 = vunpack.c.l.b16 %v2098
      %v2107 = vunpack.c.l.b16 %v2099
      %v2108 = vunpack.c.l.b16 %v2100
      %v2109 = vunpack.c.l.b16 %v2101
      %v2110 = vpack.c.b16 %v2107, %v2106
      %v2111 = vpack.c.b16 %v2109, %v2108
      %v2115 = vsel %vm932, %v2096, 0
      %2117 = vmatprep.subr.bf16.mxu0 0
      %2118 = vmatpush1.bf16.msra.mxu0 0
      %2119 = vmatprep.subr.bf16.mxu0 0
      %2120 = vmatpush1.bf16.msra.mxu0 0
      %2121 = vmatprep.subr.bf16.mxu0 0
      %2122 = vmatpush1.bf16.msra.mxu0 0
      %2123 = vmatprep.subr.bf16.mxu0 0
      %2124 = vmatpush1.bf16.msra.mxu0 0
      %2125 = vmatprep.subr.bf16.mxu0 0
      %2126 = vmatpush1.bf16.msra.mxu0 0
      %2127 = vmatprep.subr.bf16.mxu0 0
      %2128 = vmatpush1.bf16.msra.mxu0 0
      %2129 = vmatprep.subr.bf16.mxu0 0
      %2130 = vmatpush1.bf16.msra.mxu0 %v2111
      %2131 = vmatprep.subr.bf16.mxu0 0
      %2132 = vmatpush1.bf16.msra.mxu0 %v2110
      %2133 = vmatprep.subr.bf16.mxu0 0
      %2134 = vmatpush2.bf16.msra.mxu0 0
      %2135 = vmatprep.subr.bf16.mxu0 0
      %2136 = vmatpush2.bf16.msra.mxu0 0
      %2137 = vmatprep.subr.bf16.mxu0 0
      %2138 = vmatpush2.bf16.msra.mxu0 0
      %2139 = vmatprep.subr.bf16.mxu0 0
      %2140 = vmatpush2.bf16.msra.mxu0 0
      %2141 = vmatprep.subr.bf16.mxu0 0
      %2142 = vmatpush2.bf16.msra.mxu0 0
      %2143 = vmatprep.subr.bf16.mxu0 0
      %2144 = vmatpush2.bf16.msra.mxu0 0
      %2145 = vmatprep.subr.bf16.mxu0 0
      %2146 = vmatpush2.bf16.msra.mxu0 0
      %2147 = vmatprep.subr.bf16.mxu0 0
      %2148 = vmatpush2.bf16.msra.mxu0 0
      %2149 = vmatprep.mubr.bf16.mxu0 0
      %2150 = vmatmul.mubr.bf16.gmra.mxu0 %v2115
      %v2151 = vpop.f32.mrf.mxu0
      %v2152 = vadd.f32 0.0, %v2151
      %v2153 = vpop.f32.mrf.mxu0
      %v2154 = vpop.f32.mrf.mxu0
      %v2155 = vadd.f32 0.0, %v2154
      %v2156 = vpop.f32.mrf.mxu0
      %2157 = vdwg.mxu0
      %v2158 = vadd.f32 %v1629, %v2152
      %v2159 = vadd.f32 %v1632, %v2155
      %s2160 = scalar_lea.vmem %s3, 192
      %v2161 = vld [vmem:[%s2160] sm:$0xf]
      %v2162 = vld [vmem:[%s2160 + $0x4] sm:$0xf]
      %v2163 = vld [vmem:[%s2160 + $0x8] sm:$0xf]
      %v2164 = vld [vmem:[%s2160 + $0xc] sm:$0xf]
      %v2165 = vld [vmem:[%s2160 + $0x10] sm:$0xf]
      %v2166 = vld [vmem:[%s2160 + $0x14] sm:$0xf]
      %v2167 = vld [vmem:[%s2160 + $0x18] sm:$0xf]
      %v2168 = vld [vmem:[%s2160 + $0x1c] sm:$0xf]
      %v2169 = vld [vmem:[%s2160 + $0x20] sm:$0xf]
      %v2170 = vld [vmem:[%s2160 + $0x24] sm:$0xf]
      %v2171 = vld [vmem:[%s2160 + $0x28] sm:$0xf]
      %v2172 = vld [vmem:[%s2160 + $0x2c] sm:$0xf]
      %v2173 = vld [vmem:[%s2160 + $0x30] sm:$0xf]
      %v2174 = vld [vmem:[%s2160 + $0x34] sm:$0xf]
      %v2175 = vld [vmem:[%s2160 + $0x38] sm:$0xf]
      %v2176 = vld [vmem:[%s2160 + $0x3c] sm:$0xf]
      %s2177 = scalar_lea.vmem %s6, 3
      %v2178 = vld [vmem:[%s2177] sm:$0x1]
      %v2180 = vlaneseq
      %v2181 = vshrl.u32 %v2180, 7
      %v2182 = vsub.s32 0, %v2181
      %v2183 = vrot.slane %v2178, %v2182
      %v2201 = vunpack.c.l.b16 %v2161
      %v2202 = vunpack.c.l.b16 %v2162
      %v2203 = vunpack.c.l.b16 %v2163
      %v2204 = vunpack.c.l.b16 %v2164
      %v2205 = vunpack.c.l.b16 %v2165
      %v2206 = vunpack.c.l.b16 %v2166
      %v2207 = vunpack.c.l.b16 %v2167
      %v2208 = vunpack.c.l.b16 %v2168
      %v2209 = vunpack.c.l.b16 %v2169
      %v2210 = vunpack.c.l.b16 %v2170
      %v2211 = vunpack.c.l.b16 %v2171
      %v2212 = vunpack.c.l.b16 %v2172
      %v2213 = vunpack.c.l.b16 %v2173
      %v2214 = vunpack.c.l.b16 %v2174
      %v2215 = vunpack.c.l.b16 %v2175
      %v2216 = vunpack.c.l.b16 %v2176
      %v2217 = vpack.c.b16 %v2202, %v2201
      %v2218 = vpack.c.b16 %v2204, %v2203
      %v2219 = vpack.c.b16 %v2206, %v2205
      %v2220 = vpack.c.b16 %v2208, %v2207
      %v2221 = vpack.c.b16 %v2210, %v2209
      %v2222 = vpack.c.b16 %v2212, %v2211
      %v2223 = vpack.c.b16 %v2214, %v2213
      %v2224 = vpack.c.b16 %v2216, %v2215
      %2233 = vmatprep.subr.bf16.mxu0 0
      %2234 = vmatpush1.bf16.msra.mxu0 %v2224
      %2235 = vmatprep.subr.bf16.mxu0 0
      %2236 = vmatpush1.bf16.msra.mxu0 %v2223
      %2237 = vmatprep.subr.bf16.mxu0 0
      %2238 = vmatpush1.bf16.msra.mxu0 %v2222
      %2239 = vmatprep.subr.bf16.mxu0 0
      %2240 = vmatpush1.bf16.msra.mxu0 %v2221
      %2241 = vmatprep.subr.bf16.mxu0 0
      %2242 = vmatpush1.bf16.msra.mxu0 %v2220
      %2243 = vmatprep.subr.bf16.mxu0 0
      %2244 = vmatpush1.bf16.msra.mxu0 %v2219
      %2245 = vmatprep.subr.bf16.mxu0 0
      %2246 = vmatpush1.bf16.msra.mxu0 %v2218
      %2247 = vmatprep.subr.bf16.mxu0 0
      %2248 = vmatpush1.bf16.msra.mxu0 %v2217
      %2249 = vmatprep.subr.bf16.mxu0 0
      %2250 = vmatpush2.bf16.msra.mxu0 0
      %2251 = vmatprep.subr.bf16.mxu0 0
      %2252 = vmatpush2.bf16.msra.mxu0 0
      %2253 = vmatprep.subr.bf16.mxu0 0
      %2254 = vmatpush2.bf16.msra.mxu0 0
      %2255 = vmatprep.subr.bf16.mxu0 0
      %2256 = vmatpush2.bf16.msra.mxu0 0
      %2257 = vmatprep.subr.bf16.mxu0 0
      %2258 = vmatpush2.bf16.msra.mxu0 0
      %2259 = vmatprep.subr.bf16.mxu0 0
      %2260 = vmatpush2.bf16.msra.mxu0 0
      %2261 = vmatprep.subr.bf16.mxu0 0
      %2262 = vmatpush2.bf16.msra.mxu0 0
      %2263 = vmatprep.subr.bf16.mxu0 0
      %2264 = vmatpush2.bf16.msra.mxu0 0
      %2265 = vmatprep.mubr.bf16.mxu0 0
      %2266 = vmatmul.mubr.bf16.gmra.mxu0 %v593
      %v2267 = vpop.f32.mrf.mxu0
      %v2268 = vadd.f32 %v2183, %v2267
      %v2269 = vpop.f32.mrf.mxu0
      %v2270 = vpop.f32.mrf.mxu0
      %v2271 = vadd.f32 %v2183, %v2270
      %v2272 = vpop.f32.mrf.mxu0
      %2273 = vdwg.mxu0
      %s2274 = scalar_lea.vmem %s4, 192
      %v2275 = vld [vmem:[%s2274] sm:$0xf]
      %v2276 = vld [vmem:[%s2274 + $0x4] sm:$0xf]
      %v2277 = vld [vmem:[%s2274 + $0x8] sm:$0xf]
      %v2278 = vld [vmem:[%s2274 + $0xc] sm:$0xf]
      %v2279 = vld [vmem:[%s2274 + $0x10] sm:$0xf]
      %v2280 = vld [vmem:[%s2274 + $0x14] sm:$0xf]
      %v2281 = vld [vmem:[%s2274 + $0x18] sm:$0xf]
      %v2282 = vld [vmem:[%s2274 + $0x1c] sm:$0xf]
      %v2283 = vld [vmem:[%s2274 + $0x20] sm:$0xf]
      %v2284 = vld [vmem:[%s2274 + $0x24] sm:$0xf]
      %v2285 = vld [vmem:[%s2274 + $0x28] sm:$0xf]
      %v2286 = vld [vmem:[%s2274 + $0x2c] sm:$0xf]
      %v2287 = vld [vmem:[%s2274 + $0x30] sm:$0xf]
      %v2288 = vld [vmem:[%s2274 + $0x34] sm:$0xf]
      %v2289 = vld [vmem:[%s2274 + $0x38] sm:$0xf]
      %v2290 = vld [vmem:[%s2274 + $0x3c] sm:$0xf]
      %s2291 = scalar_lea.vmem %s7, 3
      %v2292 = vld [vmem:[%s2291] sm:$0x1]
      %v2294 = vlaneseq
      %v2295 = vshrl.u32 %v2294, 7
      %v2296 = vsub.s32 0, %v2295
      %v2297 = vrot.slane %v2292, %v2296
      %v2315 = vunpack.c.l.b16 %v2275
      %v2316 = vunpack.c.l.b16 %v2276
      %v2317 = vunpack.c.l.b16 %v2277
      %v2318 = vunpack.c.l.b16 %v2278
      %v2319 = vunpack.c.l.b16 %v2279
      %v2320 = vunpack.c.l.b16 %v2280
      %v2321 = vunpack.c.l.b16 %v2281
      %v2322 = vunpack.c.l.b16 %v2282
      %v2323 = vunpack.c.l.b16 %v2283
      %v2324 = vunpack.c.l.b16 %v2284
      %v2325 = vunpack.c.l.b16 %v2285
      %v2326 = vunpack.c.l.b16 %v2286
      %v2327 = vunpack.c.l.b16 %v2287
      %v2328 = vunpack.c.l.b16 %v2288
      %v2329 = vunpack.c.l.b16 %v2289
      %v2330 = vunpack.c.l.b16 %v2290
      %v2331 = vpack.c.b16 %v2316, %v2315
      %v2332 = vpack.c.b16 %v2318, %v2317
      %v2333 = vpack.c.b16 %v2320, %v2319
      %v2334 = vpack.c.b16 %v2322, %v2321
      %v2335 = vpack.c.b16 %v2324, %v2323
      %v2336 = vpack.c.b16 %v2326, %v2325
      %v2337 = vpack.c.b16 %v2328, %v2327
      %v2338 = vpack.c.b16 %v2330, %v2329
      %2347 = vmatprep.subr.bf16.mxu0 0
      %2348 = vmatpush1.bf16.msra.mxu0 %v2338
      %2349 = vmatprep.subr.bf16.mxu0 0
      %2350 = vmatpush1.bf16.msra.mxu0 %v2337
      %2351 = vmatprep.subr.bf16.mxu0 0
      %2352 = vmatpush1.bf16.msra.mxu0 %v2336
      %2353 = vmatprep.subr.bf16.mxu0 0
      %2354 = vmatpush1.bf16.msra.mxu0 %v2335
      %2355 = vmatprep.subr.bf16.mxu0 0
      %2356 = vmatpush1.bf16.msra.mxu0 %v2334
      %2357 = vmatprep.subr.bf16.mxu0 0
      %2358 = vmatpush1.bf16.msra.mxu0 %v2333
      %2359 = vmatprep.subr.bf16.mxu0 0
      %2360 = vmatpush1.bf16.msra.mxu0 %v2332
      %2361 = vmatprep.subr.bf16.mxu0 0
      %2362 = vmatpush1.bf16.msra.mxu0 %v2331
      %2363 = vmatprep.subr.bf16.mxu0 0
      %2364 = vmatpush2.bf16.msra.mxu0 0
      %2365 = vmatprep.subr.bf16.mxu0 0
      %2366 = vmatpush2.bf16.msra.mxu0 0
      %2367 = vmatprep.subr.bf16.mxu0 0
      %2368 = vmatpush2.bf16.msra.mxu0 0
      %2369 = vmatprep.subr.bf16.mxu0 0
      %2370 = vmatpush2.bf16.msra.mxu0 0
      %2371 = vmatprep.subr.bf16.mxu0 0
      %2372 = vmatpush2.bf16.msra.mxu0 0
      %2373 = vmatprep.subr.bf16.mxu0 0
      %2374 = vmatpush2.bf16.msra.mxu0 0
      %2375 = vmatprep.subr.bf16.mxu0 0
      %2376 = vmatpush2.bf16.msra.mxu0 0
      %2377 = vmatprep.subr.bf16.mxu0 0
      %2378 = vmatpush2.bf16.msra.mxu0 0
      %2379 = vmatprep.mubr.bf16.mxu0 0
      %2380 = vmatmul.mubr.bf16.gmra.mxu0 %v593
      %v2381 = vpop.f32.mrf.mxu0
      %v2382 = vadd.f32 %v2297, %v2381
      %v2383 = vpop.f32.mrf.mxu0
      %v2384 = vpop.f32.mrf.mxu0
      %v2385 = vadd.f32 %v2297, %v2384
      %v2386 = vpop.f32.mrf.mxu0
      %2387 = vdwg.mxu0
      %s2388 = scalar_lea.vmem %s5, 192
      %v2389 = vld [vmem:[%s2388] sm:$0xf]
      %v2390 = vld [vmem:[%s2388 + $0x4] sm:$0xf]
      %v2391 = vld [vmem:[%s2388 + $0x8] sm:$0xf]
      %v2392 = vld [vmem:[%s2388 + $0xc] sm:$0xf]
      %v2393 = vld [vmem:[%s2388 + $0x10] sm:$0xf]
      %v2394 = vld [vmem:[%s2388 + $0x14] sm:$0xf]
      %v2395 = vld [vmem:[%s2388 + $0x18] sm:$0xf]
      %v2396 = vld [vmem:[%s2388 + $0x1c] sm:$0xf]
      %v2397 = vld [vmem:[%s2388 + $0x20] sm:$0xf]
      %v2398 = vld [vmem:[%s2388 + $0x24] sm:$0xf]
      %v2399 = vld [vmem:[%s2388 + $0x28] sm:$0xf]
      %v2400 = vld [vmem:[%s2388 + $0x2c] sm:$0xf]
      %v2401 = vld [vmem:[%s2388 + $0x30] sm:$0xf]
      %v2402 = vld [vmem:[%s2388 + $0x34] sm:$0xf]
      %v2403 = vld [vmem:[%s2388 + $0x38] sm:$0xf]
      %v2404 = vld [vmem:[%s2388 + $0x3c] sm:$0xf]
      %s2405 = scalar_lea.vmem %s8, 3
      %v2406 = vld [vmem:[%s2405] sm:$0x1]
      %v2408 = vlaneseq
      %v2409 = vshrl.u32 %v2408, 7
      %v2410 = vsub.s32 0, %v2409
      %v2411 = vrot.slane %v2406, %v2410
      %v2429 = vunpack.c.l.b16 %v2389
      %v2430 = vunpack.c.l.b16 %v2390
      %v2431 = vunpack.c.l.b16 %v2391
      %v2432 = vunpack.c.l.b16 %v2392
      %v2433 = vunpack.c.l.b16 %v2393
      %v2434 = vunpack.c.l.b16 %v2394
      %v2435 = vunpack.c.l.b16 %v2395
      %v2436 = vunpack.c.l.b16 %v2396
      %v2437 = vunpack.c.l.b16 %v2397
      %v2438 = vunpack.c.l.b16 %v2398
      %v2439 = vunpack.c.l.b16 %v2399
      %v2440 = vunpack.c.l.b16 %v2400
      %v2441 = vunpack.c.l.b16 %v2401
      %v2442 = vunpack.c.l.b16 %v2402
      %v2443 = vunpack.c.l.b16 %v2403
      %v2444 = vunpack.c.l.b16 %v2404
      %v2445 = vpack.c.b16 %v2430, %v2429
      %v2446 = vpack.c.b16 %v2432, %v2431
      %v2447 = vpack.c.b16 %v2434, %v2433
      %v2448 = vpack.c.b16 %v2436, %v2435
      %v2449 = vpack.c.b16 %v2438, %v2437
      %v2450 = vpack.c.b16 %v2440, %v2439
      %v2451 = vpack.c.b16 %v2442, %v2441
      %v2452 = vpack.c.b16 %v2444, %v2443
      %2461 = vmatprep.subr.bf16.mxu0 0
      %2462 = vmatpush1.bf16.msra.mxu0 %v2452
      %2463 = vmatprep.subr.bf16.mxu0 0
      %2464 = vmatpush1.bf16.msra.mxu0 %v2451
      %2465 = vmatprep.subr.bf16.mxu0 0
      %2466 = vmatpush1.bf16.msra.mxu0 %v2450
      %2467 = vmatprep.subr.bf16.mxu0 0
      %2468 = vmatpush1.bf16.msra.mxu0 %v2449
      %2469 = vmatprep.subr.bf16.mxu0 0
      %2470 = vmatpush1.bf16.msra.mxu0 %v2448
      %2471 = vmatprep.subr.bf16.mxu0 0
      %2472 = vmatpush1.bf16.msra.mxu0 %v2447
      %2473 = vmatprep.subr.bf16.mxu0 0
      %2474 = vmatpush1.bf16.msra.mxu0 %v2446
      %2475 = vmatprep.subr.bf16.mxu0 0
      %2476 = vmatpush1.bf16.msra.mxu0 %v2445
      %2477 = vmatprep.subr.bf16.mxu0 0
      %2478 = vmatpush2.bf16.msra.mxu0 0
      %2479 = vmatprep.subr.bf16.mxu0 0
      %2480 = vmatpush2.bf16.msra.mxu0 0
      %2481 = vmatprep.subr.bf16.mxu0 0
      %2482 = vmatpush2.bf16.msra.mxu0 0
      %2483 = vmatprep.subr.bf16.mxu0 0
      %2484 = vmatpush2.bf16.msra.mxu0 0
      %2485 = vmatprep.subr.bf16.mxu0 0
      %2486 = vmatpush2.bf16.msra.mxu0 0
      %2487 = vmatprep.subr.bf16.mxu0 0
      %2488 = vmatpush2.bf16.msra.mxu0 0
      %2489 = vmatprep.subr.bf16.mxu0 0
      %2490 = vmatpush2.bf16.msra.mxu0 0
      %2491 = vmatprep.subr.bf16.mxu0 0
      %2492 = vmatpush2.bf16.msra.mxu0 0
      %2493 = vmatprep.mubr.bf16.mxu0 0
      %2494 = vmatmul.mubr.bf16.gmra.mxu0 %v593
      %v2495 = vpop.f32.mrf.mxu0
      %v2496 = vadd.f32 %v2411, %v2495
      %v2497 = vpop.f32.mrf.mxu0
      %v2498 = vpop.f32.mrf.mxu0
      %v2499 = vadd.f32 %v2411, %v2498
      %v2500 = vpop.f32.mrf.mxu0
      %2501 = vdwg.mxu0
      %v2502 = vpack.c.bf16 %v2271, %v2268
      %v2503 = vpack.c.bf16 %v2385, %v2382
      %v2505 = vsel %vm932, %v2502, 0
      %v2508 = vsel %vm932, %v2503, 0
      %2510 = vmatprep.subr.bf16.mxu0 0
      %2511 = vmatpush1.bf16.xpose.msra.mxu0 0
      %2512 = vmatprep.subr.bf16.mxu0 0
      %2513 = vmatpush1.bf16.xpose.msra.mxu0 0
      %2514 = vmatprep.subr.bf16.mxu0 0
      %2515 = vmatpush1.bf16.xpose.msra.mxu0 0
      %2516 = vmatprep.subr.bf16.mxu0 0
      %2517 = vmatpush1.bf16.xpose.msra.mxu0 0
      %2518 = vmatprep.subr.bf16.mxu0 0
      %2519 = vmatpush1.bf16.xpose.msra.mxu0 0
      %2520 = vmatprep.subr.bf16.mxu0 0
      %2521 = vmatpush1.bf16.xpose.msra.mxu0 0
      %2522 = vmatprep.subr.bf16.mxu0 0
      %2523 = vmatpush1.bf16.xpose.msra.mxu0 0
      %2524 = vmatprep.subr.bf16.mxu0 0
      %2525 = vmatpush1.bf16.xpose.msra.mxu0 %v2508
      %2526 = vmatprep.subr.bf16.mxu0 0
      %2527 = vmatpush2.bf16.xpose.msra.mxu0 0
      %2528 = vmatprep.subr.bf16.mxu0 0
      %2529 = vmatpush2.bf16.xpose.msra.mxu0 0
      %2530 = vmatprep.subr.bf16.mxu0 0
      %2531 = vmatpush2.bf16.xpose.msra.mxu0 0
      %2532 = vmatprep.subr.bf16.mxu0 0
      %2533 = vmatpush2.bf16.xpose.msra.mxu0 0
      %2534 = vmatprep.subr.bf16.mxu0 0
      %2535 = vmatpush2.bf16.xpose.msra.mxu0 0
      %2536 = vmatprep.subr.bf16.mxu0 0
      %2537 = vmatpush2.bf16.xpose.msra.mxu0 0
      %2538 = vmatprep.subr.bf16.mxu0 0
      %2539 = vmatpush2.bf16.xpose.msra.mxu0 0
      %2540 = vmatprep.subr.bf16.mxu0 0
      %2541 = vmatpush2.bf16.xpose.msra.mxu0 0
      %2542 = vmatprep.mubr.bf16.mxu0 0
      %2543 = vmatmul.mubr.bf16.gmra.mxu0 %v2505
      %v2544 = vpop.f32.mrf.mxu0
      %v2545 = vadd.f32 0.0, %v2544
      %v2546 = vpop.f32.mrf.mxu0
      %v2547 = vpop.f32.mrf.mxu0
      %v2548 = vadd.f32 0.0, %v2547
      %v2549 = vpop.f32.mrf.mxu0
      %2550 = vdwg.mxu0
      %v2551 = vmul.f32 %v2545, 0.17677669
      %v2552 = vmul.f32 %v2548, 0.17677669
      %v2553 = vsel %vm982, %v2551, -inf
      %2554 = vmax.xlane.f32.xlu0 %v2553
      %v2555 = vpop.xlane.xlu0 %2554
      %v2556 = vsel %vm982, %v2552, -inf
      %2557 = vmax.xlane.f32.xlu0 %v2556
      %v2558 = vpop.xlane.xlu0 %2557
      %v2559 = vsub.f32 %v2551, %v2555
      %v2560 = vsub.f32 %v2552, %v2558
      %v2561 = vmul.f32 %v2559, 1.442695
      %v2562 = vpow.pop %v2561
      %v2563 = vmul.f32 %v2560, 1.442695
      %v2564 = vpow.pop %v2563
      %v2565 = vsel %vm982, %v2562, 0.0
      %2566 = vadd.xlane.f32.xlu0 %v2565
      %v2567 = vpop.xlane.xlu0 %2566
      %v2568 = vsel %vm982, %v2564, 0.0
      %2569 = vadd.xlane.f32.xlu0 %v2568
      %v2570 = vpop.xlane.xlu0 %2569
      %v2571 = vrcp.pop %v2567
      %v2572 = vrcp.pop %v2570
      %v2573 = vmul.f32 %v2562, %v2571
      %v2574 = vmul.f32 %v2564, %v2572
      %v2575 = vpack.c.bf16 %v2574, %v2573
      %v2576 = vpack.c.bf16 %v2499, %v2496
      %v2578 = vsel %vm982, %v2575, 0
      %2580 = vmatprep.subr.bf16.mxu0 0
      %2581 = vmatpush1.bf16.msra.mxu0 0
      %2582 = vmatprep.subr.bf16.mxu0 0
      %2583 = vmatpush1.bf16.msra.mxu0 0
      %2584 = vmatprep.subr.bf16.mxu0 0
      %2585 = vmatpush1.bf16.msra.mxu0 0
      %2586 = vmatprep.subr.bf16.mxu0 0
      %2587 = vmatpush1.bf16.msra.mxu0 0
      %2588 = vmatprep.subr.bf16.mxu0 0
      %2589 = vmatpush1.bf16.msra.mxu0 0
      %2590 = vmatprep.subr.bf16.mxu0 0
      %2591 = vmatpush1.bf16.msra.mxu0 0
      %2592 = vmatprep.subr.bf16.mxu0 0
      %2593 = vmatpush1.bf16.msra.mxu0 0
      %2594 = vmatprep.subr.bf16.mxu0 0
      %2595 = vmatpush1.bf16.msra.mxu0 %v2576
      %2596 = vmatprep.subr.bf16.mxu0 0
      %2597 = vmatpush2.bf16.msra.mxu0 0
      %2598 = vmatprep.subr.bf16.mxu0 0
      %2599 = vmatpush2.bf16.msra.mxu0 0
      %2600 = vmatprep.subr.bf16.mxu0 0
      %2601 = vmatpush2.bf16.msra.mxu0 0
      %2602 = vmatprep.subr.bf16.mxu0 0
      %2603 = vmatpush2.bf16.msra.mxu0 0
      %2604 = vmatprep.subr.bf16.mxu0 0
      %2605 = vmatpush2.bf16.msra.mxu0 0
      %2606 = vmatprep.subr.bf16.mxu0 0
      %2607 = vmatpush2.bf16.msra.mxu0 0
      %2608 = vmatprep.subr.bf16.mxu0 0
      %2609 = vmatpush2.bf16.msra.mxu0 0
      %2610 = vmatprep.subr.bf16.mxu0 0
      %2611 = vmatpush2.bf16.msra.mxu0 0
      %2612 = vmatprep.mubr.bf16.mxu0 0
      %2613 = vmatmul.mubr.bf16.gmra.mxu0 %v2578
      %v2614 = vpop.f32.mrf.mxu0
      %v2615 = vadd.f32 0.0, %v2614
      %v2616 = vpop.f32.mrf.mxu0
      %v2617 = vpop.f32.mrf.mxu0
      %v2618 = vadd.f32 0.0, %v2617
      %v2619 = vpop.f32.mrf.mxu0
      %2620 = vdwg.mxu0
      %v2621 = vpack.c.bf16 %v2618, %v2615
      %s2622 = scalar_lea.vmem %s9, 48
      %v2623 = vld [vmem:[%s2622] sm:$0xf]
      %v2624 = vld [vmem:[%s2622 + $0x4] sm:$0xf]
      %v2625 = vld [vmem:[%s2622 + $0x8] sm:$0xf]
      %v2626 = vld [vmem:[%s2622 + $0xc] sm:$0xf]
      %v2631 = vunpack.c.l.b16 %v2623
      %v2632 = vunpack.c.l.b16 %v2624
      %v2633 = vunpack.c.l.b16 %v2625
      %v2634 = vunpack.c.l.b16 %v2626
      %v2635 = vpack.c.b16 %v2632, %v2631
      %v2636 = vpack.c.b16 %v2634, %v2633
      %v2640 = vsel %vm932, %v2621, 0
      %2642 = vmatprep.subr.bf16.mxu0 0
      %2643 = vmatpush1.bf16.msra.mxu0 0
      %2644 = vmatprep.subr.bf16.mxu0 0
      %2645 = vmatpush1.bf16.msra.mxu0 0
      %2646 = vmatprep.subr.bf16.mxu0 0
      %2647 = vmatpush1.bf16.msra.mxu0 0
      %2648 = vmatprep.subr.bf16.mxu0 0
      %2649 = vmatpush1.bf16.msra.mxu0 0
      %2650 = vmatprep.subr.bf16.mxu0 0
      %2651 = vmatpush1.bf16.msra.mxu0 0
      %2652 = vmatprep.subr.bf16.mxu0 0
      %2653 = vmatpush1.bf16.msra.mxu0 0
      %2654 = vmatprep.subr.bf16.mxu0 0
      %2655 = vmatpush1.bf16.msra.mxu0 %v2636
      %2656 = vmatprep.subr.bf16.mxu0 0
      %2657 = vmatpush1.bf16.msra.mxu0 %v2635
      %2658 = vmatprep.subr.bf16.mxu0 0
      %2659 = vmatpush2.bf16.msra.mxu0 0
      %2660 = vmatprep.subr.bf16.mxu0 0
      %2661 = vmatpush2.bf16.msra.mxu0 0
      %2662 = vmatprep.subr.bf16.mxu0 0
      %2663 = vmatpush2.bf16.msra.mxu0 0
      %2664 = vmatprep.subr.bf16.mxu0 0
      %2665 = vmatpush2.bf16.msra.mxu0 0
      %2666 = vmatprep.subr.bf16.mxu0 0
      %2667 = vmatpush2.bf16.msra.mxu0 0
      %2668 = vmatprep.subr.bf16.mxu0 0
      %2669 = vmatpush2.bf16.msra.mxu0 0
      %2670 = vmatprep.subr.bf16.mxu0 0
      %2671 = vmatpush2.bf16.msra.mxu0 0
      %2672 = vmatprep.subr.bf16.mxu0 0
      %2673 = vmatpush2.bf16.msra.mxu0 0
      %2674 = vmatprep.mubr.bf16.mxu0 0
      %2675 = vmatmul.mubr.bf16.gmra.mxu0 %v2640
      %v2676 = vpop.f32.mrf.mxu0
      %v2677 = vadd.f32 0.0, %v2676
      %v2678 = vpop.f32.mrf.mxu0
      %v2679 = vpop.f32.mrf.mxu0
      %v2680 = vadd.f32 0.0, %v2679
      %v2681 = vpop.f32.mrf.mxu0
      %2682 = vdwg.mxu0
      %v2683 = vadd.f32 %v2158, %v2677
      %v2684 = vadd.f32 %v2159, %v2680
      %v2685 = vadd.f32 %v550, %v2683
      %v2686 = vadd.f32 %v551, %v2684
      %v2687 = vld [vmem:[%s10] sm:$0x1]
      %v2689 = vlaneseq
      %v2690 = vshrl.u32 %v2689, 7
      %v2691 = vsub.s32 0, %v2690
      %v2692 = vrot.slane %v2687, %v2691
      %v2694 = vadd.f32 %v2685, %v2692
      %v2695 = vadd.f32 %v2686, %v2692
      %v2696 = vld [vmem:[%s11] sm:$0x1]
      %v2697 = vld [vmem:[%s12] sm:$0x1]
      %2698 = vadd.xlane.f32.xlu0 %v2694
      %v2699 = vpop.xlane.xlu0 %2698
      %2700 = vadd.xlane.f32.xlu0 %v2695
      %v2701 = vpop.xlane.xlu0 %2700
      %v2702 = vmul.f32 %v2699, %v558
      %v2703 = vmul.f32 %v2701, %v558
      %v2704 = vsub.f32 %v2694, %v2702
      %v2705 = vsub.f32 %v2695, %v2703
      %v2706 = vmul.f32 %v2704, %v2704
      %v2707 = vmul.f32 %v2705, %v2705
      %2708 = vadd.xlane.f32.xlu0 %v2706
      %v2709 = vpop.xlane.xlu0 %2708
      %2710 = vadd.xlane.f32.xlu0 %v2707
      %v2711 = vpop.xlane.xlu0 %2710
      %v2712 = vmul.f32 %v2709, %v558
      %v2713 = vmul.f32 %v2711, %v558
      %v2714 = vadd.f32 %v2712, 1e-06
      %v2715 = vadd.f32 %v2713, 1e-06
      %v2716 = vrsqrt.pop %v2714
      %v2717 = vrsqrt.pop %v2715
      %v2718 = vmul.f32 %v2704, %v2716
      %v2719 = vmul.f32 %v2705, %v2717
      %v2721 = vlaneseq
      %v2722 = vshrl.u32 %v2721, 7
      %v2723 = vsub.s32 0, %v2722
      %v2724 = vrot.slane %v2696, %v2723
      %v2726 = vmul.f32 %v2718, %v2724
      %v2727 = vmul.f32 %v2719, %v2724
      %v2729 = vlaneseq
      %v2730 = vshrl.u32 %v2729, 7
      %v2731 = vsub.s32 0, %v2730
      %v2732 = vrot.slane %v2697, %v2731
      %v2734 = vadd.f32 %v2726, %v2732
      %v2735 = vadd.f32 %v2727, %v2732
      %v2736 = vpack.c.bf16 %v2735, %v2734
      %v2737 = vld [vmem:[%s13] sm:$0xff]
      %v2738 = vld [vmem:[%s13 + $0x8] sm:$0xff]
      %v2739 = vld [vmem:[%s13 + $0x10] sm:$0xff]
      %v2740 = vld [vmem:[%s13 + $0x18] sm:$0xff]
      %v2741 = vld [vmem:[%s13 + $0x20] sm:$0xff]
      %v2742 = vld [vmem:[%s13 + $0x28] sm:$0xff]
      %v2743 = vld [vmem:[%s13 + $0x30] sm:$0xff]
      %v2744 = vld [vmem:[%s13 + $0x38] sm:$0xff]
      %v2745 = vld [vmem:[%s13 + $0x40] sm:$0xff]
      %v2746 = vld [vmem:[%s13 + $0x48] sm:$0xff]
      %v2747 = vld [vmem:[%s13 + $0x50] sm:$0xff]
      %v2748 = vld [vmem:[%s13 + $0x58] sm:$0xff]
      %v2749 = vld [vmem:[%s13 + $0x60] sm:$0xff]
      %v2750 = vld [vmem:[%s13 + $0x68] sm:$0xff]
      %v2751 = vld [vmem:[%s13 + $0x70] sm:$0xff]
      %v2752 = vld [vmem:[%s13 + $0x78] sm:$0xff]
      %v2753 = vld [vmem:[%s13 + $0x80] sm:$0xff]
      %v2754 = vld [vmem:[%s13 + $0x88] sm:$0xff]
      %v2755 = vld [vmem:[%s13 + $0x90] sm:$0xff]
      %v2756 = vld [vmem:[%s13 + $0x98] sm:$0xff]
      %v2757 = vld [vmem:[%s13 + $0xa0] sm:$0xff]
      %v2758 = vld [vmem:[%s13 + $0xa8] sm:$0xff]
      %v2759 = vld [vmem:[%s13 + $0xb0] sm:$0xff]
      %v2760 = vld [vmem:[%s13 + $0xb8] sm:$0xff]
      %v2761 = vld [vmem:[%s13 + $0xc0] sm:$0xff]
      %v2762 = vld [vmem:[%s13 + $0xc8] sm:$0xff]
      %v2763 = vld [vmem:[%s13 + $0xd0] sm:$0xff]
      %v2764 = vld [vmem:[%s13 + $0xd8] sm:$0xff]
      %v2765 = vld [vmem:[%s13 + $0xe0] sm:$0xff]
      %v2766 = vld [vmem:[%s13 + $0xe8] sm:$0xff]
      %v2767 = vld [vmem:[%s13 + $0xf0] sm:$0xff]
      %v2768 = vld [vmem:[%s13 + $0xf8] sm:$0xff]
      %v2769 = vld [vmem:[%s14] sm:$0xf]
      %v2771 = vlaneseq
      %v2772 = vshrl.u32 %v2771, 7
      %v2773 = vsub.s32 0, %v2772
      %v2774 = vrot.slane %v2769, %v2773
      %v2775 = vlaneseq
      %v2776 = vshrl.u32 %v2775, 7
      %v2777 = vsub.s32 1, %v2776
      %v2778 = vrot.slane %v2769, %v2777
      %v2779 = vlaneseq
      %v2780 = vshrl.u32 %v2779, 7
      %v2781 = vsub.s32 2, %v2780
      %v2782 = vrot.slane %v2769, %v2781
      %v2783 = vlaneseq
      %v2784 = vshrl.u32 %v2783, 7
      %v2785 = vsub.s32 3, %v2784
      %v2786 = vrot.slane %v2769, %v2785
      %v2823 = vunpack.c.l.b16 %v2737
      %v2824 = vunpack.c.h.b16 %v2737
      %v2825 = vunpack.c.l.b16 %v2738
      %v2826 = vunpack.c.h.b16 %v2738
      %v2827 = vunpack.c.l.b16 %v2739
      %v2828 = vunpack.c.h.b16 %v2739
      %v2829 = vunpack.c.l.b16 %v2740
      %v2830 = vunpack.c.h.b16 %v2740
      %v2831 = vunpack.c.l.b16 %v2741
      %v2832 = vunpack.c.h.b16 %v2741
      %v2833 = vunpack.c.l.b16 %v2742
      %v2834 = vunpack.c.h.b16 %v2742
      %v2835 = vunpack.c.l.b16 %v2743
      %v2836 = vunpack.c.h.b16 %v2743
      %v2837 = vunpack.c.l.b16 %v2744
      %v2838 = vunpack.c.h.b16 %v2744
      %v2839 = vunpack.c.l.b16 %v2745
      %v2840 = vunpack.c.h.b16 %v2745
      %v2841 = vunpack.c.l.b16 %v2746
      %v2842 = vunpack.c.h.b16 %v2746
      %v2843 = vunpack.c.l.b16 %v2747
      %v2844 = vunpack.c.h.b16 %v2747
      %v2845 = vunpack.c.l.b16 %v2748
      %v2846 = vunpack.c.h.b16 %v2748
      %v2847 = vunpack.c.l.b16 %v2749
      %v2848 = vunpack.c.h.b16 %v2749
      %v2849 = vunpack.c.l.b16 %v2750
      %v2850 = vunpack.c.h.b16 %v2750
      %v2851 = vunpack.c.l.b16 %v2751
      %v2852 = vunpack.c.h.b16 %v2751
      %v2853 = vunpack.c.l.b16 %v2752
      %v2854 = vunpack.c.h.b16 %v2752
      %v2855 = vunpack.c.l.b16 %v2753
      %v2856 = vunpack.c.h.b16 %v2753
      %v2857 = vunpack.c.l.b16 %v2754
      %v2858 = vunpack.c.h.b16 %v2754
      %v2859 = vunpack.c.l.b16 %v2755
      %v2860 = vunpack.c.h.b16 %v2755
      %v2861 = vunpack.c.l.b16 %v2756
      %v2862 = vunpack.c.h.b16 %v2756
      %v2863 = vunpack.c.l.b16 %v2757
      %v2864 = vunpack.c.h.b16 %v2757
      %v2865 = vunpack.c.l.b16 %v2758
      %v2866 = vunpack.c.h.b16 %v2758
      %v2867 = vunpack.c.l.b16 %v2759
      %v2868 = vunpack.c.h.b16 %v2759
      %v2869 = vunpack.c.l.b16 %v2760
      %v2870 = vunpack.c.h.b16 %v2760
      %v2871 = vunpack.c.l.b16 %v2761
      %v2872 = vunpack.c.h.b16 %v2761
      %v2873 = vunpack.c.l.b16 %v2762
      %v2874 = vunpack.c.h.b16 %v2762
      %v2875 = vunpack.c.l.b16 %v2763
      %v2876 = vunpack.c.h.b16 %v2763
      %v2877 = vunpack.c.l.b16 %v2764
      %v2878 = vunpack.c.h.b16 %v2764
      %v2879 = vunpack.c.l.b16 %v2765
      %v2880 = vunpack.c.h.b16 %v2765
      %v2881 = vunpack.c.l.b16 %v2766
      %v2882 = vunpack.c.h.b16 %v2766
      %v2883 = vunpack.c.l.b16 %v2767
      %v2884 = vunpack.c.h.b16 %v2767
      %v2885 = vunpack.c.l.b16 %v2768
      %v2886 = vunpack.c.h.b16 %v2768
      %v2887 = vpack.c.b16 %v2827, %v2823
      %v2888 = vpack.c.b16 %v2828, %v2824
      %v2889 = vpack.c.b16 %v2829, %v2825
      %v2890 = vpack.c.b16 %v2830, %v2826
      %v2891 = vpack.c.b16 %v2835, %v2831
      %v2892 = vpack.c.b16 %v2836, %v2832
      %v2893 = vpack.c.b16 %v2837, %v2833
      %v2894 = vpack.c.b16 %v2838, %v2834
      %v2895 = vpack.c.b16 %v2843, %v2839
      %v2896 = vpack.c.b16 %v2844, %v2840
      %v2897 = vpack.c.b16 %v2845, %v2841
      %v2898 = vpack.c.b16 %v2846, %v2842
      %v2899 = vpack.c.b16 %v2851, %v2847
      %v2900 = vpack.c.b16 %v2852, %v2848
      %v2901 = vpack.c.b16 %v2853, %v2849
      %v2902 = vpack.c.b16 %v2854, %v2850
      %v2903 = vpack.c.b16 %v2859, %v2855
      %v2904 = vpack.c.b16 %v2860, %v2856
      %v2905 = vpack.c.b16 %v2861, %v2857
      %v2906 = vpack.c.b16 %v2862, %v2858
      %v2907 = vpack.c.b16 %v2867, %v2863
      %v2908 = vpack.c.b16 %v2868, %v2864
      %v2909 = vpack.c.b16 %v2869, %v2865
      %v2910 = vpack.c.b16 %v2870, %v2866
      %v2911 = vpack.c.b16 %v2875, %v2871
      %v2912 = vpack.c.b16 %v2876, %v2872
      %v2913 = vpack.c.b16 %v2877, %v2873
      %v2914 = vpack.c.b16 %v2878, %v2874
      %v2915 = vpack.c.b16 %v2883, %v2879
      %v2916 = vpack.c.b16 %v2884, %v2880
      %v2917 = vpack.c.b16 %v2885, %v2881
      %v2918 = vpack.c.b16 %v2886, %v2882
      %2951 = vmatprep.subr.bf16.mxu0 %v2916
      %2952 = vmatpush1.bf16.msra.mxu0 %v2915
      %2953 = vmatprep.subr.bf16.mxu0 %v2912
      %2954 = vmatpush1.bf16.msra.mxu0 %v2911
      %2955 = vmatprep.subr.bf16.mxu0 %v2908
      %2956 = vmatpush1.bf16.msra.mxu0 %v2907
      %2957 = vmatprep.subr.bf16.mxu0 %v2904
      %2958 = vmatpush1.bf16.msra.mxu0 %v2903
      %2959 = vmatprep.subr.bf16.mxu0 %v2900
      %2960 = vmatpush1.bf16.msra.mxu0 %v2899
      %2961 = vmatprep.subr.bf16.mxu0 %v2896
      %2962 = vmatpush1.bf16.msra.mxu0 %v2895
      %2963 = vmatprep.subr.bf16.mxu0 %v2892
      %2964 = vmatpush1.bf16.msra.mxu0 %v2891
      %2965 = vmatprep.subr.bf16.mxu0 %v2888
      %2966 = vmatpush1.bf16.msra.mxu0 %v2887
      %2967 = vmatprep.subr.bf16.mxu0 0
      %2968 = vmatpush2.bf16.msra.mxu0 0
      %2969 = vmatprep.subr.bf16.mxu0 0
      %2970 = vmatpush2.bf16.msra.mxu0 0
      %2971 = vmatprep.subr.bf16.mxu0 0
      %2972 = vmatpush2.bf16.msra.mxu0 0
      %2973 = vmatprep.subr.bf16.mxu0 0
      %2974 = vmatpush2.bf16.msra.mxu0 0
      %2975 = vmatprep.subr.bf16.mxu0 0
      %2976 = vmatpush2.bf16.msra.mxu0 0
      %2977 = vmatprep.subr.bf16.mxu0 0
      %2978 = vmatpush2.bf16.msra.mxu0 0
      %2979 = vmatprep.subr.bf16.mxu0 0
      %2980 = vmatpush2.bf16.msra.mxu0 0
      %2981 = vmatprep.subr.bf16.mxu0 0
      %2982 = vmatpush2.bf16.msra.mxu0 0
      %2983 = vmatprep.mubr.bf16.mxu0 0
      %2984 = vmatmul.mubr.bf16.gmra.mxu0 %v2736
      %v2985 = vpop.f32.mrf.mxu0
      %v2986 = vadd.f32 %v2774, %v2985
      %v2987 = vpop.f32.mrf.mxu0
      %v2988 = vadd.f32 %v2778, %v2987
      %v2989 = vpop.f32.mrf.mxu0
      %v2990 = vadd.f32 %v2774, %v2989
      %v2991 = vpop.f32.mrf.mxu0
      %v2992 = vadd.f32 %v2778, %v2991
      %2993 = vdwg.mxu0
      %2994 = vmatprep.subr.bf16.mxu0 %v2918
      %2995 = vmatpush1.bf16.msra.mxu0 %v2917
      %2996 = vmatprep.subr.bf16.mxu0 %v2914
      %2997 = vmatpush1.bf16.msra.mxu0 %v2913
      %2998 = vmatprep.subr.bf16.mxu0 %v2910
      %2999 = vmatpush1.bf16.msra.mxu0 %v2909
      %3000 = vmatprep.subr.bf16.mxu0 %v2906
      %3001 = vmatpush1.bf16.msra.mxu0 %v2905
      %3002 = vmatprep.subr.bf16.mxu0 %v2902
      %3003 = vmatpush1.bf16.msra.mxu0 %v2901
      %3004 = vmatprep.subr.bf16.mxu0 %v2898
      %3005 = vmatpush1.bf16.msra.mxu0 %v2897
      %3006 = vmatprep.subr.bf16.mxu0 %v2894
      %3007 = vmatpush1.bf16.msra.mxu0 %v2893
      %3008 = vmatprep.subr.bf16.mxu0 %v2890
      %3009 = vmatpush1.bf16.msra.mxu0 %v2889
      %3010 = vmatprep.subr.bf16.mxu0 0
      %3011 = vmatpush2.bf16.msra.mxu0 0
      %3012 = vmatprep.subr.bf16.mxu0 0
      %3013 = vmatpush2.bf16.msra.mxu0 0
      %3014 = vmatprep.subr.bf16.mxu0 0
      %3015 = vmatpush2.bf16.msra.mxu0 0
      %3016 = vmatprep.subr.bf16.mxu0 0
      %3017 = vmatpush2.bf16.msra.mxu0 0
      %3018 = vmatprep.subr.bf16.mxu0 0
      %3019 = vmatpush2.bf16.msra.mxu0 0
      %3020 = vmatprep.subr.bf16.mxu0 0
      %3021 = vmatpush2.bf16.msra.mxu0 0
      %3022 = vmatprep.subr.bf16.mxu0 0
      %3023 = vmatpush2.bf16.msra.mxu0 0
      %3024 = vmatprep.subr.bf16.mxu0 0
      %3025 = vmatpush2.bf16.msra.mxu0 0
      %3026 = vmatprep.mubr.bf16.mxu0 0
      %3027 = vmatmul.mubr.bf16.gmra.mxu0 %v2736
      %v3028 = vpop.f32.mrf.mxu0
      %v3029 = vadd.f32 %v2782, %v3028
      %v3030 = vpop.f32.mrf.mxu0
      %v3031 = vadd.f32 %v2786, %v3030
      %v3032 = vpop.f32.mrf.mxu0
      %v3033 = vadd.f32 %v2782, %v3032
      %v3034 = vpop.f32.mrf.mxu0
      %v3035 = vadd.f32 %v2786, %v3034
      %3036 = vdwg.mxu0
      %v3037 = vmul.f32 %v2986, 0.5
      %v3038 = vmul.f32 %v2988, 0.5
      %v3039 = vmul.f32 %v3029, 0.5
      %v3040 = vmul.f32 %v3031, 0.5
      %v3041 = vmul.f32 %v2990, 0.5
      %v3042 = vmul.f32 %v2992, 0.5
      %v3043 = vmul.f32 %v3033, 0.5
      %v3044 = vmul.f32 %v3035, 0.5
      %v3045 = vmul.f32 %v2986, 0.70710677
      %v3046 = vmul.f32 %v2988, 0.70710677
      %v3047 = vmul.f32 %v3029, 0.70710677
      %v3048 = vmul.f32 %v3031, 0.70710677
      %v3049 = vmul.f32 %v2990, 0.70710677
      %v3050 = vmul.f32 %v2992, 0.70710677
      %v3051 = vmul.f32 %v3033, 0.70710677
      %v3052 = vmul.f32 %v3035, 0.70710677
      %v3053 = vand.u32 2147483647, %v3045
      %v3054 = vand.u32 2147483647, %v3046
      %v3055 = vand.u32 2147483647, %v3047
      %v3056 = vand.u32 2147483647, %v3048
      %v3057 = vand.u32 2147483647, %v3049
      %v3058 = vand.u32 2147483647, %v3050
      %v3059 = vand.u32 2147483647, %v3051
      %v3060 = vand.u32 2147483647, %v3052
      %v3061 = vmul.f32 %v3053, 0.3275911
      %v3062 = vmul.f32 %v3054, 0.3275911
      %v3063 = vmul.f32 %v3055, 0.3275911
      %v3064 = vmul.f32 %v3056, 0.3275911
      %v3065 = vmul.f32 %v3057, 0.3275911
      %v3066 = vmul.f32 %v3058, 0.3275911
      %v3067 = vmul.f32 %v3059, 0.3275911
      %v3068 = vmul.f32 %v3060, 0.3275911
      %v3069 = vadd.f32 %v3061, 1.0
      %v3070 = vadd.f32 %v3062, 1.0
      %v3071 = vadd.f32 %v3063, 1.0
      %v3072 = vadd.f32 %v3064, 1.0
      %v3073 = vadd.f32 %v3065, 1.0
      %v3074 = vadd.f32 %v3066, 1.0
      %v3075 = vadd.f32 %v3067, 1.0
      %v3076 = vadd.f32 %v3068, 1.0
      %v3077 = vrcp.pop %v3069
      %v3078 = vmul.f32 1.0, %v3077
      %v3079 = vrcp.pop %v3070
      %v3080 = vmul.f32 1.0, %v3079
      %v3081 = vrcp.pop %v3071
      %v3082 = vmul.f32 1.0, %v3081
      %v3083 = vrcp.pop %v3072
      %v3084 = vmul.f32 1.0, %v3083
      %v3085 = vrcp.pop %v3073
      %v3086 = vmul.f32 1.0, %v3085
      %v3087 = vrcp.pop %v3074
      %v3088 = vmul.f32 1.0, %v3087
      %v3089 = vrcp.pop %v3075
      %v3090 = vmul.f32 1.0, %v3089
      %v3091 = vrcp.pop %v3076
      %v3092 = vmul.f32 1.0, %v3091
      %v3093 = vmul.f32 %v3078, 1.0614054
      %v3094 = vmul.f32 %v3080, 1.0614054
      %v3095 = vmul.f32 %v3082, 1.0614054
      %v3096 = vmul.f32 %v3084, 1.0614054
      %v3097 = vmul.f32 %v3086, 1.0614054
      %v3098 = vmul.f32 %v3088, 1.0614054
      %v3099 = vmul.f32 %v3090, 1.0614054
      %v3100 = vmul.f32 %v3092, 1.0614054
      %v3101 = vadd.f32 %v3093, -1.4531521
      %v3102 = vadd.f32 %v3094, -1.4531521
      %v3103 = vadd.f32 %v3095, -1.4531521
      %v3104 = vadd.f32 %v3096, -1.4531521
      %v3105 = vadd.f32 %v3097, -1.4531521
      %v3106 = vadd.f32 %v3098, -1.4531521
      %v3107 = vadd.f32 %v3099, -1.4531521
      %v3108 = vadd.f32 %v3100, -1.4531521
      %v3109 = vmul.f32 %v3078, %v3101
      %v3110 = vmul.f32 %v3080, %v3102
      %v3111 = vmul.f32 %v3082, %v3103
      %v3112 = vmul.f32 %v3084, %v3104
      %v3113 = vmul.f32 %v3086, %v3105
      %v3114 = vmul.f32 %v3088, %v3106
      %v3115 = vmul.f32 %v3090, %v3107
      %v3116 = vmul.f32 %v3092, %v3108
      %v3117 = vadd.f32 %v3109, 1.4214138
      %v3118 = vadd.f32 %v3110, 1.4214138
      %v3119 = vadd.f32 %v3111, 1.4214138
      %v3120 = vadd.f32 %v3112, 1.4214138
      %v3121 = vadd.f32 %v3113, 1.4214138
      %v3122 = vadd.f32 %v3114, 1.4214138
      %v3123 = vadd.f32 %v3115, 1.4214138
      %v3124 = vadd.f32 %v3116, 1.4214138
      %v3125 = vmul.f32 %v3078, %v3117
      %v3126 = vmul.f32 %v3080, %v3118
      %v3127 = vmul.f32 %v3082, %v3119
      %v3128 = vmul.f32 %v3084, %v3120
      %v3129 = vmul.f32 %v3086, %v3121
      %v3130 = vmul.f32 %v3088, %v3122
      %v3131 = vmul.f32 %v3090, %v3123
      %v3132 = vmul.f32 %v3092, %v3124
      %v3133 = vadd.f32 %v3125, -0.28449672
      %v3134 = vadd.f32 %v3126, -0.28449672
      %v3135 = vadd.f32 %v3127, -0.28449672
      %v3136 = vadd.f32 %v3128, -0.28449672
      %v3137 = vadd.f32 %v3129, -0.28449672
      %v3138 = vadd.f32 %v3130, -0.28449672
      %v3139 = vadd.f32 %v3131, -0.28449672
      %v3140 = vadd.f32 %v3132, -0.28449672
      %v3141 = vmul.f32 %v3078, %v3133
      %v3142 = vmul.f32 %v3080, %v3134
      %v3143 = vmul.f32 %v3082, %v3135
      %v3144 = vmul.f32 %v3084, %v3136
      %v3145 = vmul.f32 %v3086, %v3137
      %v3146 = vmul.f32 %v3088, %v3138
      %v3147 = vmul.f32 %v3090, %v3139
      %v3148 = vmul.f32 %v3092, %v3140
      %v3149 = vadd.f32 %v3141, 0.2548296
      %v3150 = vadd.f32 %v3142, 0.2548296
      %v3151 = vadd.f32 %v3143, 0.2548296
      %v3152 = vadd.f32 %v3144, 0.2548296
      %v3153 = vadd.f32 %v3145, 0.2548296
      %v3154 = vadd.f32 %v3146, 0.2548296
      %v3155 = vadd.f32 %v3147, 0.2548296
      %v3156 = vadd.f32 %v3148, 0.2548296
      %v3157 = vmul.f32 %v3078, %v3149
      %v3158 = vmul.f32 %v3080, %v3150
      %v3159 = vmul.f32 %v3082, %v3151
      %v3160 = vmul.f32 %v3084, %v3152
      %v3161 = vmul.f32 %v3086, %v3153
      %v3162 = vmul.f32 %v3088, %v3154
      %v3163 = vmul.f32 %v3090, %v3155
      %v3164 = vmul.f32 %v3092, %v3156
      %v3165 = vsub.f32 0.0, %v3053
      %v3166 = vsub.f32 0.0, %v3054
      %v3167 = vsub.f32 0.0, %v3055
      %v3168 = vsub.f32 0.0, %v3056
      %v3169 = vsub.f32 0.0, %v3057
      %v3170 = vsub.f32 0.0, %v3058
      %v3171 = vsub.f32 0.0, %v3059
      %v3172 = vsub.f32 0.0, %v3060
      %v3173 = vmul.f32 %v3165, %v3053
      %v3174 = vmul.f32 %v3166, %v3054
      %v3175 = vmul.f32 %v3167, %v3055
      %v3176 = vmul.f32 %v3168, %v3056
      %v3177 = vmul.f32 %v3169, %v3057
      %v3178 = vmul.f32 %v3170, %v3058
      %v3179 = vmul.f32 %v3171, %v3059
      %v3180 = vmul.f32 %v3172, %v3060
      %v3181 = vmul.f32 %v3173, 1.442695
      %v3182 = vpow.pop %v3181
      %v3183 = vmul.f32 %v3174, 1.442695
      %v3184 = vpow.pop %v3183
      %v3185 = vmul.f32 %v3175, 1.442695
      %v3186 = vpow.pop %v3185
      %v3187 = vmul.f32 %v3176, 1.442695
      %v3188 = vpow.pop %v3187
      %v3189 = vmul.f32 %v3177, 1.442695
      %v3190 = vpow.pop %v3189
      %v3191 = vmul.f32 %v3178, 1.442695
      %v3192 = vpow.pop %v3191
      %v3193 = vmul.f32 %v3179, 1.442695
      %v3194 = vpow.pop %v3193
      %v3195 = vmul.f32 %v3180, 1.442695
      %v3196 = vpow.pop %v3195
      %v3197 = vmul.f32 %v3157, %v3182
      %v3198 = vmul.f32 %v3158, %v3184
      %v3199 = vmul.f32 %v3159, %v3186
      %v3200 = vmul.f32 %v3160, %v3188
      %v3201 = vmul.f32 %v3161, %v3190
      %v3202 = vmul.f32 %v3162, %v3192
      %v3203 = vmul.f32 %v3163, %v3194
      %v3204 = vmul.f32 %v3164, %v3196
      %v3205 = vsub.f32 1.0, %v3197
      %v3206 = vsub.f32 1.0, %v3198
      %v3207 = vsub.f32 1.0, %v3199
      %v3208 = vsub.f32 1.0, %v3200
      %v3209 = vsub.f32 1.0, %v3201
      %v3210 = vsub.f32 1.0, %v3202
      %v3211 = vsub.f32 1.0, %v3203
      %v3212 = vsub.f32 1.0, %v3204
      %vm3213 = vcmp.lt.f32.partialorder %v3045, 0.0
      %vm3214 = vcmp.lt.f32.partialorder %v3046, 0.0
      %vm3215 = vcmp.lt.f32.partialorder %v3047, 0.0
      %vm3216 = vcmp.lt.f32.partialorder %v3048, 0.0
      %vm3217 = vcmp.lt.f32.partialorder %v3049, 0.0
      %vm3218 = vcmp.lt.f32.partialorder %v3050, 0.0
      %vm3219 = vcmp.lt.f32.partialorder %v3051, 0.0
      %vm3220 = vcmp.lt.f32.partialorder %v3052, 0.0
      %v3221 = vsub.f32 0.0, %v3205
      %v3222 = vsub.f32 0.0, %v3206
      %v3223 = vsub.f32 0.0, %v3207
      %v3224 = vsub.f32 0.0, %v3208
      %v3225 = vsub.f32 0.0, %v3209
      %v3226 = vsub.f32 0.0, %v3210
      %v3227 = vsub.f32 0.0, %v3211
      %v3228 = vsub.f32 0.0, %v3212
      %v3229 = vsel %vm3213, %v3221, %v3205
      %v3230 = vsel %vm3214, %v3222, %v3206
      %v3231 = vsel %vm3215, %v3223, %v3207
      %v3232 = vsel %vm3216, %v3224, %v3208
      %v3233 = vsel %vm3217, %v3225, %v3209
      %v3234 = vsel %vm3218, %v3226, %v3210
      %v3235 = vsel %vm3219, %v3227, %v3211
      %v3236 = vsel %vm3220, %v3228, %v3212
      %v3237 = vadd.f32 %v3229, 1.0
      %v3238 = vadd.f32 %v3230, 1.0
      %v3239 = vadd.f32 %v3231, 1.0
      %v3240 = vadd.f32 %v3232, 1.0
      %v3241 = vadd.f32 %v3233, 1.0
      %v3242 = vadd.f32 %v3234, 1.0
      %v3243 = vadd.f32 %v3235, 1.0
      %v3244 = vadd.f32 %v3236, 1.0
      %v3245 = vmul.f32 %v3037, %v3237
      %v3246 = vmul.f32 %v3038, %v3238
      %v3247 = vmul.f32 %v3039, %v3239
      %v3248 = vmul.f32 %v3040, %v3240
      %v3249 = vmul.f32 %v3041, %v3241
      %v3250 = vmul.f32 %v3042, %v3242
      %v3251 = vmul.f32 %v3043, %v3243
      %v3252 = vmul.f32 %v3044, %v3244
      %v3253 = vpack.c.bf16 %v3249, %v3245
      %v3254 = vpack.c.bf16 %v3250, %v3246
      %v3255 = vpack.c.bf16 %v3251, %v3247
      %v3256 = vpack.c.bf16 %v3252, %v3248
      %v3257 = vld [vmem:[%s15] sm:$0xf]
      %v3258 = vld [vmem:[%s15 + $0x4] sm:$0xf]
      %v3259 = vld [vmem:[%s15 + $0x8] sm:$0xf]
      %v3260 = vld [vmem:[%s15 + $0xc] sm:$0xf]
      %v3261 = vld [vmem:[%s15 + $0x10] sm:$0xf]
      %v3262 = vld [vmem:[%s15 + $0x14] sm:$0xf]
      %v3263 = vld [vmem:[%s15 + $0x18] sm:$0xf]
      %v3264 = vld [vmem:[%s15 + $0x1c] sm:$0xf]
      %v3265 = vld [vmem:[%s15 + $0x20] sm:$0xf]
      %v3266 = vld [vmem:[%s15 + $0x24] sm:$0xf]
      %v3267 = vld [vmem:[%s15 + $0x28] sm:$0xf]
      %v3268 = vld [vmem:[%s15 + $0x2c] sm:$0xf]
      %v3269 = vld [vmem:[%s15 + $0x30] sm:$0xf]
      %v3270 = vld [vmem:[%s15 + $0x34] sm:$0xf]
      %v3271 = vld [vmem:[%s15 + $0x38] sm:$0xf]
      %v3272 = vld [vmem:[%s15 + $0x3c] sm:$0xf]
      %v3273 = vld [vmem:[%s15 + $0x40] sm:$0xf]
      %v3274 = vld [vmem:[%s15 + $0x44] sm:$0xf]
      %v3275 = vld [vmem:[%s15 + $0x48] sm:$0xf]
      %v3276 = vld [vmem:[%s15 + $0x4c] sm:$0xf]
      %v3277 = vld [vmem:[%s15 + $0x50] sm:$0xf]
      %v3278 = vld [vmem:[%s15 + $0x54] sm:$0xf]
      %v3279 = vld [vmem:[%s15 + $0x58] sm:$0xf]
      %v3280 = vld [vmem:[%s15 + $0x5c] sm:$0xf]
      %v3281 = vld [vmem:[%s15 + $0x60] sm:$0xf]
      %v3282 = vld [vmem:[%s15 + $0x64] sm:$0xf]
      %v3283 = vld [vmem:[%s15 + $0x68] sm:$0xf]
      %v3284 = vld [vmem:[%s15 + $0x6c] sm:$0xf]
      %v3285 = vld [vmem:[%s15 + $0x70] sm:$0xf]
      %v3286 = vld [vmem:[%s15 + $0x74] sm:$0xf]
      %v3287 = vld [vmem:[%s15 + $0x78] sm:$0xf]
      %v3288 = vld [vmem:[%s15 + $0x7c] sm:$0xf]
      %v3289 = vld [vmem:[%s15 + $0x80] sm:$0xf]
      %v3290 = vld [vmem:[%s15 + $0x84] sm:$0xf]
      %v3291 = vld [vmem:[%s15 + $0x88] sm:$0xf]
      %v3292 = vld [vmem:[%s15 + $0x8c] sm:$0xf]
      %v3293 = vld [vmem:[%s15 + $0x90] sm:$0xf]
      %v3294 = vld [vmem:[%s15 + $0x94] sm:$0xf]
      %v3295 = vld [vmem:[%s15 + $0x98] sm:$0xf]
      %v3296 = vld [vmem:[%s15 + $0x9c] sm:$0xf]
      %v3297 = vld [vmem:[%s15 + $0xa0] sm:$0xf]
      %v3298 = vld [vmem:[%s15 + $0xa4] sm:$0xf]
      %v3299 = vld [vmem:[%s15 + $0xa8] sm:$0xf]
      %v3300 = vld [vmem:[%s15 + $0xac] sm:$0xf]
      %v3301 = vld [vmem:[%s15 + $0xb0] sm:$0xf]
      %v3302 = vld [vmem:[%s15 + $0xb4] sm:$0xf]
      %v3303 = vld [vmem:[%s15 + $0xb8] sm:$0xf]
      %v3304 = vld [vmem:[%s15 + $0xbc] sm:$0xf]
      %v3305 = vld [vmem:[%s15 + $0xc0] sm:$0xf]
      %v3306 = vld [vmem:[%s15 + $0xc4] sm:$0xf]
      %v3307 = vld [vmem:[%s15 + $0xc8] sm:$0xf]
      %v3308 = vld [vmem:[%s15 + $0xcc] sm:$0xf]
      %v3309 = vld [vmem:[%s15 + $0xd0] sm:$0xf]
      %v3310 = vld [vmem:[%s15 + $0xd4] sm:$0xf]
      %v3311 = vld [vmem:[%s15 + $0xd8] sm:$0xf]
      %v3312 = vld [vmem:[%s15 + $0xdc] sm:$0xf]
      %v3313 = vld [vmem:[%s15 + $0xe0] sm:$0xf]
      %v3314 = vld [vmem:[%s15 + $0xe4] sm:$0xf]
      %v3315 = vld [vmem:[%s15 + $0xe8] sm:$0xf]
      %v3316 = vld [vmem:[%s15 + $0xec] sm:$0xf]
      %v3317 = vld [vmem:[%s15 + $0xf0] sm:$0xf]
      %v3318 = vld [vmem:[%s15 + $0xf4] sm:$0xf]
      %v3319 = vld [vmem:[%s15 + $0xf8] sm:$0xf]
      %v3320 = vld [vmem:[%s15 + $0xfc] sm:$0xf]
      %v3321 = vld [vmem:[%s16] sm:$0x1]
      %v3323 = vlaneseq
      %v3324 = vshrl.u32 %v3323, 7
      %v3325 = vsub.s32 0, %v3324
      %v3326 = vrot.slane %v3321, %v3325
      %v3392 = vunpack.c.l.b16 %v3257
      %v3393 = vunpack.c.l.b16 %v3258
      %v3394 = vunpack.c.l.b16 %v3259
      %v3395 = vunpack.c.l.b16 %v3260
      %v3396 = vunpack.c.l.b16 %v3261
      %v3397 = vunpack.c.l.b16 %v3262
      %v3398 = vunpack.c.l.b16 %v3263
      %v3399 = vunpack.c.l.b16 %v3264
      %v3400 = vunpack.c.l.b16 %v3265
      %v3401 = vunpack.c.l.b16 %v3266
      %v3402 = vunpack.c.l.b16 %v3267
      %v3403 = vunpack.c.l.b16 %v3268
      %v3404 = vunpack.c.l.b16 %v3269
      %v3405 = vunpack.c.l.b16 %v3270
      %v3406 = vunpack.c.l.b16 %v3271
      %v3407 = vunpack.c.l.b16 %v3272
      %v3408 = vunpack.c.l.b16 %v3273
      %v3409 = vunpack.c.l.b16 %v3274
      %v3410 = vunpack.c.l.b16 %v3275
      %v3411 = vunpack.c.l.b16 %v3276
      %v3412 = vunpack.c.l.b16 %v3277
      %v3413 = vunpack.c.l.b16 %v3278
      %v3414 = vunpack.c.l.b16 %v3279
      %v3415 = vunpack.c.l.b16 %v3280
      %v3416 = vunpack.c.l.b16 %v3281
      %v3417 = vunpack.c.l.b16 %v3282
      %v3418 = vunpack.c.l.b16 %v3283
      %v3419 = vunpack.c.l.b16 %v3284
      %v3420 = vunpack.c.l.b16 %v3285
      %v3421 = vunpack.c.l.b16 %v3286
      %v3422 = vunpack.c.l.b16 %v3287
      %v3423 = vunpack.c.l.b16 %v3288
      %v3424 = vunpack.c.l.b16 %v3289
      %v3425 = vunpack.c.l.b16 %v3290
      %v3426 = vunpack.c.l.b16 %v3291
      %v3427 = vunpack.c.l.b16 %v3292
      %v3428 = vunpack.c.l.b16 %v3293
      %v3429 = vunpack.c.l.b16 %v3294
      %v3430 = vunpack.c.l.b16 %v3295
      %v3431 = vunpack.c.l.b16 %v3296
      %v3432 = vunpack.c.l.b16 %v3297
      %v3433 = vunpack.c.l.b16 %v3298
      %v3434 = vunpack.c.l.b16 %v3299
      %v3435 = vunpack.c.l.b16 %v3300
      %v3436 = vunpack.c.l.b16 %v3301
      %v3437 = vunpack.c.l.b16 %v3302
      %v3438 = vunpack.c.l.b16 %v3303
      %v3439 = vunpack.c.l.b16 %v3304
      %v3440 = vunpack.c.l.b16 %v3305
      %v3441 = vunpack.c.l.b16 %v3306
      %v3442 = vunpack.c.l.b16 %v3307
      %v3443 = vunpack.c.l.b16 %v3308
      %v3444 = vunpack.c.l.b16 %v3309
      %v3445 = vunpack.c.l.b16 %v3310
      %v3446 = vunpack.c.l.b16 %v3311
      %v3447 = vunpack.c.l.b16 %v3312
      %v3448 = vunpack.c.l.b16 %v3313
      %v3449 = vunpack.c.l.b16 %v3314
      %v3450 = vunpack.c.l.b16 %v3315
      %v3451 = vunpack.c.l.b16 %v3316
      %v3452 = vunpack.c.l.b16 %v3317
      %v3453 = vunpack.c.l.b16 %v3318
      %v3454 = vunpack.c.l.b16 %v3319
      %v3455 = vunpack.c.l.b16 %v3320
      %v3456 = vpack.c.b16 %v3393, %v3392
      %v3457 = vpack.c.b16 %v3395, %v3394
      %v3458 = vpack.c.b16 %v3397, %v3396
      %v3459 = vpack.c.b16 %v3399, %v3398
      %v3460 = vpack.c.b16 %v3401, %v3400
      %v3461 = vpack.c.b16 %v3403, %v3402
      %v3462 = vpack.c.b16 %v3405, %v3404
      %v3463 = vpack.c.b16 %v3407, %v3406
      %v3464 = vpack.c.b16 %v3409, %v3408
      %v3465 = vpack.c.b16 %v3411, %v3410
      %v3466 = vpack.c.b16 %v3413, %v3412
      %v3467 = vpack.c.b16 %v3415, %v3414
      %v3468 = vpack.c.b16 %v3417, %v3416
      %v3469 = vpack.c.b16 %v3419, %v3418
      %v3470 = vpack.c.b16 %v3421, %v3420
      %v3471 = vpack.c.b16 %v3423, %v3422
      %v3472 = vpack.c.b16 %v3425, %v3424
      %v3473 = vpack.c.b16 %v3427, %v3426
      %v3474 = vpack.c.b16 %v3429, %v3428
      %v3475 = vpack.c.b16 %v3431, %v3430
      %v3476 = vpack.c.b16 %v3433, %v3432
      %v3477 = vpack.c.b16 %v3435, %v3434
      %v3478 = vpack.c.b16 %v3437, %v3436
      %v3479 = vpack.c.b16 %v3439, %v3438
      %v3480 = vpack.c.b16 %v3441, %v3440
      %v3481 = vpack.c.b16 %v3443, %v3442
      %v3482 = vpack.c.b16 %v3445, %v3444
      %v3483 = vpack.c.b16 %v3447, %v3446
      %v3484 = vpack.c.b16 %v3449, %v3448
      %v3485 = vpack.c.b16 %v3451, %v3450
      %v3486 = vpack.c.b16 %v3453, %v3452
      %v3487 = vpack.c.b16 %v3455, %v3454
      %3520 = vmatprep.subr.bf16.mxu0 0
      %3521 = vmatpush1.bf16.msra.mxu0 %v3463
      %3522 = vmatprep.subr.bf16.mxu0 0
      %3523 = vmatpush1.bf16.msra.mxu0 %v3462
      %3524 = vmatprep.subr.bf16.mxu0 0
      %3525 = vmatpush1.bf16.msra.mxu0 %v3461
      %3526 = vmatprep.subr.bf16.mxu0 0
      %3527 = vmatpush1.bf16.msra.mxu0 %v3460
      %3528 = vmatprep.subr.bf16.mxu0 0
      %3529 = vmatpush1.bf16.msra.mxu0 %v3459
      %3530 = vmatprep.subr.bf16.mxu0 0
      %3531 = vmatpush1.bf16.msra.mxu0 %v3458
      %3532 = vmatprep.subr.bf16.mxu0 0
      %3533 = vmatpush1.bf16.msra.mxu0 %v3457
      %3534 = vmatprep.subr.bf16.mxu0 0
      %3535 = vmatpush1.bf16.msra.mxu0 %v3456
      %3536 = vmatprep.subr.bf16.mxu0 0
      %3537 = vmatpush2.bf16.msra.mxu0 %v3471
      %3538 = vmatprep.subr.bf16.mxu0 0
      %3539 = vmatpush2.bf16.msra.mxu0 %v3470
      %3540 = vmatprep.subr.bf16.mxu0 0
      %3541 = vmatpush2.bf16.msra.mxu0 %v3469
      %3542 = vmatprep.subr.bf16.mxu0 0
      %3543 = vmatpush2.bf16.msra.mxu0 %v3468
      %3544 = vmatprep.subr.bf16.mxu0 0
      %3545 = vmatpush2.bf16.msra.mxu0 %v3467
      %3546 = vmatprep.subr.bf16.mxu0 0
      %3547 = vmatpush2.bf16.msra.mxu0 %v3466
      %3548 = vmatprep.subr.bf16.mxu0 0
      %3549 = vmatpush2.bf16.msra.mxu0 %v3465
      %3550 = vmatprep.subr.bf16.mxu0 0
      %3551 = vmatpush2.bf16.msra.mxu0 %v3464
      %3552 = vmatprep.mubr.bf16.mxu0 %v3254
      %3553 = vmatmul.mubr.bf16.gmra.mxu0 %v3253
      %v3554 = vpop.f32.mrf.mxu0
      %v3555 = vadd.f32 %v3326, %v3554
      %v3556 = vpop.f32.mrf.mxu0
      %v3557 = vpop.f32.mrf.mxu0
      %v3558 = vadd.f32 %v3326, %v3557
      %v3559 = vpop.f32.mrf.mxu0
      %3560 = vdwg.mxu0
      %3561 = vmatprep.subr.bf16.mxu0 0
      %3562 = vmatpush1.bf16.msra.mxu0 %v3479
      %3563 = vmatprep.subr.bf16.mxu0 0
      %3564 = vmatpush1.bf16.msra.mxu0 %v3478
      %3565 = vmatprep.subr.bf16.mxu0 0
      %3566 = vmatpush1.bf16.msra.mxu0 %v3477
      %3567 = vmatprep.subr.bf16.mxu0 0
      %3568 = vmatpush1.bf16.msra.mxu0 %v3476
      %3569 = vmatprep.subr.bf16.mxu0 0
      %3570 = vmatpush1.bf16.msra.mxu0 %v3475
      %3571 = vmatprep.subr.bf16.mxu0 0
      %3572 = vmatpush1.bf16.msra.mxu0 %v3474
      %3573 = vmatprep.subr.bf16.mxu0 0
      %3574 = vmatpush1.bf16.msra.mxu0 %v3473
      %3575 = vmatprep.subr.bf16.mxu0 0
      %3576 = vmatpush1.bf16.msra.mxu0 %v3472
      %3577 = vmatprep.subr.bf16.mxu0 0
      %3578 = vmatpush2.bf16.msra.mxu0 %v3487
      %3579 = vmatprep.subr.bf16.mxu0 0
      %3580 = vmatpush2.bf16.msra.mxu0 %v3486
      %3581 = vmatprep.subr.bf16.mxu0 0
      %3582 = vmatpush2.bf16.msra.mxu0 %v3485
      %3583 = vmatprep.subr.bf16.mxu0 0
      %3584 = vmatpush2.bf16.msra.mxu0 %v3484
      %3585 = vmatprep.subr.bf16.mxu0 0
      %3586 = vmatpush2.bf16.msra.mxu0 %v3483
      %3587 = vmatprep.subr.bf16.mxu0 0
      %3588 = vmatpush2.bf16.msra.mxu0 %v3482
      %3589 = vmatprep.subr.bf16.mxu0 0
      %3590 = vmatpush2.bf16.msra.mxu0 %v3481
      %3591 = vmatprep.subr.bf16.mxu0 0
      %3592 = vmatpush2.bf16.msra.mxu0 %v3480
      %3593 = vmatprep.mubr.bf16.mxu0 %v3256
      %3594 = vmatmul.mubr.bf16.gmra.mxu0 %v3255
      %v3595 = vpop.f32.mrf.mxu0
      %v3596 = vadd.f32 %v3555, %v3595
      %v3597 = vpop.f32.mrf.mxu0
      %v3598 = vpop.f32.mrf.mxu0
      %v3599 = vadd.f32 %v3558, %v3598
      %v3600 = vpop.f32.mrf.mxu0
      %3601 = vdwg.mxu0
      %v3602 = vadd.f32 %v2694, %v3596
      %v3603 = vadd.f32 %v2695, %v3599
      %3604 = vst [vmem:[%s548] sm:$0xff] %v3602
      %3605 = vst [vmem:[%s548 + $0x8] sm:$0xff] %v3603
      %p3606 = scmp.lt.s32.totalorder %s28, 1
      %s3607 = scalar_select %p3606, %s28, 1
      %s3608 = smul.addr %s3607, 2
      %s3609 = smul.addr %s3608, 8
      %s3610 = scalar_lea.vmem %s17, %s3609
      // Predicated region
      $region89: #{vit_segmentation_forward.8} parent=87 // pred_check
        %p3611 = pneg %p408
      $region90: #{vit_segmentation_forward.8} parent=87 // pred_check_branch
        %3613 = sbr.rel (%p3611) target = $region92
      $region91: #{vit_segmentation_forward.8} parent=87 // pred_region
        _
      $region92: #{vit_segmentation_forward.8} parent=87 // pred_fallthru
        _
    $region88: #{vit_segmentation_forward.8} parent=5 // pred_fallthru
      _
    %p3614 = scmp.le.s32.totalorder 2, %s23
    // Predicated region
    $region93: #{vit_segmentation_forward.8} parent=5 // pred_check
      %p3615 = pneg %p3614
    $region94: #{vit_segmentation_forward.8} parent=5 // pred_check_branch
      %3617 = sbr.rel (%p3615) target = $region96
    $region95: #{vit_segmentation_forward.8} parent=5 // pred_region
      %s3618 = ssub.s32 %s23, 2
      // Predicated region
      $region97: #{vit_segmentation_forward.8} parent=95 // pred_check
        %p3619 = pneg %p414
      $region98: #{vit_segmentation_forward.8} parent=95 // pred_check_branch
        %3621 = sbr.rel (%p3619) target = $region100
      $region99: #{vit_segmentation_forward.8} parent=95 // pred_region
        %p3622 = scmp.lt.s32.totalorder %s29, 1
        %s3623 = scalar_select %p3622, %s29, 1
        %s3624 = smul.addr %s3623, 2
        %s3625 = smul.addr %s3624, 8
        %s3626 = scalar_lea.vmem %s17, %s3625
      $region100: #{vit_segmentation_forward.8} parent=95 // pred_fallthru
        _
    $region96: #{vit_segmentation_forward.8} parent=5 // pred_fallthru
      _
  $region6: #{vit_segmentation_forward.8} parent=0 // loop_footer
    %s27 = sadd.s32 1, %s23
  $region7: #{vit_segmentation_forward.8} parent=0 // loop_footer_branch
    %22 = sbr.rel target = $region3
  $region8: #{vit_segmentation_forward.8} parent=0 // loop_exit
    _

// kernel: vit_segmentation_forward.13
$region0: #{vit_segmentation_forward.13}
  #allocation0 [shape = 'u32[]', space=smem, size = 0x4, offset = 0x4, fixed_abs, tag = 'smem constant byte address 0x4 - core index']
  #allocation1 [shape = 'u32[144,128]{1,0:T(1,128)}', space=vmem, size = 0x12000, scoped, tag = 'internal scratch']
  %s0 = inlined_call_operand.vmem [shape: bf16[64,16], index: 0, kind: input, shape index: {}]
  %s1 = inlined_call_operand.vmem [shape: bf16[2,16,320], index: 1, kind: input, shape index: {}]
  %s2 = inlined_call_operand.vmem [shape: f32[2,64,320], index: 2, kind: output, shape index: {}]
  %s3 = sld [smem:[#allocation0]]
  $region41: #{vit_segmentation_forward.13} parent=0
    _
  %s5 = ssub.s32 1, %s3
  %s6 = scalar_select 0, %s5, %s3
  loop: start=0, step=1, limit=4
  $region2: #{vit_segmentation_forward.13} parent=0 // loop_pre_header
    _
  $region3: #{vit_segmentation_forward.13} parent=0 // loop_header
    %s8 = sphi 0, %s12
    %p9 = scmp.ge.s32.totalorder %s8, 4
    %s16 = sphi 0, %s16
    %s18 = sphi 0, %s16
    %s19 = sphi 0, %s18
    %s33 = sphi 0, %s19
    %s39 = sphi 0, %s41
    %s42 = sphi 0, %s39
    %s43 = sphi 0, %s42
    %s59 = sphi 0, %s43
    %s65 = sphi 0, %s67
    %s68 = sphi 0, %s65
    %s69 = sphi 0, %s68
    %s85 = sphi 0, %s69
  $region4: #{vit_segmentation_forward.13} parent=0 // loop_header_branch
    %11 = sbr.rel (%p9) target = $region8
  $region5: #{vit_segmentation_forward.13} parent=0 // loop_body
    %s13 = ssub.s32 %s8, 1
    %s14 = ssub.s32 %s8, 2
    %s15 = sadd.s32 %s8, 1
    %s17 = sadd.s32 %s16, 1
    %p20 = scmp.eq.s32.totalorder %s8, 1
    %p21 = scmp.ne.s32.totalorder %s16, %s18
    %p22 = scmp.eq.s32.totalorder %s8, 0
    %p23 = por %p21, %p22
    %p24 = scmp.ne.s32.totalorder %s16, %s18
    %p25 = scmp.eq.s32.totalorder %s13, 1
    %p26 = por %p24, %p25
    %p27 = scmp.ne.s32.totalorder %s18, %s19
    %p28 = scmp.eq.s32.totalorder %s13, 0
    %p29 = por %p27, %p28
    %p30 = scmp.ne.s32.totalorder %s18, %s19
    %p31 = scmp.eq.s32.totalorder %s14, 1
    %p32 = por %p30, %p31
    %p34 = scmp.ne.s32.totalorder %s19, %s33
    %p35 = scmp.eq.s32.totalorder %s14, 0
    %p36 = por %p34, %p35
    %s37 = ssub.s32 %s8, %s15
    %p38 = scmp.eq.s32.totalorder %s37, 0
    %s40 = sadd.s32 %s39, 1
    %s41 = scalar_select %p38, %s39, %s40
    %p44 = pneg %p38
    %p45 = scmp.eq.s32.totalorder %s8, 1
    %p46 = por %p44, %p45
    %p47 = scmp.ne.s32.totalorder %s39, %s42
    %p48 = scmp.eq.s32.totalorder %s8, 0
    %p49 = por %p47, %p48
    %p50 = scmp.ne.s32.totalorder %s39, %s42
    %p51 = scmp.eq.s32.totalorder %s13, 1
    %p52 = por %p50, %p51
    %p53 = scmp.ne.s32.totalorder %s42, %s43
    %p54 = scmp.eq.s32.totalorder %s13, 0
    %p55 = por %p53, %p54
    %p56 = scmp.ne.s32.totalorder %s42, %s43
    %p57 = scmp.eq.s32.totalorder %s14, 1
    %p58 = por %p56, %p57
    %p60 = scmp.ne.s32.totalorder %s43, %s59
    %p61 = scmp.eq.s32.totalorder %s14, 0
    %p62 = por %p60, %p61
    %s63 = ssub.s32 %s8, %s15
    %p64 = scmp.eq.s32.totalorder %s63, 0
    %s66 = sadd.s32 %s65, 1
    %s67 = scalar_select %p64, %s65, %s66
    %p70 = pneg %p64
    %p71 = scmp.eq.s32.totalorder %s8, 1
    %p72 = por %p70, %p71
    %p73 = scmp.ne.s32.totalorder %s65, %s68
    %p74 = scmp.eq.s32.totalorder %s8, 0
    %p75 = por %p73, %p74
    %p76 = scmp.ne.s32.totalorder %s65, %s68
    %p77 = scmp.eq.s32.totalorder %s13, 1
    %p78 = por %p76, %p77
    %p79 = scmp.ne.s32.totalorder %s68, %s69
    %p80 = scmp.eq.s32.totalorder %s13, 0
    %p81 = por %p79, %p80
    %p82 = scmp.ne.s32.totalorder %s68, %s69
    %p83 = scmp.eq.s32.totalorder %s14, 1
    %p84 = por %p82, %p83
    %p86 = scmp.ne.s32.totalorder %s69, %s85
    %p87 = scmp.eq.s32.totalorder %s14, 0
    %p88 = por %p86, %p87
    %p89 = scmp.le.s32.totalorder 1, %s8
    %p90 = scmp.lt.s32.totalorder %s8, 3
    %p91 = pnand %p89, %p90
    %p92 = pneg %p91
    // Predicated region
    $region9: #{vit_segmentation_forward.13} parent=5 // pred_check
      _
    $region10: #{vit_segmentation_forward.13} parent=5 // pred_check_branch
      %94 = sbr.rel (%p91) target = $region12
    $region11: #{vit_segmentation_forward.13} parent=5 // pred_region
      %s95 = ssub.s32 %s8, 1
      // Predicated region
      $region13: #{vit_segmentation_forward.13} parent=11 // pred_check
        %p96 = pneg %p29
      $region14: #{vit_segmentation_forward.13} parent=11 // pred_check_branch
        %98 = sbr.rel (%p96) target = $region16
      $region15: #{vit_segmentation_forward.13} parent=11 // pred_region
        _
      $region16: #{vit_segmentation_forward.13} parent=11 // pred_fallthru
        _
    $region12: #{vit_segmentation_forward.13} parent=5 // pred_fallthru
      _
    %p99 = scmp.lt.s32.totalorder %s8, 2
    // Predicated region
    $region17: #{vit_segmentation_forward.13} parent=5 // pred_check
      %p100 = pneg %p99
    $region18: #{vit_segmentation_forward.13} parent=5 // pred_check_branch
      %102 = sbr.rel (%p100) target = $region20
    $region19: #{vit_segmentation_forward.13} parent=5 // pred_region
      // Predicated region
      $region21: #{vit_segmentation_forward.13} parent=19 // pred_check
        %p103 = pneg %p49
      $region22: #{vit_segmentation_forward.13} parent=19 // pred_check_branch
        %105 = sbr.rel (%p103) target = $region24
      $region23: #{vit_segmentation_forward.13} parent=19 // pred_region
        %p106 = scmp.lt.s32.totalorder %s8, 1
        %s107 = scalar_select %p106, %s8, 1
        %s108 = smul.addr %s107, 6
        %s109 = smul.addr %s108, 4
        %s110 = scalar_lea.vmem %s1, %s109
      $region24: #{vit_segmentation_forward.13} parent=19 // pred_fallthru
        _
    $region20: #{vit_segmentation_forward.13} parent=5 // pred_fallthru
      _
    %p111 = scmp.le.s32.totalorder 1, %s8
    %p112 = scmp.lt.s32.totalorder %s8, 3
    %p113 = pnand %p111, %p112
    %p114 = pneg %p113
    // Predicated region
    $region25: #{vit_segmentation_forward.13} parent=5 // pred_check
      _
    $region26: #{vit_segmentation_forward.13} parent=5 // pred_check_branch
      %116 = sbr.rel (%p113) target = $region28
    $region27: #{vit_segmentation_forward.13} parent=5 // pred_region
      %s117 = ssub.s32 %s8, 1
      %p118 = pneg %p29
      %p119 = pneg %p26
      %p120 = scmp.lt.s32.totalorder %s13, 1
      %s121 = scalar_select %p120, %s13, 1
      %s122 = smul.addr %s121, 6
      %s123 = smul.addr %s122, 4
      %s124 = scalar_lea.vmem %s1, %s123
      %p125 = pneg %p55
      %p126 = pneg %p52
      %p127 = pneg %p81
      %p128 = pneg %p78
      %p129 = scmp.lt.s32.totalorder %s13, 1
      %s130 = scalar_select %p129, %s13, 1
      %s131 = smul.addr %s130, 24
      %s132 = smul.addr %s131, 8
      %s133 = scalar_lea.vmem %s2, %s132
      %p134 = scmp.lt.s32.totalorder %s13, 1
      %s135 = scalar_select %p134, %s13, 1
      %s136 = smul.addr %s135, 6
      %s137 = smul.addr %s136, 4
      %s138 = scalar_lea.vmem %s1, %s137
      %p139 = scmp.lt.s32.totalorder %s13, 1
      %s140 = scalar_select %p139, %s13, 1
      %s141 = smul.addr %s140, 24
      %s142 = smul.addr %s141, 8
      %s143 = scalar_lea.vmem %s2, %s142
      %v145 = vld [vmem:[%s0] sm:$0xf]
      %v146 = vld [vmem:[%s0 + $0x4] sm:$0xf]
      %v147 = vld [vmem:[%s0 + $0x8] sm:$0xf]
      %v148 = vld [vmem:[%s0 + $0xc] sm:$0xf]
      %v149 = vld [vmem:[%s0 + $0x10] sm:$0xf]
      %v150 = vld [vmem:[%s0 + $0x14] sm:$0xf]
      %v151 = vld [vmem:[%s0 + $0x18] sm:$0xf]
      %v152 = vld [vmem:[%s0 + $0x1c] sm:$0xf]
      %v153 = vld [vmem:[%s138] sm:$0xff]
      %v154 = vld [vmem:[%s138 + $0x8] sm:$0xf]
      %v155 = vld [vmem:[%s138 + $0xc] sm:$0xff]
      %v156 = vld [vmem:[%s138 + $0x14] sm:$0xf]
      %v165 = vunpack.c.l.b16 %v145
      %v166 = vunpack.c.l.b16 %v146
      %v167 = vunpack.c.l.b16 %v147
      %v168 = vunpack.c.l.b16 %v148
      %v169 = vunpack.c.l.b16 %v149
      %v170 = vunpack.c.l.b16 %v150
      %v171 = vunpack.c.l.b16 %v151
      %v172 = vunpack.c.l.b16 %v152
      %v173 = vpack.c.b16 %v166, %v165
      %v174 = vpack.c.b16 %v168, %v167
      %v175 = vpack.c.b16 %v170, %v169
      %v176 = vpack.c.b16 %v172, %v171
      %v181 = vunpack.c.l.b16 %v153
      %v182 = vunpack.c.h.b16 %v153
      %v183 = vunpack.c.l.b16 %v154
      %v184 = vunpack.c.l.b16 %v155
      %v185 = vunpack.c.h.b16 %v155
      %v186 = vunpack.c.l.b16 %v156
      %v187 = vpack.c.b16 %v184, %v181
      %v188 = vpack.c.b16 %v185, %v182
      %v189 = vpack.c.b16 %v186, %v183
      %vm193 = vcmask 130048
      %v195 = vsel %vm193, %v173, 0
      %v198 = vsel %vm193, %v174, 0
      %v201 = vsel %vm193, %v175, 0
      %v204 = vsel %vm193, %v176, 0
      %206 = vmatprep.subr.bf16.mxu0 0
      %207 = vmatpush1.bf16.msra.mxu0 0
      %208 = vmatprep.subr.bf16.mxu0 0
      %209 = vmatpush1.bf16.msra.mxu0 0
      %210 = vmatprep.subr.bf16.mxu0 0
      %211 = vmatpush1.bf16.msra.mxu0 0
      %212 = vmatprep.subr.bf16.mxu0 0
      %213 = vmatpush1.bf16.msra.mxu0 0
      %214 = vmatprep.subr.bf16.mxu0 0
      %215 = vmatpush1.bf16.msra.mxu0 0
      %216 = vmatprep.subr.bf16.mxu0 0
      %217 = vmatpush1.bf16.msra.mxu0 0
      %218 = vmatprep.subr.bf16.mxu0 0
      %219 = vmatpush1.bf16.msra.mxu0 0
      %220 = vmatprep.subr.bf16.mxu0 %v188
      %221 = vmatpush1.bf16.msra.mxu0 %v187
      %222 = vmatprep.subr.bf16.mxu0 0
      %223 = vmatpush2.bf16.msra.mxu0 0
      %224 = vmatprep.subr.bf16.mxu0 0
      %225 = vmatpush2.bf16.msra.mxu0 0
      %226 = vmatprep.subr.bf16.mxu0 0
      %227 = vmatpush2.bf16.msra.mxu0 0
      %228 = vmatprep.subr.bf16.mxu0 0
      %229 = vmatpush2.bf16.msra.mxu0 0
      %230 = vmatprep.subr.bf16.mxu0 0
      %231 = vmatpush2.bf16.msra.mxu0 0
      %232 = vmatprep.subr.bf16.mxu0 0
      %233 = vmatpush2.bf16.msra.mxu0 0
      %234 = vmatprep.subr.bf16.mxu0 0
      %235 = vmatpush2.bf16.msra.mxu0 0
      %236 = vmatprep.subr.bf16.mxu0 0
      %237 = vmatpush2.bf16.msra.mxu0 0
      %238 = vmatprep.mubr.bf16.mxu0 0
      %239 = vmatmul.mubr.bf16.gmra.mxu0 %v195
      %v240 = vpop.f32.mrf.mxu0
      %v241 = vadd.f32 0.0, %v240
      %v242 = vpop.f32.mrf.mxu0
      %v243 = vadd.f32 0.0, %v242
      %v244 = vpop.f32.mrf.mxu0
      %v245 = vadd.f32 0.0, %v244
      %v246 = vpop.f32.mrf.mxu0
      %v247 = vadd.f32 0.0, %v246
      %248 = vmatprep.mubr.bf16.mxu0 0
      %249 = vmatmul.mubr.bf16.gmra.mxu0 %v198
      %v250 = vpop.f32.mrf.mxu0
      %v251 = vadd.f32 0.0, %v250
      %v252 = vpop.f32.mrf.mxu0
      %v253 = vadd.f32 0.0, %v252
      %v254 = vpop.f32.mrf.mxu0
      %v255 = vadd.f32 0.0, %v254
      %v256 = vpop.f32.mrf.mxu0
      %v257 = vadd.f32 0.0, %v256
      %258 = vmatprep.mubr.bf16.mxu0 0
      %259 = vmatmul.mubr.bf16.gmra.mxu0 %v201
      %v260 = vpop.f32.mrf.mxu0
      %v261 = vadd.f32 0.0, %v260
      %v262 = vpop.f32.mrf.mxu0
      %v263 = vadd.f32 0.0, %v262
      %v264 = vpop.f32.mrf.mxu0
      %v265 = vadd.f32 0.0, %v264
      %v266 = vpop.f32.mrf.mxu0
      %v267 = vadd.f32 0.0, %v266
      %268 = vmatprep.mubr.bf16.mxu0 0
      %269 = vmatmul.mubr.bf16.gmra.mxu0 %v204
      %v270 = vpop.f32.mrf.mxu0
      %v271 = vadd.f32 0.0, %v270
      %v272 = vpop.f32.mrf.mxu0
      %v273 = vadd.f32 0.0, %v272
      %v274 = vpop.f32.mrf.mxu0
      %v275 = vadd.f32 0.0, %v274
      %v276 = vpop.f32.mrf.mxu0
      %v277 = vadd.f32 0.0, %v276
      %278 = vdwg.mxu0
      %279 = vmatprep.subr.bf16.mxu0 0
      %280 = vmatpush1.bf16.msra.mxu0 0
      %281 = vmatprep.subr.bf16.mxu0 0
      %282 = vmatpush1.bf16.msra.mxu0 0
      %283 = vmatprep.subr.bf16.mxu0 0
      %284 = vmatpush1.bf16.msra.mxu0 0
      %285 = vmatprep.subr.bf16.mxu0 0
      %286 = vmatpush1.bf16.msra.mxu0 0
      %287 = vmatprep.subr.bf16.mxu0 0
      %288 = vmatpush1.bf16.msra.mxu0 0
      %289 = vmatprep.subr.bf16.mxu0 0
      %290 = vmatpush1.bf16.msra.mxu0 0
      %291 = vmatprep.subr.bf16.mxu0 0
      %292 = vmatpush1.bf16.msra.mxu0 0
      %293 = vmatprep.subr.bf16.mxu0 0
      %294 = vmatpush1.bf16.msra.mxu0 %v189
      %295 = vmatprep.subr.bf16.mxu0 0
      %296 = vmatpush2.bf16.msra.mxu0 0
      %297 = vmatprep.subr.bf16.mxu0 0
      %298 = vmatpush2.bf16.msra.mxu0 0
      %299 = vmatprep.subr.bf16.mxu0 0
      %300 = vmatpush2.bf16.msra.mxu0 0
      %301 = vmatprep.subr.bf16.mxu0 0
      %302 = vmatpush2.bf16.msra.mxu0 0
      %303 = vmatprep.subr.bf16.mxu0 0
      %304 = vmatpush2.bf16.msra.mxu0 0
      %305 = vmatprep.subr.bf16.mxu0 0
      %306 = vmatpush2.bf16.msra.mxu0 0
      %307 = vmatprep.subr.bf16.mxu0 0
      %308 = vmatpush2.bf16.msra.mxu0 0
      %309 = vmatprep.subr.bf16.mxu0 0
      %310 = vmatpush2.bf16.msra.mxu0 0
      %311 = vmatprep.mubr.bf16.mxu0 0
      %312 = vmatmul.mubr.bf16.gmra.mxu0 %v195
      %v313 = vpop.f32.mrf.mxu0
      %v314 = vadd.f32 0.0, %v313
      %v315 = vpop.f32.mrf.mxu0
      %v316 = vpop.f32.mrf.mxu0
      %v317 = vadd.f32 0.0, %v316
      %v318 = vpop.f32.mrf.mxu0
      %319 = vmatprep.mubr.bf16.mxu0 0
      %320 = vmatmul.mubr.bf16.gmra.mxu0 %v198
      %v321 = vpop.f32.mrf.mxu0
      %v322 = vadd.f32 0.0, %v321
      %v323 = vpop.f32.mrf.mxu0
      %v324 = vpop.f32.mrf.mxu0
      %v325 = vadd.f32 0.0, %v324
      %v326 = vpop.f32.mrf.mxu0
      %327 = vmatprep.mubr.bf16.mxu0 0
      %328 = vmatmul.mubr.bf16.gmra.mxu0 %v201
      %v329 = vpop.f32.mrf.mxu0
      %v330 = vadd.f32 0.0, %v329
      %v331 = vpop.f32.mrf.mxu0
      %v332 = vpop.f32.mrf.mxu0
      %v333 = vadd.f32 0.0, %v332
      %v334 = vpop.f32.mrf.mxu0
      %335 = vmatprep.mubr.bf16.mxu0 0
      %336 = vmatmul.mubr.bf16.gmra.mxu0 %v204
      %v337 = vpop.f32.mrf.mxu0
      %v338 = vadd.f32 0.0, %v337
      %v339 = vpop.f32.mrf.mxu0
      %v340 = vpop.f32.mrf.mxu0
      %v341 = vadd.f32 0.0, %v340
      %v342 = vpop.f32.mrf.mxu0
      %343 = vdwg.mxu0
      %344 = vst [vmem:[%s143] sm:$0xff] %v241
      %345 = vst [vmem:[%s143 + $0x8] sm:$0xff] %v243
      %vm346 = vcmask 523264
      %347 = vst.msk [vmem:[%s143 + $0x10] sm:$0xff] %vm346, %v314
      %348 = vst [vmem:[%s143 + $0x18] sm:$0xff] %v245
      %349 = vst [vmem:[%s143 + $0x20] sm:$0xff] %v247
      %350 = vst.msk [vmem:[%s143 + $0x28] sm:$0xff] %vm346, %v317
      %351 = vst [vmem:[%s143 + $0x30] sm:$0xff] %v251
      %352 = vst [vmem:[%s143 + $0x38] sm:$0xff] %v253
      %353 = vst.msk [vmem:[%s143 + $0x40] sm:$0xff] %vm346, %v322
      %354 = vst [vmem:[%s143 + $0x48] sm:$0xff] %v255
      %355 = vst [vmem:[%s143 + $0x50] sm:$0xff] %v257
      %356 = vst.msk [vmem:[%s143 + $0x58] sm:$0xff] %vm346, %v325
      %357 = vst [vmem:[%s143 + $0x60] sm:$0xff] %v261
      %358 = vst [vmem:[%s143 + $0x68] sm:$0xff] %v263
      %359 = vst.msk [vmem:[%s143 + $0x70] sm:$0xff] %vm346, %v330
      %360 = vst [vmem:[%s143 + $0x78] sm:$0xff] %v265
      %361 = vst [vmem:[%s143 + $0x80] sm:$0xff] %v267
      %362 = vst.msk [vmem:[%s143 + $0x88] sm:$0xff] %vm346, %v333
      %363 = vst [vmem:[%s143 + $0x90] sm:$0xff] %v271
      %364 = vst [vmem:[%s143 + $0x98] sm:$0xff] %v273
      %365 = vst.msk [vmem:[%s143 + $0xa0] sm:$0xff] %vm346, %v338
      %366 = vst [vmem:[%s143 + $0xa8] sm:$0xff] %v275
      %367 = vst [vmem:[%s143 + $0xb0] sm:$0xff] %v277
      %368 = vst.msk [vmem:[%s143 + $0xb8] sm:$0xff] %vm346, %v341
      %p369 = scmp.lt.s32.totalorder %s13, 1
      %s370 = scalar_select %p369, %s13, 1
      %s371 = smul.addr %s370, 24
      %s372 = smul.addr %s371, 8
      %s373 = scalar_lea.vmem %s2, %s372
      // Predicated region
      $region29: #{vit_segmentation_forward.13} parent=27 // pred_check
        %p374 = pneg %p78
      $region30: #{vit_segmentation_forward.13} parent=27 // pred_check_branch
        %376 = sbr.rel (%p374) target = $region32
      $region31: #{vit_segmentation_forward.13} parent=27 // pred_region
        _
      $region32: #{vit_segmentation_forward.13} parent=27 // pred_fallthru
        _
    $region28: #{vit_segmentation_forward.13} parent=5 // pred_fallthru
      _
    %p377 = scmp.le.s32.totalorder 2, %s8
    // Predicated region
    $region33: #{vit_segmentation_forward.13} parent=5 // pred_check
      %p378 = pneg %p377
    $region34: #{vit_segmentation_forward.13} parent=5 // pred_check_branch
      %380 = sbr.rel (%p378) target = $region36
    $region35: #{vit_segmentation_forward.13} parent=5 // pred_region
      %s381 = ssub.s32 %s8, 2
      // Predicated region
      $region37: #{vit_segmentation_forward.13} parent=35 // pred_check
        %p382 = pneg %p84
      $region38: #{vit_segmentation_forward.13} parent=35 // pred_check_branch
        %384 = sbr.rel (%p382) target = $region40
      $region39: #{vit_segmentation_forward.13} parent=35 // pred_region
        %p385 = scmp.lt.s32.totalorder %s14, 1
        %s386 = scalar_select %p385, %s14, 1
        %s387 = smul.addr %s386, 24
        %s388 = smul.addr %s387, 8
        %s389 = scalar_lea.vmem %s2, %s388
      $region40: #{vit_segmentation_forward.13} parent=35 // pred_fallthru
        _
    $region36: #{vit_segmentation_forward.13} parent=5 // pred_fallthru
      _
  $region6: #{vit_segmentation_forward.13} parent=0 // loop_footer
    %s12 = sadd.s32 1, %s8
  $region7: #{vit_segmentation_forward.13} parent=0 // loop_footer_branch
    %7 = sbr.rel target = $region3
  $region8: #{vit_segmentation_forward.13} parent=0 // loop_exit
    _

// kernel: vit_segmentation_forward.12
$region0: #{vit_segmentation_forward.12}
  #allocation0 [shape = 'u32[]', space=smem, size = 0x4, offset = 0x4, fixed_abs, tag = 'smem constant byte address 0x4 - core index']
  #allocation1 [shape = 'u32[144,128]{1,0:T(1,128)}', space=vmem, size = 0x12000, scoped, tag = 'internal scratch']
  #allocation2 [shape = 'f32[16,384]{1,0:T(8,128)}', space=vmem, size = 0x6000, scoped, tag = 'scratch operand']
  %s0 = inlined_call_operand.vmem [shape: bf16[32,512], index: 0, kind: input, shape index: {}]
  %s1 = inlined_call_operand.vmem [shape: bf16[512,384], index: 1, kind: input, shape index: {}]
  %s2 = inlined_call_operand.vmem [shape: f32[1,384], index: 2, kind: input, shape index: {}]
  %s3 = inlined_call_operand.vmem [shape: bf16[32,384], index: 3, kind: output, shape index: {}]
  %s4 = sld [smem:[#allocation0]]
  $region53: #{vit_segmentation_forward.12} parent=0
    _
  %s6 = ssub.s32 1, %s4
  %s7 = scalar_select 0, %s6, %s4
  loop: start=0, step=1, limit=4
  $region2: #{vit_segmentation_forward.12} parent=0 // loop_pre_header
    _
  $region3: #{vit_segmentation_forward.12} parent=0 // loop_header
    %s9 = sphi 0, %s13
    %p10 = scmp.ge.s32.totalorder %s9, 4
    %s16 = sphi 0, %s35
    %s17 = sphi 0, %s31
    %s18 = sphi 0, %s27
    %s19 = sphi 0, %s16
    %s20 = sphi 0, %s17
    %s21 = sphi 0, %s18
    %s22 = sphi 0, %s19
    %s23 = sphi 0, %s20
    %s24 = sphi 0, %s21
    %s40 = sphi 0, %s42
    %s43 = sphi 0, %s40
    %s44 = sphi 0, %s43
    %s60 = sphi 0, %s44
    %s68 = sphi 0, %s70
    %s71 = sphi 0, %s68
    %s72 = sphi 0, %s71
    %s88 = sphi 0, %s72
    %s94 = sphi 0, %s96
    %s97 = sphi 0, %s94
    %s98 = sphi 0, %s97
    %s114 = sphi 0, %s98
    %s122 = sphi 0, %s124
    %s125 = sphi 0, %s122
    %s126 = sphi 0, %s125
    %s142 = sphi 0, %s126
  $region4: #{vit_segmentation_forward.12} parent=0 // loop_header_branch
    %12 = sbr.rel (%p10) target = $region8
  $region5: #{vit_segmentation_forward.12} parent=0 // loop_body
    %s14 = ssub.s32 %s9, 1
    %s15 = ssub.s32 %s9, 2
    %s25 = sadd.s32 1, %s18
    %p26 = scmp.ge.s32.totalorder %s25, 1
    %s27 = scalar_select %p26, 0, %s25
    %s28 = sadd.s32 1, %s17
    %s29 = scalar_select %p26, %s28, %s17
    %p30 = scmp.ge.s32.totalorder %s29, 1
    %s31 = scalar_select %p30, 0, %s29
    %s32 = sadd.s32 1, %s16
    %s33 = scalar_select %p30, %s32, %s16
    %p34 = scmp.ge.s32.totalorder %s33, 2
    %s35 = scalar_select %p34, 0, %s33
    %s36 = ssub.s32 %s16, %s35
    %s37 = ssub.s32 %s18, %s27
    %s38 = sor.u32 %s36, %s37
    %p39 = scmp.eq.s32.totalorder %s38, 0
    %s41 = sadd.s32 %s40, 1
    %s42 = scalar_select %p39, %s40, %s41
    %p45 = pneg %p39
    %p46 = scmp.eq.s32.totalorder %s9, 1
    %p47 = por %p45, %p46
    %p48 = scmp.ne.s32.totalorder %s40, %s43
    %p49 = scmp.eq.s32.totalorder %s9, 0
    %p50 = por %p48, %p49
    %p51 = scmp.ne.s32.totalorder %s40, %s43
    %p52 = scmp.eq.s32.totalorder %s14, 1
    %p53 = por %p51, %p52
    %p54 = scmp.ne.s32.totalorder %s43, %s44
    %p55 = scmp.eq.s32.totalorder %s14, 0
    %p56 = por %p54, %p55
    %p57 = scmp.ne.s32.totalorder %s43, %s44
    %p58 = scmp.eq.s32.totalorder %s15, 1
    %p59 = por %p57, %p58
    %p61 = scmp.ne.s32.totalorder %s44, %s60
    %p62 = scmp.eq.s32.totalorder %s15, 0
    %p63 = por %p61, %p62
    %s64 = ssub.s32 %s18, %s27
    %s65 = ssub.s32 %s17, %s31
    %s66 = sor.u32 %s64, %s65
    %p67 = scmp.eq.s32.totalorder %s66, 0
    %s69 = sadd.s32 %s68, 1
    %s70 = scalar_select %p67, %s68, %s69
    %p73 = pneg %p67
    %p74 = scmp.eq.s32.totalorder %s9, 1
    %p75 = por %p73, %p74
    %p76 = scmp.ne.s32.totalorder %s68, %s71
    %p77 = scmp.eq.s32.totalorder %s9, 0
    %p78 = por %p76, %p77
    %p79 = scmp.ne.s32.totalorder %s68, %s71
    %p80 = scmp.eq.s32.totalorder %s14, 1
    %p81 = por %p79, %p80
    %p82 = scmp.ne.s32.totalorder %s71, %s72
    %p83 = scmp.eq.s32.totalorder %s14, 0
    %p84 = por %p82, %p83
    %p85 = scmp.ne.s32.totalorder %s71, %s72
    %p86 = scmp.eq.s32.totalorder %s15, 1
    %p87 = por %p85, %p86
    %p89 = scmp.ne.s32.totalorder %s72, %s88
    %p90 = scmp.eq.s32.totalorder %s15, 0
    %p91 = por %p89, %p90
    %s92 = ssub.s32 %s17, %s31
    %p93 = scmp.eq.s32.totalorder %s92, 0
    %s95 = sadd.s32 %s94, 1
    %s96 = scalar_select %p93, %s94, %s95
    %p99 = pneg %p93
    %p100 = scmp.eq.s32.totalorder %s9, 1
    %p101 = por %p99, %p100
    %p102 = scmp.ne.s32.totalorder %s94, %s97
    %p103 = scmp.eq.s32.totalorder %s9, 0
    %p104 = por %p102, %p103
    %p105 = scmp.ne.s32.totalorder %s94, %s97
    %p106 = scmp.eq.s32.totalorder %s14, 1
    %p107 = por %p105, %p106
    %p108 = scmp.ne.s32.totalorder %s97, %s98
    %p109 = scmp.eq.s32.totalorder %s14, 0
    %p110 = por %p108, %p109
    %p111 = scmp.ne.s32.totalorder %s97, %s98
    %p112 = scmp.eq.s32.totalorder %s15, 1
    %p113 = por %p111, %p112
    %p115 = scmp.ne.s32.totalorder %s98, %s114
    %p116 = scmp.eq.s32.totalorder %s15, 0
    %p117 = por %p115, %p116
    %s118 = ssub.s32 %s16, %s35
    %s119 = ssub.s32 %s17, %s31
    %s120 = sor.u32 %s118, %s119
    %p121 = scmp.eq.s32.totalorder %s120, 0
    %s123 = sadd.s32 %s122, 1
    %s124 = scalar_select %p121, %s122, %s123
    %p127 = pneg %p121
    %p128 = scmp.eq.s32.totalorder %s9, 1
    %p129 = por %p127, %p128
    %p130 = scmp.ne.s32.totalorder %s122, %s125
    %p131 = scmp.eq.s32.totalorder %s9, 0
    %p132 = por %p130, %p131
    %p133 = scmp.ne.s32.totalorder %s122, %s125
    %p134 = scmp.eq.s32.totalorder %s14, 1
    %p135 = por %p133, %p134
    %p136 = scmp.ne.s32.totalorder %s125, %s126
    %p137 = scmp.eq.s32.totalorder %s14, 0
    %p138 = por %p136, %p137
    %p139 = scmp.ne.s32.totalorder %s125, %s126
    %p140 = scmp.eq.s32.totalorder %s15, 1
    %p141 = por %p139, %p140
    %p143 = scmp.ne.s32.totalorder %s126, %s142
    %p144 = scmp.eq.s32.totalorder %s15, 0
    %p145 = por %p143, %p144
    %p146 = scmp.le.s32.totalorder 1, %s9
    %p147 = scmp.lt.s32.totalorder %s9, 3
    %p148 = pnand %p146, %p147
    %p149 = pneg %p148
    // Predicated region
    $region9: #{vit_segmentation_forward.12} parent=5 // pred_check
      _
    $region10: #{vit_segmentation_forward.12} parent=5 // pred_check_branch
      %151 = sbr.rel (%p148) target = $region12
    $region11: #{vit_segmentation_forward.12} parent=5 // pred_region
      %s152 = ssub.s32 %s9, 1
      // Predicated region
      $region13: #{vit_segmentation_forward.12} parent=11 // pred_check
        %p153 = pneg %p84
      $region14: #{vit_segmentation_forward.12} parent=11 // pred_check_branch
        %155 = sbr.rel (%p153) target = $region16
      $region15: #{vit_segmentation_forward.12} parent=11 // pred_region
        %s156 = smul.u32 64, %s21
        %s157 = smul.u32 3, %s20
        %p158 = scmp.lt.s32.totalorder %s156, 63
        %s159 = scalar_select %p158, %s156, 63
        %p160 = scmp.lt.s32.totalorder %s157, 2
        %s161 = scalar_select %p160, %s157, 2
        %s162 = smul.addr %s159, 3
        %s163 = sadd.s32 %s161, %s162
        %s164 = smul.addr %s163, 4
        %s165 = scalar_lea.vmem %s1, %s164
        %s166 = smul.u32 64, %s21
        %s167 = smul.u32 3, %s20
      $region16: #{vit_segmentation_forward.12} parent=11 // pred_fallthru
        _
      // Predicated region
      $region17: #{vit_segmentation_forward.12} parent=11 // pred_check
        %p168 = pneg %p110
      $region18: #{vit_segmentation_forward.12} parent=11 // pred_check_branch
        %170 = sbr.rel (%p168) target = $region20
      $region19: #{vit_segmentation_forward.12} parent=11 // pred_region
        %s171 = smul.u32 3, %s20
        %p172 = scmp.lt.s32.totalorder %s171, 2
        %s173 = scalar_select %p172, %s171, 2
        %s174 = scalar_lea.vmem %s2, %s173
        %s175 = smul.u32 3, %s20
      $region20: #{vit_segmentation_forward.12} parent=11 // pred_fallthru
        _
    $region12: #{vit_segmentation_forward.12} parent=5 // pred_fallthru
      _
    %p176 = scmp.lt.s32.totalorder %s9, 2
    // Predicated region
    $region21: #{vit_segmentation_forward.12} parent=5 // pred_check
      %p177 = pneg %p176
    $region22: #{vit_segmentation_forward.12} parent=5 // pred_check_branch
      %179 = sbr.rel (%p177) target = $region24
    $region23: #{vit_segmentation_forward.12} parent=5 // pred_region
      // Predicated region
      $region25: #{vit_segmentation_forward.12} parent=23 // pred_check
        %p180 = pneg %p50
      $region26: #{vit_segmentation_forward.12} parent=23 // pred_check_branch
        %182 = sbr.rel (%p180) target = $region28
      $region27: #{vit_segmentation_forward.12} parent=23 // pred_region
        %s183 = smul.u32 2, %s16
        %s184 = smul.u32 4, %s18
        %p185 = scmp.lt.s32.totalorder %s183, 3
        %s186 = scalar_select %p185, %s183, 3
        %p187 = scmp.lt.s32.totalorder %s184, 3
        %s188 = scalar_select %p187, %s184, 3
        %s189 = smul.addr %s186, 4
        %s190 = sadd.s32 %s188, %s189
        %s191 = smul.addr %s190, 4
        %s192 = scalar_lea.vmem %s0, %s191
        %s193 = smul.u32 2, %s16
        %s194 = smul.u32 4, %s18
      $region28: #{vit_segmentation_forward.12} parent=23 // pred_fallthru
        _
    $region24: #{vit_segmentation_forward.12} parent=5 // pred_fallthru
      _
    %p195 = scmp.le.s32.totalorder 1, %s9
    %p196 = scmp.lt.s32.totalorder %s9, 3
    %p197 = pnand %p195, %p196
    %p198 = pneg %p197
    // Predicated region
    $region29: #{vit_segmentation_forward.12} parent=5 // pred_check
      _
    $region30: #{vit_segmentation_forward.12} parent=5 // pred_check_branch
      %200 = sbr.rel (%p197) target = $region32
    $region31: #{vit_segmentation_forward.12} parent=5 // pred_region
      %s201 = ssub.s32 %s9, 1
      %s202 = smul.u32 2, %s19
      %s203 = smul.u32 4, %s21
      %p204 = scmp.lt.s32.totalorder %s202, 3
      %s205 = scalar_select %p204, %s202, 3
      %p206 = scmp.lt.s32.totalorder %s203, 3
      %s207 = scalar_select %p206, %s203, 3
      %s208 = smul.addr %s205, 4
      %s209 = sadd.s32 %s207, %s208
      %s210 = smul.addr %s209, 4
      %s211 = scalar_lea.vmem %s0, %s210
      %p212 = pneg %p56
      %p213 = pneg %p53
      %s214 = smul.u32 64, %s21
      %s215 = smul.u32 3, %s20
      %p216 = scmp.lt.s32.totalorder %s214, 63
      %s217 = scalar_select %p216, %s214, 63
      %p218 = scmp.lt.s32.totalorder %s215, 2
      %s219 = scalar_select %p218, %s215, 2
      %s220 = smul.addr %s217, 3
      %s221 = sadd.s32 %s219, %s220
      %s222 = smul.addr %s221, 4
      %s223 = scalar_lea.vmem %s1, %s222
      %p224 = pneg %p84
      %p225 = pneg %p81
      %s226 = smul.u32 3, %s20
      %p227 = scmp.lt.s32.totalorder %s226, 2
      %s228 = scalar_select %p227, %s226, 2
      %s229 = scalar_lea.vmem %s2, %s228
      %p230 = pneg %p110
      %p231 = pneg %p107
      %p232 = pneg %p138
      %p233 = pneg %p135
      %s234 = smul.u32 2, %s19
      %s235 = smul.u32 3, %s20
      %p236 = scmp.lt.s32.totalorder %s234, 3
      %s237 = scalar_select %p236, %s234, 3
      %p238 = scmp.lt.s32.totalorder %s235, 2
      %s239 = scalar_select %p238, %s235, 2
      %s240 = smul.addr %s237, 3
      %s241 = sadd.s32 %s239, %s240
      %s242 = smul.addr %s241, 4
      %s243 = scalar_lea.vmem %s3, %s242
      %s244 = smul.u32 2, %s19
      %s245 = smul.u32 4, %s21
      %p246 = scmp.lt.s32.totalorder %s244, 3
      %s247 = scalar_select %p246, %s244, 3
      %p248 = scmp.lt.s32.totalorder %s245, 3
      %s249 = scalar_select %p248, %s245, 3
      %s250 = smul.addr %s247, 4
      %s251 = sadd.s32 %s249, %s250
      %s252 = smul.addr %s251, 4
      %s253 = scalar_lea.vmem %s0, %s252
      %s254 = smul.u32 2, %s19
      %s255 = smul.u32 4, %s21
      %s256 = smul.u32 64, %s21
      %s257 = smul.u32 3, %s20
      %p258 = scmp.lt.s32.totalorder %s256, 63
      %s259 = scalar_select %p258, %s256, 63
      %p260 = scmp.lt.s32.totalorder %s257, 2
      %s261 = scalar_select %p260, %s257, 2
      %s262 = smul.addr %s259, 3
      %s263 = sadd.s32 %s261, %s262
      %s264 = smul.addr %s263, 4
      %s265 = scalar_lea.vmem %s1, %s264
      %s266 = smul.u32 64, %s21
      %s267 = smul.u32 3, %s20
      %s268 = smul.u32 3, %s20
      %p269 = scmp.lt.s32.totalorder %s268, 2
      %s270 = scalar_select %p269, %s268, 2
      %s271 = scalar_lea.vmem %s2, %s270
      %s272 = smul.u32 3, %s20
      %s273 = smul.u32 2, %s19
      %s274 = smul.u32 3, %s20
      %p275 = scmp.lt.s32.totalorder %s273, 3
      %s276 = scalar_select %p275, %s273, 3
      %p277 = scmp.lt.s32.totalorder %s274, 2
      %s278 = scalar_select %p277, %s274, 2
      %s279 = smul.addr %s276, 3
      %s280 = sadd.s32 %s278, %s279
      %s281 = smul.addr %s280, 4
      %s282 = scalar_lea.vmem %s3, %s281
      %s283 = smul.u32 2, %s19
      %s284 = smul.u32 3, %s20
      %p286 = scmp.eq.s32.totalorder %s21, 0
      // Predicated region
      $region33: #{vit_segmentation_forward.12} parent=31 // pred_check
        %p287 = pneg %p286
      $region34: #{vit_segmentation_forward.12} parent=31 // pred_check_branch
        %289 = sbr.rel (%p287) target = $region36
      $region35: #{vit_segmentation_forward.12} parent=31 // pred_region
        %290 = vst [vmem:[#allocation2] sm:$0xff] 0.0
        %291 = vst [vmem:[#allocation2 + $0x8] sm:$0xff] 0.0
        %292 = vst [vmem:[#allocation2 + $0x10] sm:$0xff] 0.0
        %293 = vst [vmem:[#allocation2 + $0x18] sm:$0xff] 0.0
        %294 = vst [vmem:[#allocation2 + $0x20] sm:$0xff] 0.0
        %295 = vst [vmem:[#allocation2 + $0x28] sm:$0xff] 0.0
      $region36: #{vit_segmentation_forward.12} parent=31 // pred_fallthru
        _
      %v296 = vld [vmem:[%s253] sm:$0xff]
      %v297 = vld [vmem:[%s253 + $0x8] sm:$0xff]
      %v298 = vld [vmem:[%s253 + $0x10] sm:$0xff]
      %v299 = vld [vmem:[%s253 + $0x18] sm:$0xff]
      %v300 = vld [vmem:[#allocation2] sm:$0xff]
      %v301 = vld [vmem:[#allocation2 + $0x8] sm:$0xff]
      %v302 = vld [vmem:[#allocation2 + $0x10] sm:$0xff]
      %v303 = vld [vmem:[#allocation2 + $0x18] sm:$0xff]
      %v304 = vld [vmem:[#allocation2 + $0x20] sm:$0xff]
      %v305 = vld [vmem:[#allocation2 + $0x28] sm:$0xff]
      %v306 = vld [vmem:[%s265] sm:$0xff]
      %v307 = vld [vmem:[%s265 + $0x8] sm:$0xf]
      %v308 = vld [vmem:[%s265 + $0xc] sm:$0xff]
      %v309 = vld [vmem:[%s265 + $0x14] sm:$0xf]
      %v310 = vld [vmem:[%s265 + $0x18] sm:$0xff]
      %v311 = vld [vmem:[%s265 + $0x20] sm:$0xf]
      %v312 = vld [vmem:[%s265 + $0x24] sm:$0xff]
      %v313 = vld [vmem:[%s265 + $0x2c] sm:$0xf]
      %v314 = vld [vmem:[%s265 + $0x30] sm:$0xff]
      %v315 = vld [vmem:[%s265 + $0x38] sm:$0xf]
      %v316 = vld [vmem:[%s265 + $0x3c] sm:$0xff]
      %v317 = vld [vmem:[%s265 + $0x44] sm:$0xf]
      %v318 = vld [vmem:[%s265 + $0x48] sm:$0xff]
      %v319 = vld [vmem:[%s265 + $0x50] sm:$0xf]
      %v320 = vld [vmem:[%s265 + $0x54] sm:$0xff]
      %v321 = vld [vmem:[%s265 + $0x5c] sm:$0xf]
      %v322 = vld [vmem:[%s265 + $0x60] sm:$0xff]
      %v323 = vld [vmem:[%s265 + $0x68] sm:$0xf]
      %v324 = vld [vmem:[%s265 + $0x6c] sm:$0xff]
      %v325 = vld [vmem:[%s265 + $0x74] sm:$0xf]
      %v326 = vld [vmem:[%s265 + $0x78] sm:$0xff]
      %v327 = vld [vmem:[%s265 + $0x80] sm:$0xf]
      %v328 = vld [vmem:[%s265 + $0x84] sm:$0xff]
      %v329 = vld [vmem:[%s265 + $0x8c] sm:$0xf]
      %v330 = vld [vmem:[%s265 + $0x90] sm:$0xff]
      %v331 = vld [vmem:[%s265 + $0x98] sm:$0xf]
      %v332 = vld [vmem:[%s265 + $0x9c] sm:$0xff]
      %v333 = vld [vmem:[%s265 + $0xa4] sm:$0xf]
      %v334 = vld [vmem:[%s265 + $0xa8] sm:$0xff]
      %v335 = vld [vmem:[%s265 + $0xb0] sm:$0xf]
      %v336 = vld [vmem:[%s265 + $0xb4] sm:$0xff]
      %v337 = vld [vmem:[%s265 + $0xbc] sm:$0xf]
      %v338 = vld [vmem:[%s265 + $0xc0] sm:$0xff]
      %v339 = vld [vmem:[%s265 + $0xc8] sm:$0xf]
      %v340 = vld [vmem:[%s265 + $0xcc] sm:$0xff]
      %v341 = vld [vmem:[%s265 + $0xd4] sm:$0xf]
      %v342 = vld [vmem:[%s265 + $0xd8] sm:$0xff]
      %v343 = vld [vmem:[%s265 + $0xe0] sm:$0xf]
      %v344 = vld [vmem:[%s265 + $0xe4] sm:$0xff]
      %v345 = vld [vmem:[%s265 + $0xec] sm:$0xf]
      %v346 = vld [vmem:[%s265 + $0xf0] sm:$0xff]
      %v347 = vld [vmem:[%s265 + $0xf8] sm:$0xf]
      %v348 = vld [vmem:[%s265 + $0xfc] sm:$0xff]
      %v349 = vld [vmem:[%s265 + $0x104] sm:$0xf]
      %v350 = vld [vmem:[%s265 + $0x108] sm:$0xff]
      %v351 = vld [vmem:[%s265 + $0x110] sm:$0xf]
      %v352 = vld [vmem:[%s265 + $0x114] sm:$0xff]
      %v353 = vld [vmem:[%s265 + $0x11c] sm:$0xf]
      %v354 = vld [vmem:[%s265 + $0x120] sm:$0xff]
      %v355 = vld [vmem:[%s265 + $0x128] sm:$0xf]
      %v356 = vld [vmem:[%s265 + $0x12c] sm:$0xff]
      %v357 = vld [vmem:[%s265 + $0x134] sm:$0xf]
      %v358 = vld [vmem:[%s265 + $0x138] sm:$0xff]
      %v359 = vld [vmem:[%s265 + $0x140] sm:$0xf]
      %v360 = vld [vmem:[%s265 + $0x144] sm:$0xff]
      %v361 = vld [vmem:[%s265 + $0x14c] sm:$0xf]
      %v362 = vld [vmem:[%s265 + $0x150] sm:$0xff]
      %v363 = vld [vmem:[%s265 + $0x158] sm:$0xf]
      %v364 = vld [vmem:[%s265 + $0x15c] sm:$0xff]
      %v365 = vld [vmem:[%s265 + $0x164] sm:$0xf]
      %v366 = vld [vmem:[%s265 + $0x168] sm:$0xff]
      %v367 = vld [vmem:[%s265 + $0x170] sm:$0xf]
      %v368 = vld [vmem:[%s265 + $0x174] sm:$0xff]
      %v369 = vld [vmem:[%s265 + $0x17c] sm:$0xf]
      %v370 = vld [vmem:[%s265 + $0x180] sm:$0xff]
      %v371 = vld [vmem:[%s265 + $0x188] sm:$0xf]
      %v372 = vld [vmem:[%s265 + $0x18c] sm:$0xff]
      %v373 = vld [vmem:[%s265 + $0x194] sm:$0xf]
      %v374 = vld [vmem:[%s265 + $0x198] sm:$0xff]
      %v375 = vld [vmem:[%s265 + $0x1a0] sm:$0xf]
      %v376 = vld [vmem:[%s265 + $0x1a4] sm:$0xff]
      %v377 = vld [vmem:[%s265 + $0x1ac] sm:$0xf]
      %v378 = vld [vmem:[%s265 + $0x1b0] sm:$0xff]
      %v379 = vld [vmem:[%s265 + $0x1b8] sm:$0xf]
      %v380 = vld [vmem:[%s265 + $0x1bc] sm:$0xff]
      %v381 = vld [vmem:[%s265 + $0x1c4] sm:$0xf]
      %v382 = vld [vmem:[%s265 + $0x1c8] sm:$0xff]
      %v383 = vld [vmem:[%s265 + $0x1d0] sm:$0xf]
      %v384 = vld [vmem:[%s265 + $0x1d4] sm:$0xff]
      %v385 = vld [vmem:[%s265 + $0x1dc] sm:$0xf]
      %v386 = vld [vmem:[%s265 + $0x1e0] sm:$0xff]
      %v387 = vld [vmem:[%s265 + $0x1e8] sm:$0xf]
      %v388 = vld [vmem:[%s265 + $0x1ec] sm:$0xff]
      %v389 = vld [vmem:[%s265 + $0x1f4] sm:$0xf]
      %v390 = vld [vmem:[%s265 + $0x1f8] sm:$0xff]
      %v391 = vld [vmem:[%s265 + $0x200] sm:$0xf]
      %v392 = vld [vmem:[%s265 + $0x204] sm:$0xff]
      %v393 = vld [vmem:[%s265 + $0x20c] sm:$0xf]
      %v394 = vld [vmem:[%s265 + $0x210] sm:$0xff]
      %v395 = vld [vmem:[%s265 + $0x218] sm:$0xf]
      %v396 = vld [vmem:[%s265 + $0x21c] sm:$0xff]
      %v397 = vld [vmem:[%s265 + $0x224] sm:$0xf]
      %v398 = vld [vmem:[%s265 + $0x228] sm:$0xff]
      %v399 = vld [vmem:[%s265 + $0x230] sm:$0xf]
      %v400 = vld [vmem:[%s265 + $0x234] sm:$0xff]
      %v401 = vld [vmem:[%s265 + $0x23c] sm:$0xf]
      %v402 = vld [vmem:[%s265 + $0x240] sm:$0xff]
      %v403 = vld [vmem:[%s265 + $0x248] sm:$0xf]
      %v404 = vld [vmem:[%s265 + $0x24c] sm:$0xff]
      %v405 = vld [vmem:[%s265 + $0x254] sm:$0xf]
      %v406 = vld [vmem:[%s265 + $0x258] sm:$0xff]
      %v407 = vld [vmem:[%s265 + $0x260] sm:$0xf]
      %v408 = vld [vmem:[%s265 + $0x264] sm:$0xff]
      %v409 = vld [vmem:[%s265 + $0x26c] sm:$0xf]
      %v410 = vld [vmem:[%s265 + $0x270] sm:$0xff]
      %v411 = vld [vmem:[%s265 + $0x278] sm:$0xf]
      %v412 = vld [vmem:[%s265 + $0x27c] sm:$0xff]
      %v413 = vld [vmem:[%s265 + $0x284] sm:$0xf]
      %v414 = vld [vmem:[%s265 + $0x288] sm:$0xff]
      %v415 = vld [vmem:[%s265 + $0x290] sm:$0xf]
      %v416 = vld [vmem:[%s265 + $0x294] sm:$0xff]
      %v417 = vld [vmem:[%s265 + $0x29c] sm:$0xf]
      %v418 = vld [vmem:[%s265 + $0x2a0] sm:$0xff]
      %v419 = vld [vmem:[%s265 + $0x2a8] sm:$0xf]
      %v420 = vld [vmem:[%s265 + $0x2ac] sm:$0xff]
      %v421 = vld [vmem:[%s265 + $0x2b4] sm:$0xf]
      %v422 = vld [vmem:[%s265 + $0x2b8] sm:$0xff]
      %v423 = vld [vmem:[%s265 + $0x2c0] sm:$0xf]
      %v424 = vld [vmem:[%s265 + $0x2c4] sm:$0xff]
      %v425 = vld [vmem:[%s265 + $0x2cc] sm:$0xf]
      %v426 = vld [vmem:[%s265 + $0x2d0] sm:$0xff]
      %v427 = vld [vmem:[%s265 + $0x2d8] sm:$0xf]
      %v428 = vld [vmem:[%s265 + $0x2dc] sm:$0xff]
      %v429 = vld [vmem:[%s265 + $0x2e4] sm:$0xf]
      %v430 = vld [vmem:[%s265 + $0x2e8] sm:$0xff]
      %v431 = vld [vmem:[%s265 + $0x2f0] sm:$0xf]
      %v432 = vld [vmem:[%s265 + $0x2f4] sm:$0xff]
      %v433 = vld [vmem:[%s265 + $0x2fc] sm:$0xf]
      %v438 = vunpack.c.l.b16 %v296
      %v439 = vunpack.c.h.b16 %v296
      %v440 = vunpack.c.l.b16 %v297
      %v441 = vunpack.c.h.b16 %v297
      %v442 = vunpack.c.l.b16 %v298
      %v443 = vunpack.c.h.b16 %v298
      %v444 = vunpack.c.l.b16 %v299
      %v445 = vunpack.c.h.b16 %v299
      %v446 = vpack.c.b16 %v442, %v438
      %v447 = vpack.c.b16 %v443, %v439
      %v448 = vpack.c.b16 %v444, %v440
      %v449 = vpack.c.b16 %v445, %v441
      %v582 = vunpack.c.l.b16 %v306
      %v583 = vunpack.c.h.b16 %v306
      %v584 = vunpack.c.l.b16 %v307
      %v585 = vunpack.c.l.b16 %v308
      %v586 = vunpack.c.h.b16 %v308
      %v587 = vunpack.c.l.b16 %v309
      %v588 = vunpack.c.l.b16 %v310
      %v589 = vunpack.c.h.b16 %v310
      %v590 = vunpack.c.l.b16 %v311
      %v591 = vunpack.c.l.b16 %v312
      %v592 = vunpack.c.h.b16 %v312
      %v593 = vunpack.c.l.b16 %v313
      %v594 = vunpack.c.l.b16 %v314
      %v595 = vunpack.c.h.b16 %v314
      %v596 = vunpack.c.l.b16 %v315
      %v597 = vunpack.c.l.b16 %v316
      %v598 = vunpack.c.h.b16 %v316
      %v599 = vunpack.c.l.b16 %v317
      %v600 = vunpack.c.l.b16 %v318
      %v601 = vunpack.c.h.b16 %v318
      %v602 = vunpack.c.l.b16 %v319
      %v603 = vunpack.c.l.b16 %v320
      %v604 = vunpack.c.h.b16 %v320
      %v605 = vunpack.c.l.b16 %v321
      %v606 = vunpack.c.l.b16 %v322
      %v607 = vunpack.c.h.b16 %v322
      %v608 = vunpack.c.l.b16 %v323
      %v609 = vunpack.c.l.b16 %v324
      %v610 = vunpack.c.h.b16 %v324
      %v611 = vunpack.c.l.b16 %v325
      %v612 = vunpack.c.l.b16 %v326
      %v613 = vunpack.c.h.b16 %v326
      %v614 = vunpack.c.l.b16 %v327
      %v615 = vunpack.c.l.b16 %v328
      %v616 = vunpack.c.h.b16 %v328
      %v617 = vunpack.c.l.b16 %v329
      %v618 = vunpack.c.l.b16 %v330
      %v619 = vunpack.c.h.b16 %v330
      %v620 = vunpack.c.l.b16 %v331
      %v621 = vunpack.c.l.b16 %v332
      %v622 = vunpack.c.h.b16 %v332
      %v623 = vunpack.c.l.b16 %v333
      %v624 = vunpack.c.l.b16 %v334
      %v625 = vunpack.c.h.b16 %v334
      %v626 = vunpack.c.l.b16 %v335
      %v627 = vunpack.c.l.b16 %v336
      %v628 = vunpack.c.h.b16 %v336
      %v629 = vunpack.c.l.b16 %v337
      %v630 = vunpack.c.l.b16 %v338
      %v631 = vunpack.c.h.b16 %v338
      %v632 = vunpack.c.l.b16 %v339
      %v633 = vunpack.c.l.b16 %v340
      %v634 = vunpack.c.h.b16 %v340
      %v635 = vunpack.c.l.b16 %v341
      %v636 = vunpack.c.l.b16 %v342
      %v637 = vunpack.c.h.b16 %v342
      %v638 = vunpack.c.l.b16 %v343
      %v639 = vunpack.c.l.b16 %v344
      %v640 = vunpack.c.h.b16 %v344
      %v641 = vunpack.c.l.b16 %v345
      %v642 = vunpack.c.l.b16 %v346
      %v643 = vunpack.c.h.b16 %v346
      %v644 = vunpack.c.l.b16 %v347
      %v645 = vunpack.c.l.b16 %v348
      %v646 = vunpack.c.h.b16 %v348
      %v647 = vunpack.c.l.b16 %v349
      %v648 = vunpack.c.l.b16 %v350
      %v649 = vunpack.c.h.b16 %v350
      %v650 = vunpack.c.l.b16 %v351
      %v651 = vunpack.c.l.b16 %v352
      %v652 = vunpack.c.h.b16 %v352
      %v653 = vunpack.c.l.b16 %v353
      %v654 = vunpack.c.l.b16 %v354
      %v655 = vunpack.c.h.b16 %v354
      %v656 = vunpack.c.l.b16 %v355
      %v657 = vunpack.c.l.b16 %v356
      %v658 = vunpack.c.h.b16 %v356
      %v659 = vunpack.c.l.b16 %v357
      %v660 = vunpack.c.l.b16 %v358
      %v661 = vunpack.c.h.b16 %v358
      %v662 = vunpack.c.l.b16 %v359
      %v663 = vunpack.c.l.b16 %v360
      %v664 = vunpack.c.h.b16 %v360
      %v665 = vunpack.c.l.b16 %v361
      %v666 = vunpack.c.l.b16 %v362
      %v667 = vunpack.c.h.b16 %v362
      %v668 = vunpack.c.l.b16 %v363
      %v669 = vunpack.c.l.b16 %v364
      %v670 = vunpack.c.h.b16 %v364
      %v671 = vunpack.c.l.b16 %v365
      %v672 = vunpack.c.l.b16 %v366
      %v673 = vunpack.c.h.b16 %v366
      %v674 = vunpack.c.l.b16 %v367
      %v675 = vunpack.c.l.b16 %v368
      %v676 = vunpack.c.h.b16 %v368
      %v677 = vunpack.c.l.b16 %v369
      %v678 = vunpack.c.l.b16 %v370
      %v679 = vunpack.c.h.b16 %v370
      %v680 = vunpack.c.l.b16 %v371
      %v681 = vunpack.c.l.b16 %v372
      %v682 = vunpack.c.h.b16 %v372
      %v683 = vunpack.c.l.b16 %v373
      %v684 = vunpack.c.l.b16 %v374
      %v685 = vunpack.c.h.b16 %v374
      %v686 = vunpack.c.l.b16 %v375
      %v687 = vunpack.c.l.b16 %v376
      %v688 = vunpack.c.h.b16 %v376
      %v689 = vunpack.c.l.b16 %v377
      %v690 = vunpack.c.l.b16 %v378
      %v691 = vunpack.c.h.b16 %v378
      %v692 = vunpack.c.l.b16 %v379
      %v693 = vunpack.c.l.b16 %v380
      %v694 = vunpack.c.h.b16 %v380
      %v695 = vunpack.c.l.b16 %v381
      %v696 = vunpack.c.l.b16 %v382
      %v697 = vunpack.c.h.b16 %v382
      %v698 = vunpack.c.l.b16 %v383
      %v699 = vunpack.c.l.b16 %v384
      %v700 = vunpack.c.h.b16 %v384
      %v701 = vunpack.c.l.b16 %v385
      %v702 = vunpack.c.l.b16 %v386
      %v703 = vunpack.c.h.b16 %v386
      %v704 = vunpack.c.l.b16 %v387
      %v705 = vunpack.c.l.b16 %v388
      %v706 = vunpack.c.h.b16 %v388
      %v707 = vunpack.c.l.b16 %v389
      %v708 = vunpack.c.l.b16 %v390
      %v709 = vunpack.c.h.b16 %v390
      %v710 = vunpack.c.l.b16 %v391
      %v711 = vunpack.c.l.b16 %v392
      %v712 = vunpack.c.h.b16 %v392
      %v713 = vunpack.c.l.b16 %v393
      %v714 = vunpack.c.l.b16 %v394
      %v715 = vunpack.c.h.b16 %v394
      %v716 = vunpack.c.l.b16 %v395
      %v717 = vunpack.c.l.b16 %v396
      %v718 = vunpack.c.h.b16 %v396
      %v719 = vunpack.c.l.b16 %v397
      %v720 = vunpack.c.l.b16 %v398
      %v721 = vunpack.c.h.b16 %v398
      %v722 = vunpack.c.l.b16 %v399
      %v723 = vunpack.c.l.b16 %v400
      %v724 = vunpack.c.h.b16 %v400
      %v725 = vunpack.c.l.b16 %v401
      %v726 = vunpack.c.l.b16 %v402
      %v727 = vunpack.c.h.b16 %v402
      %v728 = vunpack.c.l.b16 %v403
      %v729 = vunpack.c.l.b16 %v404
      %v730 = vunpack.c.h.b16 %v404
      %v731 = vunpack.c.l.b16 %v405
      %v732 = vunpack.c.l.b16 %v406
      %v733 = vunpack.c.h.b16 %v406
      %v734 = vunpack.c.l.b16 %v407
      %v735 = vunpack.c.l.b16 %v408
      %v736 = vunpack.c.h.b16 %v408
      %v737 = vunpack.c.l.b16 %v409
      %v738 = vunpack.c.l.b16 %v410
      %v739 = vunpack.c.h.b16 %v410
      %v740 = vunpack.c.l.b16 %v411
      %v741 = vunpack.c.l.b16 %v412
      %v742 = vunpack.c.h.b16 %v412
      %v743 = vunpack.c.l.b16 %v413
      %v744 = vunpack.c.l.b16 %v414
      %v745 = vunpack.c.h.b16 %v414
      %v746 = vunpack.c.l.b16 %v415
      %v747 = vunpack.c.l.b16 %v416
      %v748 = vunpack.c.h.b16 %v416
      %v749 = vunpack.c.l.b16 %v417
      %v750 = vunpack.c.l.b16 %v418
      %v751 = vunpack.c.h.b16 %v418
      %v752 = vunpack.c.l.b16 %v419
      %v753 = vunpack.c.l.b16 %v420
      %v754 = vunpack.c.h.b16 %v420
      %v755 = vunpack.c.l.b16 %v421
      %v756 = vunpack.c.l.b16 %v422
      %v757 = vunpack.c.h.b16 %v422
      %v758 = vunpack.c.l.b16 %v423
      %v759 = vunpack.c.l.b16 %v424
      %v760 = vunpack.c.h.b16 %v424
      %v761 = vunpack.c.l.b16 %v425
      %v762 = vunpack.c.l.b16 %v426
      %v763 = vunpack.c.h.b16 %v426
      %v764 = vunpack.c.l.b16 %v427
      %v765 = vunpack.c.l.b16 %v428
      %v766 = vunpack.c.h.b16 %v428
      %v767 = vunpack.c.l.b16 %v429
      %v768 = vunpack.c.l.b16 %v430
      %v769 = vunpack.c.h.b16 %v430
      %v770 = vunpack.c.l.b16 %v431
      %v771 = vunpack.c.l.b16 %v432
      %v772 = vunpack.c.h.b16 %v432
      %v773 = vunpack.c.l.b16 %v433
      %v774 = vpack.c.b16 %v585, %v582
      %v775 = vpack.c.b16 %v586, %v583
      %v776 = vpack.c.b16 %v587, %v584
      %v777 = vpack.c.b16 %v591, %v588
      %v778 = vpack.c.b16 %v592, %v589
      %v779 = vpack.c.b16 %v593, %v590
      %v780 = vpack.c.b16 %v597, %v594
      %v781 = vpack.c.b16 %v598, %v595
      %v782 = vpack.c.b16 %v599, %v596
      %v783 = vpack.c.b16 %v603, %v600
      %v784 = vpack.c.b16 %v604, %v601
      %v785 = vpack.c.b16 %v605, %v602
      %v786 = vpack.c.b16 %v609, %v606
      %v787 = vpack.c.b16 %v610, %v607
      %v788 = vpack.c.b16 %v611, %v608
      %v789 = vpack.c.b16 %v615, %v612
      %v790 = vpack.c.b16 %v616, %v613
      %v791 = vpack.c.b16 %v617, %v614
      %v792 = vpack.c.b16 %v621, %v618
      %v793 = vpack.c.b16 %v622, %v619
      %v794 = vpack.c.b16 %v623, %v620
      %v795 = vpack.c.b16 %v627, %v624
      %v796 = vpack.c.b16 %v628, %v625
      %v797 = vpack.c.b16 %v629, %v626
      %v798 = vpack.c.b16 %v633, %v630
      %v799 = vpack.c.b16 %v634, %v631
      %v800 = vpack.c.b16 %v635, %v632
      %v801 = vpack.c.b16 %v639, %v636
      %v802 = vpack.c.b16 %v640, %v637
      %v803 = vpack.c.b16 %v641, %v638
      %v804 = vpack.c.b16 %v645, %v642
      %v805 = vpack.c.b16 %v646, %v643
      %v806 = vpack.c.b16 %v647, %v644
      %v807 = vpack.c.b16 %v651, %v648
      %v808 = vpack.c.b16 %v652, %v649
      %v809 = vpack.c.b16 %v653, %v650
      %v810 = vpack.c.b16 %v657, %v654
      %v811 = vpack.c.b16 %v658, %v655
      %v812 = vpack.c.b16 %v659, %v656
      %v813 = vpack.c.b16 %v663, %v660
      %v814 = vpack.c.b16 %v664, %v661
      %v815 = vpack.c.b16 %v665, %v662
      %v816 = vpack.c.b16 %v669, %v666
      %v817 = vpack.c.b16 %v670, %v667
      %v818 = vpack.c.b16 %v671, %v668
      %v819 = vpack.c.b16 %v675, %v672
      %v820 = vpack.c.b16 %v676, %v673
      %v821 = vpack.c.b16 %v677, %v674
      %v822 = vpack.c.b16 %v681, %v678
      %v823 = vpack.c.b16 %v682, %v679
      %v824 = vpack.c.b16 %v683, %v680
      %v825 = vpack.c.b16 %v687, %v684
      %v826 = vpack.c.b16 %v688, %v685
      %v827 = vpack.c.b16 %v689, %v686
      %v828 = vpack.c.b16 %v693, %v690
      %v829 = vpack.c.b16 %v694, %v691
      %v830 = vpack.c.b16 %v695, %v692
      %v831 = vpack.c.b16 %v699, %v696
      %v832 = vpack.c.b16 %v700, %v697
      %v833 = vpack.c.b16 %v701, %v698
      %v834 = vpack.c.b16 %v705, %v702
      %v835 = vpack.c.b16 %v706, %v703
      %v836 = vpack.c.b16 %v707, %v704
      %v837 = vpack.c.b16 %v711, %v708
      %v838 = vpack.c.b16 %v712, %v709
      %v839 = vpack.c.b16 %v713, %v710
      %v840 = vpack.c.b16 %v717, %v714
      %v841 = vpack.c.b16 %v718, %v715
      %v842 = vpack.c.b16 %v719, %v716
      %v843 = vpack.c.b16 %v723, %v720
      %v844 = vpack.c.b16 %v724, %v721
      %v845 = vpack.c.b16 %v725, %v722
      %v846 = vpack.c.b16 %v729, %v726
      %v847 = vpack.c.b16 %v730, %v727
      %v848 = vpack.c.b16 %v731, %v728
      %v849 = vpack.c.b16 %v735, %v732
      %v850 = vpack.c.b16 %v736, %v733
      %v851 = vpack.c.b16 %v737, %v734
      %v852 = vpack.c.b16 %v741, %v738
      %v853 = vpack.c.b16 %v742, %v739
      %v854 = vpack.c.b16 %v743, %v740
      %v855 = vpack.c.b16 %v747, %v744
      %v856 = vpack.c.b16 %v748, %v745
      %v857 = vpack.c.b16 %v749, %v746
      %v858 = vpack.c.b16 %v753, %v750
      %v859 = vpack.c.b16 %v754, %v751
      %v860 = vpack.c.b16 %v755, %v752
      %v861 = vpack.c.b16 %v759, %v756
      %v862 = vpack.c.b16 %v760, %v757
      %v863 = vpack.c.b16 %v761, %v758
      %v864 = vpack.c.b16 %v765, %v762
      %v865 = vpack.c.b16 %v766, %v763
      %v866 = vpack.c.b16 %v767, %v764
      %v867 = vpack.c.b16 %v771, %v768
      %v868 = vpack.c.b16 %v772, %v769
      %v869 = vpack.c.b16 %v773, %v770
      %966 = vmatprep.subr.bf16.mxu0 %v796
      %967 = vmatpush1.bf16.msra.mxu0 %v795
      %968 = vmatprep.subr.bf16.mxu0 %v793
      %969 = vmatpush1.bf16.msra.mxu0 %v792
      %970 = vmatprep.subr.bf16.mxu0 %v790
      %971 = vmatpush1.bf16.msra.mxu0 %v789
      %972 = vmatprep.subr.bf16.mxu0 %v787
      %973 = vmatpush1.bf16.msra.mxu0 %v786
      %974 = vmatprep.subr.bf16.mxu0 %v784
      %975 = vmatpush1.bf16.msra.mxu0 %v783
      %976 = vmatprep.subr.bf16.mxu0 %v781
      %977 = vmatpush1.bf16.msra.mxu0 %v780
      %978 = vmatprep.subr.bf16.mxu0 %v778
      %979 = vmatpush1.bf16.msra.mxu0 %v777
      %980 = vmatprep.subr.bf16.mxu0 %v775
      %981 = vmatpush1.bf16.msra.mxu0 %v774
      %982 = vmatprep.subr.bf16.mxu0 %v820
      %983 = vmatpush2.bf16.msra.mxu0 %v819
      %984 = vmatprep.subr.bf16.mxu0 %v817
      %985 = vmatpush2.bf16.msra.mxu0 %v816
      %986 = vmatprep.subr.bf16.mxu0 %v814
      %987 = vmatpush2.bf16.msra.mxu0 %v813
      %988 = vmatprep.subr.bf16.mxu0 %v811
      %989 = vmatpush2.bf16.msra.mxu0 %v810
      %990 = vmatprep.subr.bf16.mxu0 %v808
      %991 = vmatpush2.bf16.msra.mxu0 %v807
      %992 = vmatprep.subr.bf16.mxu0 %v805
      %993 = vmatpush2.bf16.msra.mxu0 %v804
      %994 = vmatprep.subr.bf16.mxu0 %v802
      %995 = vmatpush2.bf16.msra.mxu0 %v801
      %996 = vmatprep.subr.bf16.mxu0 %v799
      %997 = vmatpush2.bf16.msra.mxu0 %v798
      %998 = vmatprep.mubr.bf16.mxu0 %v447
      %999 = vmatmul.mubr.bf16.gmra.mxu0 %v446
      %v1000 = vpop.f32.mrf.mxu0
      %v1001 = vadd.f32 0.0, %v1000
      %v1002 = vpop.f32.mrf.mxu0
      %v1003 = vadd.f32 0.0, %v1002
      %v1004 = vpop.f32.mrf.mxu0
      %v1005 = vadd.f32 0.0, %v1004
      %v1006 = vpop.f32.mrf.mxu0
      %v1007 = vadd.f32 0.0, %v1006
      %1008 = vdwg.mxu0
      %1009 = vmatprep.subr.bf16.mxu0 %v844
      %1010 = vmatpush1.bf16.msra.mxu0 %v843
      %1011 = vmatprep.subr.bf16.mxu0 %v841
      %1012 = vmatpush1.bf16.msra.mxu0 %v840
      %1013 = vmatprep.subr.bf16.mxu0 %v838
      %1014 = vmatpush1.bf16.msra.mxu0 %v837
      %1015 = vmatprep.subr.bf16.mxu0 %v835
      %1016 = vmatpush1.bf16.msra.mxu0 %v834
      %1017 = vmatprep.subr.bf16.mxu0 %v832
      %1018 = vmatpush1.bf16.msra.mxu0 %v831
      %1019 = vmatprep.subr.bf16.mxu0 %v829
      %1020 = vmatpush1.bf16.msra.mxu0 %v828
      %1021 = vmatprep.subr.bf16.mxu0 %v826
      %1022 = vmatpush1.bf16.msra.mxu0 %v825
      %1023 = vmatprep.subr.bf16.mxu0 %v823
      %1024 = vmatpush1.bf16.msra.mxu0 %v822
      %1025 = vmatprep.subr.bf16.mxu0 %v868
      %1026 = vmatpush2.bf16.msra.mxu0 %v867
      %1027 = vmatprep.subr.bf16.mxu0 %v865
      %1028 = vmatpush2.bf16.msra.mxu0 %v864
      %1029 = vmatprep.subr.bf16.mxu0 %v862
      %1030 = vmatpush2.bf16.msra.mxu0 %v861
      %1031 = vmatprep.subr.bf16.mxu0 %v859
      %1032 = vmatpush2.bf16.msra.mxu0 %v858
      %1033 = vmatprep.subr.bf16.mxu0 %v856
      %1034 = vmatpush2.bf16.msra.mxu0 %v855
      %1035 = vmatprep.subr.bf16.mxu0 %v853
      %1036 = vmatpush2.bf16.msra.mxu0 %v852
      %1037 = vmatprep.subr.bf16.mxu0 %v850
      %1038 = vmatpush2.bf16.msra.mxu0 %v849
      %1039 = vmatprep.subr.bf16.mxu0 %v847
      %1040 = vmatpush2.bf16.msra.mxu0 %v846
      %1041 = vmatprep.mubr.bf16.mxu0 %v449
      %1042 = vmatmul.mubr.bf16.gmra.mxu0 %v448
      %v1043 = vpop.f32.mrf.mxu0
      %v1044 = vadd.f32 %v1001, %v1043
      %v1045 = vpop.f32.mrf.mxu0
      %v1046 = vadd.f32 %v1003, %v1045
      %v1047 = vpop.f32.mrf.mxu0
      %v1048 = vadd.f32 %v1005, %v1047
      %v1049 = vpop.f32.mrf.mxu0
      %v1050 = vadd.f32 %v1007, %v1049
      %1051 = vdwg.mxu0
      %1052 = vmatprep.subr.bf16.mxu0 0
      %1053 = vmatpush1.bf16.msra.mxu0 %v797
      %1054 = vmatprep.subr.bf16.mxu0 0
      %1055 = vmatpush1.bf16.msra.mxu0 %v794
      %1056 = vmatprep.subr.bf16.mxu0 0
      %1057 = vmatpush1.bf16.msra.mxu0 %v791
      %1058 = vmatprep.subr.bf16.mxu0 0
      %1059 = vmatpush1.bf16.msra.mxu0 %v788
      %1060 = vmatprep.subr.bf16.mxu0 0
      %1061 = vmatpush1.bf16.msra.mxu0 %v785
      %1062 = vmatprep.subr.bf16.mxu0 0
      %1063 = vmatpush1.bf16.msra.mxu0 %v782
      %1064 = vmatprep.subr.bf16.mxu0 0
      %1065 = vmatpush1.bf16.msra.mxu0 %v779
      %1066 = vmatprep.subr.bf16.mxu0 0
      %1067 = vmatpush1.bf16.msra.mxu0 %v776
      %1068 = vmatprep.subr.bf16.mxu0 0
      %1069 = vmatpush2.bf16.msra.mxu0 %v821
      %1070 = vmatprep.subr.bf16.mxu0 0
      %1071 = vmatpush2.bf16.msra.mxu0 %v818
      %1072 = vmatprep.subr.bf16.mxu0 0
      %1073 = vmatpush2.bf16.msra.mxu0 %v815
      %1074 = vmatprep.subr.bf16.mxu0 0
      %1075 = vmatpush2.bf16.msra.mxu0 %v812
      %1076 = vmatprep.subr.bf16.mxu0 0
      %1077 = vmatpush2.bf16.msra.mxu0 %v809
      %1078 = vmatprep.subr.bf16.mxu0 0
      %1079 = vmatpush2.bf16.msra.mxu0 %v806
      %1080 = vmatprep.subr.bf16.mxu0 0
      %1081 = vmatpush2.bf16.msra.mxu0 %v803
      %1082 = vmatprep.subr.bf16.mxu0 0
      %1083 = vmatpush2.bf16.msra.mxu0 %v800
      %1084 = vmatprep.mubr.bf16.mxu0 %v447
      %1085 = vmatmul.mubr.bf16.gmra.mxu0 %v446
      %v1086 = vpop.f32.mrf.mxu0
      %v1087 = vadd.f32 0.0, %v1086
      %v1088 = vpop.f32.mrf.mxu0
      %v1089 = vpop.f32.mrf.mxu0
      %v1090 = vadd.f32 0.0, %v1089
      %v1091 = vpop.f32.mrf.mxu0
      %1092 = vdwg.mxu0
      %1093 = vmatprep.subr.bf16.mxu0 0
      %1094 = vmatpush1.bf16.msra.mxu0 %v845
      %1095 = vmatprep.subr.bf16.mxu0 0
      %1096 = vmatpush1.bf16.msra.mxu0 %v842
      %1097 = vmatprep.subr.bf16.mxu0 0
      %1098 = vmatpush1.bf16.msra.mxu0 %v839
      %1099 = vmatprep.subr.bf16.mxu0 0
      %1100 = vmatpush1.bf16.msra.mxu0 %v836
      %1101 = vmatprep.subr.bf16.mxu0 0
      %1102 = vmatpush1.bf16.msra.mxu0 %v833
      %1103 = vmatprep.subr.bf16.mxu0 0
      %1104 = vmatpush1.bf16.msra.mxu0 %v830
      %1105 = vmatprep.subr.bf16.mxu0 0
      %1106 = vmatpush1.bf16.msra.mxu0 %v827
      %1107 = vmatprep.subr.bf16.mxu0 0
      %1108 = vmatpush1.bf16.msra.mxu0 %v824
      %1109 = vmatprep.subr.bf16.mxu0 0
      %1110 = vmatpush2.bf16.msra.mxu0 %v869
      %1111 = vmatprep.subr.bf16.mxu0 0
      %1112 = vmatpush2.bf16.msra.mxu0 %v866
      %1113 = vmatprep.subr.bf16.mxu0 0
      %1114 = vmatpush2.bf16.msra.mxu0 %v863
      %1115 = vmatprep.subr.bf16.mxu0 0
      %1116 = vmatpush2.bf16.msra.mxu0 %v860
      %1117 = vmatprep.subr.bf16.mxu0 0
      %1118 = vmatpush2.bf16.msra.mxu0 %v857
      %1119 = vmatprep.subr.bf16.mxu0 0
      %1120 = vmatpush2.bf16.msra.mxu0 %v854
      %1121 = vmatprep.subr.bf16.mxu0 0
      %1122 = vmatpush2.bf16.msra.mxu0 %v851
      %1123 = vmatprep.subr.bf16.mxu0 0
      %1124 = vmatpush2.bf16.msra.mxu0 %v848
      %1125 = vmatprep.mubr.bf16.mxu0 %v449
      %1126 = vmatmul.mubr.bf16.gmra.mxu0 %v448
      %v1127 = vpop.f32.mrf.mxu0
      %v1128 = vadd.f32 %v1087, %v1127
      %v1129 = vpop.f32.mrf.mxu0
      %v1130 = vpop.f32.mrf.mxu0
      %v1131 = vadd.f32 %v1090, %v1130
      %v1132 = vpop.f32.mrf.mxu0
      %1133 = vdwg.mxu0
      %v1134 = vadd.f32 %v300, %v1044
      %v1135 = vadd.f32 %v301, %v1046
      %v1136 = vadd.f32 %v302, %v1128
      %v1137 = vadd.f32 %v303, %v1048
      %v1138 = vadd.f32 %v304, %v1050
      %v1139 = vadd.f32 %v305, %v1131
      %1140 = vst [vmem:[#allocation2] sm:$0xff] %v1134
      %1141 = vst [vmem:[#allocation2 + $0x8] sm:$0xff] %v1135
      %1142 = vst [vmem:[#allocation2 + $0x10] sm:$0xff] %v1136
      %1143 = vst [vmem:[#allocation2 + $0x18] sm:$0xff] %v1137
      %1144 = vst [vmem:[#allocation2 + $0x20] sm:$0xff] %v1138
      %1145 = vst [vmem:[#allocation2 + $0x28] sm:$0xff] %v1139
      // Predicated region
      $region37: #{vit_segmentation_forward.12} parent=31 // pred_check
        %p1146 = pneg %p286
      $region38: #{vit_segmentation_forward.12} parent=31 // pred_check_branch
        %1148 = sbr.rel (%p1146) target = $region40
      $region39: #{vit_segmentation_forward.12} parent=31 // pred_region
        %v1149 = vld [vmem:[#allocation2] sm:$0xff]
        %v1150 = vld [vmem:[#allocation2 + $0x8] sm:$0xff]
        %v1151 = vld [vmem:[#allocation2 + $0x10] sm:$0xff]
        %v1152 = vld [vmem:[#allocation2 + $0x18] sm:$0xff]
        %v1153 = vld [vmem:[#allocation2 + $0x20] sm:$0xff]
        %v1154 = vld [vmem:[#allocation2 + $0x28] sm:$0xff]
        %v1155 = vld [vmem:[%s271] sm:$0x7]
        %v1157 = vlaneseq
        %v1158 = vshrl.u32 %v1157, 7
        %v1159 = vsub.s32 0, %v1158
        %v1160 = vrot.slane %v1155, %v1159
        %v1161 = vlaneseq
        %v1162 = vshrl.u32 %v1161, 7
        %v1163 = vsub.s32 1, %v1162
        %v1164 = vrot.slane %v1155, %v1163
        %v1165 = vlaneseq
        %v1166 = vshrl.u32 %v1165, 7
        %v1167 = vsub.s32 2, %v1166
        %v1168 = vrot.slane %v1155, %v1167
        %v1172 = vadd.f32 %v1149, %v1160
        %v1173 = vadd.f32 %v1150, %v1164
        %v1174 = vadd.f32 %v1151, %v1168
        %v1175 = vadd.f32 %v1152, %v1160
        %v1176 = vadd.f32 %v1153, %v1164
        %v1177 = vadd.f32 %v1154, %v1168
        %v1178 = vpack.c.bf16 %v1175, %v1172
        %v1179 = vpack.c.bf16 %v1176, %v1173
        %v1180 = vpack.c.bf16 %v1177, %v1174
        %v1184 = vunpack.c.l.b16 %v1178
        %v1185 = vunpack.c.l.b16 %v1179
        %v1186 = vunpack.c.l.b16 %v1180
        %v1187 = vunpack.c.h.b16 %v1178
        %v1188 = vunpack.c.h.b16 %v1179
        %v1189 = vunpack.c.h.b16 %v1180
        %v1190 = vpack.c.b16 %v1185, %v1184
        %v1191 = vpack.c.b16 %v1186, %v1186
        %v1192 = vpack.c.b16 %v1188, %v1187
        %v1193 = vpack.c.b16 %v1189, %v1189
        %1198 = vst [vmem:[%s282] sm:$0xff] %v1190
        %1199 = vst [vmem:[%s282 + $0x8] sm:$0xf] %v1191
        %1200 = vst [vmem:[%s282 + $0xc] sm:$0xff] %v1192
        %1201 = vst [vmem:[%s282 + $0x14] sm:$0xf] %v1193
      $region40: #{vit_segmentation_forward.12} parent=31 // pred_fallthru
        _
      %s1202 = smul.u32 2, %s19
      %s1203 = smul.u32 3, %s20
      %p1204 = scmp.lt.s32.totalorder %s1202, 3
      %s1205 = scalar_select %p1204, %s1202, 3
      %p1206 = scmp.lt.s32.totalorder %s1203, 2
      %s1207 = scalar_select %p1206, %s1203, 2
      %s1208 = smul.addr %s1205, 3
      %s1209 = sadd.s32 %s1207, %s1208
      %s1210 = smul.addr %s1209, 4
      %s1211 = scalar_lea.vmem %s3, %s1210
      // Predicated region
      $region41: #{vit_segmentation_forward.12} parent=31 // pred_check
        %p1212 = pneg %p135
      $region42: #{vit_segmentation_forward.12} parent=31 // pred_check_branch
        %1214 = sbr.rel (%p1212) target = $region44
      $region43: #{vit_segmentation_forward.12} parent=31 // pred_region
        %s1215 = smul.u32 2, %s19
        %s1216 = smul.u32 3, %s20
      $region44: #{vit_segmentation_forward.12} parent=31 // pred_fallthru
        _
    $region32: #{vit_segmentation_forward.12} parent=5 // pred_fallthru
      _
    %p1217 = scmp.le.s32.totalorder 2, %s9
    // Predicated region
    $region45: #{vit_segmentation_forward.12} parent=5 // pred_check
      %p1218 = pneg %p1217
    $region46: #{vit_segmentation_forward.12} parent=5 // pred_check_branch
      %1220 = sbr.rel (%p1218) target = $region48
    $region47: #{vit_segmentation_forward.12} parent=5 // pred_region
      %s1221 = ssub.s32 %s9, 2
      // Predicated region
      $region49: #{vit_segmentation_forward.12} parent=47 // pred_check
        %p1222 = pneg %p141
      $region50: #{vit_segmentation_forward.12} parent=47 // pred_check_branch
        %1224 = sbr.rel (%p1222) target = $region52
      $region51: #{vit_segmentation_forward.12} parent=47 // pred_region
        %s1225 = smul.u32 2, %s22
        %s1226 = smul.u32 3, %s23
        %p1227 = scmp.lt.s32.totalorder %s1225, 3
        %s1228 = scalar_select %p1227, %s1225, 3
        %p1229 = scmp.lt.s32.totalorder %s1226, 2
        %s1230 = scalar_select %p1229, %s1226, 2
        %s1231 = smul.addr %s1228, 3
        %s1232 = sadd.s32 %s1230, %s1231
        %s1233 = smul.addr %s1232, 4
        %s1234 = scalar_lea.vmem %s3, %s1233
      $region52: #{vit_segmentation_forward.12} parent=47 // pred_fallthru
        _
    $region48: #{vit_segmentation_forward.12} parent=5 // pred_fallthru
      _
  $region6: #{vit_segmentation_forward.12} parent=0 // loop_footer
    %s13 = sadd.s32 1, %s9
  $region7: #{vit_segmentation_forward.12} parent=0 // loop_footer_branch
    %8 = sbr.rel target = $region3
  $region8: #{vit_segmentation_forward.12} parent=0 // loop_exit
    _

</llo_original>
